<compile_context>
chip_gen: v7x
topology: tpu7x:2x2x1
jax: 0.10.0
libtpu: 0.0.40
codegen_flags: <defaults>
</compile_context>

<pallas_src>
import numpy as np
import jax
import jax.numpy as jnp
from jax import lax
from jax.experimental import pallas as pl
from jax.experimental.pallas import tpu as pltpu


HALO = 16          # halo rows on each side of a time tile (covers pad <= 4, k <= 9;
                   # 16 keeps bf16 sublane packing aligned)
EPS = 1e-5
TILE_HALF_TARGET = 1024   # target time tile for the 256-ch (half-rate) layers
VMEM_LIMIT = 32 * 1024 * 1024


def _round_up(x, m):
    return ((x + m - 1) // m) * m


# --------------------------------------------------------------------------------------
# Layer 1: plain matmul per tile (im2col'd input, no halo needed)
# --------------------------------------------------------------------------------------
def _make_matmul_kernel(relu):
    def kernel(x_ref, w_ref, scale_ref, shift_ref, o_ref):
        y = jnp.dot(x_ref[0], w_ref[...], preferred_element_type=jnp.float32)
        y = y * scale_ref[...] + shift_ref[...]
        if relu:
            y = jnp.maximum(y, 0.0)
        o_ref[0] = y.astype(o_ref.dtype)
    return kernel


def matmul_layer(x, w, scale, shift, *, relu, tile_t, out_dtype):
    B, L, cin = map(int, x.shape)
    cout = int(w.shape[-1])
    assert L % tile_t == 0
    grid = (B, L // tile_t)
    return pl.pallas_call(
        _make_matmul_kernel(relu),
        out_shape=jax.ShapeDtypeStruct((B, L, cout), out_dtype),
        grid=grid,
        in_specs=[
            pl.BlockSpec((1, tile_t, cin), lambda b, t: (b, t, 0)),
            pl.BlockSpec(w.shape, lambda b, t: (0, 0)),
            pl.BlockSpec((1, cout), lambda b, t: (0, 0)),
            pl.BlockSpec((1, cout), lambda b, t: (0, 0)),
        ],
        out_specs=pl.BlockSpec((1, tile_t, cout), lambda b, t: (b, t, 0)),
        compiler_params=pltpu.CompilerParams(
            dimension_semantics=("parallel", "parallel"),
            vmem_limit_bytes=VMEM_LIMIT),
    )(x, w, scale, shift)


# --------------------------------------------------------------------------------------
# Layers 2/3: K-tap "shifted matmul" conv with in-kernel halo + edge masking
# --------------------------------------------------------------------------------------
def _make_halo_conv_kernel(K, tile_t, cin, pad_lo, valid_in_len, relu):
    off = HALO - pad_lo     # window row of input row (t*tile_t - pad_lo)

    def kernel(x_ref, lh_ref, rh_ref, w_ref, scale_ref, shift_ref, o_ref, win_ref):
        t = pl.program_id(1)
        # window row i  <->  global input row  g = t*tile_t - HALO + i   (bf16 scratch)
        win_ref[0:HALO, :] = lh_ref[0]
        win_ref[HALO:HALO + tile_t, :] = x_ref[0]
        win_ref[HALO + tile_t:2 * HALO + tile_t, :] = rh_ref[0]

        @pl.when(t == 0)
        def _():                                     # rows with g < 0 -> zero padding
            win_ref[0:HALO, :] = jnp.zeros((HALO, cin), win_ref.dtype)

        @pl.when((t + 1) * tile_t + HALO > valid_in_len)
        def _():                                     # rows with g >= valid -> zero padding
            row = lax.broadcasted_iota(jnp.int32, (tile_t + 2 * HALO, 1), 0)
            g = t * tile_t - HALO + row
            win_ref[...] = jnp.where(g >= valid_in_len,
                                     jnp.zeros_like(win_ref[...]),
                                     win_ref[...]).astype(win_ref.dtype)

        # K shifted matmuls, accumulated as a value chain (no per-tap VMEM round-trip).
        acc = None
        for k in range(K):
            xs = win_ref[off + k:off + k + tile_t, :]
            d = jnp.dot(xs, w_ref[k], preferred_element_type=jnp.float32)
            acc = d if acc is None else acc + d
        y = acc * scale_ref[...] + shift_ref[...]
        if relu:
            y = jnp.maximum(y, 0.0)
        o_ref[0] = y.astype(o_ref.dtype)

    return kernel


def halo_conv_layer(x, w, scale, shift, *, pad_lo, valid_in_len, relu, tile_t, out_dtype):
    B, L, cin = map(int, x.shape)
    K = int(w.shape[0])
    cout = int(w.shape[-1])
    assert L % tile_t == 0 and tile_t % HALO == 0
    hb = tile_t // HALO
    n_halo_blocks = L // HALO
    grid = (B, L // tile_t)

    return pl.pallas_call(
        _make_halo_conv_kernel(K, tile_t, cin, pad_lo, valid_in_len, relu),
        out_shape=jax.ShapeDtypeStruct((B, L, cout), out_dtype),
        grid=grid,
        in_specs=[
            pl.BlockSpec((1, tile_t, cin), lambda b, t: (b, t, 0)),              # main tile
            pl.BlockSpec((1, HALO, cin),                                         # left halo
                         lambda b, t: (b, jnp.maximum(t * hb - 1, 0), 0)),
            pl.BlockSpec((1, HALO, cin),                                         # right halo
                         lambda b, t: (b, jnp.minimum((t + 1) * hb, n_halo_blocks - 1), 0)),
            pl.BlockSpec(w.shape, lambda b, t: (0, 0, 0)),                       # weights
            pl.BlockSpec((1, cout), lambda b, t: (0, 0)),                        # BN scale
            pl.BlockSpec((1, cout), lambda b, t: (0, 0)),                        # BN shift
        ],
        out_specs=pl.BlockSpec((1, tile_t, cout), lambda b, t: (b, t, 0)),
        scratch_shapes=[pltpu.VMEM((tile_t + 2 * HALO, cin), jnp.bfloat16)],
        compiler_params=pltpu.CompilerParams(
            dimension_semantics=("parallel", "parallel"),
            vmem_limit_bytes=VMEM_LIMIT),
    )(x, x, x, w, scale, shift)


# --------------------------------------------------------------------------------------
# Layer 4 (Conv1d 128 -> 1): one matmul with the 9 taps as output columns, then
# shifted-column adds (MXU instead of VPU broadcast + cross-lane reduce).
# --------------------------------------------------------------------------------------
def _make_taps_cols_kernel(K, tile_t, cin, pad_lo, valid_in_len):
    off = HALO - pad_lo

    def kernel(x_ref, lh_ref, rh_ref, w_ref, shift_ref, o_ref, win_ref):
        t = pl.program_id(1)
        win_ref[0:HALO, :] = lh_ref[0]
        win_ref[HALO:HALO + tile_t, :] = x_ref[0]
        win_ref[HALO + tile_t:2 * HALO + tile_t, :] = rh_ref[0]

        @pl.when(t == 0)
        def _():
            win_ref[0:HALO, :] = jnp.zeros((HALO, cin), win_ref.dtype)

        @pl.when((t + 1) * tile_t + HALO > valid_in_len)
        def _():
            row = lax.broadcasted_iota(jnp.int32, (tile_t + 2 * HALO, 1), 0)
            g = t * tile_t - HALO + row
            win_ref[...] = jnp.where(g >= valid_in_len,
                                     jnp.zeros_like(win_ref[...]),
                                     win_ref[...]).astype(win_ref.dtype)

        # (tile+32, 128) x (128, 16):  column k holds tap-k partial products.
        p_taps = jnp.dot(win_ref[...], w_ref[...], preferred_element_type=jnp.float32)
        acc = p_taps[off:off + tile_t, 0:1]
        for k in range(1, K):
            acc = acc + p_taps[off + k:off + k + tile_t, k:k + 1]
        o_ref[0] = (acc + shift_ref[...]).astype(o_ref.dtype)

    return kernel


def taps_cols_layer(x, w, shift, *, pad_lo, valid_in_len, tile_t):
    B, L, cin = map(int, x.shape)
    K = 9
    assert L % tile_t == 0 and tile_t % HALO == 0
    hb = tile_t // HALO
    n_halo_blocks = L // HALO
    grid = (B, L // tile_t)

    return pl.pallas_call(
        _make_taps_cols_kernel(K, tile_t, cin, pad_lo, valid_in_len),
        out_shape=jax.ShapeDtypeStruct((B, L, 1), jnp.float32),
        grid=grid,
        in_specs=[
            pl.BlockSpec((1, tile_t, cin), lambda b, t: (b, t, 0)),
            pl.BlockSpec((1, HALO, cin),
                         lambda b, t: (b, jnp.maximum(t * hb - 1, 0), 0)),
            pl.BlockSpec((1, HALO, cin),
                         lambda b, t: (b, jnp.minimum((t + 1) * hb, n_halo_blocks - 1), 0)),
            pl.BlockSpec(w.shape, lambda b, t: (0, 0)),
            pl.BlockSpec((1, 1), lambda b, t: (0, 0)),
        ],
        out_specs=pl.BlockSpec((1, tile_t, 1), lambda b, t: (b, t, 0)),
        scratch_shapes=[pltpu.VMEM((tile_t + 2 * HALO, cin), jnp.bfloat16)],
        compiler_params=pltpu.CompilerParams(
            dimension_semantics=("parallel", "parallel"),
            vmem_limit_bytes=VMEM_LIMIT),
    )(x, x, x, w, shift)


# --------------------------------------------------------------------------------------
# One-time parameter preparation (BN fold, transposes, folded weights, bf16 casts) —
# hoisted OUT of the jitted forward.
# --------------------------------------------------------------------------------------
def prepare_params(p):
    def bn_fold(g, be, m, v, b):
        s = g / jnp.sqrt(v + EPS)
        return s, (b - m) * s + be

    q = {}
    # encoder[0]: Conv1d(1,128,k9,s1,p4) + BN + ReLU  ->  im2col matmul weights (16,128)
    s1, sh1 = bn_fold(p['g1'], p['be1'], p['m1'], p['v1'], p['b1'])
    w1 = jnp.zeros((16, 128), jnp.float32).at[:9, :].set(p['w1'][:, 0, :].T)
    q['w1'] = w1.astype(jnp.bfloat16)
    q['s1'], q['sh1'] = s1[None, :], sh1[None, :]

    # encoder[3]: Conv1d(128,256,k9,s2,p4) + BN + ReLU, stride folded into channels
    s2, sh2 = bn_fold(p['g2'], p['be2'], p['m2'], p['v2'], p['b2'])
    w2t = jnp.transpose(p['w2'], (2, 1, 0))                  # (9, 128, 256)
    w2f = jnp.zeros((5, 256, 256), jnp.float32)
    w2f = w2f.at[:, 0:128, :].set(w2t[0::2])                 # even taps 0,2,4,6,8
    w2f = w2f.at[0:4, 128:256, :].set(w2t[1::2])             # odd taps 1,3,5,7
    q['w2'] = w2f.astype(jnp.bfloat16)
    q['s2'], q['sh2'] = s2[None, :], sh2[None, :]

    # decoder[0]: ConvTranspose1d(256,128,k9,s2,p4,out_pad=1) + BN + ReLU,
    # both output phases from one kernel: out channels [even(0:128) | odd(128:256)]
    st, sht = bn_fold(p['gt'], p['bet'], p['mt'], p['vt'], p['bt'])
    wtt = jnp.transpose(p['wt'], (2, 0, 1))                  # (9, 256, 128)
    wdf = jnp.zeros((5, 256, 256), jnp.float32)
    wdf = wdf.at[:, :, 0:128].set(jnp.stack([wtt[8 - 2 * m] for m in range(5)]))
    wdf = wdf.at[1:5, :, 128:256].set(jnp.stack([wtt[9 - 2 * m] for m in range(1, 5)]))
    q['wt'] = wdf.astype(jnp.bfloat16)
    q['st'] = jnp.concatenate([st, st])[None, :]
    q['sht'] = jnp.concatenate([sht, sht])[None, :]

    # decoder[3]: Conv1d(128,1,k9,s1,p4): taps as output columns (128, 16)
    w3 = jnp.zeros((128, 16), jnp.float32).at[:, :9].set(p['w3'][0, :, :])
    q['w3'] = w3.astype(jnp.bfloat16)
    q['b3'] = p['b3'][None, :]                               # (1, 1)
    return q


# --------------------------------------------------------------------------------------
# Model forward (Pallas path)
# --------------------------------------------------------------------------------------
def audio_enhancement_pallas(x, q, *, tile_half_target=TILE_HALF_TARGET):
    B, T = map(int, x.shape)
    assert T % 2 == 0, "T must be even (stride-2 encoder / transpose-conv decoder)"
    t_half = T // 2

    tile_half = min(tile_half_target, _round_up(max(t_half, HALO), HALO))
    lp_half = _round_up(t_half, tile_half)
    tile_full = 2 * tile_half
    lp_full = 2 * lp_half

    # ---- encoder[0]: im2col (9 taps -> 16 input channels) + one MXU matmul per tile ----
    xpad = jnp.pad(x, ((0, 0), (4, lp_full - T + 4)))        # (B, lp_full + 8), tiny array
    cols = [xpad[:, j:j + lp_full] for j in range(9)]
    cols += [jnp.zeros((B, lp_full), x.dtype)] * 7
    xim = jnp.stack(cols, axis=-1).astype(jnp.bfloat16)      # (B, lp_full, 16)
    h1 = matmul_layer(xim, q['w1'], q['s1'], q['sh1'],
                      relu=True, tile_t=tile_full, out_dtype=jnp.bfloat16)   # (B, lp_full, 128)

    # ---- encoder[3]: stride-2 conv, even/odd phases folded into channels (free reshape) ----
    h1f = h1.reshape(B, lp_half, 256)
    h2 = halo_conv_layer(h1f, q['w2'], q['s2'], q['sh2'],
                         pad_lo=2, valid_in_len=t_half, relu=True,
                         tile_t=tile_half, out_dtype=jnp.bfloat16)           # (B, lp_half, 256)

    # ---- decoder[0]: transpose conv, both output phases from one kernel ----
    hc = halo_conv_layer(h2, q['wt'], q['st'], q['sht'],
                         pad_lo=2, valid_in_len=t_half, relu=True,
                         tile_t=tile_half, out_dtype=jnp.bfloat16)           # (B, lp_half, 256)
    h3 = hc.reshape(B, lp_full, 128)                                         # free interleave

    # ---- decoder[3]: Conv1d(128 -> 1) via taps-as-columns matmul ----
    out = taps_cols_layer(h3, q['w3'], q['b3'],
                          pad_lo=4, valid_in_len=T, tile_t=tile_full)        # (B, lp_full, 1)
    return out[:, :T, 0]                                                     # (B, T) f32


# --------------------------------------------------------------------------------------
# Pure-JAX reference (same eval-mode BN semantics) for verification
# --------------------------------------------------------------------------------------
def reference_forward(x, p):
    dn = ('NCH', 'OIH', 'NCH')

    def conv(h, w, b, stride, pad_lo, pad_hi=None, lhs_dil=1):
        if pad_hi is None:
            pad_hi = pad_lo
        y = lax.conv_general_dilated(h, w, window_strides=(stride,),
                                     padding=[(pad_lo, pad_hi)],
                                     lhs_dilation=(lhs_dil,),
                                     dimension_numbers=dn)
        return y + b[None, :, None]

    def bn(h, g, be, m, v):
        return (h - m[None, :, None]) * (g / jnp.sqrt(v + EPS))[None, :, None] + be[None, :, None]

    h = x[:, None, :]
    h = jax.nn.relu(bn(conv(h, p['w1'], p['b1'], 1, 4), p['g1'], p['be1'], p['m1'], p['v1']))
    h = jax.nn.relu(bn(conv(h, p['w2'], p['b2'], 2, 4), p['g2'], p['be2'], p['m2'], p['v2']))
    # ConvTranspose1d == conv of 2x-dilated input with flipped/transposed kernel, pad (4, 5)
    wt_conv = jnp.transpose(jnp.flip(p['wt'], axis=2), (1, 0, 2))    # (128, 256, 9)
    h = conv(h, wt_conv, p['bt'], 1, 4, pad_hi=5, lhs_dil=2)
    h = jax.nn.relu(bn(h, p['gt'], p['bet'], p['mt'], p['vt']))
    h = conv(h, p['w3'], p['b3'], 1, 4)
    return h[:, 0, :]


# --------------------------------------------------------------------------------------
# Deterministic parameter init (shapes from the PyTorch module's __init__)
# --------------------------------------------------------------------------------------
def init_params(key):
    ks = jax.random.split(key, 16)

    def u(k, shape, fan):
        b = 1.0 / np.sqrt(fan)
        return jax.random.uniform(k, shape, jnp.float32, -b, b)

    def bn_params(k, c):
        k1, k2, k3, k4 = jax.random.split(k, 4)
        return (1.0 + 0.1 * jax.random.normal(k1, (c,), jnp.float32),   # gamma
                0.1 * jax.random.normal(k2, (c,), jnp.float32),         # beta
                0.1 * jax.random.normal(k3, (c,), jnp.float32),         # running_mean
                jax.random.uniform(k4, (c,), jnp.float32, 0.5, 1.5))    # running_var

    p = {}
    p['w1'] = u(ks[0], (128, 1, 9), 1 * 9)
    p['b1'] = u(ks[1], (128,), 1 * 9)
    p['g1'], p['be1'], p['m1'], p['v1'] = bn_params(ks[2], 128)
    p['w2'] = u(ks[3], (256, 128, 9), 128 * 9)
    p['b2'] = u(ks[4], (256,), 128 * 9)
    p['g2'], p['be2'], p['m2'], p['v2'] = bn_params(ks[5], 256)
    p['wt'] = u(ks[6], (256, 128, 9), 256 * 9)       # ConvTranspose1d weight (in, out, K)
    p['bt'] = u(ks[7], (128,), 256 * 9)
    p['gt'], p['bet'], p['mt'], p['vt'] = bn_params(ks[8], 128)
    p['w3'] = u(ks[9], (1, 128, 9), 128 * 9)
    p['b3'] = u(ks[10], (1,), 128 * 9)
    return p


if __name__ == "__main__":
    key = jax.random.PRNGKey(0)
    kx, kp = jax.random.split(key)
    B, T = 2, 256
    x = jax.random.normal(kx, (B, T), jnp.float32)
    p = init_params(kp)
    q = prepare_params(p)            # one-time parameter prep, outside the jitted forward

    out = jax.jit(audio_enhancement_pallas)(x, q)
    out = jax.block_until_ready(out)

    assert out.shape == (B, T)
    assert bool(jnp.isfinite(out).all())

    ref = reference_forward(x, p)
    err = float(jnp.max(jnp.abs(out - ref)))
    ref_scale = float(jnp.max(jnp.abs(ref)))
    # bf16 weights + bf16 stored activations with f32 accumulation.
    assert err < 5e-2 or err < 2e-2 * ref_scale, \
        f"Pallas output mismatch vs JAX reference: max abs err {err} (ref scale {ref_scale})"

    print("KERNEL_OK")
</pallas_src>

<mosaic_0001>
module attributes {stable_mosaic.version = 11 : i64} {
  func.func @kernel(%arg0: i32, %arg1: i32, %arg2: memref<1x256x16xbf16, #tpu.memory_space<vmem>>, %arg3: memref<16x128xbf16, #tpu.memory_space<vmem>>, %arg4: memref<1x128xf32, #tpu.memory_space<vmem>>, %arg5: memref<1x128xf32, #tpu.memory_space<vmem>>, %arg6: memref<1x256x128xbf16, #tpu.memory_space<vmem>>) attributes {dimension_semantics = [#tpu.dimension_semantics<parallel>, #tpu.dimension_semantics<parallel>], iteration_bounds = array<i64: 2, 1>, scalar_prefetch = 0 : i64, scratch_operands = 0 : i64, tpu.core_type = #tpu.core_type<tc>, window_params = [{transform_indices = @transform_0, window_bounds = array<i64: 1, 256, 16>}, {pipeline_mode = #tpu.pipeline_mode<synchronous>, transform_indices = @transform_1, window_bounds = array<i64: 16, 128>}, {pipeline_mode = #tpu.pipeline_mode<synchronous>, transform_indices = @transform_2, window_bounds = array<i64: 1, 128>}, {pipeline_mode = #tpu.pipeline_mode<synchronous>, transform_indices = @transform_3, window_bounds = array<i64: 1, 128>}, {transform_indices = @transform_4, window_bounds = array<i64: 1, 256, 128>}]} {
    %c0 = arith.constant 0 : index
    %c0_0 = arith.constant 0 : index
    %c0_1 = arith.constant 0 : index
    %0 = vector.load %arg2[%c0, %c0_0, %c0_1] : memref<1x256x16xbf16, #tpu.memory_space<vmem>>, vector<1x256x16xbf16>
    %1 = vector.shape_cast %0 : vector<1x256x16xbf16> to vector<256x16xbf16>
    %c0_2 = arith.constant 0 : index
    %c0_3 = arith.constant 0 : index
    %2 = vector.load %arg3[%c0_2, %c0_3] : memref<16x128xbf16, #tpu.memory_space<vmem>>, vector<16x128xbf16>
    %cst = arith.constant dense<0.000000e+00> : vector<256x128xf32>
    %3 = tpu.matmul %1, %2, %cst {dimension_numbers = #tpu.dot_dimension_numbers<[1], [0], [0], [1], [0, 0, 1, 1], [], []>} : vector<256x16xbf16>, vector<16x128xbf16>, vector<256x128xf32> -> vector<256x128xf32>
    %c0_4 = arith.constant 0 : index
    %c0_5 = arith.constant 0 : index
    %4 = vector.load %arg4[%c0_4, %c0_5] : memref<1x128xf32, #tpu.memory_space<vmem>>, vector<1x128xf32>
    %5 = vector.broadcast %4 : vector<1x128xf32> to vector<256x128xf32>
    %6 = arith.mulf %3, %5 : vector<256x128xf32>
    %c0_6 = arith.constant 0 : index
    %c0_7 = arith.constant 0 : index
    %7 = vector.load %arg5[%c0_6, %c0_7] : memref<1x128xf32, #tpu.memory_space<vmem>>, vector<1x128xf32>
    %8 = vector.broadcast %7 : vector<1x128xf32> to vector<256x128xf32>
    %9 = arith.addf %6, %8 : vector<256x128xf32>
    %cst_8 = arith.constant 0.000000e+00 : f32
    %10 = vector.broadcast %cst_8 : f32 to vector<256x128xf32>
    %11 = arith.maximumf %9, %10 : vector<256x128xf32>
    %12 = arith.truncf %11 : vector<256x128xf32> to vector<256x128xbf16>
    %c0_9 = arith.constant 0 : index
    %c0_10 = arith.constant 0 : index
    %c0_11 = arith.constant 0 : index
    %13 = vector.load %arg6[%c0_9, %c0_10, %c0_11] : memref<1x256x128xbf16, #tpu.memory_space<vmem>>, vector<1x256x128xbf16>
    %14 = vector.shape_cast %13 : vector<1x256x128xbf16> to vector<256x128xbf16>
    %15 = vector.shape_cast %12 : vector<256x128xbf16> to vector<1x256x128xbf16>
    tpu.vector_store %arg6[%c0_9, %c0_10, %c0_11], %15 {strides = array<i32>} : memref<1x256x128xbf16, #tpu.memory_space<vmem>>, vector<1x256x128xbf16>,
    return
  }
  func.func @transform_0(%arg0: i32, %arg1: i32) -> (i32, i32, i32) {
    %c0_i32 = arith.constant 0 : i32
    %c0_i32_0 = arith.constant 0 : i32
    return %arg0, %arg1, %c0_i32 : i32, i32, i32
  }
  func.func @transform_1(%arg0: i32, %arg1: i32) -> (i32, i32) {
    %c0_i32 = arith.constant 0 : i32
    %c0_i32_0 = arith.constant 0 : i32
    %c0_i32_1 = arith.constant 0 : i32
    return %c0_i32, %c0_i32_0 : i32, i32
  }
  func.func @transform_2(%arg0: i32, %arg1: i32) -> (i32, i32) {
    %c0_i32 = arith.constant 0 : i32
    %c0_i32_0 = arith.constant 0 : i32
    %c0_i32_1 = arith.constant 0 : i32
    return %c0_i32, %c0_i32_0 : i32, i32
  }
  func.func @transform_3(%arg0: i32, %arg1: i32) -> (i32, i32) {
    %c0_i32 = arith.constant 0 : i32
    %c0_i32_0 = arith.constant 0 : i32
    %c0_i32_1 = arith.constant 0 : i32
    return %c0_i32, %c0_i32_0 : i32, i32
  }
  func.func @transform_4(%arg0: i32, %arg1: i32) -> (i32, i32, i32) {
    %c0_i32 = arith.constant 0 : i32
    %c0_i32_0 = arith.constant 0 : i32
    return %arg0, %arg1, %c0_i32 : i32, i32, i32
  }
}

module attributes {stable_mosaic.version = 11 : i64} {
  func.func @kernel(%arg0: i32, %arg1: i32, %arg2: memref<1x128x256xbf16, #tpu.memory_space<vmem>>, %arg3: memref<1x16x256xbf16, #tpu.memory_space<vmem>>, %arg4: memref<1x16x256xbf16, #tpu.memory_space<vmem>>, %arg5: memref<5x256x256xbf16, #tpu.memory_space<vmem>>, %arg6: memref<1x256xf32, #tpu.memory_space<vmem>>, %arg7: memref<1x256xf32, #tpu.memory_space<vmem>>, %arg8: memref<1x128x256xbf16, #tpu.memory_space<vmem>>, %arg9: memref<160x256xbf16, #tpu.memory_space<vmem>>) attributes {dimension_semantics = [#tpu.dimension_semantics<parallel>, #tpu.dimension_semantics<parallel>], iteration_bounds = array<i64: 2, 1>, scalar_prefetch = 0 : i64, scratch_operands = 1 : i64, tpu.core_type = #tpu.core_type<tc>, window_params = [{transform_indices = @transform_0, window_bounds = array<i64: 1, 128, 256>}, {transform_indices = @transform_1, window_bounds = array<i64: 1, 16, 256>}, {transform_indices = @transform_2, window_bounds = array<i64: 1, 16, 256>}, {pipeline_mode = #tpu.pipeline_mode<synchronous>, transform_indices = @transform_3, window_bounds = array<i64: 5, 256, 256>}, {pipeline_mode = #tpu.pipeline_mode<synchronous>, transform_indices = @transform_4, window_bounds = array<i64: 1, 256>}, {pipeline_mode = #tpu.pipeline_mode<synchronous>, transform_indices = @transform_5, window_bounds = array<i64: 1, 256>}, {transform_indices = @transform_6, window_bounds = array<i64: 1, 128, 256>}]} {
    %c0 = arith.constant 0 : index
    %c0_0 = arith.constant 0 : index
    %c0_1 = arith.constant 0 : index
    %0 = vector.load %arg3[%c0, %c0_0, %c0_1] : memref<1x16x256xbf16, #tpu.memory_space<vmem>>, vector<1x16x256xbf16>
    %1 = vector.shape_cast %0 : vector<1x16x256xbf16> to vector<16x256xbf16>
    %c0_2 = arith.constant 0 : index
    %c0_3 = arith.constant 0 : index
    %2 = vector.load %arg9[%c0_2, %c0_3] : memref<160x256xbf16, #tpu.memory_space<vmem>>, vector<16x256xbf16>
    tpu.vector_store %arg9[%c0_2, %c0_3], %1 {strides = array<i32>} : memref<160x256xbf16, #tpu.memory_space<vmem>>, vector<16x256xbf16>,
    %c0_4 = arith.constant 0 : index
    %c0_5 = arith.constant 0 : index
    %c0_6 = arith.constant 0 : index
    %3 = vector.load %arg2[%c0_4, %c0_5, %c0_6] : memref<1x128x256xbf16, #tpu.memory_space<vmem>>, vector<1x128x256xbf16>
    %4 = vector.shape_cast %3 : vector<1x128x256xbf16> to vector<128x256xbf16>
    %c16 = arith.constant 16 : index
    %c0_7 = arith.constant 0 : index
    %5 = vector.load %arg9[%c16, %c0_7] : memref<160x256xbf16, #tpu.memory_space<vmem>>, vector<128x256xbf16>
    tpu.vector_store %arg9[%c16, %c0_7], %4 {strides = array<i32>} : memref<160x256xbf16, #tpu.memory_space<vmem>>, vector<128x256xbf16>,
    %c0_8 = arith.constant 0 : index
    %c0_9 = arith.constant 0 : index
    %c0_10 = arith.constant 0 : index
    %6 = vector.load %arg4[%c0_8, %c0_9, %c0_10] : memref<1x16x256xbf16, #tpu.memory_space<vmem>>, vector<1x16x256xbf16>
    %7 = vector.shape_cast %6 : vector<1x16x256xbf16> to vector<16x256xbf16>
    %c144 = arith.constant 144 : index
    %c0_11 = arith.constant 0 : index
    %8 = vector.load %arg9[%c144, %c0_11] : memref<160x256xbf16, #tpu.memory_space<vmem>>, vector<16x256xbf16>
    tpu.vector_store %arg9[%c144, %c0_11], %7 {strides = array<i32>} : memref<160x256xbf16, #tpu.memory_space<vmem>>, vector<16x256xbf16>,
    %c0_i32 = arith.constant 0 : i32
    %9 = arith.cmpi eq, %arg1, %c0_i32 : i32
    %10 = arith.extui %9 : i1 to i32
    %c0_i32_12 = arith.constant 0 : i32
    %11 = arith.cmpi ne, %10, %c0_i32_12 : i32
    scf.if %11 {
      %cst_44 = arith.constant 0.000000e+00 : bf16
      %54 = vector.broadcast %cst_44 : bf16 to vector<16x256xbf16>
      %c0_45 = arith.constant 0 : index
      %c0_46 = arith.constant 0 : index
      %55 = vector.load %arg9[%c0_45, %c0_46] : memref<160x256xbf16, #tpu.memory_space<vmem>>, vector<16x256xbf16>
      tpu.vector_store %arg9[%c0_45, %c0_46], %54 {strides = array<i32>} : memref<160x256xbf16, #tpu.memory_space<vmem>>, vector<16x256xbf16>,
    } else {
    }
    %c1_i32 = arith.constant 1 : i32
    %12 = arith.addi %arg1, %c1_i32 : i32
    %c128_i32 = arith.constant 128 : i32
    %13 = arith.muli %12, %c128_i32 : i32
    %c16_i32 = arith.constant 16 : i32
    %14 = arith.addi %13, %c16_i32 : i32
    %c128_i32_13 = arith.constant 128 : i32
    %15 = arith.cmpi sgt, %14, %c128_i32_13 : i32
    %16 = arith.extui %15 : i1 to i32
    %c0_i32_14 = arith.constant 0 : i32
    %17 = arith.cmpi ne, %16, %c0_i32_14 : i32
    scf.if %17 {
      %54 = tpu.iota {dimensions = array<i32: 0>} : vector<160x1xi32>
      %c128_i32_44 = arith.constant 128 : i32
      %55 = arith.muli %arg1, %c128_i32_44 : i32
      %c16_i32_45 = arith.constant 16 : i32
      %56 = arith.subi %55, %c16_i32_45 : i32
      %57 = vector.broadcast %56 : i32 to vector<160x1xi32>
      %58 = arith.addi %57, %54 : vector<160x1xi32>
      %c128_i32_46 = arith.constant 128 : i32
      %59 = vector.broadcast %c128_i32_46 : i32 to vector<160x1xi32>
      %60 = arith.cmpi sge, %58, %59 : vector<160x1xi32>
      %cst_47 = arith.constant 0.000000e+00 : bf16
      %61 = vector.broadcast %cst_47 : bf16 to vector<160x256xbf16>
      %c0_48 = arith.constant 0 : index
      %c0_49 = arith.constant 0 : index
      %62 = vector.load %arg9[%c0_48, %c0_49] : memref<160x256xbf16, #tpu.memory_space<vmem>>, vector<160x256xbf16>
      %63 = vector.shape_cast %60 : vector<160x1xi1> to vector<160x1xi1>
      %64 = vector.broadcast %63 : vector<160x1xi1> to vector<160x256xi1>
      %65 = arith.select %64, %61, %62 : vector<160x256xi1>, vector<160x256xbf16>
      %c0_50 = arith.constant 0 : index
      %c0_51 = arith.constant 0 : index
      %66 = vector.load %arg9[%c0_50, %c0_51] : memref<160x256xbf16, #tpu.memory_space<vmem>>, vector<160x256xbf16>
      tpu.vector_store %arg9[%c0_50, %c0_51], %65 {strides = array<i32>} : memref<160x256xbf16, #tpu.memory_space<vmem>>, vector<160x256xbf16>,
    } else {
    }
    %c14 = arith.constant 14 : index
    %c0_15 = arith.constant 0 : index
    %18 = vector.load %arg9[%c14, %c0_15] : memref<160x256xbf16, #tpu.memory_space<vmem>>, vector<128x256xbf16>
    %c0_16 = arith.constant 0 : index
    %c0_17 = arith.constant 0 : index
    %c0_18 = arith.constant 0 : index
    %19 = vector.load %arg5[%c0_16, %c0_17, %c0_18] : memref<5x256x256xbf16, #tpu.memory_space<vmem>>, vector<1x256x256xbf16>
    %20 = vector.shape_cast %19 : vector<1x256x256xbf16> to vector<256x256xbf16>
    %cst = arith.constant dense<0.000000e+00> : vector<128x256xf32>
    %21 = tpu.matmul %18, %20, %cst {dimension_numbers = #tpu.dot_dimension_numbers<[1], [0], [0], [1], [0, 0, 1, 1], [], []>} : vector<128x256xbf16>, vector<256x256xbf16>, vector<128x256xf32> -> vector<128x256xf32>
    %c15 = arith.constant 15 : index
    %c0_19 = arith.constant 0 : index
    %22 = vector.load %arg9[%c15, %c0_19] : memref<160x256xbf16, #tpu.memory_space<vmem>>, vector<128x256xbf16>
    %c1 = arith.constant 1 : index
    %c0_20 = arith.constant 0 : index
    %c0_21 = arith.constant 0 : index
    %23 = vector.load %arg5[%c1, %c0_20, %c0_21] : memref<5x256x256xbf16, #tpu.memory_space<vmem>>, vector<1x256x256xbf16>
    %24 = vector.shape_cast %23 : vector<1x256x256xbf16> to vector<256x256xbf16>
    %cst_22 = arith.constant dense<0.000000e+00> : vector<128x256xf32>
    %25 = tpu.matmul %22, %24, %cst_22 {dimension_numbers = #tpu.dot_dimension_numbers<[1], [0], [0], [1], [0, 0, 1, 1], [], []>} : vector<128x256xbf16>, vector<256x256xbf16>, vector<128x256xf32> -> vector<128x256xf32>
    %26 = arith.addf %21, %25 : vector<128x256xf32>
    %c16_23 = arith.constant 16 : index
    %c0_24 = arith.constant 0 : index
    %27 = vector.load %arg9[%c16_23, %c0_24] : memref<160x256xbf16, #tpu.memory_space<vmem>>, vector<128x256xbf16>
    %c2 = arith.constant 2 : index
    %c0_25 = arith.constant 0 : index
    %c0_26 = arith.constant 0 : index
    %28 = vector.load %arg5[%c2, %c0_25, %c0_26] : memref<5x256x256xbf16, #tpu.memory_space<vmem>>, vector<1x256x256xbf16>
    %29 = vector.shape_cast %28 : vector<1x256x256xbf16> to vector<256x256xbf16>
    %cst_27 = arith.constant dense<0.000000e+00> : vector<128x256xf32>
    %30 = tpu.matmul %27, %29, %cst_27 {dimension_numbers = #tpu.dot_dimension_numbers<[1], [0], [0], [1], [0, 0, 1, 1], [], []>} : vector<128x256xbf16>, vector<256x256xbf16>, vector<128x256xf32> -> vector<128x256xf32>
    %31 = arith.addf %26, %30 : vector<128x256xf32>
    %c17 = arith.constant 17 : index
    %c0_28 = arith.constant 0 : index
    %32 = vector.load %arg9[%c17, %c0_28] : memref<160x256xbf16, #tpu.memory_space<vmem>>, vector<128x256xbf16>
    %c3 = arith.constant 3 : index
    %c0_29 = arith.constant 0 : index
    %c0_30 = arith.constant 0 : index
    %33 = vector.load %arg5[%c3, %c0_29, %c0_30] : memref<5x256x256xbf16, #tpu.memory_space<vmem>>, vector<1x256x256xbf16>
    %34 = vector.shape_cast %33 : vector<1x256x256xbf16> to vector<256x256xbf16>
    %cst_31 = arith.constant dense<0.000000e+00> : vector<128x256xf32>
    %35 = tpu.matmul %32, %34, %cst_31 {dimension_numbers = #tpu.dot_dimension_numbers<[1], [0], [0], [1], [0, 0, 1, 1], [], []>} : vector<128x256xbf16>, vector<256x256xbf16>, vector<128x256xf32> -> vector<128x256xf32>
    %36 = arith.addf %31, %35 : vector<128x256xf32>
    %c18 = arith.constant 18 : index
    %c0_32 = arith.constant 0 : index
    %37 = vector.load %arg9[%c18, %c0_32] : memref<160x256xbf16, #tpu.memory_space<vmem>>, vector<128x256xbf16>
    %c4 = arith.constant 4 : index
    %c0_33 = arith.constant 0 : index
    %c0_34 = arith.constant 0 : index
    %38 = vector.load %arg5[%c4, %c0_33, %c0_34] : memref<5x256x256xbf16, #tpu.memory_space<vmem>>, vector<1x256x256xbf16>
    %39 = vector.shape_cast %38 : vector<1x256x256xbf16> to vector<256x256xbf16>
    %cst_35 = arith.constant dense<0.000000e+00> : vector<128x256xf32>
    %40 = tpu.matmul %37, %39, %cst_35 {dimension_numbers = #tpu.dot_dimension_numbers<[1], [0], [0], [1], [0, 0, 1, 1], [], []>} : vector<128x256xbf16>, vector<256x256xbf16>, vector<128x256xf32> -> vector<128x256xf32>
    %41 = arith.addf %36, %40 : vector<128x256xf32>
    %c0_36 = arith.constant 0 : index
    %c0_37 = arith.constant 0 : index
    %42 = vector.load %arg6[%c0_36, %c0_37] : memref<1x256xf32, #tpu.memory_space<vmem>>, vector<1x256xf32>
    %43 = vector.broadcast %42 : vector<1x256xf32> to vector<128x256xf32>
    %44 = arith.mulf %41, %43 : vector<128x256xf32>
    %c0_38 = arith.constant 0 : index
    %c0_39 = arith.constant 0 : index
    %45 = vector.load %arg7[%c0_38, %c0_39] : memref<1x256xf32, #tpu.memory_space<vmem>>, vector<1x256xf32>
    %46 = vector.broadcast %45 : vector<1x256xf32> to vector<128x256xf32>
    %47 = arith.addf %44, %46 : vector<128x256xf32>
    %cst_40 = arith.constant 0.000000e+00 : f32
    %48 = vector.broadcast %cst_40 : f32 to vector<128x256xf32>
    %49 = arith.maximumf %47, %48 : vector<128x256xf32>
    %50 = arith.truncf %49 : vector<128x256xf32> to vector<128x256xbf16>
    %c0_41 = arith.constant 0 : index
    %c0_42 = arith.constant 0 : index
    %c0_43 = arith.constant 0 : index
    %51 = vector.load %arg8[%c0_41, %c0_42, %c0_43] : memref<1x128x256xbf16, #tpu.memory_space<vmem>>, vector<1x128x256xbf16>
    %52 = vector.shape_cast %51 : vector<1x128x256xbf16> to vector<128x256xbf16>
    %53 = vector.shape_cast %50 : vector<128x256xbf16> to vector<1x128x256xbf16>
    tpu.vector_store %arg8[%c0_41, %c0_42, %c0_43], %53 {strides = array<i32>} : memref<1x128x256xbf16, #tpu.memory_space<vmem>>, vector<1x128x256xbf16>,
    return
  }
  func.func @transform_0(%arg0: i32, %arg1: i32) -> (i32, i32, i32) {
    %c0_i32 = arith.constant 0 : i32
    %c0_i32_0 = arith.constant 0 : i32
    return %arg0, %arg1, %c0_i32 : i32, i32, i32
  }
  func.func @transform_1(%arg0: i32, %arg1: i32) -> (i32, i32, i32) {
    %c8_i32 = arith.constant 8 : i32
    %0 = arith.muli %arg1, %c8_i32 : i32
    %c1_i32 = arith.constant 1 : i32
    %1 = arith.subi %0, %c1_i32 : i32
    %c0_i32 = arith.constant 0 : i32
    %2 = arith.maxsi %1, %c0_i32 : i32
    %c0_i32_0 = arith.constant 0 : i32
    %c0_i32_1 = arith.constant 0 : i32
    return %arg0, %2, %c0_i32_0 : i32, i32, i32
  }
  func.func @transform_2(%arg0: i32, %arg1: i32) -> (i32, i32, i32) {
    %c1_i32 = arith.constant 1 : i32
    %0 = arith.addi %arg1, %c1_i32 : i32
    %c8_i32 = arith.constant 8 : i32
    %1 = arith.muli %0, %c8_i32 : i32
    %c7_i32 = arith.constant 7 : i32
    %2 = arith.minsi %1, %c7_i32 : i32
    %c0_i32 = arith.constant 0 : i32
    %c0_i32_0 = arith.constant 0 : i32
    return %arg0, %2, %c0_i32 : i32, i32, i32
  }
  func.func @transform_3(%arg0: i32, %arg1: i32) -> (i32, i32, i32) {
    %c0_i32 = arith.constant 0 : i32
    %c0_i32_0 = arith.constant 0 : i32
    %c0_i32_1 = arith.constant 0 : i32
    %c0_i32_2 = arith.constant 0 : i32
    return %c0_i32, %c0_i32_0, %c0_i32_1 : i32, i32, i32
  }
  func.func @transform_4(%arg0: i32, %arg1: i32) -> (i32, i32) {
    %c0_i32 = arith.constant 0 : i32
    %c0_i32_0 = arith.constant 0 : i32
    %c0_i32_1 = arith.constant 0 : i32
    return %c0_i32, %c0_i32_0 : i32, i32
  }
  func.func @transform_5(%arg0: i32, %arg1: i32) -> (i32, i32) {
    %c0_i32 = arith.constant 0 : i32
    %c0_i32_0 = arith.constant 0 : i32
    %c0_i32_1 = arith.constant 0 : i32
    return %c0_i32, %c0_i32_0 : i32, i32
  }
  func.func @transform_6(%arg0: i32, %arg1: i32) -> (i32, i32, i32) {
    %c0_i32 = arith.constant 0 : i32
    %c0_i32_0 = arith.constant 0 : i32
    return %arg0, %arg1, %c0_i32 : i32, i32, i32
  }
}

module attributes {stable_mosaic.version = 11 : i64} {
  func.func @kernel(%arg0: i32, %arg1: i32, %arg2: memref<1x256x128xbf16, #tpu.memory_space<vmem>>, %arg3: memref<1x16x128xbf16, #tpu.memory_space<vmem>>, %arg4: memref<1x16x128xbf16, #tpu.memory_space<vmem>>, %arg5: memref<128x16xbf16, #tpu.memory_space<vmem>>, %arg6: memref<1x1xf32, #tpu.memory_space<vmem>>, %arg7: memref<1x256x1xf32, #tpu.memory_space<vmem>>, %arg8: memref<288x128xbf16, #tpu.memory_space<vmem>>) attributes {dimension_semantics = [#tpu.dimension_semantics<parallel>, #tpu.dimension_semantics<parallel>], iteration_bounds = array<i64: 2, 1>, scalar_prefetch = 0 : i64, scratch_operands = 1 : i64, tpu.core_type = #tpu.core_type<tc>, window_params = [{transform_indices = @transform_0, window_bounds = array<i64: 1, 256, 128>}, {transform_indices = @transform_1, window_bounds = array<i64: 1, 16, 128>}, {transform_indices = @transform_2, window_bounds = array<i64: 1, 16, 128>}, {pipeline_mode = #tpu.pipeline_mode<synchronous>, transform_indices = @transform_3, window_bounds = array<i64: 128, 16>}, {pipeline_mode = #tpu.pipeline_mode<synchronous>, transform_indices = @transform_4, window_bounds = array<i64: 1, 1>}, {transform_indices = @transform_5, window_bounds = array<i64: 1, 256, 1>}]} {
    %c0 = arith.constant 0 : index
    %c0_0 = arith.constant 0 : index
    %c0_1 = arith.constant 0 : index
    %0 = vector.load %arg3[%c0, %c0_0, %c0_1] : memref<1x16x128xbf16, #tpu.memory_space<vmem>>, vector<1x16x128xbf16>
    %1 = vector.shape_cast %0 : vector<1x16x128xbf16> to vector<16x128xbf16>
    %c0_2 = arith.constant 0 : index
    %c0_3 = arith.constant 0 : index
    %2 = vector.load %arg8[%c0_2, %c0_3] : memref<288x128xbf16, #tpu.memory_space<vmem>>, vector<16x128xbf16>
    tpu.vector_store %arg8[%c0_2, %c0_3], %1 {strides = array<i32>} : memref<288x128xbf16, #tpu.memory_space<vmem>>, vector<16x128xbf16>,
    %c0_4 = arith.constant 0 : index
    %c0_5 = arith.constant 0 : index
    %c0_6 = arith.constant 0 : index
    %3 = vector.load %arg2[%c0_4, %c0_5, %c0_6] : memref<1x256x128xbf16, #tpu.memory_space<vmem>>, vector<1x256x128xbf16>
    %4 = vector.shape_cast %3 : vector<1x256x128xbf16> to vector<256x128xbf16>
    %c16 = arith.constant 16 : index
    %c0_7 = arith.constant 0 : index
    %5 = vector.load %arg8[%c16, %c0_7] : memref<288x128xbf16, #tpu.memory_space<vmem>>, vector<256x128xbf16>
    tpu.vector_store %arg8[%c16, %c0_7], %4 {strides = array<i32>} : memref<288x128xbf16, #tpu.memory_space<vmem>>, vector<256x128xbf16>,
    %c0_8 = arith.constant 0 : index
    %c0_9 = arith.constant 0 : index
    %c0_10 = arith.constant 0 : index
    %6 = vector.load %arg4[%c0_8, %c0_9, %c0_10] : memref<1x16x128xbf16, #tpu.memory_space<vmem>>, vector<1x16x128xbf16>
    %7 = vector.shape_cast %6 : vector<1x16x128xbf16> to vector<16x128xbf16>
    %c272 = arith.constant 272 : index
    %c0_11 = arith.constant 0 : index
    %8 = vector.load %arg8[%c272, %c0_11] : memref<288x128xbf16, #tpu.memory_space<vmem>>, vector<16x128xbf16>
    tpu.vector_store %arg8[%c272, %c0_11], %7 {strides = array<i32>} : memref<288x128xbf16, #tpu.memory_space<vmem>>, vector<16x128xbf16>,
    %c0_i32 = arith.constant 0 : i32
    %9 = arith.cmpi eq, %arg1, %c0_i32 : i32
    %10 = arith.extui %9 : i1 to i32
    %c0_i32_12 = arith.constant 0 : i32
    %11 = arith.cmpi ne, %10, %c0_i32_12 : i32
    scf.if %11 {
      %cst_24 = arith.constant 0.000000e+00 : bf16
      %44 = vector.broadcast %cst_24 : bf16 to vector<16x128xbf16>
      %c0_25 = arith.constant 0 : index
      %c0_26 = arith.constant 0 : index
      %45 = vector.load %arg8[%c0_25, %c0_26] : memref<288x128xbf16, #tpu.memory_space<vmem>>, vector<16x128xbf16>
      tpu.vector_store %arg8[%c0_25, %c0_26], %44 {strides = array<i32>} : memref<288x128xbf16, #tpu.memory_space<vmem>>, vector<16x128xbf16>,
    } else {
    }
    %c1_i32 = arith.constant 1 : i32
    %12 = arith.addi %arg1, %c1_i32 : i32
    %c256_i32 = arith.constant 256 : i32
    %13 = arith.muli %12, %c256_i32 : i32
    %c16_i32 = arith.constant 16 : i32
    %14 = arith.addi %13, %c16_i32 : i32
    %c256_i32_13 = arith.constant 256 : i32
    %15 = arith.cmpi sgt, %14, %c256_i32_13 : i32
    %16 = arith.extui %15 : i1 to i32
    %c0_i32_14 = arith.constant 0 : i32
    %17 = arith.cmpi ne, %16, %c0_i32_14 : i32
    scf.if %17 {
      %44 = tpu.iota {dimensions = array<i32: 0>} : vector<288x1xi32>
      %c256_i32_24 = arith.constant 256 : i32
      %45 = arith.muli %arg1, %c256_i32_24 : i32
      %c16_i32_25 = arith.constant 16 : i32
      %46 = arith.subi %45, %c16_i32_25 : i32
      %47 = vector.broadcast %46 : i32 to vector<288x1xi32>
      %48 = arith.addi %47, %44 : vector<288x1xi32>
      %c256_i32_26 = arith.constant 256 : i32
      %49 = vector.broadcast %c256_i32_26 : i32 to vector<288x1xi32>
      %50 = arith.cmpi sge, %48, %49 : vector<288x1xi32>
      %cst_27 = arith.constant 0.000000e+00 : bf16
      %51 = vector.broadcast %cst_27 : bf16 to vector<288x128xbf16>
      %c0_28 = arith.constant 0 : index
      %c0_29 = arith.constant 0 : index
      %52 = vector.load %arg8[%c0_28, %c0_29] : memref<288x128xbf16, #tpu.memory_space<vmem>>, vector<288x128xbf16>
      %53 = vector.shape_cast %50 : vector<288x1xi1> to vector<288x1xi1>
      %54 = vector.broadcast %53 : vector<288x1xi1> to vector<288x128xi1>
      %55 = arith.select %54, %51, %52 : vector<288x128xi1>, vector<288x128xbf16>
      %c0_30 = arith.constant 0 : index
      %c0_31 = arith.constant 0 : index
      %56 = vector.load %arg8[%c0_30, %c0_31] : memref<288x128xbf16, #tpu.memory_space<vmem>>, vector<288x128xbf16>
      tpu.vector_store %arg8[%c0_30, %c0_31], %55 {strides = array<i32>} : memref<288x128xbf16, #tpu.memory_space<vmem>>, vector<288x128xbf16>,
    } else {
    }
    %c0_15 = arith.constant 0 : index
    %c0_16 = arith.constant 0 : index
    %18 = vector.load %arg8[%c0_15, %c0_16] : memref<288x128xbf16, #tpu.memory_space<vmem>>, vector<288x128xbf16>
    %c0_17 = arith.constant 0 : index
    %c0_18 = arith.constant 0 : index
    %19 = vector.load %arg5[%c0_17, %c0_18] : memref<128x16xbf16, #tpu.memory_space<vmem>>, vector<128x16xbf16>
    %cst = arith.constant dense<0.000000e+00> : vector<288x16xf32>
    %20 = tpu.matmul %18, %19, %cst {dimension_numbers = #tpu.dot_dimension_numbers<[1], [0], [0], [1], [0, 0, 1, 1], [], []>} : vector<288x128xbf16>, vector<128x16xbf16>, vector<288x16xf32> -> vector<288x16xf32>
    %21 = vector.extract_strided_slice %20 {offsets = [12, 0], sizes = [256, 1], strides = [1, 1]} : vector<288x16xf32> to vector<256x1xf32>
    %22 = vector.extract_strided_slice %20 {offsets = [13, 1], sizes = [256, 1], strides = [1, 1]} : vector<288x16xf32> to vector<256x1xf32>
    %23 = arith.addf %21, %22 : vector<256x1xf32>
    %24 = vector.extract_strided_slice %20 {offsets = [14, 2], sizes = [256, 1], strides = [1, 1]} : vector<288x16xf32> to vector<256x1xf32>
    %25 = arith.addf %23, %24 : vector<256x1xf32>
    %26 = vector.extract_strided_slice %20 {offsets = [15, 3], sizes = [256, 1], strides = [1, 1]} : vector<288x16xf32> to vector<256x1xf32>
    %27 = arith.addf %25, %26 : vector<256x1xf32>
    %28 = vector.extract_strided_slice %20 {offsets = [16, 4], sizes = [256, 1], strides = [1, 1]} : vector<288x16xf32> to vector<256x1xf32>
    %29 = arith.addf %27, %28 : vector<256x1xf32>
    %30 = vector.extract_strided_slice %20 {offsets = [17, 5], sizes = [256, 1], strides = [1, 1]} : vector<288x16xf32> to vector<256x1xf32>
    %31 = arith.addf %29, %30 : vector<256x1xf32>
    %32 = vector.extract_strided_slice %20 {offsets = [18, 6], sizes = [256, 1], strides = [1, 1]} : vector<288x16xf32> to vector<256x1xf32>
    %33 = arith.addf %31, %32 : vector<256x1xf32>
    %34 = vector.extract_strided_slice %20 {offsets = [19, 7], sizes = [256, 1], strides = [1, 1]} : vector<288x16xf32> to vector<256x1xf32>
    %35 = arith.addf %33, %34 : vector<256x1xf32>
    %36 = vector.extract_strided_slice %20 {offsets = [20, 8], sizes = [256, 1], strides = [1, 1]} : vector<288x16xf32> to vector<256x1xf32>
    %37 = arith.addf %35, %36 : vector<256x1xf32>
    %c0_19 = arith.constant 0 : index
    %c0_20 = arith.constant 0 : index
    %38 = vector.load %arg6[%c0_19, %c0_20] : memref<1x1xf32, #tpu.memory_space<vmem>>, vector<1x1xf32>
    %39 = vector.broadcast %38 : vector<1x1xf32> to vector<256x1xf32>
    %40 = arith.addf %37, %39 : vector<256x1xf32>
    %c0_21 = arith.constant 0 : index
    %c0_22 = arith.constant 0 : index
    %c0_23 = arith.constant 0 : index
    %41 = vector.load %arg7[%c0_21, %c0_22, %c0_23] : memref<1x256x1xf32, #tpu.memory_space<vmem>>, vector<1x256x1xf32>
    %42 = vector.shape_cast %41 : vector<1x256x1xf32> to vector<256x1xf32>
    %43 = vector.shape_cast %40 : vector<256x1xf32> to vector<1x256x1xf32>
    tpu.vector_store %arg7[%c0_21, %c0_22, %c0_23], %43 {strides = array<i32>} : memref<1x256x1xf32, #tpu.memory_space<vmem>>, vector<1x256x1xf32>,
    return
  }
  func.func @transform_0(%arg0: i32, %arg1: i32) -> (i32, i32, i32) {
    %c0_i32 = arith.constant 0 : i32
    %c0_i32_0 = arith.constant 0 : i32
    return %arg0, %arg1, %c0_i32 : i32, i32, i32
  }
  func.func @transform_1(%arg0: i32, %arg1: i32) -> (i32, i32, i32) {
    %c16_i32 = arith.constant 16 : i32
    %0 = arith.muli %arg1, %c16_i32 : i32
    %c1_i32 = arith.constant 1 : i32
    %1 = arith.subi %0, %c1_i32 : i32
    %c0_i32 = arith.constant 0 : i32
    %2 = arith.maxsi %1, %c0_i32 : i32
    %c0_i32_0 = arith.constant 0 : i32
    %c0_i32_1 = arith.constant 0 : i32
    return %arg0, %2, %c0_i32_0 : i32, i32, i32
  }
  func.func @transform_2(%arg0: i32, %arg1: i32) -> (i32, i32, i32) {
    %c1_i32 = arith.constant 1 : i32
    %0 = arith.addi %arg1, %c1_i32 : i32
    %c16_i32 = arith.constant 16 : i32
    %1 = arith.muli %0, %c16_i32 : i32
    %c15_i32 = arith.constant 15 : i32
    %2 = arith.minsi %1, %c15_i32 : i32
    %c0_i32 = arith.constant 0 : i32
    %c0_i32_0 = arith.constant 0 : i32
    return %arg0, %2, %c0_i32 : i32, i32, i32
  }
  func.func @transform_3(%arg0: i32, %arg1: i32) -> (i32, i32) {
    %c0_i32 = arith.constant 0 : i32
    %c0_i32_0 = arith.constant 0 : i32
    %c0_i32_1 = arith.constant 0 : i32
    return %c0_i32, %c0_i32_0 : i32, i32
  }
  func.func @transform_4(%arg0: i32, %arg1: i32) -> (i32, i32) {
    %c0_i32 = arith.constant 0 : i32
    %c0_i32_0 = arith.constant 0 : i32
    %c0_i32_1 = arith.constant 0 : i32
    return %c0_i32, %c0_i32_0 : i32, i32
  }
  func.func @transform_5(%arg0: i32, %arg1: i32) -> (i32, i32, i32) {
    %c0_i32 = arith.constant 0 : i32
    %c0_i32_0 = arith.constant 0 : i32
    return %arg0, %arg1, %c0_i32 : i32, i32, i32
  }
}

</mosaic_0001>

<llo_original>
// kernel: audio_enhancement_pallas.4
$region0: #{audio_enhancement_pallas.4}
  #allocation0 [shape = 'u32[]', space=smem, size = 0x4, offset = 0x4, fixed_abs, tag = 'smem constant byte address 0x4 - core index']
  #allocation1 [shape = 'u32[144,128]{1,0:T(1,128)}', space=vmem, size = 0x12000, scoped, tag = 'internal scratch']
  %s0 = inlined_call_operand.vmem [shape: bf16[2,256,16], index: 0, kind: input, shape index: {}]
  %s1 = inlined_call_operand.vmem [shape: bf16[16,128], index: 1, kind: input, shape index: {}]
  %s2 = inlined_call_operand.vmem [shape: f32[1,128], index: 2, kind: input, shape index: {}]
  %s3 = inlined_call_operand.vmem [shape: f32[1,128], index: 3, kind: input, shape index: {}]
  %s4 = inlined_call_operand.vmem [shape: bf16[2,256,128], index: 4, kind: output, shape index: {}]
  %s5 = sld [smem:[#allocation0]]
  $region49: #{audio_enhancement_pallas.4} parent=0
    _
  %s7 = ssub.s32 1, %s5
  %s8 = scalar_select 0, %s7, %s5
  loop: start=0, step=1, limit=4
  $region2: #{audio_enhancement_pallas.4} parent=0 // loop_pre_header
    _
  $region3: #{audio_enhancement_pallas.4} parent=0 // loop_header
    %s10 = sphi 0, %s14
    %p11 = scmp.ge.s32.totalorder %s10, 4
    %s17 = sphi 0, %s29
    %s18 = sphi 0, %s25
    %s19 = sphi 0, %s17
    %s20 = sphi 0, %s18
    %s21 = sphi 0, %s19
    %s22 = sphi 0, %s20
    %s34 = sphi 0, %s36
    %s37 = sphi 0, %s34
    %s38 = sphi 0, %s37
    %s54 = sphi 0, %s38
    %s58 = sphi 0, %s58
    %s60 = sphi 0, %s58
    %s61 = sphi 0, %s60
    %s75 = sphi 0, %s61
    %s79 = sphi 0, %s79
    %s81 = sphi 0, %s79
    %s82 = sphi 0, %s81
    %s96 = sphi 0, %s82
    %s100 = sphi 0, %s100
    %s102 = sphi 0, %s100
    %s103 = sphi 0, %s102
    %s117 = sphi 0, %s103
    %s125 = sphi 0, %s127
    %s128 = sphi 0, %s125
    %s129 = sphi 0, %s128
    %s145 = sphi 0, %s129
  $region4: #{audio_enhancement_pallas.4} parent=0 // loop_header_branch
    %13 = sbr.rel (%p11) target = $region8
  $region5: #{audio_enhancement_pallas.4} parent=0 // loop_body
    %s15 = ssub.s32 %s10, 1
    %s16 = ssub.s32 %s10, 2
    %s23 = sadd.s32 1, %s18
    %p24 = scmp.ge.s32.totalorder %s23, 1
    %s25 = scalar_select %p24, 0, %s23
    %s26 = sadd.s32 1, %s17
    %s27 = scalar_select %p24, %s26, %s17
    %p28 = scmp.ge.s32.totalorder %s27, 2
    %s29 = scalar_select %p28, 0, %s27
    %s30 = ssub.s32 %s17, %s29
    %s31 = ssub.s32 %s18, %s25
    %s32 = sor.u32 %s30, %s31
    %p33 = scmp.eq.s32.totalorder %s32, 0
    %s35 = sadd.s32 %s34, 1
    %s36 = scalar_select %p33, %s34, %s35
    %p39 = pneg %p33
    %p40 = scmp.eq.s32.totalorder %s10, 1
    %p41 = por %p39, %p40
    %p42 = scmp.ne.s32.totalorder %s34, %s37
    %p43 = scmp.eq.s32.totalorder %s10, 0
    %p44 = por %p42, %p43
    %p45 = scmp.ne.s32.totalorder %s34, %s37
    %p46 = scmp.eq.s32.totalorder %s15, 1
    %p47 = por %p45, %p46
    %p48 = scmp.ne.s32.totalorder %s37, %s38
    %p49 = scmp.eq.s32.totalorder %s15, 0
    %p50 = por %p48, %p49
    %p51 = scmp.ne.s32.totalorder %s37, %s38
    %p52 = scmp.eq.s32.totalorder %s16, 1
    %p53 = por %p51, %p52
    %p55 = scmp.ne.s32.totalorder %s38, %s54
    %p56 = scmp.eq.s32.totalorder %s16, 0
    %p57 = por %p55, %p56
    %s59 = sadd.s32 %s58, 1
    %p62 = scmp.eq.s32.totalorder %s10, 1
    %p63 = scmp.ne.s32.totalorder %s58, %s60
    %p64 = scmp.eq.s32.totalorder %s10, 0
    %p65 = por %p63, %p64
    %p66 = scmp.ne.s32.totalorder %s58, %s60
    %p67 = scmp.eq.s32.totalorder %s15, 1
    %p68 = por %p66, %p67
    %p69 = scmp.ne.s32.totalorder %s60, %s61
    %p70 = scmp.eq.s32.totalorder %s15, 0
    %p71 = por %p69, %p70
    %p72 = scmp.ne.s32.totalorder %s60, %s61
    %p73 = scmp.eq.s32.totalorder %s16, 1
    %p74 = por %p72, %p73
    %p76 = scmp.ne.s32.totalorder %s61, %s75
    %p77 = scmp.eq.s32.totalorder %s16, 0
    %p78 = por %p76, %p77
    %s80 = sadd.s32 %s79, 1
    %p83 = scmp.eq.s32.totalorder %s10, 1
    %p84 = scmp.ne.s32.totalorder %s79, %s81
    %p85 = scmp.eq.s32.totalorder %s10, 0
    %p86 = por %p84, %p85
    %p87 = scmp.ne.s32.totalorder %s79, %s81
    %p88 = scmp.eq.s32.totalorder %s15, 1
    %p89 = por %p87, %p88
    %p90 = scmp.ne.s32.totalorder %s81, %s82
    %p91 = scmp.eq.s32.totalorder %s15, 0
    %p92 = por %p90, %p91
    %p93 = scmp.ne.s32.totalorder %s81, %s82
    %p94 = scmp.eq.s32.totalorder %s16, 1
    %p95 = por %p93, %p94
    %p97 = scmp.ne.s32.totalorder %s82, %s96
    %p98 = scmp.eq.s32.totalorder %s16, 0
    %p99 = por %p97, %p98
    %s101 = sadd.s32 %s100, 1
    %p104 = scmp.eq.s32.totalorder %s10, 1
    %p105 = scmp.ne.s32.totalorder %s100, %s102
    %p106 = scmp.eq.s32.totalorder %s10, 0
    %p107 = por %p105, %p106
    %p108 = scmp.ne.s32.totalorder %s100, %s102
    %p109 = scmp.eq.s32.totalorder %s15, 1
    %p110 = por %p108, %p109
    %p111 = scmp.ne.s32.totalorder %s102, %s103
    %p112 = scmp.eq.s32.totalorder %s15, 0
    %p113 = por %p111, %p112
    %p114 = scmp.ne.s32.totalorder %s102, %s103
    %p115 = scmp.eq.s32.totalorder %s16, 1
    %p116 = por %p114, %p115
    %p118 = scmp.ne.s32.totalorder %s103, %s117
    %p119 = scmp.eq.s32.totalorder %s16, 0
    %p120 = por %p118, %p119
    %s121 = ssub.s32 %s17, %s29
    %s122 = ssub.s32 %s18, %s25
    %s123 = sor.u32 %s121, %s122
    %p124 = scmp.eq.s32.totalorder %s123, 0
    %s126 = sadd.s32 %s125, 1
    %s127 = scalar_select %p124, %s125, %s126
    %p130 = pneg %p124
    %p131 = scmp.eq.s32.totalorder %s10, 1
    %p132 = por %p130, %p131
    %p133 = scmp.ne.s32.totalorder %s125, %s128
    %p134 = scmp.eq.s32.totalorder %s10, 0
    %p135 = por %p133, %p134
    %p136 = scmp.ne.s32.totalorder %s125, %s128
    %p137 = scmp.eq.s32.totalorder %s15, 1
    %p138 = por %p136, %p137
    %p139 = scmp.ne.s32.totalorder %s128, %s129
    %p140 = scmp.eq.s32.totalorder %s15, 0
    %p141 = por %p139, %p140
    %p142 = scmp.ne.s32.totalorder %s128, %s129
    %p143 = scmp.eq.s32.totalorder %s16, 1
    %p144 = por %p142, %p143
    %p146 = scmp.ne.s32.totalorder %s129, %s145
    %p147 = scmp.eq.s32.totalorder %s16, 0
    %p148 = por %p146, %p147
    %p149 = scmp.le.s32.totalorder 1, %s10
    %p150 = scmp.lt.s32.totalorder %s10, 3
    %p151 = pnand %p149, %p150
    %p152 = pneg %p151
    // Predicated region
    $region9: #{audio_enhancement_pallas.4} parent=5 // pred_check
      _
    $region10: #{audio_enhancement_pallas.4} parent=5 // pred_check_branch
      %154 = sbr.rel (%p151) target = $region12
    $region11: #{audio_enhancement_pallas.4} parent=5 // pred_region
      %s155 = ssub.s32 %s10, 1
      // Predicated region
      $region13: #{audio_enhancement_pallas.4} parent=11 // pred_check
        %p156 = pneg %p71
      $region14: #{audio_enhancement_pallas.4} parent=11 // pred_check_branch
        %158 = sbr.rel (%p156) target = $region16
      $region15: #{audio_enhancement_pallas.4} parent=11 // pred_region
        _
      $region16: #{audio_enhancement_pallas.4} parent=11 // pred_fallthru
        _
      // Predicated region
      $region17: #{audio_enhancement_pallas.4} parent=11 // pred_check
        %p159 = pneg %p92
      $region18: #{audio_enhancement_pallas.4} parent=11 // pred_check_branch
        %161 = sbr.rel (%p159) target = $region20
      $region19: #{audio_enhancement_pallas.4} parent=11 // pred_region
        _
      $region20: #{audio_enhancement_pallas.4} parent=11 // pred_fallthru
        _
      // Predicated region
      $region21: #{audio_enhancement_pallas.4} parent=11 // pred_check
        %p162 = pneg %p113
      $region22: #{audio_enhancement_pallas.4} parent=11 // pred_check_branch
        %164 = sbr.rel (%p162) target = $region24
      $region23: #{audio_enhancement_pallas.4} parent=11 // pred_region
        _
      $region24: #{audio_enhancement_pallas.4} parent=11 // pred_fallthru
        _
    $region12: #{audio_enhancement_pallas.4} parent=5 // pred_fallthru
      _
    %p165 = scmp.lt.s32.totalorder %s10, 2
    // Predicated region
    $region25: #{audio_enhancement_pallas.4} parent=5 // pred_check
      %p166 = pneg %p165
    $region26: #{audio_enhancement_pallas.4} parent=5 // pred_check_branch
      %168 = sbr.rel (%p166) target = $region28
    $region27: #{audio_enhancement_pallas.4} parent=5 // pred_region
      // Predicated region
      $region29: #{audio_enhancement_pallas.4} parent=27 // pred_check
        %p169 = pneg %p44
      $region30: #{audio_enhancement_pallas.4} parent=27 // pred_check_branch
        %171 = sbr.rel (%p169) target = $region32
      $region31: #{audio_enhancement_pallas.4} parent=27 // pred_region
        %s172 = smul.u32 32, %s18
        %p173 = scmp.lt.s32.totalorder %s17, 1
        %s174 = scalar_select %p173, %s17, 1
        %p175 = scmp.lt.s32.totalorder %s172, 31
        %s176 = scalar_select %p175, %s172, 31
        %s177 = smul.addr %s174, 32
        %s178 = sadd.s32 %s176, %s177
        %s179 = smul.addr %s178, 4
        %s180 = scalar_lea.vmem %s0, %s179
        %s181 = smul.u32 32, %s18
      $region32: #{audio_enhancement_pallas.4} parent=27 // pred_fallthru
        _
    $region28: #{audio_enhancement_pallas.4} parent=5 // pred_fallthru
      _
    %p182 = scmp.le.s32.totalorder 1, %s10
    %p183 = scmp.lt.s32.totalorder %s10, 3
    %p184 = pnand %p182, %p183
    %p185 = pneg %p184
    // Predicated region
    $region33: #{audio_enhancement_pallas.4} parent=5 // pred_check
      _
    $region34: #{audio_enhancement_pallas.4} parent=5 // pred_check_branch
      %187 = sbr.rel (%p184) target = $region36
    $region35: #{audio_enhancement_pallas.4} parent=5 // pred_region
      %s188 = ssub.s32 %s10, 1
      %s189 = smul.u32 32, %s20
      %p190 = scmp.lt.s32.totalorder %s19, 1
      %s191 = scalar_select %p190, %s19, 1
      %p192 = scmp.lt.s32.totalorder %s189, 31
      %s193 = scalar_select %p192, %s189, 31
      %s194 = smul.addr %s191, 32
      %s195 = sadd.s32 %s193, %s194
      %s196 = smul.addr %s195, 4
      %s197 = scalar_lea.vmem %s0, %s196
      %p198 = pneg %p50
      %p199 = pneg %p47
      %p200 = pneg %p71
      %p201 = pneg %p68
      %p202 = pneg %p92
      %p203 = pneg %p89
      %p204 = pneg %p113
      %p205 = pneg %p110
      %p206 = pneg %p141
      %p207 = pneg %p138
      %s208 = smul.u32 32, %s20
      %p209 = scmp.lt.s32.totalorder %s19, 1
      %s210 = scalar_select %p209, %s19, 1
      %p211 = scmp.lt.s32.totalorder %s208, 31
      %s212 = scalar_select %p211, %s208, 31
      %s213 = smul.addr %s210, 32
      %s214 = sadd.s32 %s212, %s213
      %s215 = smul.addr %s214, 4
      %s216 = scalar_lea.vmem %s4, %s215
      %s217 = smul.u32 32, %s20
      %p218 = scmp.lt.s32.totalorder %s19, 1
      %s219 = scalar_select %p218, %s19, 1
      %p220 = scmp.lt.s32.totalorder %s217, 31
      %s221 = scalar_select %p220, %s217, 31
      %s222 = smul.addr %s219, 32
      %s223 = sadd.s32 %s221, %s222
      %s224 = smul.addr %s223, 4
      %s225 = scalar_lea.vmem %s0, %s224
      %s226 = smul.u32 32, %s20
      %s227 = smul.u32 32, %s20
      %p228 = scmp.lt.s32.totalorder %s19, 1
      %s229 = scalar_select %p228, %s19, 1
      %p230 = scmp.lt.s32.totalorder %s227, 31
      %s231 = scalar_select %p230, %s227, 31
      %s232 = smul.addr %s229, 32
      %s233 = sadd.s32 %s231, %s232
      %s234 = smul.addr %s233, 4
      %s235 = scalar_lea.vmem %s4, %s234
      %s236 = smul.u32 32, %s20
      %v238 = vld [vmem:[%s225] sm:$0xf]
      %v239 = vld [vmem:[%s225 + $0x4] sm:$0xf]
      %v240 = vld [vmem:[%s225 + $0x8] sm:$0xf]
      %v241 = vld [vmem:[%s225 + $0xc] sm:$0xf]
      %v242 = vld [vmem:[%s225 + $0x10] sm:$0xf]
      %v243 = vld [vmem:[%s225 + $0x14] sm:$0xf]
      %v244 = vld [vmem:[%s225 + $0x18] sm:$0xf]
      %v245 = vld [vmem:[%s225 + $0x1c] sm:$0xf]
      %v246 = vld [vmem:[%s225 + $0x20] sm:$0xf]
      %v247 = vld [vmem:[%s225 + $0x24] sm:$0xf]
      %v248 = vld [vmem:[%s225 + $0x28] sm:$0xf]
      %v249 = vld [vmem:[%s225 + $0x2c] sm:$0xf]
      %v250 = vld [vmem:[%s225 + $0x30] sm:$0xf]
      %v251 = vld [vmem:[%s225 + $0x34] sm:$0xf]
      %v252 = vld [vmem:[%s225 + $0x38] sm:$0xf]
      %v253 = vld [vmem:[%s225 + $0x3c] sm:$0xf]
      %v254 = vld [vmem:[%s225 + $0x40] sm:$0xf]
      %v255 = vld [vmem:[%s225 + $0x44] sm:$0xf]
      %v256 = vld [vmem:[%s225 + $0x48] sm:$0xf]
      %v257 = vld [vmem:[%s225 + $0x4c] sm:$0xf]
      %v258 = vld [vmem:[%s225 + $0x50] sm:$0xf]
      %v259 = vld [vmem:[%s225 + $0x54] sm:$0xf]
      %v260 = vld [vmem:[%s225 + $0x58] sm:$0xf]
      %v261 = vld [vmem:[%s225 + $0x5c] sm:$0xf]
      %v262 = vld [vmem:[%s225 + $0x60] sm:$0xf]
      %v263 = vld [vmem:[%s225 + $0x64] sm:$0xf]
      %v264 = vld [vmem:[%s225 + $0x68] sm:$0xf]
      %v265 = vld [vmem:[%s225 + $0x6c] sm:$0xf]
      %v266 = vld [vmem:[%s225 + $0x70] sm:$0xf]
      %v267 = vld [vmem:[%s225 + $0x74] sm:$0xf]
      %v268 = vld [vmem:[%s225 + $0x78] sm:$0xf]
      %v269 = vld [vmem:[%s225 + $0x7c] sm:$0xf]
      %v270 = vld [vmem:[%s1] sm:$0xf]
      %v271 = vld [vmem:[%s1 + $0x4] sm:$0xf]
      %v304 = vunpack.c.l.b16 %v238
      %v305 = vunpack.c.l.b16 %v239
      %v306 = vunpack.c.l.b16 %v240
      %v307 = vunpack.c.l.b16 %v241
      %v308 = vunpack.c.l.b16 %v242
      %v309 = vunpack.c.l.b16 %v243
      %v310 = vunpack.c.l.b16 %v244
      %v311 = vunpack.c.l.b16 %v245
      %v312 = vunpack.c.l.b16 %v246
      %v313 = vunpack.c.l.b16 %v247
      %v314 = vunpack.c.l.b16 %v248
      %v315 = vunpack.c.l.b16 %v249
      %v316 = vunpack.c.l.b16 %v250
      %v317 = vunpack.c.l.b16 %v251
      %v318 = vunpack.c.l.b16 %v252
      %v319 = vunpack.c.l.b16 %v253
      %v320 = vunpack.c.l.b16 %v254
      %v321 = vunpack.c.l.b16 %v255
      %v322 = vunpack.c.l.b16 %v256
      %v323 = vunpack.c.l.b16 %v257
      %v324 = vunpack.c.l.b16 %v258
      %v325 = vunpack.c.l.b16 %v259
      %v326 = vunpack.c.l.b16 %v260
      %v327 = vunpack.c.l.b16 %v261
      %v328 = vunpack.c.l.b16 %v262
      %v329 = vunpack.c.l.b16 %v263
      %v330 = vunpack.c.l.b16 %v264
      %v331 = vunpack.c.l.b16 %v265
      %v332 = vunpack.c.l.b16 %v266
      %v333 = vunpack.c.l.b16 %v267
      %v334 = vunpack.c.l.b16 %v268
      %v335 = vunpack.c.l.b16 %v269
      %v336 = vpack.c.b16 %v305, %v304
      %v337 = vpack.c.b16 %v307, %v306
      %v338 = vpack.c.b16 %v309, %v308
      %v339 = vpack.c.b16 %v311, %v310
      %v340 = vpack.c.b16 %v313, %v312
      %v341 = vpack.c.b16 %v315, %v314
      %v342 = vpack.c.b16 %v317, %v316
      %v343 = vpack.c.b16 %v319, %v318
      %v344 = vpack.c.b16 %v321, %v320
      %v345 = vpack.c.b16 %v323, %v322
      %v346 = vpack.c.b16 %v325, %v324
      %v347 = vpack.c.b16 %v327, %v326
      %v348 = vpack.c.b16 %v329, %v328
      %v349 = vpack.c.b16 %v331, %v330
      %v350 = vpack.c.b16 %v333, %v332
      %v351 = vpack.c.b16 %v335, %v334
      %v354 = vunpack.c.l.b16 %v270
      %v355 = vunpack.c.l.b16 %v271
      %v356 = vpack.c.b16 %v355, %v354
      %vm358 = vcmask 130048
      %v360 = vsel %vm358, %v336, 0
      %v363 = vsel %vm358, %v337, 0
      %v366 = vsel %vm358, %v338, 0
      %v369 = vsel %vm358, %v339, 0
      %v372 = vsel %vm358, %v340, 0
      %v375 = vsel %vm358, %v341, 0
      %v378 = vsel %vm358, %v342, 0
      %v381 = vsel %vm358, %v343, 0
      %v384 = vsel %vm358, %v344, 0
      %v387 = vsel %vm358, %v345, 0
      %v390 = vsel %vm358, %v346, 0
      %v393 = vsel %vm358, %v347, 0
      %v396 = vsel %vm358, %v348, 0
      %v399 = vsel %vm358, %v349, 0
      %v402 = vsel %vm358, %v350, 0
      %v405 = vsel %vm358, %v351, 0
      %407 = vmatprep.subr.bf16.mxu0 0
      %408 = vmatpush1.bf16.msra.mxu0 %v356
      %409 = vmatprep.subr.bf16.mxu0 0
      %410 = vmatpush1.bf16.msra.mxu0 0
      %411 = vmatprep.subr.bf16.mxu0 0
      %412 = vmatpush1.bf16.msra.mxu0 0
      %413 = vmatprep.subr.bf16.mxu0 0
      %414 = vmatpush1.bf16.msra.mxu0 0
      %415 = vmatprep.subr.bf16.mxu0 0
      %416 = vmatpush1.bf16.msra.mxu0 0
      %417 = vmatprep.subr.bf16.mxu0 0
      %418 = vmatpush1.bf16.msra.mxu0 0
      %419 = vmatprep.subr.bf16.mxu0 0
      %420 = vmatpush1.bf16.msra.mxu0 0
      %421 = vmatprep.subr.bf16.mxu0 0
      %422 = vmatpush1.bf16.msra.mxu0 0
      %423 = vmatprep.subr.bf16.mxu0 0
      %424 = vmatpush1.bf16.msra.mxu0 0
      %425 = vmatprep.subr.bf16.mxu0 0
      %426 = vmatpush1.bf16.msra.mxu0 0
      %427 = vmatprep.subr.bf16.mxu0 0
      %428 = vmatpush1.bf16.msra.mxu0 0
      %429 = vmatprep.subr.bf16.mxu0 0
      %430 = vmatpush1.bf16.msra.mxu0 0
      %431 = vmatprep.subr.bf16.mxu0 0
      %432 = vmatpush1.bf16.msra.mxu0 0
      %433 = vmatprep.subr.bf16.mxu0 0
      %434 = vmatpush1.bf16.msra.mxu0 0
      %435 = vmatprep.subr.bf16.mxu0 0
      %436 = vmatpush1.bf16.msra.mxu0 0
      %437 = vmatprep.subr.bf16.mxu0 0
      %438 = vmatpush1.bf16.msra.mxu0 0
      %439 = vmatprep.mubr.bf16.mxu0 0
      %440 = vmatmul.mubr.bf16.gmra.mrb[0].mxu0 %v360
      %v441 = vpop.f32.mrb[0].mxu0
      %v442 = vadd.f32 0.0, %v441
      %v443 = vpop.f32.mrb[0].mxu0
      %v444 = vpop.f32.mrb[0].mxu0
      %v445 = vadd.f32 0.0, %v444
      %v446 = vpop.f32.mrb[0].mxu0
      %447 = vmatprep.mubr.bf16.mxu0 0
      %448 = vmatmul.mubr.bf16.gmra.mrb[0].mxu0 %v363
      %v449 = vpop.f32.mrb[0].mxu0
      %v450 = vadd.f32 0.0, %v449
      %v451 = vpop.f32.mrb[0].mxu0
      %v452 = vpop.f32.mrb[0].mxu0
      %v453 = vadd.f32 0.0, %v452
      %v454 = vpop.f32.mrb[0].mxu0
      %455 = vmatprep.mubr.bf16.mxu0 0
      %456 = vmatmul.mubr.bf16.gmra.mrb[0].mxu0 %v366
      %v457 = vpop.f32.mrb[0].mxu0
      %v458 = vadd.f32 0.0, %v457
      %v459 = vpop.f32.mrb[0].mxu0
      %v460 = vpop.f32.mrb[0].mxu0
      %v461 = vadd.f32 0.0, %v460
      %v462 = vpop.f32.mrb[0].mxu0
      %463 = vmatprep.mubr.bf16.mxu0 0
      %464 = vmatmul.mubr.bf16.gmra.mrb[0].mxu0 %v369
      %v465 = vpop.f32.mrb[0].mxu0
      %v466 = vadd.f32 0.0, %v465
      %v467 = vpop.f32.mrb[0].mxu0
      %v468 = vpop.f32.mrb[0].mxu0
      %v469 = vadd.f32 0.0, %v468
      %v470 = vpop.f32.mrb[0].mxu0
      %471 = vmatprep.mubr.bf16.mxu0 0
      %472 = vmatmul.mubr.bf16.gmra.mrb[0].mxu0 %v372
      %v473 = vpop.f32.mrb[0].mxu0
      %v474 = vadd.f32 0.0, %v473
      %v475 = vpop.f32.mrb[0].mxu0
      %v476 = vpop.f32.mrb[0].mxu0
      %v477 = vadd.f32 0.0, %v476
      %v478 = vpop.f32.mrb[0].mxu0
      %479 = vmatprep.mubr.bf16.mxu0 0
      %480 = vmatmul.mubr.bf16.gmra.mrb[0].mxu0 %v375
      %v481 = vpop.f32.mrb[0].mxu0
      %v482 = vadd.f32 0.0, %v481
      %v483 = vpop.f32.mrb[0].mxu0
      %v484 = vpop.f32.mrb[0].mxu0
      %v485 = vadd.f32 0.0, %v484
      %v486 = vpop.f32.mrb[0].mxu0
      %487 = vmatprep.mubr.bf16.mxu0 0
      %488 = vmatmul.mubr.bf16.gmra.mrb[0].mxu0 %v378
      %v489 = vpop.f32.mrb[0].mxu0
      %v490 = vadd.f32 0.0, %v489
      %v491 = vpop.f32.mrb[0].mxu0
      %v492 = vpop.f32.mrb[0].mxu0
      %v493 = vadd.f32 0.0, %v492
      %v494 = vpop.f32.mrb[0].mxu0
      %495 = vmatprep.mubr.bf16.mxu0 0
      %496 = vmatmul.mubr.bf16.gmra.mrb[0].mxu0 %v381
      %v497 = vpop.f32.mrb[0].mxu0
      %v498 = vadd.f32 0.0, %v497
      %v499 = vpop.f32.mrb[0].mxu0
      %v500 = vpop.f32.mrb[0].mxu0
      %v501 = vadd.f32 0.0, %v500
      %v502 = vpop.f32.mrb[0].mxu0
      %503 = vmatprep.mubr.bf16.mxu0 0
      %504 = vmatmul.mubr.bf16.gmra.mrb[0].mxu0 %v384
      %v505 = vpop.f32.mrb[0].mxu0
      %v506 = vadd.f32 0.0, %v505
      %v507 = vpop.f32.mrb[0].mxu0
      %v508 = vpop.f32.mrb[0].mxu0
      %v509 = vadd.f32 0.0, %v508
      %v510 = vpop.f32.mrb[0].mxu0
      %511 = vmatprep.mubr.bf16.mxu0 0
      %512 = vmatmul.mubr.bf16.gmra.mrb[0].mxu0 %v387
      %v513 = vpop.f32.mrb[0].mxu0
      %v514 = vadd.f32 0.0, %v513
      %v515 = vpop.f32.mrb[0].mxu0
      %v516 = vpop.f32.mrb[0].mxu0
      %v517 = vadd.f32 0.0, %v516
      %v518 = vpop.f32.mrb[0].mxu0
      %519 = vmatprep.mubr.bf16.mxu0 0
      %520 = vmatmul.mubr.bf16.gmra.mrb[0].mxu0 %v390
      %v521 = vpop.f32.mrb[0].mxu0
      %v522 = vadd.f32 0.0, %v521
      %v523 = vpop.f32.mrb[0].mxu0
      %v524 = vpop.f32.mrb[0].mxu0
      %v525 = vadd.f32 0.0, %v524
      %v526 = vpop.f32.mrb[0].mxu0
      %527 = vmatprep.mubr.bf16.mxu0 0
      %528 = vmatmul.mubr.bf16.gmra.mrb[0].mxu0 %v393
      %v529 = vpop.f32.mrb[0].mxu0
      %v530 = vadd.f32 0.0, %v529
      %v531 = vpop.f32.mrb[0].mxu0
      %v532 = vpop.f32.mrb[0].mxu0
      %v533 = vadd.f32 0.0, %v532
      %v534 = vpop.f32.mrb[0].mxu0
      %535 = vmatprep.mubr.bf16.mxu0 0
      %536 = vmatmul.mubr.bf16.gmra.mrb[0].mxu0 %v396
      %v537 = vpop.f32.mrb[0].mxu0
      %v538 = vadd.f32 0.0, %v537
      %v539 = vpop.f32.mrb[0].mxu0
      %v540 = vpop.f32.mrb[0].mxu0
      %v541 = vadd.f32 0.0, %v540
      %v542 = vpop.f32.mrb[0].mxu0
      %543 = vmatprep.mubr.bf16.mxu0 0
      %544 = vmatmul.mubr.bf16.gmra.mrb[0].mxu0 %v399
      %v545 = vpop.f32.mrb[0].mxu0
      %v546 = vadd.f32 0.0, %v545
      %v547 = vpop.f32.mrb[0].mxu0
      %v548 = vpop.f32.mrb[0].mxu0
      %v549 = vadd.f32 0.0, %v548
      %v550 = vpop.f32.mrb[0].mxu0
      %551 = vmatprep.mubr.bf16.mxu0 0
      %552 = vmatmul.mubr.bf16.gmra.mrb[0].mxu0 %v402
      %v553 = vpop.f32.mrb[0].mxu0
      %v554 = vadd.f32 0.0, %v553
      %v555 = vpop.f32.mrb[0].mxu0
      %v556 = vpop.f32.mrb[0].mxu0
      %v557 = vadd.f32 0.0, %v556
      %v558 = vpop.f32.mrb[0].mxu0
      %559 = vmatprep.mubr.bf16.mxu0 0
      %560 = vmatmul.mubr.bf16.gmra.mrb[0].mxu0 %v405
      %v561 = vpop.f32.mrb[0].mxu0
      %v562 = vadd.f32 0.0, %v561
      %v563 = vpop.f32.mrb[0].mxu0
      %v564 = vpop.f32.mrb[0].mxu0
      %v565 = vadd.f32 0.0, %v564
      %v566 = vpop.f32.mrb[0].mxu0
      %567 = vdwg.mxu0
      %v568 = vld [vmem:[%s2] sm:$0x1]
      %v570 = vlaneseq
      %v571 = vshrl.u32 %v570, 7
      %v572 = vsub.s32 0, %v571
      %v573 = vrot.slane %v568, %v572
      %v575 = vmul.f32 %v442, %v573
      %v576 = vmul.f32 %v445, %v573
      %v577 = vmul.f32 %v450, %v573
      %v578 = vmul.f32 %v453, %v573
      %v579 = vmul.f32 %v458, %v573
      %v580 = vmul.f32 %v461, %v573
      %v581 = vmul.f32 %v466, %v573
      %v582 = vmul.f32 %v469, %v573
      %v583 = vmul.f32 %v474, %v573
      %v584 = vmul.f32 %v477, %v573
      %v585 = vmul.f32 %v482, %v573
      %v586 = vmul.f32 %v485, %v573
      %v587 = vmul.f32 %v490, %v573
      %v588 = vmul.f32 %v493, %v573
      %v589 = vmul.f32 %v498, %v573
      %v590 = vmul.f32 %v501, %v573
      %v591 = vmul.f32 %v506, %v573
      %v592 = vmul.f32 %v509, %v573
      %v593 = vmul.f32 %v514, %v573
      %v594 = vmul.f32 %v517, %v573
      %v595 = vmul.f32 %v522, %v573
      %v596 = vmul.f32 %v525, %v573
      %v597 = vmul.f32 %v530, %v573
      %v598 = vmul.f32 %v533, %v573
      %v599 = vmul.f32 %v538, %v573
      %v600 = vmul.f32 %v541, %v573
      %v601 = vmul.f32 %v546, %v573
      %v602 = vmul.f32 %v549, %v573
      %v603 = vmul.f32 %v554, %v573
      %v604 = vmul.f32 %v557, %v573
      %v605 = vmul.f32 %v562, %v573
      %v606 = vmul.f32 %v565, %v573
      %v607 = vld [vmem:[%s3] sm:$0x1]
      %v609 = vlaneseq
      %v610 = vshrl.u32 %v609, 7
      %v611 = vsub.s32 0, %v610
      %v612 = vrot.slane %v607, %v611
      %v614 = vadd.f32 %v575, %v612
      %v615 = vadd.f32 %v576, %v612
      %v616 = vadd.f32 %v577, %v612
      %v617 = vadd.f32 %v578, %v612
      %v618 = vadd.f32 %v579, %v612
      %v619 = vadd.f32 %v580, %v612
      %v620 = vadd.f32 %v581, %v612
      %v621 = vadd.f32 %v582, %v612
      %v622 = vadd.f32 %v583, %v612
      %v623 = vadd.f32 %v584, %v612
      %v624 = vadd.f32 %v585, %v612
      %v625 = vadd.f32 %v586, %v612
      %v626 = vadd.f32 %v587, %v612
      %v627 = vadd.f32 %v588, %v612
      %v628 = vadd.f32 %v589, %v612
      %v629 = vadd.f32 %v590, %v612
      %v630 = vadd.f32 %v591, %v612
      %v631 = vadd.f32 %v592, %v612
      %v632 = vadd.f32 %v593, %v612
      %v633 = vadd.f32 %v594, %v612
      %v634 = vadd.f32 %v595, %v612
      %v635 = vadd.f32 %v596, %v612
      %v636 = vadd.f32 %v597, %v612
      %v637 = vadd.f32 %v598, %v612
      %v638 = vadd.f32 %v599, %v612
      %v639 = vadd.f32 %v600, %v612
      %v640 = vadd.f32 %v601, %v612
      %v641 = vadd.f32 %v602, %v612
      %v642 = vadd.f32 %v603, %v612
      %v643 = vadd.f32 %v604, %v612
      %v644 = vadd.f32 %v605, %v612
      %v645 = vadd.f32 %v606, %v612
      %v646 = vmax.f32 %v614, 0.0
      %v647 = vmax.f32 %v615, 0.0
      %v648 = vmax.f32 %v616, 0.0
      %v649 = vmax.f32 %v617, 0.0
      %v650 = vmax.f32 %v618, 0.0
      %v651 = vmax.f32 %v619, 0.0
      %v652 = vmax.f32 %v620, 0.0
      %v653 = vmax.f32 %v621, 0.0
      %v654 = vmax.f32 %v622, 0.0
      %v655 = vmax.f32 %v623, 0.0
      %v656 = vmax.f32 %v624, 0.0
      %v657 = vmax.f32 %v625, 0.0
      %v658 = vmax.f32 %v626, 0.0
      %v659 = vmax.f32 %v627, 0.0
      %v660 = vmax.f32 %v628, 0.0
      %v661 = vmax.f32 %v629, 0.0
      %v662 = vmax.f32 %v630, 0.0
      %v663 = vmax.f32 %v631, 0.0
      %v664 = vmax.f32 %v632, 0.0
      %v665 = vmax.f32 %v633, 0.0
      %v666 = vmax.f32 %v634, 0.0
      %v667 = vmax.f32 %v635, 0.0
      %v668 = vmax.f32 %v636, 0.0
      %v669 = vmax.f32 %v637, 0.0
      %v670 = vmax.f32 %v638, 0.0
      %v671 = vmax.f32 %v639, 0.0
      %v672 = vmax.f32 %v640, 0.0
      %v673 = vmax.f32 %v641, 0.0
      %v674 = vmax.f32 %v642, 0.0
      %v675 = vmax.f32 %v643, 0.0
      %v676 = vmax.f32 %v644, 0.0
      %v677 = vmax.f32 %v645, 0.0
      %v678 = vpack.c.bf16 %v647, %v646
      %v679 = vpack.c.bf16 %v649, %v648
      %v680 = vpack.c.bf16 %v651, %v650
      %v681 = vpack.c.bf16 %v653, %v652
      %v682 = vpack.c.bf16 %v655, %v654
      %v683 = vpack.c.bf16 %v657, %v656
      %v684 = vpack.c.bf16 %v659, %v658
      %v685 = vpack.c.bf16 %v661, %v660
      %v686 = vpack.c.bf16 %v663, %v662
      %v687 = vpack.c.bf16 %v665, %v664
      %v688 = vpack.c.bf16 %v667, %v666
      %v689 = vpack.c.bf16 %v669, %v668
      %v690 = vpack.c.bf16 %v671, %v670
      %v691 = vpack.c.bf16 %v673, %v672
      %v692 = vpack.c.bf16 %v675, %v674
      %v693 = vpack.c.bf16 %v677, %v676
      %v710 = vunpack.c.l.b16 %v678
      %v711 = vunpack.c.h.b16 %v678
      %v712 = vunpack.c.l.b16 %v679
      %v713 = vunpack.c.h.b16 %v679
      %v714 = vunpack.c.l.b16 %v680
      %v715 = vunpack.c.h.b16 %v680
      %v716 = vunpack.c.l.b16 %v681
      %v717 = vunpack.c.h.b16 %v681
      %v718 = vunpack.c.l.b16 %v682
      %v719 = vunpack.c.h.b16 %v682
      %v720 = vunpack.c.l.b16 %v683
      %v721 = vunpack.c.h.b16 %v683
      %v722 = vunpack.c.l.b16 %v684
      %v723 = vunpack.c.h.b16 %v684
      %v724 = vunpack.c.l.b16 %v685
      %v725 = vunpack.c.h.b16 %v685
      %v726 = vunpack.c.l.b16 %v686
      %v727 = vunpack.c.h.b16 %v686
      %v728 = vunpack.c.l.b16 %v687
      %v729 = vunpack.c.h.b16 %v687
      %v730 = vunpack.c.l.b16 %v688
      %v731 = vunpack.c.h.b16 %v688
      %v732 = vunpack.c.l.b16 %v689
      %v733 = vunpack.c.h.b16 %v689
      %v734 = vunpack.c.l.b16 %v690
      %v735 = vunpack.c.h.b16 %v690
      %v736 = vunpack.c.l.b16 %v691
      %v737 = vunpack.c.h.b16 %v691
      %v738 = vunpack.c.l.b16 %v692
      %v739 = vunpack.c.h.b16 %v692
      %v740 = vunpack.c.l.b16 %v693
      %v741 = vunpack.c.h.b16 %v693
      %v742 = vpack.c.b16 %v710, %v710
      %v743 = vpack.c.b16 %v711, %v711
      %v744 = vpack.c.b16 %v712, %v712
      %v745 = vpack.c.b16 %v713, %v713
      %v746 = vpack.c.b16 %v714, %v714
      %v747 = vpack.c.b16 %v715, %v715
      %v748 = vpack.c.b16 %v716, %v716
      %v749 = vpack.c.b16 %v717, %v717
      %v750 = vpack.c.b16 %v718, %v718
      %v751 = vpack.c.b16 %v719, %v719
      %v752 = vpack.c.b16 %v720, %v720
      %v753 = vpack.c.b16 %v721, %v721
      %v754 = vpack.c.b16 %v722, %v722
      %v755 = vpack.c.b16 %v723, %v723
      %v756 = vpack.c.b16 %v724, %v724
      %v757 = vpack.c.b16 %v725, %v725
      %v758 = vpack.c.b16 %v726, %v726
      %v759 = vpack.c.b16 %v727, %v727
      %v760 = vpack.c.b16 %v728, %v728
      %v761 = vpack.c.b16 %v729, %v729
      %v762 = vpack.c.b16 %v730, %v730
      %v763 = vpack.c.b16 %v731, %v731
      %v764 = vpack.c.b16 %v732, %v732
      %v765 = vpack.c.b16 %v733, %v733
      %v766 = vpack.c.b16 %v734, %v734
      %v767 = vpack.c.b16 %v735, %v735
      %v768 = vpack.c.b16 %v736, %v736
      %v769 = vpack.c.b16 %v737, %v737
      %v770 = vpack.c.b16 %v738, %v738
      %v771 = vpack.c.b16 %v739, %v739
      %v772 = vpack.c.b16 %v740, %v740
      %v773 = vpack.c.b16 %v741, %v741
      %806 = vst [vmem:[%s235] sm:$0xf] %v742
      %807 = vst [vmem:[%s235 + $0x4] sm:$0xf] %v743
      %808 = vst [vmem:[%s235 + $0x8] sm:$0xf] %v744
      %809 = vst [vmem:[%s235 + $0xc] sm:$0xf] %v745
      %810 = vst [vmem:[%s235 + $0x10] sm:$0xf] %v746
      %811 = vst [vmem:[%s235 + $0x14] sm:$0xf] %v747
      %812 = vst [vmem:[%s235 + $0x18] sm:$0xf] %v748
      %813 = vst [vmem:[%s235 + $0x1c] sm:$0xf] %v749
      %814 = vst [vmem:[%s235 + $0x20] sm:$0xf] %v750
      %815 = vst [vmem:[%s235 + $0x24] sm:$0xf] %v751
      %816 = vst [vmem:[%s235 + $0x28] sm:$0xf] %v752
      %817 = vst [vmem:[%s235 + $0x2c] sm:$0xf] %v753
      %818 = vst [vmem:[%s235 + $0x30] sm:$0xf] %v754
      %819 = vst [vmem:[%s235 + $0x34] sm:$0xf] %v755
      %820 = vst [vmem:[%s235 + $0x38] sm:$0xf] %v756
      %821 = vst [vmem:[%s235 + $0x3c] sm:$0xf] %v757
      %822 = vst [vmem:[%s235 + $0x40] sm:$0xf] %v758
      %823 = vst [vmem:[%s235 + $0x44] sm:$0xf] %v759
      %824 = vst [vmem:[%s235 + $0x48] sm:$0xf] %v760
      %825 = vst [vmem:[%s235 + $0x4c] sm:$0xf] %v761
      %826 = vst [vmem:[%s235 + $0x50] sm:$0xf] %v762
      %827 = vst [vmem:[%s235 + $0x54] sm:$0xf] %v763
      %828 = vst [vmem:[%s235 + $0x58] sm:$0xf] %v764
      %829 = vst [vmem:[%s235 + $0x5c] sm:$0xf] %v765
      %830 = vst [vmem:[%s235 + $0x60] sm:$0xf] %v766
      %831 = vst [vmem:[%s235 + $0x64] sm:$0xf] %v767
      %832 = vst [vmem:[%s235 + $0x68] sm:$0xf] %v768
      %833 = vst [vmem:[%s235 + $0x6c] sm:$0xf] %v769
      %834 = vst [vmem:[%s235 + $0x70] sm:$0xf] %v770
      %835 = vst [vmem:[%s235 + $0x74] sm:$0xf] %v771
      %836 = vst [vmem:[%s235 + $0x78] sm:$0xf] %v772
      %837 = vst [vmem:[%s235 + $0x7c] sm:$0xf] %v773
      %s838 = smul.u32 32, %s20
      %p839 = scmp.lt.s32.totalorder %s19, 1
      %s840 = scalar_select %p839, %s19, 1
      %p841 = scmp.lt.s32.totalorder %s838, 31
      %s842 = scalar_select %p841, %s838, 31
      %s843 = smul.addr %s840, 32
      %s844 = sadd.s32 %s842, %s843
      %s845 = smul.addr %s844, 4
      %s846 = scalar_lea.vmem %s4, %s845
      // Predicated region
      $region37: #{audio_enhancement_pallas.4} parent=35 // pred_check
        %p847 = pneg %p138
      $region38: #{audio_enhancement_pallas.4} parent=35 // pred_check_branch
        %849 = sbr.rel (%p847) target = $region40
      $region39: #{audio_enhancement_pallas.4} parent=35 // pred_region
        %s850 = smul.u32 32, %s20
      $region40: #{audio_enhancement_pallas.4} parent=35 // pred_fallthru
        _
    $region36: #{audio_enhancement_pallas.4} parent=5 // pred_fallthru
      _
    %p851 = scmp.le.s32.totalorder 2, %s10
    // Predicated region
    $region41: #{audio_enhancement_pallas.4} parent=5 // pred_check
      %p852 = pneg %p851
    $region42: #{audio_enhancement_pallas.4} parent=5 // pred_check_branch
      %854 = sbr.rel (%p852) target = $region44
    $region43: #{audio_enhancement_pallas.4} parent=5 // pred_region
      %s855 = ssub.s32 %s10, 2
      // Predicated region
      $region45: #{audio_enhancement_pallas.4} parent=43 // pred_check
        %p856 = pneg %p144
      $region46: #{audio_enhancement_pallas.4} parent=43 // pred_check_branch
        %858 = sbr.rel (%p856) target = $region48
      $region47: #{audio_enhancement_pallas.4} parent=43 // pred_region
        %s859 = smul.u32 32, %s22
        %p860 = scmp.lt.s32.totalorder %s21, 1
        %s861 = scalar_select %p860, %s21, 1
        %p862 = scmp.lt.s32.totalorder %s859, 31
        %s863 = scalar_select %p862, %s859, 31
        %s864 = smul.addr %s861, 32
        %s865 = sadd.s32 %s863, %s864
        %s866 = smul.addr %s865, 4
        %s867 = scalar_lea.vmem %s4, %s866
      $region48: #{audio_enhancement_pallas.4} parent=43 // pred_fallthru
        _
    $region44: #{audio_enhancement_pallas.4} parent=5 // pred_fallthru
      _
  $region6: #{audio_enhancement_pallas.4} parent=0 // loop_footer
    %s14 = sadd.s32 1, %s10
  $region7: #{audio_enhancement_pallas.4} parent=0 // loop_footer_branch
    %9 = sbr.rel target = $region3
  $region8: #{audio_enhancement_pallas.4} parent=0 // loop_exit
    _

// kernel: audio_enhancement_pallas.5
$region0: #{audio_enhancement_pallas.5}
  #allocation0 [shape = 'u32[]', space=smem, size = 0x4, offset = 0x4, fixed_abs, tag = 'smem constant byte address 0x4 - core index']
  #allocation1 [shape = 'u32[144,128]{1,0:T(1,128)}', space=vmem, size = 0x12000, scoped, tag = 'internal scratch']
  #allocation2 [shape = 'bf16[160,256]{1,0:T(16,128)(2,1)}', space=vmem, size = 0x14000, scoped, tag = 'scratch operand']
  %s0 = inlined_call_operand.vmem [shape: bf16[2,128,256], index: 0, kind: input, shape index: {}, may-alias: {0,1,2}]
  %s1 = inlined_call_operand.vmem [shape: bf16[2,128,256], index: 1, kind: input, shape index: {}, may-alias: {0,1,2}]
  %s2 = inlined_call_operand.vmem [shape: bf16[2,128,256], index: 2, kind: input, shape index: {}, may-alias: {0,1,2}]
  %s3 = inlined_call_operand.vmem [shape: bf16[5,256,256], index: 3, kind: input, shape index: {}]
  %s4 = inlined_call_operand.vmem [shape: f32[1,256], index: 4, kind: input, shape index: {}]
  %s5 = inlined_call_operand.vmem [shape: f32[1,256], index: 5, kind: input, shape index: {}]
  %s6 = inlined_call_operand.vmem [shape: bf16[2,128,256], index: 6, kind: output, shape index: {}]
  %s7 = sld [smem:[#allocation0]]
  $region65: #{audio_enhancement_pallas.5} parent=0
    _
  %s9 = ssub.s32 1, %s7
  %s10 = scalar_select 0, %s9, %s7
  loop: start=0, step=1, limit=4
  $region2: #{audio_enhancement_pallas.5} parent=0 // loop_pre_header
    _
  $region3: #{audio_enhancement_pallas.5} parent=0 // loop_header
    %s12 = sphi 0, %s16
    %p13 = scmp.ge.s32.totalorder %s12, 4
    %s19 = sphi 0, %s31
    %s20 = sphi 0, %s27
    %s21 = sphi 0, %s19
    %s22 = sphi 0, %s20
    %s23 = sphi 0, %s21
    %s24 = sphi 0, %s22
    %s36 = sphi 0, %s38
    %s39 = sphi 0, %s36
    %s40 = sphi 0, %s39
    %s56 = sphi 0, %s40
    %s72 = sphi 0, %s74
    %s75 = sphi 0, %s72
    %s76 = sphi 0, %s75
    %s92 = sphi 0, %s76
    %s108 = sphi 0, %s110
    %s111 = sphi 0, %s108
    %s112 = sphi 0, %s111
    %s128 = sphi 0, %s112
    %s132 = sphi 0, %s132
    %s134 = sphi 0, %s132
    %s135 = sphi 0, %s134
    %s149 = sphi 0, %s135
    %s153 = sphi 0, %s153
    %s155 = sphi 0, %s153
    %s156 = sphi 0, %s155
    %s170 = sphi 0, %s156
    %s174 = sphi 0, %s174
    %s176 = sphi 0, %s174
    %s177 = sphi 0, %s176
    %s191 = sphi 0, %s177
    %s199 = sphi 0, %s201
    %s202 = sphi 0, %s199
    %s203 = sphi 0, %s202
    %s219 = sphi 0, %s203
  $region4: #{audio_enhancement_pallas.5} parent=0 // loop_header_branch
    %15 = sbr.rel (%p13) target = $region8
  $region5: #{audio_enhancement_pallas.5} parent=0 // loop_body
    %s17 = ssub.s32 %s12, 1
    %s18 = ssub.s32 %s12, 2
    %s25 = sadd.s32 1, %s20
    %p26 = scmp.ge.s32.totalorder %s25, 1
    %s27 = scalar_select %p26, 0, %s25
    %s28 = sadd.s32 1, %s19
    %s29 = scalar_select %p26, %s28, %s19
    %p30 = scmp.ge.s32.totalorder %s29, 2
    %s31 = scalar_select %p30, 0, %s29
    %s32 = ssub.s32 %s19, %s31
    %s33 = ssub.s32 %s20, %s27
    %s34 = sor.u32 %s32, %s33
    %p35 = scmp.eq.s32.totalorder %s34, 0
    %s37 = sadd.s32 %s36, 1
    %s38 = scalar_select %p35, %s36, %s37
    %p41 = pneg %p35
    %p42 = scmp.eq.s32.totalorder %s12, 1
    %p43 = por %p41, %p42
    %p44 = scmp.ne.s32.totalorder %s36, %s39
    %p45 = scmp.eq.s32.totalorder %s12, 0
    %p46 = por %p44, %p45
    %p47 = scmp.ne.s32.totalorder %s36, %s39
    %p48 = scmp.eq.s32.totalorder %s17, 1
    %p49 = por %p47, %p48
    %p50 = scmp.ne.s32.totalorder %s39, %s40
    %p51 = scmp.eq.s32.totalorder %s17, 0
    %p52 = por %p50, %p51
    %p53 = scmp.ne.s32.totalorder %s39, %s40
    %p54 = scmp.eq.s32.totalorder %s18, 1
    %p55 = por %p53, %p54
    %p57 = scmp.ne.s32.totalorder %s40, %s56
    %p58 = scmp.eq.s32.totalorder %s18, 0
    %p59 = por %p57, %p58
    %s60 = smul.u32 %s20, 8
    %s61 = ssub.s32 %s60, 1
    %p62 = scmp.gt.s32.totalorder %s61, 0
    %s63 = scalar_select %p62, %s61, 0
    %s64 = smul.u32 %s27, 8
    %s65 = ssub.s32 %s64, 1
    %p66 = scmp.gt.s32.totalorder %s65, 0
    %s67 = scalar_select %p66, %s65, 0
    %s68 = ssub.s32 %s19, %s31
    %s69 = ssub.s32 %s63, %s67
    %s70 = sor.u32 %s68, %s69
    %p71 = scmp.eq.s32.totalorder %s70, 0
    %s73 = sadd.s32 %s72, 1
    %s74 = scalar_select %p71, %s72, %s73
    %p77 = pneg %p71
    %p78 = scmp.eq.s32.totalorder %s12, 1
    %p79 = por %p77, %p78
    %p80 = scmp.ne.s32.totalorder %s72, %s75
    %p81 = scmp.eq.s32.totalorder %s12, 0
    %p82 = por %p80, %p81
    %p83 = scmp.ne.s32.totalorder %s72, %s75
    %p84 = scmp.eq.s32.totalorder %s17, 1
    %p85 = por %p83, %p84
    %p86 = scmp.ne.s32.totalorder %s75, %s76
    %p87 = scmp.eq.s32.totalorder %s17, 0
    %p88 = por %p86, %p87
    %p89 = scmp.ne.s32.totalorder %s75, %s76
    %p90 = scmp.eq.s32.totalorder %s18, 1
    %p91 = por %p89, %p90
    %p93 = scmp.ne.s32.totalorder %s76, %s92
    %p94 = scmp.eq.s32.totalorder %s18, 0
    %p95 = por %p93, %p94
    %s96 = sadd.s32 %s20, 1
    %s97 = smul.u32 %s96, 8
    %p98 = scmp.lt.s32.totalorder %s97, 7
    %s99 = scalar_select %p98, %s97, 7
    %s100 = sadd.s32 %s27, 1
    %s101 = smul.u32 %s100, 8
    %p102 = scmp.lt.s32.totalorder %s101, 7
    %s103 = scalar_select %p102, %s101, 7
    %s104 = ssub.s32 %s19, %s31
    %s105 = ssub.s32 %s99, %s103
    %s106 = sor.u32 %s104, %s105
    %p107 = scmp.eq.s32.totalorder %s106, 0
    %s109 = sadd.s32 %s108, 1
    %s110 = scalar_select %p107, %s108, %s109
    %p113 = pneg %p107
    %p114 = scmp.eq.s32.totalorder %s12, 1
    %p115 = por %p113, %p114
    %p116 = scmp.ne.s32.totalorder %s108, %s111
    %p117 = scmp.eq.s32.totalorder %s12, 0
    %p118 = por %p116, %p117
    %p119 = scmp.ne.s32.totalorder %s108, %s111
    %p120 = scmp.eq.s32.totalorder %s17, 1
    %p121 = por %p119, %p120
    %p122 = scmp.ne.s32.totalorder %s111, %s112
    %p123 = scmp.eq.s32.totalorder %s17, 0
    %p124 = por %p122, %p123
    %p125 = scmp.ne.s32.totalorder %s111, %s112
    %p126 = scmp.eq.s32.totalorder %s18, 1
    %p127 = por %p125, %p126
    %p129 = scmp.ne.s32.totalorder %s112, %s128
    %p130 = scmp.eq.s32.totalorder %s18, 0
    %p131 = por %p129, %p130
    %s133 = sadd.s32 %s132, 1
    %p136 = scmp.eq.s32.totalorder %s12, 1
    %p137 = scmp.ne.s32.totalorder %s132, %s134
    %p138 = scmp.eq.s32.totalorder %s12, 0
    %p139 = por %p137, %p138
    %p140 = scmp.ne.s32.totalorder %s132, %s134
    %p141 = scmp.eq.s32.totalorder %s17, 1
    %p142 = por %p140, %p141
    %p143 = scmp.ne.s32.totalorder %s134, %s135
    %p144 = scmp.eq.s32.totalorder %s17, 0
    %p145 = por %p143, %p144
    %p146 = scmp.ne.s32.totalorder %s134, %s135
    %p147 = scmp.eq.s32.totalorder %s18, 1
    %p148 = por %p146, %p147
    %p150 = scmp.ne.s32.totalorder %s135, %s149
    %p151 = scmp.eq.s32.totalorder %s18, 0
    %p152 = por %p150, %p151
    %s154 = sadd.s32 %s153, 1
    %p157 = scmp.eq.s32.totalorder %s12, 1
    %p158 = scmp.ne.s32.totalorder %s153, %s155
    %p159 = scmp.eq.s32.totalorder %s12, 0
    %p160 = por %p158, %p159
    %p161 = scmp.ne.s32.totalorder %s153, %s155
    %p162 = scmp.eq.s32.totalorder %s17, 1
    %p163 = por %p161, %p162
    %p164 = scmp.ne.s32.totalorder %s155, %s156
    %p165 = scmp.eq.s32.totalorder %s17, 0
    %p166 = por %p164, %p165
    %p167 = scmp.ne.s32.totalorder %s155, %s156
    %p168 = scmp.eq.s32.totalorder %s18, 1
    %p169 = por %p167, %p168
    %p171 = scmp.ne.s32.totalorder %s156, %s170
    %p172 = scmp.eq.s32.totalorder %s18, 0
    %p173 = por %p171, %p172
    %s175 = sadd.s32 %s174, 1
    %p178 = scmp.eq.s32.totalorder %s12, 1
    %p179 = scmp.ne.s32.totalorder %s174, %s176
    %p180 = scmp.eq.s32.totalorder %s12, 0
    %p181 = por %p179, %p180
    %p182 = scmp.ne.s32.totalorder %s174, %s176
    %p183 = scmp.eq.s32.totalorder %s17, 1
    %p184 = por %p182, %p183
    %p185 = scmp.ne.s32.totalorder %s176, %s177
    %p186 = scmp.eq.s32.totalorder %s17, 0
    %p187 = por %p185, %p186
    %p188 = scmp.ne.s32.totalorder %s176, %s177
    %p189 = scmp.eq.s32.totalorder %s18, 1
    %p190 = por %p188, %p189
    %p192 = scmp.ne.s32.totalorder %s177, %s191
    %p193 = scmp.eq.s32.totalorder %s18, 0
    %p194 = por %p192, %p193
    %s195 = ssub.s32 %s19, %s31
    %s196 = ssub.s32 %s20, %s27
    %s197 = sor.u32 %s195, %s196
    %p198 = scmp.eq.s32.totalorder %s197, 0
    %s200 = sadd.s32 %s199, 1
    %s201 = scalar_select %p198, %s199, %s200
    %p204 = pneg %p198
    %p205 = scmp.eq.s32.totalorder %s12, 1
    %p206 = por %p204, %p205
    %p207 = scmp.ne.s32.totalorder %s199, %s202
    %p208 = scmp.eq.s32.totalorder %s12, 0
    %p209 = por %p207, %p208
    %p210 = scmp.ne.s32.totalorder %s199, %s202
    %p211 = scmp.eq.s32.totalorder %s17, 1
    %p212 = por %p210, %p211
    %p213 = scmp.ne.s32.totalorder %s202, %s203
    %p214 = scmp.eq.s32.totalorder %s17, 0
    %p215 = por %p213, %p214
    %p216 = scmp.ne.s32.totalorder %s202, %s203
    %p217 = scmp.eq.s32.totalorder %s18, 1
    %p218 = por %p216, %p217
    %p220 = scmp.ne.s32.totalorder %s203, %s219
    %p221 = scmp.eq.s32.totalorder %s18, 0
    %p222 = por %p220, %p221
    %p223 = scmp.le.s32.totalorder 1, %s12
    %p224 = scmp.lt.s32.totalorder %s12, 3
    %p225 = pnand %p223, %p224
    %p226 = pneg %p225
    // Predicated region
    $region9: #{audio_enhancement_pallas.5} parent=5 // pred_check
      _
    $region10: #{audio_enhancement_pallas.5} parent=5 // pred_check_branch
      %228 = sbr.rel (%p225) target = $region12
    $region11: #{audio_enhancement_pallas.5} parent=5 // pred_region
      %s229 = ssub.s32 %s12, 1
      // Predicated region
      $region13: #{audio_enhancement_pallas.5} parent=11 // pred_check
        %p230 = pneg %p145
      $region14: #{audio_enhancement_pallas.5} parent=11 // pred_check_branch
        %232 = sbr.rel (%p230) target = $region16
      $region15: #{audio_enhancement_pallas.5} parent=11 // pred_region
        _
      $region16: #{audio_enhancement_pallas.5} parent=11 // pred_fallthru
        _
      // Predicated region
      $region17: #{audio_enhancement_pallas.5} parent=11 // pred_check
        %p233 = pneg %p166
      $region18: #{audio_enhancement_pallas.5} parent=11 // pred_check_branch
        %235 = sbr.rel (%p233) target = $region20
      $region19: #{audio_enhancement_pallas.5} parent=11 // pred_region
        _
      $region20: #{audio_enhancement_pallas.5} parent=11 // pred_fallthru
        _
      // Predicated region
      $region21: #{audio_enhancement_pallas.5} parent=11 // pred_check
        %p236 = pneg %p187
      $region22: #{audio_enhancement_pallas.5} parent=11 // pred_check_branch
        %238 = sbr.rel (%p236) target = $region24
      $region23: #{audio_enhancement_pallas.5} parent=11 // pred_region
        _
      $region24: #{audio_enhancement_pallas.5} parent=11 // pred_fallthru
        _
    $region12: #{audio_enhancement_pallas.5} parent=5 // pred_fallthru
      _
    %p239 = scmp.lt.s32.totalorder %s12, 2
    // Predicated region
    $region25: #{audio_enhancement_pallas.5} parent=5 // pred_check
      %p240 = pneg %p239
    $region26: #{audio_enhancement_pallas.5} parent=5 // pred_check_branch
      %242 = sbr.rel (%p240) target = $region28
    $region27: #{audio_enhancement_pallas.5} parent=5 // pred_region
      // Predicated region
      $region29: #{audio_enhancement_pallas.5} parent=27 // pred_check
        %p243 = pneg %p46
      $region30: #{audio_enhancement_pallas.5} parent=27 // pred_check_branch
        %245 = sbr.rel (%p243) target = $region32
      $region31: #{audio_enhancement_pallas.5} parent=27 // pred_region
        %s246 = smul.u32 16, %s20
        %p247 = scmp.lt.s32.totalorder %s19, 1
        %s248 = scalar_select %p247, %s19, 1
        %p249 = scmp.lt.s32.totalorder %s246, 15
        %s250 = scalar_select %p249, %s246, 15
        %s251 = smul.addr %s250, 2
        %s252 = smul.addr %s248, 32
        %s253 = sadd.s32 %s251, %s252
        %s254 = smul.addr %s253, 4
        %s255 = scalar_lea.vmem %s0, %s254
        %s256 = smul.u32 16, %s20
      $region32: #{audio_enhancement_pallas.5} parent=27 // pred_fallthru
        _
      // Predicated region
      $region33: #{audio_enhancement_pallas.5} parent=27 // pred_check
        %p257 = pneg %p82
      $region34: #{audio_enhancement_pallas.5} parent=27 // pred_check_branch
        %259 = sbr.rel (%p257) target = $region36
      $region35: #{audio_enhancement_pallas.5} parent=27 // pred_region
        %s260 = smul.u32 %s20, 8
        %s261 = ssub.s32 %s260, 1
        %p262 = scmp.gt.s32.totalorder %s261, 0
        %s263 = scalar_select %p262, %s261, 0
        %s264 = smul.u32 2, %s263
        %p265 = scmp.lt.s32.totalorder %s19, 1
        %s266 = scalar_select %p265, %s19, 1
        %p267 = scmp.lt.s32.totalorder %s264, 15
        %s268 = scalar_select %p267, %s264, 15
        %s269 = smul.addr %s268, 2
        %s270 = smul.addr %s266, 32
        %s271 = sadd.s32 %s269, %s270
        %s272 = smul.addr %s271, 4
        %s273 = scalar_lea.vmem %s1, %s272
        %s274 = smul.u32 %s20, 8
        %s275 = ssub.s32 %s274, 1
        %p276 = scmp.gt.s32.totalorder %s275, 0
        %s277 = scalar_select %p276, %s275, 0
        %s278 = smul.u32 2, %s277
      $region36: #{audio_enhancement_pallas.5} parent=27 // pred_fallthru
        _
      // Predicated region
      $region37: #{audio_enhancement_pallas.5} parent=27 // pred_check
        %p279 = pneg %p118
      $region38: #{audio_enhancement_pallas.5} parent=27 // pred_check_branch
        %281 = sbr.rel (%p279) target = $region40
      $region39: #{audio_enhancement_pallas.5} parent=27 // pred_region
        %s282 = sadd.s32 %s20, 1
        %s283 = smul.u32 %s282, 8
        %p284 = scmp.lt.s32.totalorder %s283, 7
        %s285 = scalar_select %p284, %s283, 7
        %s286 = smul.u32 2, %s285
        %p287 = scmp.lt.s32.totalorder %s19, 1
        %s288 = scalar_select %p287, %s19, 1
        %p289 = scmp.lt.s32.totalorder %s286, 15
        %s290 = scalar_select %p289, %s286, 15
        %s291 = smul.addr %s290, 2
        %s292 = smul.addr %s288, 32
        %s293 = sadd.s32 %s291, %s292
        %s294 = smul.addr %s293, 4
        %s295 = scalar_lea.vmem %s2, %s294
        %s296 = sadd.s32 %s20, 1
        %s297 = smul.u32 %s296, 8
        %p298 = scmp.lt.s32.totalorder %s297, 7
        %s299 = scalar_select %p298, %s297, 7
        %s300 = smul.u32 2, %s299
      $region40: #{audio_enhancement_pallas.5} parent=27 // pred_fallthru
        _
    $region28: #{audio_enhancement_pallas.5} parent=5 // pred_fallthru
      _
    %p301 = scmp.le.s32.totalorder 1, %s12
    %p302 = scmp.lt.s32.totalorder %s12, 3
    %p303 = pnand %p301, %p302
    %p304 = pneg %p303
    // Predicated region
    $region41: #{audio_enhancement_pallas.5} parent=5 // pred_check
      _
    $region42: #{audio_enhancement_pallas.5} parent=5 // pred_check_branch
      %306 = sbr.rel (%p303) target = $region44
    $region43: #{audio_enhancement_pallas.5} parent=5 // pred_region
      %s307 = ssub.s32 %s12, 1
      %s308 = smul.u32 16, %s22
      %p309 = scmp.lt.s32.totalorder %s21, 1
      %s310 = scalar_select %p309, %s21, 1
      %p311 = scmp.lt.s32.totalorder %s308, 15
      %s312 = scalar_select %p311, %s308, 15
      %s313 = smul.addr %s312, 2
      %s314 = smul.addr %s310, 32
      %s315 = sadd.s32 %s313, %s314
      %s316 = smul.addr %s315, 4
      %s317 = scalar_lea.vmem %s0, %s316
      %p318 = pneg %p52
      %p319 = pneg %p49
      %s320 = smul.u32 %s22, 8
      %s321 = ssub.s32 %s320, 1
      %p322 = scmp.gt.s32.totalorder %s321, 0
      %s323 = scalar_select %p322, %s321, 0
      %s324 = smul.u32 2, %s323
      %p325 = scmp.lt.s32.totalorder %s21, 1
      %s326 = scalar_select %p325, %s21, 1
      %p327 = scmp.lt.s32.totalorder %s324, 15
      %s328 = scalar_select %p327, %s324, 15
      %s329 = smul.addr %s328, 2
      %s330 = smul.addr %s326, 32
      %s331 = sadd.s32 %s329, %s330
      %s332 = smul.addr %s331, 4
      %s333 = scalar_lea.vmem %s1, %s332
      %p334 = pneg %p88
      %p335 = pneg %p85
      %s336 = sadd.s32 %s22, 1
      %s337 = smul.u32 %s336, 8
      %p338 = scmp.lt.s32.totalorder %s337, 7
      %s339 = scalar_select %p338, %s337, 7
      %s340 = smul.u32 2, %s339
      %p341 = scmp.lt.s32.totalorder %s21, 1
      %s342 = scalar_select %p341, %s21, 1
      %p343 = scmp.lt.s32.totalorder %s340, 15
      %s344 = scalar_select %p343, %s340, 15
      %s345 = smul.addr %s344, 2
      %s346 = smul.addr %s342, 32
      %s347 = sadd.s32 %s345, %s346
      %s348 = smul.addr %s347, 4
      %s349 = scalar_lea.vmem %s2, %s348
      %p350 = pneg %p124
      %p351 = pneg %p121
      %p352 = pneg %p145
      %p353 = pneg %p142
      %p354 = pneg %p166
      %p355 = pneg %p163
      %p356 = pneg %p187
      %p357 = pneg %p184
      %p358 = pneg %p215
      %p359 = pneg %p212
      %s360 = smul.u32 16, %s22
      %p361 = scmp.lt.s32.totalorder %s21, 1
      %s362 = scalar_select %p361, %s21, 1
      %p363 = scmp.lt.s32.totalorder %s360, 15
      %s364 = scalar_select %p363, %s360, 15
      %s365 = smul.addr %s364, 2
      %s366 = smul.addr %s362, 32
      %s367 = sadd.s32 %s365, %s366
      %s368 = smul.addr %s367, 4
      %s369 = scalar_lea.vmem %s6, %s368
      %s370 = smul.u32 16, %s22
      %p371 = scmp.lt.s32.totalorder %s21, 1
      %s372 = scalar_select %p371, %s21, 1
      %p373 = scmp.lt.s32.totalorder %s370, 15
      %s374 = scalar_select %p373, %s370, 15
      %s375 = smul.addr %s374, 2
      %s376 = smul.addr %s372, 32
      %s377 = sadd.s32 %s375, %s376
      %s378 = smul.addr %s377, 4
      %s379 = scalar_lea.vmem %s0, %s378
      %s380 = smul.u32 16, %s22
      %s381 = smul.u32 %s22, 8
      %s382 = ssub.s32 %s381, 1
      %p383 = scmp.gt.s32.totalorder %s382, 0
      %s384 = scalar_select %p383, %s382, 0
      %s385 = smul.u32 2, %s384
      %p386 = scmp.lt.s32.totalorder %s21, 1
      %s387 = scalar_select %p386, %s21, 1
      %p388 = scmp.lt.s32.totalorder %s385, 15
      %s389 = scalar_select %p388, %s385, 15
      %s390 = smul.addr %s389, 2
      %s391 = smul.addr %s387, 32
      %s392 = sadd.s32 %s390, %s391
      %s393 = smul.addr %s392, 4
      %s394 = scalar_lea.vmem %s1, %s393
      %s395 = smul.u32 %s22, 8
      %s396 = ssub.s32 %s395, 1
      %p397 = scmp.gt.s32.totalorder %s396, 0
      %s398 = scalar_select %p397, %s396, 0
      %s399 = smul.u32 2, %s398
      %s400 = sadd.s32 %s22, 1
      %s401 = smul.u32 %s400, 8
      %p402 = scmp.lt.s32.totalorder %s401, 7
      %s403 = scalar_select %p402, %s401, 7
      %s404 = smul.u32 2, %s403
      %p405 = scmp.lt.s32.totalorder %s21, 1
      %s406 = scalar_select %p405, %s21, 1
      %p407 = scmp.lt.s32.totalorder %s404, 15
      %s408 = scalar_select %p407, %s404, 15
      %s409 = smul.addr %s408, 2
      %s410 = smul.addr %s406, 32
      %s411 = sadd.s32 %s409, %s410
      %s412 = smul.addr %s411, 4
      %s413 = scalar_lea.vmem %s2, %s412
      %s414 = sadd.s32 %s22, 1
      %s415 = smul.u32 %s414, 8
      %p416 = scmp.lt.s32.totalorder %s415, 7
      %s417 = scalar_select %p416, %s415, 7
      %s418 = smul.u32 2, %s417
      %s419 = smul.u32 16, %s22
      %p420 = scmp.lt.s32.totalorder %s21, 1
      %s421 = scalar_select %p420, %s21, 1
      %p422 = scmp.lt.s32.totalorder %s419, 15
      %s423 = scalar_select %p422, %s419, 15
      %s424 = smul.addr %s423, 2
      %s425 = smul.addr %s421, 32
      %s426 = sadd.s32 %s424, %s425
      %s427 = smul.addr %s426, 4
      %s428 = scalar_lea.vmem %s6, %s427
      %s429 = smul.u32 16, %s22
      %v433 = vld [vmem:[%s394] sm:$0xff]
      %v434 = vld [vmem:[%s394 + $0x8] sm:$0xff]
      %v437 = vunpack.c.l.b16 %v433
      %v438 = vunpack.c.h.b16 %v433
      %v439 = vunpack.c.l.b16 %v434
      %v440 = vunpack.c.h.b16 %v434
      %v441 = vpack.c.b16 %v439, %v437
      %v442 = vpack.c.b16 %v440, %v438
      %445 = vst [vmem:[#allocation2] sm:$0xff] %v441
      %446 = vst [vmem:[#allocation2 + $0x8] sm:$0xff] %v442
      %v447 = vld [vmem:[%s379] sm:$0xff]
      %v448 = vld [vmem:[%s379 + $0x8] sm:$0xff]
      %v449 = vld [vmem:[%s379 + $0x10] sm:$0xff]
      %v450 = vld [vmem:[%s379 + $0x18] sm:$0xff]
      %v451 = vld [vmem:[%s379 + $0x20] sm:$0xff]
      %v452 = vld [vmem:[%s379 + $0x28] sm:$0xff]
      %v453 = vld [vmem:[%s379 + $0x30] sm:$0xff]
      %v454 = vld [vmem:[%s379 + $0x38] sm:$0xff]
      %v455 = vld [vmem:[%s379 + $0x40] sm:$0xff]
      %v456 = vld [vmem:[%s379 + $0x48] sm:$0xff]
      %v457 = vld [vmem:[%s379 + $0x50] sm:$0xff]
      %v458 = vld [vmem:[%s379 + $0x58] sm:$0xff]
      %v459 = vld [vmem:[%s379 + $0x60] sm:$0xff]
      %v460 = vld [vmem:[%s379 + $0x68] sm:$0xff]
      %v461 = vld [vmem:[%s379 + $0x70] sm:$0xff]
      %v462 = vld [vmem:[%s379 + $0x78] sm:$0xff]
      %v479 = vunpack.c.l.b16 %v447
      %v480 = vunpack.c.h.b16 %v447
      %v481 = vunpack.c.l.b16 %v448
      %v482 = vunpack.c.h.b16 %v448
      %v483 = vunpack.c.l.b16 %v449
      %v484 = vunpack.c.h.b16 %v449
      %v485 = vunpack.c.l.b16 %v450
      %v486 = vunpack.c.h.b16 %v450
      %v487 = vunpack.c.l.b16 %v451
      %v488 = vunpack.c.h.b16 %v451
      %v489 = vunpack.c.l.b16 %v452
      %v490 = vunpack.c.h.b16 %v452
      %v491 = vunpack.c.l.b16 %v453
      %v492 = vunpack.c.h.b16 %v453
      %v493 = vunpack.c.l.b16 %v454
      %v494 = vunpack.c.h.b16 %v454
      %v495 = vunpack.c.l.b16 %v455
      %v496 = vunpack.c.h.b16 %v455
      %v497 = vunpack.c.l.b16 %v456
      %v498 = vunpack.c.h.b16 %v456
      %v499 = vunpack.c.l.b16 %v457
      %v500 = vunpack.c.h.b16 %v457
      %v501 = vunpack.c.l.b16 %v458
      %v502 = vunpack.c.h.b16 %v458
      %v503 = vunpack.c.l.b16 %v459
      %v504 = vunpack.c.h.b16 %v459
      %v505 = vunpack.c.l.b16 %v460
      %v506 = vunpack.c.h.b16 %v460
      %v507 = vunpack.c.l.b16 %v461
      %v508 = vunpack.c.h.b16 %v461
      %v509 = vunpack.c.l.b16 %v462
      %v510 = vunpack.c.h.b16 %v462
      %v511 = vpack.c.b16 %v481, %v479
      %v512 = vpack.c.b16 %v482, %v480
      %v513 = vpack.c.b16 %v485, %v483
      %v514 = vpack.c.b16 %v486, %v484
      %v515 = vpack.c.b16 %v489, %v487
      %v516 = vpack.c.b16 %v490, %v488
      %v517 = vpack.c.b16 %v493, %v491
      %v518 = vpack.c.b16 %v494, %v492
      %v519 = vpack.c.b16 %v497, %v495
      %v520 = vpack.c.b16 %v498, %v496
      %v521 = vpack.c.b16 %v501, %v499
      %v522 = vpack.c.b16 %v502, %v500
      %v523 = vpack.c.b16 %v505, %v503
      %v524 = vpack.c.b16 %v506, %v504
      %v525 = vpack.c.b16 %v509, %v507
      %v526 = vpack.c.b16 %v510, %v508
      %543 = vst [vmem:[#allocation2 + $0x10] sm:$0xff] %v511
      %544 = vst [vmem:[#allocation2 + $0x18] sm:$0xff] %v512
      %545 = vst [vmem:[#allocation2 + $0x20] sm:$0xff] %v513
      %546 = vst [vmem:[#allocation2 + $0x28] sm:$0xff] %v514
      %547 = vst [vmem:[#allocation2 + $0x30] sm:$0xff] %v515
      %548 = vst [vmem:[#allocation2 + $0x38] sm:$0xff] %v516
      %549 = vst [vmem:[#allocation2 + $0x40] sm:$0xff] %v517
      %550 = vst [vmem:[#allocation2 + $0x48] sm:$0xff] %v518
      %551 = vst [vmem:[#allocation2 + $0x50] sm:$0xff] %v519
      %552 = vst [vmem:[#allocation2 + $0x58] sm:$0xff] %v520
      %553 = vst [vmem:[#allocation2 + $0x60] sm:$0xff] %v521
      %554 = vst [vmem:[#allocation2 + $0x68] sm:$0xff] %v522
      %555 = vst [vmem:[#allocation2 + $0x70] sm:$0xff] %v523
      %556 = vst [vmem:[#allocation2 + $0x78] sm:$0xff] %v524
      %557 = vst [vmem:[#allocation2 + $0x80] sm:$0xff] %v525
      %558 = vst [vmem:[#allocation2 + $0x88] sm:$0xff] %v526
      %v559 = vld [vmem:[%s413] sm:$0xff]
      %v560 = vld [vmem:[%s413 + $0x8] sm:$0xff]
      %v563 = vunpack.c.l.b16 %v559
      %v564 = vunpack.c.h.b16 %v559
      %v565 = vunpack.c.l.b16 %v560
      %v566 = vunpack.c.h.b16 %v560
      %v567 = vpack.c.b16 %v565, %v563
      %v568 = vpack.c.b16 %v566, %v564
      %571 = vst [vmem:[#allocation2 + $0x90] sm:$0xff] %v567
      %572 = vst [vmem:[#allocation2 + $0x98] sm:$0xff] %v568
      %p573 = scmp.eq.s32.totalorder %s22, 0
      // Predicated region
      $region45: #{audio_enhancement_pallas.5} parent=43 // pred_check
        %p574 = pneg %p573
      $region46: #{audio_enhancement_pallas.5} parent=43 // pred_check_branch
        %576 = sbr.rel (%p574) target = $region48
      $region47: #{audio_enhancement_pallas.5} parent=43 // pred_region
        %577 = vst [vmem:[#allocation2] sm:$0xff] 0
        %578 = vst [vmem:[#allocation2 + $0x8] sm:$0xff] 0
      $region48: #{audio_enhancement_pallas.5} parent=43 // pred_fallthru
        _
      %s579 = sadd.s32 %s22, 1
      %s580 = smul.u32 %s579, 128
      %s581 = sadd.s32 %s580, 16
      %p582 = scmp.gt.s32.totalorder %s581, 128
      // Predicated region
      $region49: #{audio_enhancement_pallas.5} parent=43 // pred_check
        %p583 = pneg %p582
      $region50: #{audio_enhancement_pallas.5} parent=43 // pred_check_branch
        %585 = sbr.rel (%p583) target = $region52
      $region51: #{audio_enhancement_pallas.5} parent=43 // pred_region
        %v586 = vlaneseq
        %v587 = vshrl.u32 %v586, 7
        %v588 = vadd.s32 %v587, 8
        %v589 = vadd.s32 %v587, 16
        %v590 = vadd.s32 %v587, 24
        %v591 = vadd.s32 %v587, 32
        %v592 = vadd.s32 %v587, 40
        %v593 = vadd.s32 %v587, 48
        %v594 = vadd.s32 %v587, 56
        %v595 = vadd.s32 %v587, 64
        %v596 = vadd.s32 %v587, 72
        %v597 = vadd.s32 %v587, 80
        %v598 = vadd.s32 %v587, 88
        %v599 = vadd.s32 %v587, 96
        %v600 = vadd.s32 %v587, 104
        %v601 = vadd.s32 %v587, 112
        %v602 = vadd.s32 %v587, 120
        %v603 = vadd.s32 %v587, 128
        %v604 = vadd.s32 %v587, 136
        %v605 = vadd.s32 %v587, 144
        %v606 = vadd.s32 %v587, 152
        %s607 = smul.u32 %s22, 128
        %s608 = ssub.s32 %s607, 16
        %v609 = vstv %s608
        %v610 = vadd.s32 %v609, %v587
        %v611 = vadd.s32 %v609, %v588
        %v612 = vadd.s32 %v609, %v589
        %v613 = vadd.s32 %v609, %v590
        %v614 = vadd.s32 %v609, %v591
        %v615 = vadd.s32 %v609, %v592
        %v616 = vadd.s32 %v609, %v593
        %v617 = vadd.s32 %v609, %v594
        %v618 = vadd.s32 %v609, %v595
        %v619 = vadd.s32 %v609, %v596
        %v620 = vadd.s32 %v609, %v597
        %v621 = vadd.s32 %v609, %v598
        %v622 = vadd.s32 %v609, %v599
        %v623 = vadd.s32 %v609, %v600
        %v624 = vadd.s32 %v609, %v601
        %v625 = vadd.s32 %v609, %v602
        %v626 = vadd.s32 %v609, %v603
        %v627 = vadd.s32 %v609, %v604
        %v628 = vadd.s32 %v609, %v605
        %v629 = vadd.s32 %v609, %v606
        %vm630 = vcmp.ge.s32.totalorder %v610, 128
        %vm631 = vcmp.ge.s32.totalorder %v611, 128
        %vm632 = vcmp.ge.s32.totalorder %v612, 128
        %vm633 = vcmp.ge.s32.totalorder %v613, 128
        %vm634 = vcmp.ge.s32.totalorder %v614, 128
        %vm635 = vcmp.ge.s32.totalorder %v615, 128
        %vm636 = vcmp.ge.s32.totalorder %v616, 128
        %vm637 = vcmp.ge.s32.totalorder %v617, 128
        %vm638 = vcmp.ge.s32.totalorder %v618, 128
        %vm639 = vcmp.ge.s32.totalorder %v619, 128
        %vm640 = vcmp.ge.s32.totalorder %v620, 128
        %vm641 = vcmp.ge.s32.totalorder %v621, 128
        %vm642 = vcmp.ge.s32.totalorder %v622, 128
        %vm643 = vcmp.ge.s32.totalorder %v623, 128
        %vm644 = vcmp.ge.s32.totalorder %v624, 128
        %vm645 = vcmp.ge.s32.totalorder %v625, 128
        %vm646 = vcmp.ge.s32.totalorder %v626, 128
        %vm647 = vcmp.ge.s32.totalorder %v627, 128
        %vm648 = vcmp.ge.s32.totalorder %v628, 128
        %vm649 = vcmp.ge.s32.totalorder %v629, 128
        %v650 = vld [vmem:[#allocation2] sm:$0xff]
        %v651 = vld [vmem:[#allocation2 + $0x8] sm:$0xff]
        %v652 = vld [vmem:[#allocation2 + $0x10] sm:$0xff]
        %v653 = vld [vmem:[#allocation2 + $0x18] sm:$0xff]
        %v654 = vld [vmem:[#allocation2 + $0x20] sm:$0xff]
        %v655 = vld [vmem:[#allocation2 + $0x28] sm:$0xff]
        %v656 = vld [vmem:[#allocation2 + $0x30] sm:$0xff]
        %v657 = vld [vmem:[#allocation2 + $0x38] sm:$0xff]
        %v658 = vld [vmem:[#allocation2 + $0x40] sm:$0xff]
        %v659 = vld [vmem:[#allocation2 + $0x48] sm:$0xff]
        %v660 = vld [vmem:[#allocation2 + $0x50] sm:$0xff]
        %v661 = vld [vmem:[#allocation2 + $0x58] sm:$0xff]
        %v662 = vld [vmem:[#allocation2 + $0x60] sm:$0xff]
        %v663 = vld [vmem:[#allocation2 + $0x68] sm:$0xff]
        %v664 = vld [vmem:[#allocation2 + $0x70] sm:$0xff]
        %v665 = vld [vmem:[#allocation2 + $0x78] sm:$0xff]
        %v666 = vld [vmem:[#allocation2 + $0x80] sm:$0xff]
        %v667 = vld [vmem:[#allocation2 + $0x88] sm:$0xff]
        %v668 = vld [vmem:[#allocation2 + $0x90] sm:$0xff]
        %v669 = vld [vmem:[#allocation2 + $0x98] sm:$0xff]
        %v670 = vsel %vm630, 1, 0
        %v671 = vsel %vm631, 1, 0
        %v672 = vsel %vm632, 1, 0
        %v673 = vsel %vm633, 1, 0
        %v674 = vsel %vm634, 1, 0
        %v675 = vsel %vm635, 1, 0
        %v676 = vsel %vm636, 1, 0
        %v677 = vsel %vm637, 1, 0
        %v678 = vsel %vm638, 1, 0
        %v679 = vsel %vm639, 1, 0
        %v680 = vsel %vm640, 1, 0
        %v681 = vsel %vm641, 1, 0
        %v682 = vsel %vm642, 1, 0
        %v683 = vsel %vm643, 1, 0
        %v684 = vsel %vm644, 1, 0
        %v685 = vsel %vm645, 1, 0
        %v686 = vsel %vm646, 1, 0
        %v687 = vsel %vm647, 1, 0
        %v688 = vsel %vm648, 1, 0
        %v689 = vsel %vm649, 1, 0
        %vm690 = vcmp.eq.s32.totalorder %v670, 1
        %vm691 = vcmp.eq.s32.totalorder %v671, 1
        %vm692 = vcmp.eq.s32.totalorder %v672, 1
        %vm693 = vcmp.eq.s32.totalorder %v673, 1
        %vm694 = vcmp.eq.s32.totalorder %v674, 1
        %vm695 = vcmp.eq.s32.totalorder %v675, 1
        %vm696 = vcmp.eq.s32.totalorder %v676, 1
        %vm697 = vcmp.eq.s32.totalorder %v677, 1
        %vm698 = vcmp.eq.s32.totalorder %v678, 1
        %vm699 = vcmp.eq.s32.totalorder %v679, 1
        %vm700 = vcmp.eq.s32.totalorder %v680, 1
        %vm701 = vcmp.eq.s32.totalorder %v681, 1
        %vm702 = vcmp.eq.s32.totalorder %v682, 1
        %vm703 = vcmp.eq.s32.totalorder %v683, 1
        %vm704 = vcmp.eq.s32.totalorder %v684, 1
        %vm705 = vcmp.eq.s32.totalorder %v685, 1
        %vm706 = vcmp.eq.s32.totalorder %v686, 1
        %vm707 = vcmp.eq.s32.totalorder %v687, 1
        %vm708 = vcmp.eq.s32.totalorder %v688, 1
        %vm709 = vcmp.eq.s32.totalorder %v689, 1
        %vm710 = vmpackc.low %vm690, %vm690
        %vm711 = vmpackc.low %vm691, %vm691
        %vm712 = vmpackc.low %vm692, %vm692
        %vm713 = vmpackc.low %vm693, %vm693
        %vm714 = vmpackc.low %vm694, %vm694
        %vm715 = vmpackc.low %vm695, %vm695
        %vm716 = vmpackc.low %vm696, %vm696
        %vm717 = vmpackc.low %vm697, %vm697
        %vm718 = vmpackc.low %vm698, %vm698
        %vm719 = vmpackc.low %vm699, %vm699
        %vm720 = vmpackc.low %vm700, %vm700
        %vm721 = vmpackc.low %vm701, %vm701
        %vm722 = vmpackc.low %vm702, %vm702
        %vm723 = vmpackc.low %vm703, %vm703
        %vm724 = vmpackc.low %vm704, %vm704
        %vm725 = vmpackc.low %vm705, %vm705
        %vm726 = vmpackc.low %vm706, %vm706
        %vm727 = vmpackc.low %vm707, %vm707
        %vm728 = vmpackc.low %vm708, %vm708
        %vm729 = vmpackc.low %vm709, %vm709
        %v730 = vsel %vm710, 65537, 0
        %v731 = vsel %vm711, 65537, 0
        %v732 = vsel %vm712, 65537, 0
        %v733 = vsel %vm713, 65537, 0
        %v734 = vsel %vm714, 65537, 0
        %v735 = vsel %vm715, 65537, 0
        %v736 = vsel %vm716, 65537, 0
        %v737 = vsel %vm717, 65537, 0
        %v738 = vsel %vm718, 65537, 0
        %v739 = vsel %vm719, 65537, 0
        %v740 = vsel %vm720, 65537, 0
        %v741 = vsel %vm721, 65537, 0
        %v742 = vsel %vm722, 65537, 0
        %v743 = vsel %vm723, 65537, 0
        %v744 = vsel %vm724, 65537, 0
        %v745 = vsel %vm725, 65537, 0
        %v746 = vsel %vm726, 65537, 0
        %v747 = vsel %vm727, 65537, 0
        %v748 = vsel %vm728, 65537, 0
        %v749 = vsel %vm729, 65537, 0
        %v750 = vunpack.c.l.b16 %v730
        %v751 = vunpack.c.l.b16 %v731
        %v752 = vunpack.c.l.b16 %v732
        %v753 = vunpack.c.l.b16 %v733
        %v754 = vunpack.c.l.b16 %v734
        %v755 = vunpack.c.l.b16 %v735
        %v756 = vunpack.c.l.b16 %v736
        %v757 = vunpack.c.l.b16 %v737
        %v758 = vunpack.c.l.b16 %v738
        %v759 = vunpack.c.l.b16 %v739
        %v760 = vunpack.c.l.b16 %v740
        %v761 = vunpack.c.l.b16 %v741
        %v762 = vunpack.c.l.b16 %v742
        %v763 = vunpack.c.l.b16 %v743
        %v764 = vunpack.c.l.b16 %v744
        %v765 = vunpack.c.l.b16 %v745
        %v766 = vunpack.c.l.b16 %v746
        %v767 = vunpack.c.l.b16 %v747
        %v768 = vunpack.c.l.b16 %v748
        %v769 = vunpack.c.l.b16 %v749
        %v770 = vpack.c.b16 %v751, %v750
        %v771 = vpack.c.b16 %v753, %v752
        %v772 = vpack.c.b16 %v755, %v754
        %v773 = vpack.c.b16 %v757, %v756
        %v774 = vpack.c.b16 %v759, %v758
        %v775 = vpack.c.b16 %v761, %v760
        %v776 = vpack.c.b16 %v763, %v762
        %v777 = vpack.c.b16 %v765, %v764
        %v778 = vpack.c.b16 %v767, %v766
        %v779 = vpack.c.b16 %v769, %v768
        %vm780 = vcmp.ne.s16.totalorder %v770, 0
        %vm781 = vcmp.ne.s16.totalorder %v771, 0
        %vm782 = vcmp.ne.s16.totalorder %v772, 0
        %vm783 = vcmp.ne.s16.totalorder %v773, 0
        %vm784 = vcmp.ne.s16.totalorder %v774, 0
        %vm785 = vcmp.ne.s16.totalorder %v775, 0
        %vm786 = vcmp.ne.s16.totalorder %v776, 0
        %vm787 = vcmp.ne.s16.totalorder %v777, 0
        %vm788 = vcmp.ne.s16.totalorder %v778, 0
        %vm789 = vcmp.ne.s16.totalorder %v779, 0
        %v790 = vsel %vm780, 0, %v650
        %v791 = vsel %vm780, 0, %v651
        %v792 = vsel %vm781, 0, %v652
        %v793 = vsel %vm781, 0, %v653
        %v794 = vsel %vm782, 0, %v654
        %v795 = vsel %vm782, 0, %v655
        %v796 = vsel %vm783, 0, %v656
        %v797 = vsel %vm783, 0, %v657
        %v798 = vsel %vm784, 0, %v658
        %v799 = vsel %vm784, 0, %v659
        %v800 = vsel %vm785, 0, %v660
        %v801 = vsel %vm785, 0, %v661
        %v802 = vsel %vm786, 0, %v662
        %v803 = vsel %vm786, 0, %v663
        %v804 = vsel %vm787, 0, %v664
        %v805 = vsel %vm787, 0, %v665
        %v806 = vsel %vm788, 0, %v666
        %v807 = vsel %vm788, 0, %v667
        %v808 = vsel %vm789, 0, %v668
        %v809 = vsel %vm789, 0, %v669
        %810 = vst [vmem:[#allocation2] sm:$0xff] %v790
        %811 = vst [vmem:[#allocation2 + $0x8] sm:$0xff] %v791
        %812 = vst [vmem:[#allocation2 + $0x10] sm:$0xff] %v792
        %813 = vst [vmem:[#allocation2 + $0x18] sm:$0xff] %v793
        %814 = vst [vmem:[#allocation2 + $0x20] sm:$0xff] %v794
        %815 = vst [vmem:[#allocation2 + $0x28] sm:$0xff] %v795
        %816 = vst [vmem:[#allocation2 + $0x30] sm:$0xff] %v796
        %817 = vst [vmem:[#allocation2 + $0x38] sm:$0xff] %v797
        %818 = vst [vmem:[#allocation2 + $0x40] sm:$0xff] %v798
        %819 = vst [vmem:[#allocation2 + $0x48] sm:$0xff] %v799
        %820 = vst [vmem:[#allocation2 + $0x50] sm:$0xff] %v800
        %821 = vst [vmem:[#allocation2 + $0x58] sm:$0xff] %v801
        %822 = vst [vmem:[#allocation2 + $0x60] sm:$0xff] %v802
        %823 = vst [vmem:[#allocation2 + $0x68] sm:$0xff] %v803
        %824 = vst [vmem:[#allocation2 + $0x70] sm:$0xff] %v804
        %825 = vst [vmem:[#allocation2 + $0x78] sm:$0xff] %v805
        %826 = vst [vmem:[#allocation2 + $0x80] sm:$0xff] %v806
        %827 = vst [vmem:[#allocation2 + $0x88] sm:$0xff] %v807
        %828 = vst [vmem:[#allocation2 + $0x90] sm:$0xff] %v808
        %829 = vst [vmem:[#allocation2 + $0x98] sm:$0xff] %v809
      $region52: #{audio_enhancement_pallas.5} parent=43 // pred_fallthru
        _
      %v830 = vld [vmem:[#allocation2] sm:$0x80]
      %v831 = vld [vmem:[#allocation2 + $0x8] sm:$0x80]
      %v832 = vld [vmem:[#allocation2 + $0x10] sm:$0xff]
      %v833 = vld [vmem:[#allocation2 + $0x18] sm:$0xff]
      %v834 = vld [vmem:[#allocation2 + $0x20] sm:$0xff]
      %v835 = vld [vmem:[#allocation2 + $0x28] sm:$0xff]
      %v836 = vld [vmem:[#allocation2 + $0x30] sm:$0xff]
      %v837 = vld [vmem:[#allocation2 + $0x38] sm:$0xff]
      %v838 = vld [vmem:[#allocation2 + $0x40] sm:$0xff]
      %v839 = vld [vmem:[#allocation2 + $0x48] sm:$0xff]
      %v840 = vld [vmem:[#allocation2 + $0x50] sm:$0xff]
      %v841 = vld [vmem:[#allocation2 + $0x58] sm:$0xff]
      %v842 = vld [vmem:[#allocation2 + $0x60] sm:$0xff]
      %v843 = vld [vmem:[#allocation2 + $0x68] sm:$0xff]
      %v844 = vld [vmem:[#allocation2 + $0x70] sm:$0xff]
      %v845 = vld [vmem:[#allocation2 + $0x78] sm:$0xff]
      %v846 = vld [vmem:[#allocation2 + $0x80] sm:$0x7f]
      %v847 = vld [vmem:[#allocation2 + $0x88] sm:$0x7f]
      %v848 = vld [vmem:[%s3] sm:$0xff]
      %v849 = vld [vmem:[%s3 + $0x8] sm:$0xff]
      %v850 = vld [vmem:[%s3 + $0x10] sm:$0xff]
      %v851 = vld [vmem:[%s3 + $0x18] sm:$0xff]
      %v852 = vld [vmem:[%s3 + $0x20] sm:$0xff]
      %v853 = vld [vmem:[%s3 + $0x28] sm:$0xff]
      %v854 = vld [vmem:[%s3 + $0x30] sm:$0xff]
      %v855 = vld [vmem:[%s3 + $0x38] sm:$0xff]
      %v856 = vld [vmem:[%s3 + $0x40] sm:$0xff]
      %v857 = vld [vmem:[%s3 + $0x48] sm:$0xff]
      %v858 = vld [vmem:[%s3 + $0x50] sm:$0xff]
      %v859 = vld [vmem:[%s3 + $0x58] sm:$0xff]
      %v860 = vld [vmem:[%s3 + $0x60] sm:$0xff]
      %v861 = vld [vmem:[%s3 + $0x68] sm:$0xff]
      %v862 = vld [vmem:[%s3 + $0x70] sm:$0xff]
      %v863 = vld [vmem:[%s3 + $0x78] sm:$0xff]
      %v864 = vld [vmem:[%s3 + $0x80] sm:$0xff]
      %v865 = vld [vmem:[%s3 + $0x88] sm:$0xff]
      %v866 = vld [vmem:[%s3 + $0x90] sm:$0xff]
      %v867 = vld [vmem:[%s3 + $0x98] sm:$0xff]
      %v868 = vld [vmem:[%s3 + $0xa0] sm:$0xff]
      %v869 = vld [vmem:[%s3 + $0xa8] sm:$0xff]
      %v870 = vld [vmem:[%s3 + $0xb0] sm:$0xff]
      %v871 = vld [vmem:[%s3 + $0xb8] sm:$0xff]
      %v872 = vld [vmem:[%s3 + $0xc0] sm:$0xff]
      %v873 = vld [vmem:[%s3 + $0xc8] sm:$0xff]
      %v874 = vld [vmem:[%s3 + $0xd0] sm:$0xff]
      %v875 = vld [vmem:[%s3 + $0xd8] sm:$0xff]
      %v876 = vld [vmem:[%s3 + $0xe0] sm:$0xff]
      %v877 = vld [vmem:[%s3 + $0xe8] sm:$0xff]
      %v878 = vld [vmem:[%s3 + $0xf0] sm:$0xff]
      %v879 = vld [vmem:[%s3 + $0xf8] sm:$0xff]
      %v880 = vld [vmem:[#allocation2 + $0x80] sm:$0xff]
      %v881 = vld [vmem:[#allocation2 + $0x88] sm:$0xff]
      %s882 = scalar_lea.vmem %s3, 256
      %v883 = vld [vmem:[%s882] sm:$0xff]
      %v884 = vld [vmem:[%s882 + $0x8] sm:$0xff]
      %v885 = vld [vmem:[%s882 + $0x10] sm:$0xff]
      %v886 = vld [vmem:[%s882 + $0x18] sm:$0xff]
      %v887 = vld [vmem:[%s882 + $0x20] sm:$0xff]
      %v888 = vld [vmem:[%s882 + $0x28] sm:$0xff]
      %v889 = vld [vmem:[%s882 + $0x30] sm:$0xff]
      %v890 = vld [vmem:[%s882 + $0x38] sm:$0xff]
      %v891 = vld [vmem:[%s882 + $0x40] sm:$0xff]
      %v892 = vld [vmem:[%s882 + $0x48] sm:$0xff]
      %v893 = vld [vmem:[%s882 + $0x50] sm:$0xff]
      %v894 = vld [vmem:[%s882 + $0x58] sm:$0xff]
      %v895 = vld [vmem:[%s882 + $0x60] sm:$0xff]
      %v896 = vld [vmem:[%s882 + $0x68] sm:$0xff]
      %v897 = vld [vmem:[%s882 + $0x70] sm:$0xff]
      %v898 = vld [vmem:[%s882 + $0x78] sm:$0xff]
      %v899 = vld [vmem:[%s882 + $0x80] sm:$0xff]
      %v900 = vld [vmem:[%s882 + $0x88] sm:$0xff]
      %v901 = vld [vmem:[%s882 + $0x90] sm:$0xff]
      %v902 = vld [vmem:[%s882 + $0x98] sm:$0xff]
      %v903 = vld [vmem:[%s882 + $0xa0] sm:$0xff]
      %v904 = vld [vmem:[%s882 + $0xa8] sm:$0xff]
      %v905 = vld [vmem:[%s882 + $0xb0] sm:$0xff]
      %v906 = vld [vmem:[%s882 + $0xb8] sm:$0xff]
      %v907 = vld [vmem:[%s882 + $0xc0] sm:$0xff]
      %v908 = vld [vmem:[%s882 + $0xc8] sm:$0xff]
      %v909 = vld [vmem:[%s882 + $0xd0] sm:$0xff]
      %v910 = vld [vmem:[%s882 + $0xd8] sm:$0xff]
      %v911 = vld [vmem:[%s882 + $0xe0] sm:$0xff]
      %v912 = vld [vmem:[%s882 + $0xe8] sm:$0xff]
      %v913 = vld [vmem:[%s882 + $0xf0] sm:$0xff]
      %v914 = vld [vmem:[%s882 + $0xf8] sm:$0xff]
      %vm915 = vsmask.f32 256
      %v917 = vshrl.u32 %v830, 16
      %v919 = vrot.slane %v917, 7
      %v921 = vshrl.u32 %v832, 16
      %v923 = vrot.slane %v921, 7
      %v924 = vshll.u32 %v832, 16
      %v926 = vor.u32 %v923, %v924
      %v927 = vsel %vm915, %v919, %v926
      %v929 = vshrl.u32 %v831, 16
      %v931 = vrot.slane %v929, 7
      %v933 = vshrl.u32 %v833, 16
      %v935 = vrot.slane %v933, 7
      %v936 = vshll.u32 %v833, 16
      %v938 = vor.u32 %v935, %v936
      %v939 = vsel %vm915, %v931, %v938
      %v941 = vshrl.u32 %v834, 16
      %v943 = vrot.slane %v941, 7
      %v944 = vshll.u32 %v834, 16
      %v946 = vor.u32 %v943, %v944
      %v947 = vsel %vm915, %v923, %v946
      %v949 = vshrl.u32 %v835, 16
      %v951 = vrot.slane %v949, 7
      %v952 = vshll.u32 %v835, 16
      %v954 = vor.u32 %v951, %v952
      %v955 = vsel %vm915, %v935, %v954
      %v957 = vshrl.u32 %v836, 16
      %v959 = vrot.slane %v957, 7
      %v960 = vshll.u32 %v836, 16
      %v962 = vor.u32 %v959, %v960
      %v963 = vsel %vm915, %v943, %v962
      %v965 = vshrl.u32 %v837, 16
      %v967 = vrot.slane %v965, 7
      %v968 = vshll.u32 %v837, 16
      %v970 = vor.u32 %v967, %v968
      %v971 = vsel %vm915, %v951, %v970
      %v973 = vshrl.u32 %v838, 16
      %v975 = vrot.slane %v973, 7
      %v976 = vshll.u32 %v838, 16
      %v978 = vor.u32 %v975, %v976
      %v979 = vsel %vm915, %v959, %v978
      %v981 = vshrl.u32 %v839, 16
      %v983 = vrot.slane %v981, 7
      %v984 = vshll.u32 %v839, 16
      %v986 = vor.u32 %v983, %v984
      %v987 = vsel %vm915, %v967, %v986
      %v989 = vshrl.u32 %v840, 16
      %v991 = vrot.slane %v989, 7
      %v992 = vshll.u32 %v840, 16
      %v994 = vor.u32 %v991, %v992
      %v995 = vsel %vm915, %v975, %v994
      %v997 = vshrl.u32 %v841, 16
      %v999 = vrot.slane %v997, 7
      %v1000 = vshll.u32 %v841, 16
      %v1002 = vor.u32 %v999, %v1000
      %v1003 = vsel %vm915, %v983, %v1002
      %v1005 = vshrl.u32 %v842, 16
      %v1007 = vrot.slane %v1005, 7
      %v1008 = vshll.u32 %v842, 16
      %v1010 = vor.u32 %v1007, %v1008
      %v1011 = vsel %vm915, %v991, %v1010
      %v1013 = vshrl.u32 %v843, 16
      %v1015 = vrot.slane %v1013, 7
      %v1016 = vshll.u32 %v843, 16
      %v1018 = vor.u32 %v1015, %v1016
      %v1019 = vsel %vm915, %v999, %v1018
      %v1021 = vshrl.u32 %v844, 16
      %v1023 = vrot.slane %v1021, 7
      %v1024 = vshll.u32 %v844, 16
      %v1026 = vor.u32 %v1023, %v1024
      %v1027 = vsel %vm915, %v1007, %v1026
      %v1029 = vshrl.u32 %v845, 16
      %v1031 = vrot.slane %v1029, 7
      %v1032 = vshll.u32 %v845, 16
      %v1034 = vor.u32 %v1031, %v1032
      %v1035 = vsel %vm915, %v1015, %v1034
      %v1037 = vshrl.u32 %v880, 16
      %v1039 = vrot.slane %v1037, 7
      %v1040 = vshll.u32 %v880, 16
      %v1042 = vor.u32 %v1039, %v1040
      %v1043 = vsel %vm915, %v1023, %v1042
      %v1045 = vshrl.u32 %v881, 16
      %v1047 = vrot.slane %v1045, 7
      %v1048 = vshll.u32 %v881, 16
      %v1050 = vor.u32 %v1047, %v1048
      %v1051 = vsel %vm915, %v1031, %v1050
      %v1100 = vunpack.c.l.b16 %v883
      %v1101 = vunpack.c.h.b16 %v883
      %v1102 = vunpack.c.l.b16 %v884
      %v1103 = vunpack.c.h.b16 %v884
      %v1104 = vunpack.c.l.b16 %v885
      %v1105 = vunpack.c.h.b16 %v885
      %v1106 = vunpack.c.l.b16 %v886
      %v1107 = vunpack.c.h.b16 %v886
      %v1108 = vunpack.c.l.b16 %v887
      %v1109 = vunpack.c.h.b16 %v887
      %v1110 = vunpack.c.l.b16 %v888
      %v1111 = vunpack.c.h.b16 %v888
      %v1112 = vunpack.c.l.b16 %v889
      %v1113 = vunpack.c.h.b16 %v889
      %v1114 = vunpack.c.l.b16 %v890
      %v1115 = vunpack.c.h.b16 %v890
      %v1116 = vunpack.c.l.b16 %v891
      %v1117 = vunpack.c.h.b16 %v891
      %v1118 = vunpack.c.l.b16 %v892
      %v1119 = vunpack.c.h.b16 %v892
      %v1120 = vunpack.c.l.b16 %v893
      %v1121 = vunpack.c.h.b16 %v893
      %v1122 = vunpack.c.l.b16 %v894
      %v1123 = vunpack.c.h.b16 %v894
      %v1124 = vunpack.c.l.b16 %v895
      %v1125 = vunpack.c.h.b16 %v895
      %v1126 = vunpack.c.l.b16 %v896
      %v1127 = vunpack.c.h.b16 %v896
      %v1128 = vunpack.c.l.b16 %v897
      %v1129 = vunpack.c.h.b16 %v897
      %v1130 = vunpack.c.l.b16 %v898
      %v1131 = vunpack.c.h.b16 %v898
      %v1132 = vunpack.c.l.b16 %v899
      %v1133 = vunpack.c.h.b16 %v899
      %v1134 = vunpack.c.l.b16 %v900
      %v1135 = vunpack.c.h.b16 %v900
      %v1136 = vunpack.c.l.b16 %v901
      %v1137 = vunpack.c.h.b16 %v901
      %v1138 = vunpack.c.l.b16 %v902
      %v1139 = vunpack.c.h.b16 %v902
      %v1140 = vunpack.c.l.b16 %v903
      %v1141 = vunpack.c.h.b16 %v903
      %v1142 = vunpack.c.l.b16 %v904
      %v1143 = vunpack.c.h.b16 %v904
      %v1144 = vunpack.c.l.b16 %v905
      %v1145 = vunpack.c.h.b16 %v905
      %v1146 = vunpack.c.l.b16 %v906
      %v1147 = vunpack.c.h.b16 %v906
      %v1148 = vunpack.c.l.b16 %v907
      %v1149 = vunpack.c.h.b16 %v907
      %v1150 = vunpack.c.l.b16 %v908
      %v1151 = vunpack.c.h.b16 %v908
      %v1152 = vunpack.c.l.b16 %v909
      %v1153 = vunpack.c.h.b16 %v909
      %v1154 = vunpack.c.l.b16 %v910
      %v1155 = vunpack.c.h.b16 %v910
      %v1156 = vunpack.c.l.b16 %v911
      %v1157 = vunpack.c.h.b16 %v911
      %v1158 = vunpack.c.l.b16 %v912
      %v1159 = vunpack.c.h.b16 %v912
      %v1160 = vunpack.c.l.b16 %v913
      %v1161 = vunpack.c.h.b16 %v913
      %v1162 = vunpack.c.l.b16 %v914
      %v1163 = vunpack.c.h.b16 %v914
      %v1164 = vpack.c.b16 %v1102, %v1100
      %v1165 = vpack.c.b16 %v1103, %v1101
      %v1166 = vpack.c.b16 %v1106, %v1104
      %v1167 = vpack.c.b16 %v1107, %v1105
      %v1168 = vpack.c.b16 %v1110, %v1108
      %v1169 = vpack.c.b16 %v1111, %v1109
      %v1170 = vpack.c.b16 %v1114, %v1112
      %v1171 = vpack.c.b16 %v1115, %v1113
      %v1172 = vpack.c.b16 %v1118, %v1116
      %v1173 = vpack.c.b16 %v1119, %v1117
      %v1174 = vpack.c.b16 %v1122, %v1120
      %v1175 = vpack.c.b16 %v1123, %v1121
      %v1176 = vpack.c.b16 %v1126, %v1124
      %v1177 = vpack.c.b16 %v1127, %v1125
      %v1178 = vpack.c.b16 %v1130, %v1128
      %v1179 = vpack.c.b16 %v1131, %v1129
      %v1180 = vpack.c.b16 %v1134, %v1132
      %v1181 = vpack.c.b16 %v1135, %v1133
      %v1182 = vpack.c.b16 %v1138, %v1136
      %v1183 = vpack.c.b16 %v1139, %v1137
      %v1184 = vpack.c.b16 %v1142, %v1140
      %v1185 = vpack.c.b16 %v1143, %v1141
      %v1186 = vpack.c.b16 %v1146, %v1144
      %v1187 = vpack.c.b16 %v1147, %v1145
      %v1188 = vpack.c.b16 %v1150, %v1148
      %v1189 = vpack.c.b16 %v1151, %v1149
      %v1190 = vpack.c.b16 %v1154, %v1152
      %v1191 = vpack.c.b16 %v1155, %v1153
      %v1192 = vpack.c.b16 %v1158, %v1156
      %v1193 = vpack.c.b16 %v1159, %v1157
      %v1194 = vpack.c.b16 %v1162, %v1160
      %v1195 = vpack.c.b16 %v1163, %v1161
      %1228 = vmatprep.subr.bf16.mxu0 %v1165
      %1229 = vmatpush1.bf16.msra.mxu0 %v1164
      %1230 = vmatprep.subr.bf16.mxu0 %v1167
      %1231 = vmatpush1.bf16.msra.mxu0 %v1166
      %1232 = vmatprep.subr.bf16.mxu0 %v1169
      %1233 = vmatpush1.bf16.msra.mxu0 %v1168
      %1234 = vmatprep.subr.bf16.mxu0 %v1171
      %1235 = vmatpush1.bf16.msra.mxu0 %v1170
      %1236 = vmatprep.subr.bf16.mxu0 %v1173
      %1237 = vmatpush1.bf16.msra.mxu0 %v1172
      %1238 = vmatprep.subr.bf16.mxu0 %v1175
      %1239 = vmatpush1.bf16.msra.mxu0 %v1174
      %1240 = vmatprep.subr.bf16.mxu0 %v1177
      %1241 = vmatpush1.bf16.msra.mxu0 %v1176
      %1242 = vmatprep.subr.bf16.mxu0 %v1179
      %1243 = vmatpush1.bf16.msra.mxu0 %v1178
      %1244 = vmatprep.subr.bf16.mxu0 %v1181
      %1245 = vmatpush1.bf16.msra.mxu0 %v1180
      %1246 = vmatprep.subr.bf16.mxu0 %v1183
      %1247 = vmatpush1.bf16.msra.mxu0 %v1182
      %1248 = vmatprep.subr.bf16.mxu0 %v1185
      %1249 = vmatpush1.bf16.msra.mxu0 %v1184
      %1250 = vmatprep.subr.bf16.mxu0 %v1187
      %1251 = vmatpush1.bf16.msra.mxu0 %v1186
      %1252 = vmatprep.subr.bf16.mxu0 %v1189
      %1253 = vmatpush1.bf16.msra.mxu0 %v1188
      %1254 = vmatprep.subr.bf16.mxu0 %v1191
      %1255 = vmatpush1.bf16.msra.mxu0 %v1190
      %1256 = vmatprep.subr.bf16.mxu0 %v1193
      %1257 = vmatpush1.bf16.msra.mxu0 %v1192
      %1258 = vmatprep.subr.bf16.mxu0 %v1195
      %1259 = vmatpush1.bf16.msra.mxu0 %v1194
      %1260 = vmatprep.mubr.bf16.mxu0 %v939
      %1261 = vmatmul.mubr.bf16.gmra.mrb[0].mxu0 %v927
      %v1262 = vpop.f32.mrb[0].mxu0
      %v1263 = vadd.f32 0.0, %v1262
      %v1264 = vpop.f32.mrb[0].mxu0
      %v1265 = vadd.f32 0.0, %v1264
      %v1266 = vpop.f32.mrb[0].mxu0
      %v1267 = vadd.f32 0.0, %v1266
      %v1268 = vpop.f32.mrb[0].mxu0
      %v1269 = vadd.f32 0.0, %v1268
      %1270 = vmatprep.mubr.bf16.mxu0 %v955
      %1271 = vmatmul.mubr.bf16.gmra.mrb[0].mxu0 %v947
      %v1272 = vpop.f32.mrb[0].mxu0
      %v1273 = vadd.f32 0.0, %v1272
      %v1274 = vpop.f32.mrb[0].mxu0
      %v1275 = vadd.f32 0.0, %v1274
      %v1276 = vpop.f32.mrb[0].mxu0
      %v1277 = vadd.f32 0.0, %v1276
      %v1278 = vpop.f32.mrb[0].mxu0
      %v1279 = vadd.f32 0.0, %v1278
      %1280 = vmatprep.mubr.bf16.mxu0 %v971
      %1281 = vmatmul.mubr.bf16.gmra.mrb[0].mxu0 %v963
      %v1282 = vpop.f32.mrb[0].mxu0
      %v1283 = vadd.f32 0.0, %v1282
      %v1284 = vpop.f32.mrb[0].mxu0
      %v1285 = vadd.f32 0.0, %v1284
      %v1286 = vpop.f32.mrb[0].mxu0
      %v1287 = vadd.f32 0.0, %v1286
      %v1288 = vpop.f32.mrb[0].mxu0
      %v1289 = vadd.f32 0.0, %v1288
      %1290 = vmatprep.mubr.bf16.mxu0 %v987
      %1291 = vmatmul.mubr.bf16.gmra.mrb[0].mxu0 %v979
      %v1292 = vpop.f32.mrb[0].mxu0
      %v1293 = vadd.f32 0.0, %v1292
      %v1294 = vpop.f32.mrb[0].mxu0
      %v1295 = vadd.f32 0.0, %v1294
      %v1296 = vpop.f32.mrb[0].mxu0
      %v1297 = vadd.f32 0.0, %v1296
      %v1298 = vpop.f32.mrb[0].mxu0
      %v1299 = vadd.f32 0.0, %v1298
      %1300 = vmatprep.mubr.bf16.mxu0 %v1003
      %1301 = vmatmul.mubr.bf16.gmra.mrb[0].mxu0 %v995
      %v1302 = vpop.f32.mrb[0].mxu0
      %v1303 = vadd.f32 0.0, %v1302
      %v1304 = vpop.f32.mrb[0].mxu0
      %v1305 = vadd.f32 0.0, %v1304
      %v1306 = vpop.f32.mrb[0].mxu0
      %v1307 = vadd.f32 0.0, %v1306
      %v1308 = vpop.f32.mrb[0].mxu0
      %v1309 = vadd.f32 0.0, %v1308
      %1310 = vmatprep.mubr.bf16.mxu0 %v1019
      %1311 = vmatmul.mubr.bf16.gmra.mrb[0].mxu0 %v1011
      %v1312 = vpop.f32.mrb[0].mxu0
      %v1313 = vadd.f32 0.0, %v1312
      %v1314 = vpop.f32.mrb[0].mxu0
      %v1315 = vadd.f32 0.0, %v1314
      %v1316 = vpop.f32.mrb[0].mxu0
      %v1317 = vadd.f32 0.0, %v1316
      %v1318 = vpop.f32.mrb[0].mxu0
      %v1319 = vadd.f32 0.0, %v1318
      %1320 = vmatprep.mubr.bf16.mxu0 %v1035
      %1321 = vmatmul.mubr.bf16.gmra.mrb[0].mxu0 %v1027
      %v1322 = vpop.f32.mrb[0].mxu0
      %v1323 = vadd.f32 0.0, %v1322
      %v1324 = vpop.f32.mrb[0].mxu0
      %v1325 = vadd.f32 0.0, %v1324
      %v1326 = vpop.f32.mrb[0].mxu0
      %v1327 = vadd.f32 0.0, %v1326
      %v1328 = vpop.f32.mrb[0].mxu0
      %v1329 = vadd.f32 0.0, %v1328
      %1330 = vmatprep.mubr.bf16.mxu0 %v1051
      %1331 = vmatmul.mubr.bf16.gmra.mrb[0].mxu0 %v1043
      %v1332 = vpop.f32.mrb[0].mxu0
      %v1333 = vadd.f32 0.0, %v1332
      %v1334 = vpop.f32.mrb[0].mxu0
      %v1335 = vadd.f32 0.0, %v1334
      %v1336 = vpop.f32.mrb[0].mxu0
      %v1337 = vadd.f32 0.0, %v1336
      %v1338 = vpop.f32.mrb[0].mxu0
      %v1339 = vadd.f32 0.0, %v1338
      %1340 = vdwg.mxu0
      %vm1359 = vcmask 1040384
      %v1360 = vrot.slane %v830, 7
      %v1361 = vrot.slane %v832, 7
      %v1362 = vsel %vm1359, %v1360, %v1361
      %v1363 = vrot.slane %v831, 7
      %v1364 = vrot.slane %v833, 7
      %v1365 = vsel %vm1359, %v1363, %v1364
      %v1366 = vrot.slane %v834, 7
      %v1367 = vsel %vm1359, %v1361, %v1366
      %v1368 = vrot.slane %v835, 7
      %v1369 = vsel %vm1359, %v1364, %v1368
      %v1370 = vrot.slane %v836, 7
      %v1371 = vsel %vm1359, %v1366, %v1370
      %v1372 = vrot.slane %v837, 7
      %v1373 = vsel %vm1359, %v1368, %v1372
      %v1374 = vrot.slane %v838, 7
      %v1375 = vsel %vm1359, %v1370, %v1374
      %v1376 = vrot.slane %v839, 7
      %v1377 = vsel %vm1359, %v1372, %v1376
      %v1378 = vrot.slane %v840, 7
      %v1379 = vsel %vm1359, %v1374, %v1378
      %v1380 = vrot.slane %v841, 7
      %v1381 = vsel %vm1359, %v1376, %v1380
      %v1382 = vrot.slane %v842, 7
      %v1383 = vsel %vm1359, %v1378, %v1382
      %v1384 = vrot.slane %v843, 7
      %v1385 = vsel %vm1359, %v1380, %v1384
      %v1386 = vrot.slane %v844, 7
      %v1387 = vsel %vm1359, %v1382, %v1386
      %v1388 = vrot.slane %v845, 7
      %v1389 = vsel %vm1359, %v1384, %v1388
      %v1390 = vrot.slane %v846, 7
      %v1391 = vsel %vm1359, %v1386, %v1390
      %v1392 = vrot.slane %v847, 7
      %v1393 = vsel %vm1359, %v1388, %v1392
      %v1442 = vunpack.c.l.b16 %v848
      %v1443 = vunpack.c.h.b16 %v848
      %v1444 = vunpack.c.l.b16 %v849
      %v1445 = vunpack.c.h.b16 %v849
      %v1446 = vunpack.c.l.b16 %v850
      %v1447 = vunpack.c.h.b16 %v850
      %v1448 = vunpack.c.l.b16 %v851
      %v1449 = vunpack.c.h.b16 %v851
      %v1450 = vunpack.c.l.b16 %v852
      %v1451 = vunpack.c.h.b16 %v852
      %v1452 = vunpack.c.l.b16 %v853
      %v1453 = vunpack.c.h.b16 %v853
      %v1454 = vunpack.c.l.b16 %v854
      %v1455 = vunpack.c.h.b16 %v854
      %v1456 = vunpack.c.l.b16 %v855
      %v1457 = vunpack.c.h.b16 %v855
      %v1458 = vunpack.c.l.b16 %v856
      %v1459 = vunpack.c.h.b16 %v856
      %v1460 = vunpack.c.l.b16 %v857
      %v1461 = vunpack.c.h.b16 %v857
      %v1462 = vunpack.c.l.b16 %v858
      %v1463 = vunpack.c.h.b16 %v858
      %v1464 = vunpack.c.l.b16 %v859
      %v1465 = vunpack.c.h.b16 %v859
      %v1466 = vunpack.c.l.b16 %v860
      %v1467 = vunpack.c.h.b16 %v860
      %v1468 = vunpack.c.l.b16 %v861
      %v1469 = vunpack.c.h.b16 %v861
      %v1470 = vunpack.c.l.b16 %v862
      %v1471 = vunpack.c.h.b16 %v862
      %v1472 = vunpack.c.l.b16 %v863
      %v1473 = vunpack.c.h.b16 %v863
      %v1474 = vunpack.c.l.b16 %v864
      %v1475 = vunpack.c.h.b16 %v864
      %v1476 = vunpack.c.l.b16 %v865
      %v1477 = vunpack.c.h.b16 %v865
      %v1478 = vunpack.c.l.b16 %v866
      %v1479 = vunpack.c.h.b16 %v866
      %v1480 = vunpack.c.l.b16 %v867
      %v1481 = vunpack.c.h.b16 %v867
      %v1482 = vunpack.c.l.b16 %v868
      %v1483 = vunpack.c.h.b16 %v868
      %v1484 = vunpack.c.l.b16 %v869
      %v1485 = vunpack.c.h.b16 %v869
      %v1486 = vunpack.c.l.b16 %v870
      %v1487 = vunpack.c.h.b16 %v870
      %v1488 = vunpack.c.l.b16 %v871
      %v1489 = vunpack.c.h.b16 %v871
      %v1490 = vunpack.c.l.b16 %v872
      %v1491 = vunpack.c.h.b16 %v872
      %v1492 = vunpack.c.l.b16 %v873
      %v1493 = vunpack.c.h.b16 %v873
      %v1494 = vunpack.c.l.b16 %v874
      %v1495 = vunpack.c.h.b16 %v874
      %v1496 = vunpack.c.l.b16 %v875
      %v1497 = vunpack.c.h.b16 %v875
      %v1498 = vunpack.c.l.b16 %v876
      %v1499 = vunpack.c.h.b16 %v876
      %v1500 = vunpack.c.l.b16 %v877
      %v1501 = vunpack.c.h.b16 %v877
      %v1502 = vunpack.c.l.b16 %v878
      %v1503 = vunpack.c.h.b16 %v878
      %v1504 = vunpack.c.l.b16 %v879
      %v1505 = vunpack.c.h.b16 %v879
      %v1506 = vpack.c.b16 %v1444, %v1442
      %v1507 = vpack.c.b16 %v1445, %v1443
      %v1508 = vpack.c.b16 %v1448, %v1446
      %v1509 = vpack.c.b16 %v1449, %v1447
      %v1510 = vpack.c.b16 %v1452, %v1450
      %v1511 = vpack.c.b16 %v1453, %v1451
      %v1512 = vpack.c.b16 %v1456, %v1454
      %v1513 = vpack.c.b16 %v1457, %v1455
      %v1514 = vpack.c.b16 %v1460, %v1458
      %v1515 = vpack.c.b16 %v1461, %v1459
      %v1516 = vpack.c.b16 %v1464, %v1462
      %v1517 = vpack.c.b16 %v1465, %v1463
      %v1518 = vpack.c.b16 %v1468, %v1466
      %v1519 = vpack.c.b16 %v1469, %v1467
      %v1520 = vpack.c.b16 %v1472, %v1470
      %v1521 = vpack.c.b16 %v1473, %v1471
      %v1522 = vpack.c.b16 %v1476, %v1474
      %v1523 = vpack.c.b16 %v1477, %v1475
      %v1524 = vpack.c.b16 %v1480, %v1478
      %v1525 = vpack.c.b16 %v1481, %v1479
      %v1526 = vpack.c.b16 %v1484, %v1482
      %v1527 = vpack.c.b16 %v1485, %v1483
      %v1528 = vpack.c.b16 %v1488, %v1486
      %v1529 = vpack.c.b16 %v1489, %v1487
      %v1530 = vpack.c.b16 %v1492, %v1490
      %v1531 = vpack.c.b16 %v1493, %v1491
      %v1532 = vpack.c.b16 %v1496, %v1494
      %v1533 = vpack.c.b16 %v1497, %v1495
      %v1534 = vpack.c.b16 %v1500, %v1498
      %v1535 = vpack.c.b16 %v1501, %v1499
      %v1536 = vpack.c.b16 %v1504, %v1502
      %v1537 = vpack.c.b16 %v1505, %v1503
      %1570 = vmatprep.subr.bf16.mxu0 %v1507
      %1571 = vmatpush1.bf16.msra.mxu0 %v1506
      %1572 = vmatprep.subr.bf16.mxu0 %v1509
      %1573 = vmatpush1.bf16.msra.mxu0 %v1508
      %1574 = vmatprep.subr.bf16.mxu0 %v1511
      %1575 = vmatpush1.bf16.msra.mxu0 %v1510
      %1576 = vmatprep.subr.bf16.mxu0 %v1513
      %1577 = vmatpush1.bf16.msra.mxu0 %v1512
      %1578 = vmatprep.subr.bf16.mxu0 %v1515
      %1579 = vmatpush1.bf16.msra.mxu0 %v1514
      %1580 = vmatprep.subr.bf16.mxu0 %v1517
      %1581 = vmatpush1.bf16.msra.mxu0 %v1516
      %1582 = vmatprep.subr.bf16.mxu0 %v1519
      %1583 = vmatpush1.bf16.msra.mxu0 %v1518
      %1584 = vmatprep.subr.bf16.mxu0 %v1521
      %1585 = vmatpush1.bf16.msra.mxu0 %v1520
      %1586 = vmatprep.subr.bf16.mxu0 %v1523
      %1587 = vmatpush1.bf16.msra.mxu0 %v1522
      %1588 = vmatprep.subr.bf16.mxu0 %v1525
      %1589 = vmatpush1.bf16.msra.mxu0 %v1524
      %1590 = vmatprep.subr.bf16.mxu0 %v1527
      %1591 = vmatpush1.bf16.msra.mxu0 %v1526
      %1592 = vmatprep.subr.bf16.mxu0 %v1529
      %1593 = vmatpush1.bf16.msra.mxu0 %v1528
      %1594 = vmatprep.subr.bf16.mxu0 %v1531
      %1595 = vmatpush1.bf16.msra.mxu0 %v1530
      %1596 = vmatprep.subr.bf16.mxu0 %v1533
      %1597 = vmatpush1.bf16.msra.mxu0 %v1532
      %1598 = vmatprep.subr.bf16.mxu0 %v1535
      %1599 = vmatpush1.bf16.msra.mxu0 %v1534
      %1600 = vmatprep.subr.bf16.mxu0 %v1537
      %1601 = vmatpush1.bf16.msra.mxu0 %v1536
      %1602 = vmatprep.mubr.bf16.mxu0 %v1365
      %1603 = vmatmul.mubr.bf16.gmra.mrb[0].mxu0 %v1362
      %v1604 = vpop.f32.mrb[0].mxu0
      %v1605 = vadd.f32 %v1263, %v1604
      %v1606 = vpop.f32.mrb[0].mxu0
      %v1607 = vadd.f32 %v1265, %v1606
      %v1608 = vpop.f32.mrb[0].mxu0
      %v1609 = vadd.f32 %v1267, %v1608
      %v1610 = vpop.f32.mrb[0].mxu0
      %v1611 = vadd.f32 %v1269, %v1610
      %1612 = vmatprep.mubr.bf16.mxu0 %v1369
      %1613 = vmatmul.mubr.bf16.gmra.mrb[0].mxu0 %v1367
      %v1614 = vpop.f32.mrb[0].mxu0
      %v1615 = vadd.f32 %v1273, %v1614
      %v1616 = vpop.f32.mrb[0].mxu0
      %v1617 = vadd.f32 %v1275, %v1616
      %v1618 = vpop.f32.mrb[0].mxu0
      %v1619 = vadd.f32 %v1277, %v1618
      %v1620 = vpop.f32.mrb[0].mxu0
      %v1621 = vadd.f32 %v1279, %v1620
      %1622 = vmatprep.mubr.bf16.mxu0 %v1373
      %1623 = vmatmul.mubr.bf16.gmra.mrb[0].mxu0 %v1371
      %v1624 = vpop.f32.mrb[0].mxu0
      %v1625 = vadd.f32 %v1283, %v1624
      %v1626 = vpop.f32.mrb[0].mxu0
      %v1627 = vadd.f32 %v1285, %v1626
      %v1628 = vpop.f32.mrb[0].mxu0
      %v1629 = vadd.f32 %v1287, %v1628
      %v1630 = vpop.f32.mrb[0].mxu0
      %v1631 = vadd.f32 %v1289, %v1630
      %1632 = vmatprep.mubr.bf16.mxu0 %v1377
      %1633 = vmatmul.mubr.bf16.gmra.mrb[0].mxu0 %v1375
      %v1634 = vpop.f32.mrb[0].mxu0
      %v1635 = vadd.f32 %v1293, %v1634
      %v1636 = vpop.f32.mrb[0].mxu0
      %v1637 = vadd.f32 %v1295, %v1636
      %v1638 = vpop.f32.mrb[0].mxu0
      %v1639 = vadd.f32 %v1297, %v1638
      %v1640 = vpop.f32.mrb[0].mxu0
      %v1641 = vadd.f32 %v1299, %v1640
      %1642 = vmatprep.mubr.bf16.mxu0 %v1381
      %1643 = vmatmul.mubr.bf16.gmra.mrb[0].mxu0 %v1379
      %v1644 = vpop.f32.mrb[0].mxu0
      %v1645 = vadd.f32 %v1303, %v1644
      %v1646 = vpop.f32.mrb[0].mxu0
      %v1647 = vadd.f32 %v1305, %v1646
      %v1648 = vpop.f32.mrb[0].mxu0
      %v1649 = vadd.f32 %v1307, %v1648
      %v1650 = vpop.f32.mrb[0].mxu0
      %v1651 = vadd.f32 %v1309, %v1650
      %1652 = vmatprep.mubr.bf16.mxu0 %v1385
      %1653 = vmatmul.mubr.bf16.gmra.mrb[0].mxu0 %v1383
      %v1654 = vpop.f32.mrb[0].mxu0
      %v1655 = vadd.f32 %v1313, %v1654
      %v1656 = vpop.f32.mrb[0].mxu0
      %v1657 = vadd.f32 %v1315, %v1656
      %v1658 = vpop.f32.mrb[0].mxu0
      %v1659 = vadd.f32 %v1317, %v1658
      %v1660 = vpop.f32.mrb[0].mxu0
      %v1661 = vadd.f32 %v1319, %v1660
      %1662 = vmatprep.mubr.bf16.mxu0 %v1389
      %1663 = vmatmul.mubr.bf16.gmra.mrb[0].mxu0 %v1387
      %v1664 = vpop.f32.mrb[0].mxu0
      %v1665 = vadd.f32 %v1323, %v1664
      %v1666 = vpop.f32.mrb[0].mxu0
      %v1667 = vadd.f32 %v1325, %v1666
      %v1668 = vpop.f32.mrb[0].mxu0
      %v1669 = vadd.f32 %v1327, %v1668
      %v1670 = vpop.f32.mrb[0].mxu0
      %v1671 = vadd.f32 %v1329, %v1670
      %1672 = vmatprep.mubr.bf16.mxu0 %v1393
      %1673 = vmatmul.mubr.bf16.gmra.mrb[0].mxu0 %v1391
      %v1674 = vpop.f32.mrb[0].mxu0
      %v1675 = vadd.f32 %v1333, %v1674
      %v1676 = vpop.f32.mrb[0].mxu0
      %v1677 = vadd.f32 %v1335, %v1676
      %v1678 = vpop.f32.mrb[0].mxu0
      %v1679 = vadd.f32 %v1337, %v1678
      %v1680 = vpop.f32.mrb[0].mxu0
      %v1681 = vadd.f32 %v1339, %v1680
      %1682 = vdwg.mxu0
      %s1683 = scalar_lea.vmem %s3, 512
      %v1684 = vld [vmem:[%s1683] sm:$0xff]
      %v1685 = vld [vmem:[%s1683 + $0x8] sm:$0xff]
      %v1686 = vld [vmem:[%s1683 + $0x10] sm:$0xff]
      %v1687 = vld [vmem:[%s1683 + $0x18] sm:$0xff]
      %v1688 = vld [vmem:[%s1683 + $0x20] sm:$0xff]
      %v1689 = vld [vmem:[%s1683 + $0x28] sm:$0xff]
      %v1690 = vld [vmem:[%s1683 + $0x30] sm:$0xff]
      %v1691 = vld [vmem:[%s1683 + $0x38] sm:$0xff]
      %v1692 = vld [vmem:[%s1683 + $0x40] sm:$0xff]
      %v1693 = vld [vmem:[%s1683 + $0x48] sm:$0xff]
      %v1694 = vld [vmem:[%s1683 + $0x50] sm:$0xff]
      %v1695 = vld [vmem:[%s1683 + $0x58] sm:$0xff]
      %v1696 = vld [vmem:[%s1683 + $0x60] sm:$0xff]
      %v1697 = vld [vmem:[%s1683 + $0x68] sm:$0xff]
      %v1698 = vld [vmem:[%s1683 + $0x70] sm:$0xff]
      %v1699 = vld [vmem:[%s1683 + $0x78] sm:$0xff]
      %v1700 = vld [vmem:[%s1683 + $0x80] sm:$0xff]
      %v1701 = vld [vmem:[%s1683 + $0x88] sm:$0xff]
      %v1702 = vld [vmem:[%s1683 + $0x90] sm:$0xff]
      %v1703 = vld [vmem:[%s1683 + $0x98] sm:$0xff]
      %v1704 = vld [vmem:[%s1683 + $0xa0] sm:$0xff]
      %v1705 = vld [vmem:[%s1683 + $0xa8] sm:$0xff]
      %v1706 = vld [vmem:[%s1683 + $0xb0] sm:$0xff]
      %v1707 = vld [vmem:[%s1683 + $0xb8] sm:$0xff]
      %v1708 = vld [vmem:[%s1683 + $0xc0] sm:$0xff]
      %v1709 = vld [vmem:[%s1683 + $0xc8] sm:$0xff]
      %v1710 = vld [vmem:[%s1683 + $0xd0] sm:$0xff]
      %v1711 = vld [vmem:[%s1683 + $0xd8] sm:$0xff]
      %v1712 = vld [vmem:[%s1683 + $0xe0] sm:$0xff]
      %v1713 = vld [vmem:[%s1683 + $0xe8] sm:$0xff]
      %v1714 = vld [vmem:[%s1683 + $0xf0] sm:$0xff]
      %v1715 = vld [vmem:[%s1683 + $0xf8] sm:$0xff]
      %v1748 = vunpack.c.l.b16 %v1684
      %v1749 = vunpack.c.h.b16 %v1684
      %v1750 = vunpack.c.l.b16 %v1685
      %v1751 = vunpack.c.h.b16 %v1685
      %v1752 = vunpack.c.l.b16 %v1686
      %v1753 = vunpack.c.h.b16 %v1686
      %v1754 = vunpack.c.l.b16 %v1687
      %v1755 = vunpack.c.h.b16 %v1687
      %v1756 = vunpack.c.l.b16 %v1688
      %v1757 = vunpack.c.h.b16 %v1688
      %v1758 = vunpack.c.l.b16 %v1689
      %v1759 = vunpack.c.h.b16 %v1689
      %v1760 = vunpack.c.l.b16 %v1690
      %v1761 = vunpack.c.h.b16 %v1690
      %v1762 = vunpack.c.l.b16 %v1691
      %v1763 = vunpack.c.h.b16 %v1691
      %v1764 = vunpack.c.l.b16 %v1692
      %v1765 = vunpack.c.h.b16 %v1692
      %v1766 = vunpack.c.l.b16 %v1693
      %v1767 = vunpack.c.h.b16 %v1693
      %v1768 = vunpack.c.l.b16 %v1694
      %v1769 = vunpack.c.h.b16 %v1694
      %v1770 = vunpack.c.l.b16 %v1695
      %v1771 = vunpack.c.h.b16 %v1695
      %v1772 = vunpack.c.l.b16 %v1696
      %v1773 = vunpack.c.h.b16 %v1696
      %v1774 = vunpack.c.l.b16 %v1697
      %v1775 = vunpack.c.h.b16 %v1697
      %v1776 = vunpack.c.l.b16 %v1698
      %v1777 = vunpack.c.h.b16 %v1698
      %v1778 = vunpack.c.l.b16 %v1699
      %v1779 = vunpack.c.h.b16 %v1699
      %v1780 = vunpack.c.l.b16 %v1700
      %v1781 = vunpack.c.h.b16 %v1700
      %v1782 = vunpack.c.l.b16 %v1701
      %v1783 = vunpack.c.h.b16 %v1701
      %v1784 = vunpack.c.l.b16 %v1702
      %v1785 = vunpack.c.h.b16 %v1702
      %v1786 = vunpack.c.l.b16 %v1703
      %v1787 = vunpack.c.h.b16 %v1703
      %v1788 = vunpack.c.l.b16 %v1704
      %v1789 = vunpack.c.h.b16 %v1704
      %v1790 = vunpack.c.l.b16 %v1705
      %v1791 = vunpack.c.h.b16 %v1705
      %v1792 = vunpack.c.l.b16 %v1706
      %v1793 = vunpack.c.h.b16 %v1706
      %v1794 = vunpack.c.l.b16 %v1707
      %v1795 = vunpack.c.h.b16 %v1707
      %v1796 = vunpack.c.l.b16 %v1708
      %v1797 = vunpack.c.h.b16 %v1708
      %v1798 = vunpack.c.l.b16 %v1709
      %v1799 = vunpack.c.h.b16 %v1709
      %v1800 = vunpack.c.l.b16 %v1710
      %v1801 = vunpack.c.h.b16 %v1710
      %v1802 = vunpack.c.l.b16 %v1711
      %v1803 = vunpack.c.h.b16 %v1711
      %v1804 = vunpack.c.l.b16 %v1712
      %v1805 = vunpack.c.h.b16 %v1712
      %v1806 = vunpack.c.l.b16 %v1713
      %v1807 = vunpack.c.h.b16 %v1713
      %v1808 = vunpack.c.l.b16 %v1714
      %v1809 = vunpack.c.h.b16 %v1714
      %v1810 = vunpack.c.l.b16 %v1715
      %v1811 = vunpack.c.h.b16 %v1715
      %v1812 = vpack.c.b16 %v1750, %v1748
      %v1813 = vpack.c.b16 %v1751, %v1749
      %v1814 = vpack.c.b16 %v1754, %v1752
      %v1815 = vpack.c.b16 %v1755, %v1753
      %v1816 = vpack.c.b16 %v1758, %v1756
      %v1817 = vpack.c.b16 %v1759, %v1757
      %v1818 = vpack.c.b16 %v1762, %v1760
      %v1819 = vpack.c.b16 %v1763, %v1761
      %v1820 = vpack.c.b16 %v1766, %v1764
      %v1821 = vpack.c.b16 %v1767, %v1765
      %v1822 = vpack.c.b16 %v1770, %v1768
      %v1823 = vpack.c.b16 %v1771, %v1769
      %v1824 = vpack.c.b16 %v1774, %v1772
      %v1825 = vpack.c.b16 %v1775, %v1773
      %v1826 = vpack.c.b16 %v1778, %v1776
      %v1827 = vpack.c.b16 %v1779, %v1777
      %v1828 = vpack.c.b16 %v1782, %v1780
      %v1829 = vpack.c.b16 %v1783, %v1781
      %v1830 = vpack.c.b16 %v1786, %v1784
      %v1831 = vpack.c.b16 %v1787, %v1785
      %v1832 = vpack.c.b16 %v1790, %v1788
      %v1833 = vpack.c.b16 %v1791, %v1789
      %v1834 = vpack.c.b16 %v1794, %v1792
      %v1835 = vpack.c.b16 %v1795, %v1793
      %v1836 = vpack.c.b16 %v1798, %v1796
      %v1837 = vpack.c.b16 %v1799, %v1797
      %v1838 = vpack.c.b16 %v1802, %v1800
      %v1839 = vpack.c.b16 %v1803, %v1801
      %v1840 = vpack.c.b16 %v1806, %v1804
      %v1841 = vpack.c.b16 %v1807, %v1805
      %v1842 = vpack.c.b16 %v1810, %v1808
      %v1843 = vpack.c.b16 %v1811, %v1809
      %1876 = vmatprep.subr.bf16.mxu0 %v1813
      %1877 = vmatpush1.bf16.msra.mxu0 %v1812
      %1878 = vmatprep.subr.bf16.mxu0 %v1815
      %1879 = vmatpush1.bf16.msra.mxu0 %v1814
      %1880 = vmatprep.subr.bf16.mxu0 %v1817
      %1881 = vmatpush1.bf16.msra.mxu0 %v1816
      %1882 = vmatprep.subr.bf16.mxu0 %v1819
      %1883 = vmatpush1.bf16.msra.mxu0 %v1818
      %1884 = vmatprep.subr.bf16.mxu0 %v1821
      %1885 = vmatpush1.bf16.msra.mxu0 %v1820
      %1886 = vmatprep.subr.bf16.mxu0 %v1823
      %1887 = vmatpush1.bf16.msra.mxu0 %v1822
      %1888 = vmatprep.subr.bf16.mxu0 %v1825
      %1889 = vmatpush1.bf16.msra.mxu0 %v1824
      %1890 = vmatprep.subr.bf16.mxu0 %v1827
      %1891 = vmatpush1.bf16.msra.mxu0 %v1826
      %1892 = vmatprep.subr.bf16.mxu0 %v1829
      %1893 = vmatpush1.bf16.msra.mxu0 %v1828
      %1894 = vmatprep.subr.bf16.mxu0 %v1831
      %1895 = vmatpush1.bf16.msra.mxu0 %v1830
      %1896 = vmatprep.subr.bf16.mxu0 %v1833
      %1897 = vmatpush1.bf16.msra.mxu0 %v1832
      %1898 = vmatprep.subr.bf16.mxu0 %v1835
      %1899 = vmatpush1.bf16.msra.mxu0 %v1834
      %1900 = vmatprep.subr.bf16.mxu0 %v1837
      %1901 = vmatpush1.bf16.msra.mxu0 %v1836
      %1902 = vmatprep.subr.bf16.mxu0 %v1839
      %1903 = vmatpush1.bf16.msra.mxu0 %v1838
      %1904 = vmatprep.subr.bf16.mxu0 %v1841
      %1905 = vmatpush1.bf16.msra.mxu0 %v1840
      %1906 = vmatprep.subr.bf16.mxu0 %v1843
      %1907 = vmatpush1.bf16.msra.mxu0 %v1842
      %1908 = vmatprep.mubr.bf16.mxu0 %v833
      %1909 = vmatmul.mubr.bf16.gmra.mrb[0].mxu0 %v832
      %v1910 = vpop.f32.mrb[0].mxu0
      %v1911 = vadd.f32 0.0, %v1910
      %v1912 = vpop.f32.mrb[0].mxu0
      %v1913 = vadd.f32 0.0, %v1912
      %v1914 = vpop.f32.mrb[0].mxu0
      %v1915 = vadd.f32 0.0, %v1914
      %v1916 = vpop.f32.mrb[0].mxu0
      %v1917 = vadd.f32 0.0, %v1916
      %1918 = vmatprep.mubr.bf16.mxu0 %v835
      %1919 = vmatmul.mubr.bf16.gmra.mrb[0].mxu0 %v834
      %v1920 = vpop.f32.mrb[0].mxu0
      %v1921 = vadd.f32 0.0, %v1920
      %v1922 = vpop.f32.mrb[0].mxu0
      %v1923 = vadd.f32 0.0, %v1922
      %v1924 = vpop.f32.mrb[0].mxu0
      %v1925 = vadd.f32 0.0, %v1924
      %v1926 = vpop.f32.mrb[0].mxu0
      %v1927 = vadd.f32 0.0, %v1926
      %1928 = vmatprep.mubr.bf16.mxu0 %v837
      %1929 = vmatmul.mubr.bf16.gmra.mrb[0].mxu0 %v836
      %v1930 = vpop.f32.mrb[0].mxu0
      %v1931 = vadd.f32 0.0, %v1930
      %v1932 = vpop.f32.mrb[0].mxu0
      %v1933 = vadd.f32 0.0, %v1932
      %v1934 = vpop.f32.mrb[0].mxu0
      %v1935 = vadd.f32 0.0, %v1934
      %v1936 = vpop.f32.mrb[0].mxu0
      %v1937 = vadd.f32 0.0, %v1936
      %1938 = vmatprep.mubr.bf16.mxu0 %v839
      %1939 = vmatmul.mubr.bf16.gmra.mrb[0].mxu0 %v838
      %v1940 = vpop.f32.mrb[0].mxu0
      %v1941 = vadd.f32 0.0, %v1940
      %v1942 = vpop.f32.mrb[0].mxu0
      %v1943 = vadd.f32 0.0, %v1942
      %v1944 = vpop.f32.mrb[0].mxu0
      %v1945 = vadd.f32 0.0, %v1944
      %v1946 = vpop.f32.mrb[0].mxu0
      %v1947 = vadd.f32 0.0, %v1946
      %1948 = vmatprep.mubr.bf16.mxu0 %v841
      %1949 = vmatmul.mubr.bf16.gmra.mrb[0].mxu0 %v840
      %v1950 = vpop.f32.mrb[0].mxu0
      %v1951 = vadd.f32 0.0, %v1950
      %v1952 = vpop.f32.mrb[0].mxu0
      %v1953 = vadd.f32 0.0, %v1952
      %v1954 = vpop.f32.mrb[0].mxu0
      %v1955 = vadd.f32 0.0, %v1954
      %v1956 = vpop.f32.mrb[0].mxu0
      %v1957 = vadd.f32 0.0, %v1956
      %1958 = vmatprep.mubr.bf16.mxu0 %v843
      %1959 = vmatmul.mubr.bf16.gmra.mrb[0].mxu0 %v842
      %v1960 = vpop.f32.mrb[0].mxu0
      %v1961 = vadd.f32 0.0, %v1960
      %v1962 = vpop.f32.mrb[0].mxu0
      %v1963 = vadd.f32 0.0, %v1962
      %v1964 = vpop.f32.mrb[0].mxu0
      %v1965 = vadd.f32 0.0, %v1964
      %v1966 = vpop.f32.mrb[0].mxu0
      %v1967 = vadd.f32 0.0, %v1966
      %1968 = vmatprep.mubr.bf16.mxu0 %v845
      %1969 = vmatmul.mubr.bf16.gmra.mrb[0].mxu0 %v844
      %v1970 = vpop.f32.mrb[0].mxu0
      %v1971 = vadd.f32 0.0, %v1970
      %v1972 = vpop.f32.mrb[0].mxu0
      %v1973 = vadd.f32 0.0, %v1972
      %v1974 = vpop.f32.mrb[0].mxu0
      %v1975 = vadd.f32 0.0, %v1974
      %v1976 = vpop.f32.mrb[0].mxu0
      %v1977 = vadd.f32 0.0, %v1976
      %1978 = vmatprep.mubr.bf16.mxu0 %v881
      %1979 = vmatmul.mubr.bf16.gmra.mrb[0].mxu0 %v880
      %v1980 = vpop.f32.mrb[0].mxu0
      %v1981 = vadd.f32 0.0, %v1980
      %v1982 = vpop.f32.mrb[0].mxu0
      %v1983 = vadd.f32 0.0, %v1982
      %v1984 = vpop.f32.mrb[0].mxu0
      %v1985 = vadd.f32 0.0, %v1984
      %v1986 = vpop.f32.mrb[0].mxu0
      %v1987 = vadd.f32 0.0, %v1986
      %1988 = vdwg.mxu0
      %v1989 = vadd.f32 %v1605, %v1911
      %v1990 = vadd.f32 %v1607, %v1913
      %v1991 = vadd.f32 %v1609, %v1915
      %v1992 = vadd.f32 %v1611, %v1917
      %v1993 = vadd.f32 %v1615, %v1921
      %v1994 = vadd.f32 %v1617, %v1923
      %v1995 = vadd.f32 %v1619, %v1925
      %v1996 = vadd.f32 %v1621, %v1927
      %v1997 = vadd.f32 %v1625, %v1931
      %v1998 = vadd.f32 %v1627, %v1933
      %v1999 = vadd.f32 %v1629, %v1935
      %v2000 = vadd.f32 %v1631, %v1937
      %v2001 = vadd.f32 %v1635, %v1941
      %v2002 = vadd.f32 %v1637, %v1943
      %v2003 = vadd.f32 %v1639, %v1945
      %v2004 = vadd.f32 %v1641, %v1947
      %v2005 = vadd.f32 %v1645, %v1951
      %v2006 = vadd.f32 %v1647, %v1953
      %v2007 = vadd.f32 %v1649, %v1955
      %v2008 = vadd.f32 %v1651, %v1957
      %v2009 = vadd.f32 %v1655, %v1961
      %v2010 = vadd.f32 %v1657, %v1963
      %v2011 = vadd.f32 %v1659, %v1965
      %v2012 = vadd.f32 %v1661, %v1967
      %v2013 = vadd.f32 %v1665, %v1971
      %v2014 = vadd.f32 %v1667, %v1973
      %v2015 = vadd.f32 %v1669, %v1975
      %v2016 = vadd.f32 %v1671, %v1977
      %v2017 = vadd.f32 %v1675, %v1981
      %v2018 = vadd.f32 %v1677, %v1983
      %v2019 = vadd.f32 %v1679, %v1985
      %v2020 = vadd.f32 %v1681, %v1987
      %v2021 = vld [vmem:[#allocation2 + $0x10] sm:$0xff]
      %v2022 = vld [vmem:[#allocation2 + $0x18] sm:$0xff]
      %v2023 = vld [vmem:[#allocation2 + $0x20] sm:$0xff]
      %v2024 = vld [vmem:[#allocation2 + $0x28] sm:$0xff]
      %v2025 = vld [vmem:[#allocation2 + $0x30] sm:$0xff]
      %v2026 = vld [vmem:[#allocation2 + $0x38] sm:$0xff]
      %v2027 = vld [vmem:[#allocation2 + $0x40] sm:$0xff]
      %v2028 = vld [vmem:[#allocation2 + $0x48] sm:$0xff]
      %v2029 = vld [vmem:[#allocation2 + $0x50] sm:$0xff]
      %v2030 = vld [vmem:[#allocation2 + $0x58] sm:$0xff]
      %v2031 = vld [vmem:[#allocation2 + $0x60] sm:$0xff]
      %v2032 = vld [vmem:[#allocation2 + $0x68] sm:$0xff]
      %v2033 = vld [vmem:[#allocation2 + $0x70] sm:$0xff]
      %v2034 = vld [vmem:[#allocation2 + $0x78] sm:$0xff]
      %v2035 = vld [vmem:[#allocation2 + $0x80] sm:$0xff]
      %v2036 = vld [vmem:[#allocation2 + $0x88] sm:$0xff]
      %v2037 = vld [vmem:[#allocation2 + $0x90] sm:$0x1]
      %v2038 = vld [vmem:[#allocation2 + $0x98] sm:$0x1]
      %s2039 = scalar_lea.vmem %s3, 768
      %v2040 = vld [vmem:[%s2039] sm:$0xff]
      %v2041 = vld [vmem:[%s2039 + $0x8] sm:$0xff]
      %v2042 = vld [vmem:[%s2039 + $0x10] sm:$0xff]
      %v2043 = vld [vmem:[%s2039 + $0x18] sm:$0xff]
      %v2044 = vld [vmem:[%s2039 + $0x20] sm:$0xff]
      %v2045 = vld [vmem:[%s2039 + $0x28] sm:$0xff]
      %v2046 = vld [vmem:[%s2039 + $0x30] sm:$0xff]
      %v2047 = vld [vmem:[%s2039 + $0x38] sm:$0xff]
      %v2048 = vld [vmem:[%s2039 + $0x40] sm:$0xff]
      %v2049 = vld [vmem:[%s2039 + $0x48] sm:$0xff]
      %v2050 = vld [vmem:[%s2039 + $0x50] sm:$0xff]
      %v2051 = vld [vmem:[%s2039 + $0x58] sm:$0xff]
      %v2052 = vld [vmem:[%s2039 + $0x60] sm:$0xff]
      %v2053 = vld [vmem:[%s2039 + $0x68] sm:$0xff]
      %v2054 = vld [vmem:[%s2039 + $0x70] sm:$0xff]
      %v2055 = vld [vmem:[%s2039 + $0x78] sm:$0xff]
      %v2056 = vld [vmem:[%s2039 + $0x80] sm:$0xff]
      %v2057 = vld [vmem:[%s2039 + $0x88] sm:$0xff]
      %v2058 = vld [vmem:[%s2039 + $0x90] sm:$0xff]
      %v2059 = vld [vmem:[%s2039 + $0x98] sm:$0xff]
      %v2060 = vld [vmem:[%s2039 + $0xa0] sm:$0xff]
      %v2061 = vld [vmem:[%s2039 + $0xa8] sm:$0xff]
      %v2062 = vld [vmem:[%s2039 + $0xb0] sm:$0xff]
      %v2063 = vld [vmem:[%s2039 + $0xb8] sm:$0xff]
      %v2064 = vld [vmem:[%s2039 + $0xc0] sm:$0xff]
      %v2065 = vld [vmem:[%s2039 + $0xc8] sm:$0xff]
      %v2066 = vld [vmem:[%s2039 + $0xd0] sm:$0xff]
      %v2067 = vld [vmem:[%s2039 + $0xd8] sm:$0xff]
      %v2068 = vld [vmem:[%s2039 + $0xe0] sm:$0xff]
      %v2069 = vld [vmem:[%s2039 + $0xe8] sm:$0xff]
      %v2070 = vld [vmem:[%s2039 + $0xf0] sm:$0xff]
      %v2071 = vld [vmem:[%s2039 + $0xf8] sm:$0xff]
      %vm2072 = vsmask.f32 7424
      %v2074 = vshrl.u32 %v2021, 16
      %v2076 = vshll.u32 %v2021, 16
      %v2078 = vrot.slane %v2076, 1
      %v2079 = vor.u32 %v2074, %v2078
      %v2081 = vshll.u32 %v2023, 16
      %v2083 = vrot.slane %v2081, 1
      %v2084 = vsel %vm2072, %v2079, %v2083
      %v2086 = vshrl.u32 %v2022, 16
      %v2088 = vshll.u32 %v2022, 16
      %v2090 = vrot.slane %v2088, 1
      %v2091 = vor.u32 %v2086, %v2090
      %v2093 = vshll.u32 %v2024, 16
      %v2095 = vrot.slane %v2093, 1
      %v2096 = vsel %vm2072, %v2091, %v2095
      %v2097 = vshrl.u32 %v2023, 16
      %v2099 = vor.u32 %v2097, %v2083
      %v2101 = vshll.u32 %v2025, 16
      %v2103 = vrot.slane %v2101, 1
      %v2104 = vsel %vm2072, %v2099, %v2103
      %v2105 = vshrl.u32 %v2024, 16
      %v2107 = vor.u32 %v2105, %v2095
      %v2109 = vshll.u32 %v2026, 16
      %v2111 = vrot.slane %v2109, 1
      %v2112 = vsel %vm2072, %v2107, %v2111
      %v2113 = vshrl.u32 %v2025, 16
      %v2115 = vor.u32 %v2113, %v2103
      %v2117 = vshll.u32 %v2027, 16
      %v2119 = vrot.slane %v2117, 1
      %v2120 = vsel %vm2072, %v2115, %v2119
      %v2121 = vshrl.u32 %v2026, 16
      %v2123 = vor.u32 %v2121, %v2111
      %v2125 = vshll.u32 %v2028, 16
      %v2127 = vrot.slane %v2125, 1
      %v2128 = vsel %vm2072, %v2123, %v2127
      %v2129 = vshrl.u32 %v2027, 16
      %v2131 = vor.u32 %v2129, %v2119
      %v2133 = vshll.u32 %v2029, 16
      %v2135 = vrot.slane %v2133, 1
      %v2136 = vsel %vm2072, %v2131, %v2135
      %v2137 = vshrl.u32 %v2028, 16
      %v2139 = vor.u32 %v2137, %v2127
      %v2141 = vshll.u32 %v2030, 16
      %v2143 = vrot.slane %v2141, 1
      %v2144 = vsel %vm2072, %v2139, %v2143
      %v2145 = vshrl.u32 %v2029, 16
      %v2147 = vor.u32 %v2145, %v2135
      %v2149 = vshll.u32 %v2031, 16
      %v2151 = vrot.slane %v2149, 1
      %v2152 = vsel %vm2072, %v2147, %v2151
      %v2153 = vshrl.u32 %v2030, 16
      %v2155 = vor.u32 %v2153, %v2143
      %v2157 = vshll.u32 %v2032, 16
      %v2159 = vrot.slane %v2157, 1
      %v2160 = vsel %vm2072, %v2155, %v2159
      %v2161 = vshrl.u32 %v2031, 16
      %v2163 = vor.u32 %v2161, %v2151
      %v2165 = vshll.u32 %v2033, 16
      %v2167 = vrot.slane %v2165, 1
      %v2168 = vsel %vm2072, %v2163, %v2167
      %v2169 = vshrl.u32 %v2032, 16
      %v2171 = vor.u32 %v2169, %v2159
      %v2173 = vshll.u32 %v2034, 16
      %v2175 = vrot.slane %v2173, 1
      %v2176 = vsel %vm2072, %v2171, %v2175
      %v2177 = vshrl.u32 %v2033, 16
      %v2179 = vor.u32 %v2177, %v2167
      %v2181 = vshll.u32 %v2035, 16
      %v2183 = vrot.slane %v2181, 1
      %v2184 = vsel %vm2072, %v2179, %v2183
      %v2185 = vshrl.u32 %v2034, 16
      %v2187 = vor.u32 %v2185, %v2175
      %v2189 = vshll.u32 %v2036, 16
      %v2191 = vrot.slane %v2189, 1
      %v2192 = vsel %vm2072, %v2187, %v2191
      %v2193 = vshrl.u32 %v2035, 16
      %v2195 = vor.u32 %v2193, %v2183
      %v2197 = vshll.u32 %v2037, 16
      %v2199 = vrot.slane %v2197, 1
      %v2200 = vsel %vm2072, %v2195, %v2199
      %v2201 = vshrl.u32 %v2036, 16
      %v2203 = vor.u32 %v2201, %v2191
      %v2205 = vshll.u32 %v2038, 16
      %v2207 = vrot.slane %v2205, 1
      %v2208 = vsel %vm2072, %v2203, %v2207
      %v2257 = vunpack.c.l.b16 %v2040
      %v2258 = vunpack.c.h.b16 %v2040
      %v2259 = vunpack.c.l.b16 %v2041
      %v2260 = vunpack.c.h.b16 %v2041
      %v2261 = vunpack.c.l.b16 %v2042
      %v2262 = vunpack.c.h.b16 %v2042
      %v2263 = vunpack.c.l.b16 %v2043
      %v2264 = vunpack.c.h.b16 %v2043
      %v2265 = vunpack.c.l.b16 %v2044
      %v2266 = vunpack.c.h.b16 %v2044
      %v2267 = vunpack.c.l.b16 %v2045
      %v2268 = vunpack.c.h.b16 %v2045
      %v2269 = vunpack.c.l.b16 %v2046
      %v2270 = vunpack.c.h.b16 %v2046
      %v2271 = vunpack.c.l.b16 %v2047
      %v2272 = vunpack.c.h.b16 %v2047
      %v2273 = vunpack.c.l.b16 %v2048
      %v2274 = vunpack.c.h.b16 %v2048
      %v2275 = vunpack.c.l.b16 %v2049
      %v2276 = vunpack.c.h.b16 %v2049
      %v2277 = vunpack.c.l.b16 %v2050
      %v2278 = vunpack.c.h.b16 %v2050
      %v2279 = vunpack.c.l.b16 %v2051
      %v2280 = vunpack.c.h.b16 %v2051
      %v2281 = vunpack.c.l.b16 %v2052
      %v2282 = vunpack.c.h.b16 %v2052
      %v2283 = vunpack.c.l.b16 %v2053
      %v2284 = vunpack.c.h.b16 %v2053
      %v2285 = vunpack.c.l.b16 %v2054
      %v2286 = vunpack.c.h.b16 %v2054
      %v2287 = vunpack.c.l.b16 %v2055
      %v2288 = vunpack.c.h.b16 %v2055
      %v2289 = vunpack.c.l.b16 %v2056
      %v2290 = vunpack.c.h.b16 %v2056
      %v2291 = vunpack.c.l.b16 %v2057
      %v2292 = vunpack.c.h.b16 %v2057
      %v2293 = vunpack.c.l.b16 %v2058
      %v2294 = vunpack.c.h.b16 %v2058
      %v2295 = vunpack.c.l.b16 %v2059
      %v2296 = vunpack.c.h.b16 %v2059
      %v2297 = vunpack.c.l.b16 %v2060
      %v2298 = vunpack.c.h.b16 %v2060
      %v2299 = vunpack.c.l.b16 %v2061
      %v2300 = vunpack.c.h.b16 %v2061
      %v2301 = vunpack.c.l.b16 %v2062
      %v2302 = vunpack.c.h.b16 %v2062
      %v2303 = vunpack.c.l.b16 %v2063
      %v2304 = vunpack.c.h.b16 %v2063
      %v2305 = vunpack.c.l.b16 %v2064
      %v2306 = vunpack.c.h.b16 %v2064
      %v2307 = vunpack.c.l.b16 %v2065
      %v2308 = vunpack.c.h.b16 %v2065
      %v2309 = vunpack.c.l.b16 %v2066
      %v2310 = vunpack.c.h.b16 %v2066
      %v2311 = vunpack.c.l.b16 %v2067
      %v2312 = vunpack.c.h.b16 %v2067
      %v2313 = vunpack.c.l.b16 %v2068
      %v2314 = vunpack.c.h.b16 %v2068
      %v2315 = vunpack.c.l.b16 %v2069
      %v2316 = vunpack.c.h.b16 %v2069
      %v2317 = vunpack.c.l.b16 %v2070
      %v2318 = vunpack.c.h.b16 %v2070
      %v2319 = vunpack.c.l.b16 %v2071
      %v2320 = vunpack.c.h.b16 %v2071
      %v2321 = vpack.c.b16 %v2259, %v2257
      %v2322 = vpack.c.b16 %v2260, %v2258
      %v2323 = vpack.c.b16 %v2263, %v2261
      %v2324 = vpack.c.b16 %v2264, %v2262
      %v2325 = vpack.c.b16 %v2267, %v2265
      %v2326 = vpack.c.b16 %v2268, %v2266
      %v2327 = vpack.c.b16 %v2271, %v2269
      %v2328 = vpack.c.b16 %v2272, %v2270
      %v2329 = vpack.c.b16 %v2275, %v2273
      %v2330 = vpack.c.b16 %v2276, %v2274
      %v2331 = vpack.c.b16 %v2279, %v2277
      %v2332 = vpack.c.b16 %v2280, %v2278
      %v2333 = vpack.c.b16 %v2283, %v2281
      %v2334 = vpack.c.b16 %v2284, %v2282
      %v2335 = vpack.c.b16 %v2287, %v2285
      %v2336 = vpack.c.b16 %v2288, %v2286
      %v2337 = vpack.c.b16 %v2291, %v2289
      %v2338 = vpack.c.b16 %v2292, %v2290
      %v2339 = vpack.c.b16 %v2295, %v2293
      %v2340 = vpack.c.b16 %v2296, %v2294
      %v2341 = vpack.c.b16 %v2299, %v2297
      %v2342 = vpack.c.b16 %v2300, %v2298
      %v2343 = vpack.c.b16 %v2303, %v2301
      %v2344 = vpack.c.b16 %v2304, %v2302
      %v2345 = vpack.c.b16 %v2307, %v2305
      %v2346 = vpack.c.b16 %v2308, %v2306
      %v2347 = vpack.c.b16 %v2311, %v2309
      %v2348 = vpack.c.b16 %v2312, %v2310
      %v2349 = vpack.c.b16 %v2315, %v2313
      %v2350 = vpack.c.b16 %v2316, %v2314
      %v2351 = vpack.c.b16 %v2319, %v2317
      %v2352 = vpack.c.b16 %v2320, %v2318
      %2385 = vmatprep.subr.bf16.mxu0 %v2322
      %2386 = vmatpush1.bf16.msra.mxu0 %v2321
      %2387 = vmatprep.subr.bf16.mxu0 %v2324
      %2388 = vmatpush1.bf16.msra.mxu0 %v2323
      %2389 = vmatprep.subr.bf16.mxu0 %v2326
      %2390 = vmatpush1.bf16.msra.mxu0 %v2325
      %2391 = vmatprep.subr.bf16.mxu0 %v2328
      %2392 = vmatpush1.bf16.msra.mxu0 %v2327
      %2393 = vmatprep.subr.bf16.mxu0 %v2330
      %2394 = vmatpush1.bf16.msra.mxu0 %v2329
      %2395 = vmatprep.subr.bf16.mxu0 %v2332
      %2396 = vmatpush1.bf16.msra.mxu0 %v2331
      %2397 = vmatprep.subr.bf16.mxu0 %v2334
      %2398 = vmatpush1.bf16.msra.mxu0 %v2333
      %2399 = vmatprep.subr.bf16.mxu0 %v2336
      %2400 = vmatpush1.bf16.msra.mxu0 %v2335
      %2401 = vmatprep.subr.bf16.mxu0 %v2338
      %2402 = vmatpush1.bf16.msra.mxu0 %v2337
      %2403 = vmatprep.subr.bf16.mxu0 %v2340
      %2404 = vmatpush1.bf16.msra.mxu0 %v2339
      %2405 = vmatprep.subr.bf16.mxu0 %v2342
      %2406 = vmatpush1.bf16.msra.mxu0 %v2341
      %2407 = vmatprep.subr.bf16.mxu0 %v2344
      %2408 = vmatpush1.bf16.msra.mxu0 %v2343
      %2409 = vmatprep.subr.bf16.mxu0 %v2346
      %2410 = vmatpush1.bf16.msra.mxu0 %v2345
      %2411 = vmatprep.subr.bf16.mxu0 %v2348
      %2412 = vmatpush1.bf16.msra.mxu0 %v2347
      %2413 = vmatprep.subr.bf16.mxu0 %v2350
      %2414 = vmatpush1.bf16.msra.mxu0 %v2349
      %2415 = vmatprep.subr.bf16.mxu0 %v2352
      %2416 = vmatpush1.bf16.msra.mxu0 %v2351
      %2417 = vmatprep.mubr.bf16.mxu0 %v2096
      %2418 = vmatmul.mubr.bf16.gmra.mrb[0].mxu0 %v2084
      %v2419 = vpop.f32.mrb[0].mxu0
      %v2420 = vadd.f32 0.0, %v2419
      %v2421 = vpop.f32.mrb[0].mxu0
      %v2422 = vadd.f32 0.0, %v2421
      %v2423 = vpop.f32.mrb[0].mxu0
      %v2424 = vadd.f32 0.0, %v2423
      %v2425 = vpop.f32.mrb[0].mxu0
      %v2426 = vadd.f32 0.0, %v2425
      %2427 = vmatprep.mubr.bf16.mxu0 %v2112
      %2428 = vmatmul.mubr.bf16.gmra.mrb[0].mxu0 %v2104
      %v2429 = vpop.f32.mrb[0].mxu0
      %v2430 = vadd.f32 0.0, %v2429
      %v2431 = vpop.f32.mrb[0].mxu0
      %v2432 = vadd.f32 0.0, %v2431
      %v2433 = vpop.f32.mrb[0].mxu0
      %v2434 = vadd.f32 0.0, %v2433
      %v2435 = vpop.f32.mrb[0].mxu0
      %v2436 = vadd.f32 0.0, %v2435
      %2437 = vmatprep.mubr.bf16.mxu0 %v2128
      %2438 = vmatmul.mubr.bf16.gmra.mrb[0].mxu0 %v2120
      %v2439 = vpop.f32.mrb[0].mxu0
      %v2440 = vadd.f32 0.0, %v2439
      %v2441 = vpop.f32.mrb[0].mxu0
      %v2442 = vadd.f32 0.0, %v2441
      %v2443 = vpop.f32.mrb[0].mxu0
      %v2444 = vadd.f32 0.0, %v2443
      %v2445 = vpop.f32.mrb[0].mxu0
      %v2446 = vadd.f32 0.0, %v2445
      %2447 = vmatprep.mubr.bf16.mxu0 %v2144
      %2448 = vmatmul.mubr.bf16.gmra.mrb[0].mxu0 %v2136
      %v2449 = vpop.f32.mrb[0].mxu0
      %v2450 = vadd.f32 0.0, %v2449
      %v2451 = vpop.f32.mrb[0].mxu0
      %v2452 = vadd.f32 0.0, %v2451
      %v2453 = vpop.f32.mrb[0].mxu0
      %v2454 = vadd.f32 0.0, %v2453
      %v2455 = vpop.f32.mrb[0].mxu0
      %v2456 = vadd.f32 0.0, %v2455
      %2457 = vmatprep.mubr.bf16.mxu0 %v2160
      %2458 = vmatmul.mubr.bf16.gmra.mrb[0].mxu0 %v2152
      %v2459 = vpop.f32.mrb[0].mxu0
      %v2460 = vadd.f32 0.0, %v2459
      %v2461 = vpop.f32.mrb[0].mxu0
      %v2462 = vadd.f32 0.0, %v2461
      %v2463 = vpop.f32.mrb[0].mxu0
      %v2464 = vadd.f32 0.0, %v2463
      %v2465 = vpop.f32.mrb[0].mxu0
      %v2466 = vadd.f32 0.0, %v2465
      %2467 = vmatprep.mubr.bf16.mxu0 %v2176
      %2468 = vmatmul.mubr.bf16.gmra.mrb[0].mxu0 %v2168
      %v2469 = vpop.f32.mrb[0].mxu0
      %v2470 = vadd.f32 0.0, %v2469
      %v2471 = vpop.f32.mrb[0].mxu0
      %v2472 = vadd.f32 0.0, %v2471
      %v2473 = vpop.f32.mrb[0].mxu0
      %v2474 = vadd.f32 0.0, %v2473
      %v2475 = vpop.f32.mrb[0].mxu0
      %v2476 = vadd.f32 0.0, %v2475
      %2477 = vmatprep.mubr.bf16.mxu0 %v2192
      %2478 = vmatmul.mubr.bf16.gmra.mrb[0].mxu0 %v2184
      %v2479 = vpop.f32.mrb[0].mxu0
      %v2480 = vadd.f32 0.0, %v2479
      %v2481 = vpop.f32.mrb[0].mxu0
      %v2482 = vadd.f32 0.0, %v2481
      %v2483 = vpop.f32.mrb[0].mxu0
      %v2484 = vadd.f32 0.0, %v2483
      %v2485 = vpop.f32.mrb[0].mxu0
      %v2486 = vadd.f32 0.0, %v2485
      %2487 = vmatprep.mubr.bf16.mxu0 %v2208
      %2488 = vmatmul.mubr.bf16.gmra.mrb[0].mxu0 %v2200
      %v2489 = vpop.f32.mrb[0].mxu0
      %v2490 = vadd.f32 0.0, %v2489
      %v2491 = vpop.f32.mrb[0].mxu0
      %v2492 = vadd.f32 0.0, %v2491
      %v2493 = vpop.f32.mrb[0].mxu0
      %v2494 = vadd.f32 0.0, %v2493
      %v2495 = vpop.f32.mrb[0].mxu0
      %v2496 = vadd.f32 0.0, %v2495
      %2497 = vdwg.mxu0
      %v2498 = vadd.f32 %v1989, %v2420
      %v2499 = vadd.f32 %v1990, %v2422
      %v2500 = vadd.f32 %v1991, %v2424
      %v2501 = vadd.f32 %v1992, %v2426
      %v2502 = vadd.f32 %v1993, %v2430
      %v2503 = vadd.f32 %v1994, %v2432
      %v2504 = vadd.f32 %v1995, %v2434
      %v2505 = vadd.f32 %v1996, %v2436
      %v2506 = vadd.f32 %v1997, %v2440
      %v2507 = vadd.f32 %v1998, %v2442
      %v2508 = vadd.f32 %v1999, %v2444
      %v2509 = vadd.f32 %v2000, %v2446
      %v2510 = vadd.f32 %v2001, %v2450
      %v2511 = vadd.f32 %v2002, %v2452
      %v2512 = vadd.f32 %v2003, %v2454
      %v2513 = vadd.f32 %v2004, %v2456
      %v2514 = vadd.f32 %v2005, %v2460
      %v2515 = vadd.f32 %v2006, %v2462
      %v2516 = vadd.f32 %v2007, %v2464
      %v2517 = vadd.f32 %v2008, %v2466
      %v2518 = vadd.f32 %v2009, %v2470
      %v2519 = vadd.f32 %v2010, %v2472
      %v2520 = vadd.f32 %v2011, %v2474
      %v2521 = vadd.f32 %v2012, %v2476
      %v2522 = vadd.f32 %v2013, %v2480
      %v2523 = vadd.f32 %v2014, %v2482
      %v2524 = vadd.f32 %v2015, %v2484
      %v2525 = vadd.f32 %v2016, %v2486
      %v2526 = vadd.f32 %v2017, %v2490
      %v2527 = vadd.f32 %v2018, %v2492
      %v2528 = vadd.f32 %v2019, %v2494
      %v2529 = vadd.f32 %v2020, %v2496
      %v2530 = vld [vmem:[#allocation2 + $0x10] sm:$0xfe]
      %v2531 = vld [vmem:[#allocation2 + $0x18] sm:$0xfe]
      %s2532 = scalar_lea.vmem %s3, 1024
      %v2533 = vld [vmem:[%s2532] sm:$0xff]
      %v2534 = vld [vmem:[%s2532 + $0x8] sm:$0xff]
      %v2535 = vld [vmem:[%s2532 + $0x10] sm:$0xff]
      %v2536 = vld [vmem:[%s2532 + $0x18] sm:$0xff]
      %v2537 = vld [vmem:[%s2532 + $0x20] sm:$0xff]
      %v2538 = vld [vmem:[%s2532 + $0x28] sm:$0xff]
      %v2539 = vld [vmem:[%s2532 + $0x30] sm:$0xff]
      %v2540 = vld [vmem:[%s2532 + $0x38] sm:$0xff]
      %v2541 = vld [vmem:[%s2532 + $0x40] sm:$0xff]
      %v2542 = vld [vmem:[%s2532 + $0x48] sm:$0xff]
      %v2543 = vld [vmem:[%s2532 + $0x50] sm:$0xff]
      %v2544 = vld [vmem:[%s2532 + $0x58] sm:$0xff]
      %v2545 = vld [vmem:[%s2532 + $0x60] sm:$0xff]
      %v2546 = vld [vmem:[%s2532 + $0x68] sm:$0xff]
      %v2547 = vld [vmem:[%s2532 + $0x70] sm:$0xff]
      %v2548 = vld [vmem:[%s2532 + $0x78] sm:$0xff]
      %v2549 = vld [vmem:[%s2532 + $0x80] sm:$0xff]
      %v2550 = vld [vmem:[%s2532 + $0x88] sm:$0xff]
      %v2551 = vld [vmem:[%s2532 + $0x90] sm:$0xff]
      %v2552 = vld [vmem:[%s2532 + $0x98] sm:$0xff]
      %v2553 = vld [vmem:[%s2532 + $0xa0] sm:$0xff]
      %v2554 = vld [vmem:[%s2532 + $0xa8] sm:$0xff]
      %v2555 = vld [vmem:[%s2532 + $0xb0] sm:$0xff]
      %v2556 = vld [vmem:[%s2532 + $0xb8] sm:$0xff]
      %v2557 = vld [vmem:[%s2532 + $0xc0] sm:$0xff]
      %v2558 = vld [vmem:[%s2532 + $0xc8] sm:$0xff]
      %v2559 = vld [vmem:[%s2532 + $0xd0] sm:$0xff]
      %v2560 = vld [vmem:[%s2532 + $0xd8] sm:$0xff]
      %v2561 = vld [vmem:[%s2532 + $0xe0] sm:$0xff]
      %v2562 = vld [vmem:[%s2532 + $0xe8] sm:$0xff]
      %v2563 = vld [vmem:[%s2532 + $0xf0] sm:$0xff]
      %v2564 = vld [vmem:[%s2532 + $0xf8] sm:$0xff]
      %vm2583 = vcmask 1046528
      %v2584 = vrot.slane %v2530, 1
      %v2585 = vrot.slane %v2023, 1
      %v2586 = vsel %vm2583, %v2584, %v2585
      %v2587 = vrot.slane %v2531, 1
      %v2588 = vrot.slane %v2024, 1
      %v2589 = vsel %vm2583, %v2587, %v2588
      %v2590 = vrot.slane %v2025, 1
      %v2591 = vsel %vm2583, %v2585, %v2590
      %v2592 = vrot.slane %v2026, 1
      %v2593 = vsel %vm2583, %v2588, %v2592
      %v2594 = vrot.slane %v2027, 1
      %v2595 = vsel %vm2583, %v2590, %v2594
      %v2596 = vrot.slane %v2028, 1
      %v2597 = vsel %vm2583, %v2592, %v2596
      %v2598 = vrot.slane %v2029, 1
      %v2599 = vsel %vm2583, %v2594, %v2598
      %v2600 = vrot.slane %v2030, 1
      %v2601 = vsel %vm2583, %v2596, %v2600
      %v2602 = vrot.slane %v2031, 1
      %v2603 = vsel %vm2583, %v2598, %v2602
      %v2604 = vrot.slane %v2032, 1
      %v2605 = vsel %vm2583, %v2600, %v2604
      %v2606 = vrot.slane %v2033, 1
      %v2607 = vsel %vm2583, %v2602, %v2606
      %v2608 = vrot.slane %v2034, 1
      %v2609 = vsel %vm2583, %v2604, %v2608
      %v2610 = vrot.slane %v2035, 1
      %v2611 = vsel %vm2583, %v2606, %v2610
      %v2612 = vrot.slane %v2036, 1
      %v2613 = vsel %vm2583, %v2608, %v2612
      %v2614 = vrot.slane %v2037, 1
      %v2615 = vsel %vm2583, %v2610, %v2614
      %v2616 = vrot.slane %v2038, 1
      %v2617 = vsel %vm2583, %v2612, %v2616
      %v2666 = vunpack.c.l.b16 %v2533
      %v2667 = vunpack.c.h.b16 %v2533
      %v2668 = vunpack.c.l.b16 %v2534
      %v2669 = vunpack.c.h.b16 %v2534
      %v2670 = vunpack.c.l.b16 %v2535
      %v2671 = vunpack.c.h.b16 %v2535
      %v2672 = vunpack.c.l.b16 %v2536
      %v2673 = vunpack.c.h.b16 %v2536
      %v2674 = vunpack.c.l.b16 %v2537
      %v2675 = vunpack.c.h.b16 %v2537
      %v2676 = vunpack.c.l.b16 %v2538
      %v2677 = vunpack.c.h.b16 %v2538
      %v2678 = vunpack.c.l.b16 %v2539
      %v2679 = vunpack.c.h.b16 %v2539
      %v2680 = vunpack.c.l.b16 %v2540
      %v2681 = vunpack.c.h.b16 %v2540
      %v2682 = vunpack.c.l.b16 %v2541
      %v2683 = vunpack.c.h.b16 %v2541
      %v2684 = vunpack.c.l.b16 %v2542
      %v2685 = vunpack.c.h.b16 %v2542
      %v2686 = vunpack.c.l.b16 %v2543
      %v2687 = vunpack.c.h.b16 %v2543
      %v2688 = vunpack.c.l.b16 %v2544
      %v2689 = vunpack.c.h.b16 %v2544
      %v2690 = vunpack.c.l.b16 %v2545
      %v2691 = vunpack.c.h.b16 %v2545
      %v2692 = vunpack.c.l.b16 %v2546
      %v2693 = vunpack.c.h.b16 %v2546
      %v2694 = vunpack.c.l.b16 %v2547
      %v2695 = vunpack.c.h.b16 %v2547
      %v2696 = vunpack.c.l.b16 %v2548
      %v2697 = vunpack.c.h.b16 %v2548
      %v2698 = vunpack.c.l.b16 %v2549
      %v2699 = vunpack.c.h.b16 %v2549
      %v2700 = vunpack.c.l.b16 %v2550
      %v2701 = vunpack.c.h.b16 %v2550
      %v2702 = vunpack.c.l.b16 %v2551
      %v2703 = vunpack.c.h.b16 %v2551
      %v2704 = vunpack.c.l.b16 %v2552
      %v2705 = vunpack.c.h.b16 %v2552
      %v2706 = vunpack.c.l.b16 %v2553
      %v2707 = vunpack.c.h.b16 %v2553
      %v2708 = vunpack.c.l.b16 %v2554
      %v2709 = vunpack.c.h.b16 %v2554
      %v2710 = vunpack.c.l.b16 %v2555
      %v2711 = vunpack.c.h.b16 %v2555
      %v2712 = vunpack.c.l.b16 %v2556
      %v2713 = vunpack.c.h.b16 %v2556
      %v2714 = vunpack.c.l.b16 %v2557
      %v2715 = vunpack.c.h.b16 %v2557
      %v2716 = vunpack.c.l.b16 %v2558
      %v2717 = vunpack.c.h.b16 %v2558
      %v2718 = vunpack.c.l.b16 %v2559
      %v2719 = vunpack.c.h.b16 %v2559
      %v2720 = vunpack.c.l.b16 %v2560
      %v2721 = vunpack.c.h.b16 %v2560
      %v2722 = vunpack.c.l.b16 %v2561
      %v2723 = vunpack.c.h.b16 %v2561
      %v2724 = vunpack.c.l.b16 %v2562
      %v2725 = vunpack.c.h.b16 %v2562
      %v2726 = vunpack.c.l.b16 %v2563
      %v2727 = vunpack.c.h.b16 %v2563
      %v2728 = vunpack.c.l.b16 %v2564
      %v2729 = vunpack.c.h.b16 %v2564
      %v2730 = vpack.c.b16 %v2668, %v2666
      %v2731 = vpack.c.b16 %v2669, %v2667
      %v2732 = vpack.c.b16 %v2672, %v2670
      %v2733 = vpack.c.b16 %v2673, %v2671
      %v2734 = vpack.c.b16 %v2676, %v2674
      %v2735 = vpack.c.b16 %v2677, %v2675
      %v2736 = vpack.c.b16 %v2680, %v2678
      %v2737 = vpack.c.b16 %v2681, %v2679
      %v2738 = vpack.c.b16 %v2684, %v2682
      %v2739 = vpack.c.b16 %v2685, %v2683
      %v2740 = vpack.c.b16 %v2688, %v2686
      %v2741 = vpack.c.b16 %v2689, %v2687
      %v2742 = vpack.c.b16 %v2692, %v2690
      %v2743 = vpack.c.b16 %v2693, %v2691
      %v2744 = vpack.c.b16 %v2696, %v2694
      %v2745 = vpack.c.b16 %v2697, %v2695
      %v2746 = vpack.c.b16 %v2700, %v2698
      %v2747 = vpack.c.b16 %v2701, %v2699
      %v2748 = vpack.c.b16 %v2704, %v2702
      %v2749 = vpack.c.b16 %v2705, %v2703
      %v2750 = vpack.c.b16 %v2708, %v2706
      %v2751 = vpack.c.b16 %v2709, %v2707
      %v2752 = vpack.c.b16 %v2712, %v2710
      %v2753 = vpack.c.b16 %v2713, %v2711
      %v2754 = vpack.c.b16 %v2716, %v2714
      %v2755 = vpack.c.b16 %v2717, %v2715
      %v2756 = vpack.c.b16 %v2720, %v2718
      %v2757 = vpack.c.b16 %v2721, %v2719
      %v2758 = vpack.c.b16 %v2724, %v2722
      %v2759 = vpack.c.b16 %v2725, %v2723
      %v2760 = vpack.c.b16 %v2728, %v2726
      %v2761 = vpack.c.b16 %v2729, %v2727
      %2794 = vmatprep.subr.bf16.mxu0 %v2731
      %2795 = vmatpush1.bf16.msra.mxu0 %v2730
      %2796 = vmatprep.subr.bf16.mxu0 %v2733
      %2797 = vmatpush1.bf16.msra.mxu0 %v2732
      %2798 = vmatprep.subr.bf16.mxu0 %v2735
      %2799 = vmatpush1.bf16.msra.mxu0 %v2734
      %2800 = vmatprep.subr.bf16.mxu0 %v2737
      %2801 = vmatpush1.bf16.msra.mxu0 %v2736
      %2802 = vmatprep.subr.bf16.mxu0 %v2739
      %2803 = vmatpush1.bf16.msra.mxu0 %v2738
      %2804 = vmatprep.subr.bf16.mxu0 %v2741
      %2805 = vmatpush1.bf16.msra.mxu0 %v2740
      %2806 = vmatprep.subr.bf16.mxu0 %v2743
      %2807 = vmatpush1.bf16.msra.mxu0 %v2742
      %2808 = vmatprep.subr.bf16.mxu0 %v2745
      %2809 = vmatpush1.bf16.msra.mxu0 %v2744
      %2810 = vmatprep.subr.bf16.mxu0 %v2747
      %2811 = vmatpush1.bf16.msra.mxu0 %v2746
      %2812 = vmatprep.subr.bf16.mxu0 %v2749
      %2813 = vmatpush1.bf16.msra.mxu0 %v2748
      %2814 = vmatprep.subr.bf16.mxu0 %v2751
      %2815 = vmatpush1.bf16.msra.mxu0 %v2750
      %2816 = vmatprep.subr.bf16.mxu0 %v2753
      %2817 = vmatpush1.bf16.msra.mxu0 %v2752
      %2818 = vmatprep.subr.bf16.mxu0 %v2755
      %2819 = vmatpush1.bf16.msra.mxu0 %v2754
      %2820 = vmatprep.subr.bf16.mxu0 %v2757
      %2821 = vmatpush1.bf16.msra.mxu0 %v2756
      %2822 = vmatprep.subr.bf16.mxu0 %v2759
      %2823 = vmatpush1.bf16.msra.mxu0 %v2758
      %2824 = vmatprep.subr.bf16.mxu0 %v2761
      %2825 = vmatpush1.bf16.msra.mxu0 %v2760
      %2826 = vmatprep.mubr.bf16.mxu0 %v2589
      %2827 = vmatmul.mubr.bf16.gmra.mrb[0].mxu0 %v2586
      %v2828 = vpop.f32.mrb[0].mxu0
      %v2829 = vadd.f32 0.0, %v2828
      %v2830 = vpop.f32.mrb[0].mxu0
      %v2831 = vadd.f32 0.0, %v2830
      %v2832 = vpop.f32.mrb[0].mxu0
      %v2833 = vadd.f32 0.0, %v2832
      %v2834 = vpop.f32.mrb[0].mxu0
      %v2835 = vadd.f32 0.0, %v2834
      %2836 = vmatprep.mubr.bf16.mxu0 %v2593
      %2837 = vmatmul.mubr.bf16.gmra.mrb[0].mxu0 %v2591
      %v2838 = vpop.f32.mrb[0].mxu0
      %v2839 = vadd.f32 0.0, %v2838
      %v2840 = vpop.f32.mrb[0].mxu0
      %v2841 = vadd.f32 0.0, %v2840
      %v2842 = vpop.f32.mrb[0].mxu0
      %v2843 = vadd.f32 0.0, %v2842
      %v2844 = vpop.f32.mrb[0].mxu0
      %v2845 = vadd.f32 0.0, %v2844
      %2846 = vmatprep.mubr.bf16.mxu0 %v2597
      %2847 = vmatmul.mubr.bf16.gmra.mrb[0].mxu0 %v2595
      %v2848 = vpop.f32.mrb[0].mxu0
      %v2849 = vadd.f32 0.0, %v2848
      %v2850 = vpop.f32.mrb[0].mxu0
      %v2851 = vadd.f32 0.0, %v2850
      %v2852 = vpop.f32.mrb[0].mxu0
      %v2853 = vadd.f32 0.0, %v2852
      %v2854 = vpop.f32.mrb[0].mxu0
      %v2855 = vadd.f32 0.0, %v2854
      %2856 = vmatprep.mubr.bf16.mxu0 %v2601
      %2857 = vmatmul.mubr.bf16.gmra.mrb[0].mxu0 %v2599
      %v2858 = vpop.f32.mrb[0].mxu0
      %v2859 = vadd.f32 0.0, %v2858
      %v2860 = vpop.f32.mrb[0].mxu0
      %v2861 = vadd.f32 0.0, %v2860
      %v2862 = vpop.f32.mrb[0].mxu0
      %v2863 = vadd.f32 0.0, %v2862
      %v2864 = vpop.f32.mrb[0].mxu0
      %v2865 = vadd.f32 0.0, %v2864
      %2866 = vmatprep.mubr.bf16.mxu0 %v2605
      %2867 = vmatmul.mubr.bf16.gmra.mrb[0].mxu0 %v2603
      %v2868 = vpop.f32.mrb[0].mxu0
      %v2869 = vadd.f32 0.0, %v2868
      %v2870 = vpop.f32.mrb[0].mxu0
      %v2871 = vadd.f32 0.0, %v2870
      %v2872 = vpop.f32.mrb[0].mxu0
      %v2873 = vadd.f32 0.0, %v2872
      %v2874 = vpop.f32.mrb[0].mxu0
      %v2875 = vadd.f32 0.0, %v2874
      %2876 = vmatprep.mubr.bf16.mxu0 %v2609
      %2877 = vmatmul.mubr.bf16.gmra.mrb[0].mxu0 %v2607
      %v2878 = vpop.f32.mrb[0].mxu0
      %v2879 = vadd.f32 0.0, %v2878
      %v2880 = vpop.f32.mrb[0].mxu0
      %v2881 = vadd.f32 0.0, %v2880
      %v2882 = vpop.f32.mrb[0].mxu0
      %v2883 = vadd.f32 0.0, %v2882
      %v2884 = vpop.f32.mrb[0].mxu0
      %v2885 = vadd.f32 0.0, %v2884
      %2886 = vmatprep.mubr.bf16.mxu0 %v2613
      %2887 = vmatmul.mubr.bf16.gmra.mrb[0].mxu0 %v2611
      %v2888 = vpop.f32.mrb[0].mxu0
      %v2889 = vadd.f32 0.0, %v2888
      %v2890 = vpop.f32.mrb[0].mxu0
      %v2891 = vadd.f32 0.0, %v2890
      %v2892 = vpop.f32.mrb[0].mxu0
      %v2893 = vadd.f32 0.0, %v2892
      %v2894 = vpop.f32.mrb[0].mxu0
      %v2895 = vadd.f32 0.0, %v2894
      %2896 = vmatprep.mubr.bf16.mxu0 %v2617
      %2897 = vmatmul.mubr.bf16.gmra.mrb[0].mxu0 %v2615
      %v2898 = vpop.f32.mrb[0].mxu0
      %v2899 = vadd.f32 0.0, %v2898
      %v2900 = vpop.f32.mrb[0].mxu0
      %v2901 = vadd.f32 0.0, %v2900
      %v2902 = vpop.f32.mrb[0].mxu0
      %v2903 = vadd.f32 0.0, %v2902
      %v2904 = vpop.f32.mrb[0].mxu0
      %v2905 = vadd.f32 0.0, %v2904
      %2906 = vdwg.mxu0
      %v2907 = vadd.f32 %v2498, %v2829
      %v2908 = vadd.f32 %v2499, %v2831
      %v2909 = vadd.f32 %v2500, %v2833
      %v2910 = vadd.f32 %v2501, %v2835
      %v2911 = vadd.f32 %v2502, %v2839
      %v2912 = vadd.f32 %v2503, %v2841
      %v2913 = vadd.f32 %v2504, %v2843
      %v2914 = vadd.f32 %v2505, %v2845
      %v2915 = vadd.f32 %v2506, %v2849
      %v2916 = vadd.f32 %v2507, %v2851
      %v2917 = vadd.f32 %v2508, %v2853
      %v2918 = vadd.f32 %v2509, %v2855
      %v2919 = vadd.f32 %v2510, %v2859
      %v2920 = vadd.f32 %v2511, %v2861
      %v2921 = vadd.f32 %v2512, %v2863
      %v2922 = vadd.f32 %v2513, %v2865
      %v2923 = vadd.f32 %v2514, %v2869
      %v2924 = vadd.f32 %v2515, %v2871
      %v2925 = vadd.f32 %v2516, %v2873
      %v2926 = vadd.f32 %v2517, %v2875
      %v2927 = vadd.f32 %v2518, %v2879
      %v2928 = vadd.f32 %v2519, %v2881
      %v2929 = vadd.f32 %v2520, %v2883
      %v2930 = vadd.f32 %v2521, %v2885
      %v2931 = vadd.f32 %v2522, %v2889
      %v2932 = vadd.f32 %v2523, %v2891
      %v2933 = vadd.f32 %v2524, %v2893
      %v2934 = vadd.f32 %v2525, %v2895
      %v2935 = vadd.f32 %v2526, %v2899
      %v2936 = vadd.f32 %v2527, %v2901
      %v2937 = vadd.f32 %v2528, %v2903
      %v2938 = vadd.f32 %v2529, %v2905
      %v2939 = vld [vmem:[%s4] sm:$0x3]
      %v2941 = vlaneseq
      %v2942 = vshrl.u32 %v2941, 7
      %v2943 = vsub.s32 0, %v2942
      %v2944 = vrot.slane %v2939, %v2943
      %v2945 = vlaneseq
      %v2946 = vshrl.u32 %v2945, 7
      %v2947 = vsub.s32 1, %v2946
      %v2948 = vrot.slane %v2939, %v2947
      %v2951 = vmul.f32 %v2907, %v2944
      %v2952 = vmul.f32 %v2908, %v2948
      %v2953 = vmul.f32 %v2909, %v2944
      %v2954 = vmul.f32 %v2910, %v2948
      %v2955 = vmul.f32 %v2911, %v2944
      %v2956 = vmul.f32 %v2912, %v2948
      %v2957 = vmul.f32 %v2913, %v2944
      %v2958 = vmul.f32 %v2914, %v2948
      %v2959 = vmul.f32 %v2915, %v2944
      %v2960 = vmul.f32 %v2916, %v2948
      %v2961 = vmul.f32 %v2917, %v2944
      %v2962 = vmul.f32 %v2918, %v2948
      %v2963 = vmul.f32 %v2919, %v2944
      %v2964 = vmul.f32 %v2920, %v2948
      %v2965 = vmul.f32 %v2921, %v2944
      %v2966 = vmul.f32 %v2922, %v2948
      %v2967 = vmul.f32 %v2923, %v2944
      %v2968 = vmul.f32 %v2924, %v2948
      %v2969 = vmul.f32 %v2925, %v2944
      %v2970 = vmul.f32 %v2926, %v2948
      %v2971 = vmul.f32 %v2927, %v2944
      %v2972 = vmul.f32 %v2928, %v2948
      %v2973 = vmul.f32 %v2929, %v2944
      %v2974 = vmul.f32 %v2930, %v2948
      %v2975 = vmul.f32 %v2931, %v2944
      %v2976 = vmul.f32 %v2932, %v2948
      %v2977 = vmul.f32 %v2933, %v2944
      %v2978 = vmul.f32 %v2934, %v2948
      %v2979 = vmul.f32 %v2935, %v2944
      %v2980 = vmul.f32 %v2936, %v2948
      %v2981 = vmul.f32 %v2937, %v2944
      %v2982 = vmul.f32 %v2938, %v2948
      %v2983 = vld [vmem:[%s5] sm:$0x3]
      %v2985 = vlaneseq
      %v2986 = vshrl.u32 %v2985, 7
      %v2987 = vsub.s32 0, %v2986
      %v2988 = vrot.slane %v2983, %v2987
      %v2989 = vlaneseq
      %v2990 = vshrl.u32 %v2989, 7
      %v2991 = vsub.s32 1, %v2990
      %v2992 = vrot.slane %v2983, %v2991
      %v2995 = vadd.f32 %v2951, %v2988
      %v2996 = vadd.f32 %v2952, %v2992
      %v2997 = vadd.f32 %v2953, %v2988
      %v2998 = vadd.f32 %v2954, %v2992
      %v2999 = vadd.f32 %v2955, %v2988
      %v3000 = vadd.f32 %v2956, %v2992
      %v3001 = vadd.f32 %v2957, %v2988
      %v3002 = vadd.f32 %v2958, %v2992
      %v3003 = vadd.f32 %v2959, %v2988
      %v3004 = vadd.f32 %v2960, %v2992
      %v3005 = vadd.f32 %v2961, %v2988
      %v3006 = vadd.f32 %v2962, %v2992
      %v3007 = vadd.f32 %v2963, %v2988
      %v3008 = vadd.f32 %v2964, %v2992
      %v3009 = vadd.f32 %v2965, %v2988
      %v3010 = vadd.f32 %v2966, %v2992
      %v3011 = vadd.f32 %v2967, %v2988
      %v3012 = vadd.f32 %v2968, %v2992
      %v3013 = vadd.f32 %v2969, %v2988
      %v3014 = vadd.f32 %v2970, %v2992
      %v3015 = vadd.f32 %v2971, %v2988
      %v3016 = vadd.f32 %v2972, %v2992
      %v3017 = vadd.f32 %v2973, %v2988
      %v3018 = vadd.f32 %v2974, %v2992
      %v3019 = vadd.f32 %v2975, %v2988
      %v3020 = vadd.f32 %v2976, %v2992
      %v3021 = vadd.f32 %v2977, %v2988
      %v3022 = vadd.f32 %v2978, %v2992
      %v3023 = vadd.f32 %v2979, %v2988
      %v3024 = vadd.f32 %v2980, %v2992
      %v3025 = vadd.f32 %v2981, %v2988
      %v3026 = vadd.f32 %v2982, %v2992
      %v3027 = vmax.f32 %v2995, 0.0
      %v3028 = vmax.f32 %v2996, 0.0
      %v3029 = vmax.f32 %v2997, 0.0
      %v3030 = vmax.f32 %v2998, 0.0
      %v3031 = vmax.f32 %v2999, 0.0
      %v3032 = vmax.f32 %v3000, 0.0
      %v3033 = vmax.f32 %v3001, 0.0
      %v3034 = vmax.f32 %v3002, 0.0
      %v3035 = vmax.f32 %v3003, 0.0
      %v3036 = vmax.f32 %v3004, 0.0
      %v3037 = vmax.f32 %v3005, 0.0
      %v3038 = vmax.f32 %v3006, 0.0
      %v3039 = vmax.f32 %v3007, 0.0
      %v3040 = vmax.f32 %v3008, 0.0
      %v3041 = vmax.f32 %v3009, 0.0
      %v3042 = vmax.f32 %v3010, 0.0
      %v3043 = vmax.f32 %v3011, 0.0
      %v3044 = vmax.f32 %v3012, 0.0
      %v3045 = vmax.f32 %v3013, 0.0
      %v3046 = vmax.f32 %v3014, 0.0
      %v3047 = vmax.f32 %v3015, 0.0
      %v3048 = vmax.f32 %v3016, 0.0
      %v3049 = vmax.f32 %v3017, 0.0
      %v3050 = vmax.f32 %v3018, 0.0
      %v3051 = vmax.f32 %v3019, 0.0
      %v3052 = vmax.f32 %v3020, 0.0
      %v3053 = vmax.f32 %v3021, 0.0
      %v3054 = vmax.f32 %v3022, 0.0
      %v3055 = vmax.f32 %v3023, 0.0
      %v3056 = vmax.f32 %v3024, 0.0
      %v3057 = vmax.f32 %v3025, 0.0
      %v3058 = vmax.f32 %v3026, 0.0
      %v3059 = vpack.c.bf16 %v3029, %v3027
      %v3060 = vpack.c.bf16 %v3030, %v3028
      %v3061 = vpack.c.bf16 %v3033, %v3031
      %v3062 = vpack.c.bf16 %v3034, %v3032
      %v3063 = vpack.c.bf16 %v3037, %v3035
      %v3064 = vpack.c.bf16 %v3038, %v3036
      %v3065 = vpack.c.bf16 %v3041, %v3039
      %v3066 = vpack.c.bf16 %v3042, %v3040
      %v3067 = vpack.c.bf16 %v3045, %v3043
      %v3068 = vpack.c.bf16 %v3046, %v3044
      %v3069 = vpack.c.bf16 %v3049, %v3047
      %v3070 = vpack.c.bf16 %v3050, %v3048
      %v3071 = vpack.c.bf16 %v3053, %v3051
      %v3072 = vpack.c.bf16 %v3054, %v3052
      %v3073 = vpack.c.bf16 %v3057, %v3055
      %v3074 = vpack.c.bf16 %v3058, %v3056
      %v3091 = vunpack.c.l.b16 %v3059
      %v3092 = vunpack.c.l.b16 %v3060
      %v3093 = vunpack.c.h.b16 %v3059
      %v3094 = vunpack.c.h.b16 %v3060
      %v3095 = vunpack.c.l.b16 %v3061
      %v3096 = vunpack.c.l.b16 %v3062
      %v3097 = vunpack.c.h.b16 %v3061
      %v3098 = vunpack.c.h.b16 %v3062
      %v3099 = vunpack.c.l.b16 %v3063
      %v3100 = vunpack.c.l.b16 %v3064
      %v3101 = vunpack.c.h.b16 %v3063
      %v3102 = vunpack.c.h.b16 %v3064
      %v3103 = vunpack.c.l.b16 %v3065
      %v3104 = vunpack.c.l.b16 %v3066
      %v3105 = vunpack.c.h.b16 %v3065
      %v3106 = vunpack.c.h.b16 %v3066
      %v3107 = vunpack.c.l.b16 %v3067
      %v3108 = vunpack.c.l.b16 %v3068
      %v3109 = vunpack.c.h.b16 %v3067
      %v3110 = vunpack.c.h.b16 %v3068
      %v3111 = vunpack.c.l.b16 %v3069
      %v3112 = vunpack.c.l.b16 %v3070
      %v3113 = vunpack.c.h.b16 %v3069
      %v3114 = vunpack.c.h.b16 %v3070
      %v3115 = vunpack.c.l.b16 %v3071
      %v3116 = vunpack.c.l.b16 %v3072
      %v3117 = vunpack.c.h.b16 %v3071
      %v3118 = vunpack.c.h.b16 %v3072
      %v3119 = vunpack.c.l.b16 %v3073
      %v3120 = vunpack.c.l.b16 %v3074
      %v3121 = vunpack.c.h.b16 %v3073
      %v3122 = vunpack.c.h.b16 %v3074
      %v3123 = vpack.c.b16 %v3092, %v3091
      %v3124 = vpack.c.b16 %v3094, %v3093
      %v3125 = vpack.c.b16 %v3096, %v3095
      %v3126 = vpack.c.b16 %v3098, %v3097
      %v3127 = vpack.c.b16 %v3100, %v3099
      %v3128 = vpack.c.b16 %v3102, %v3101
      %v3129 = vpack.c.b16 %v3104, %v3103
      %v3130 = vpack.c.b16 %v3106, %v3105
      %v3131 = vpack.c.b16 %v3108, %v3107
      %v3132 = vpack.c.b16 %v3110, %v3109
      %v3133 = vpack.c.b16 %v3112, %v3111
      %v3134 = vpack.c.b16 %v3114, %v3113
      %v3135 = vpack.c.b16 %v3116, %v3115
      %v3136 = vpack.c.b16 %v3118, %v3117
      %v3137 = vpack.c.b16 %v3120, %v3119
      %v3138 = vpack.c.b16 %v3122, %v3121
      %3155 = vst [vmem:[%s428] sm:$0xff] %v3123
      %3156 = vst [vmem:[%s428 + $0x8] sm:$0xff] %v3124
      %3157 = vst [vmem:[%s428 + $0x10] sm:$0xff] %v3125
      %3158 = vst [vmem:[%s428 + $0x18] sm:$0xff] %v3126
      %3159 = vst [vmem:[%s428 + $0x20] sm:$0xff] %v3127
      %3160 = vst [vmem:[%s428 + $0x28] sm:$0xff] %v3128
      %3161 = vst [vmem:[%s428 + $0x30] sm:$0xff] %v3129
      %3162 = vst [vmem:[%s428 + $0x38] sm:$0xff] %v3130
      %3163 = vst [vmem:[%s428 + $0x40] sm:$0xff] %v3131
      %3164 = vst [vmem:[%s428 + $0x48] sm:$0xff] %v3132
      %3165 = vst [vmem:[%s428 + $0x50] sm:$0xff] %v3133
      %3166 = vst [vmem:[%s428 + $0x58] sm:$0xff] %v3134
      %3167 = vst [vmem:[%s428 + $0x60] sm:$0xff] %v3135
      %3168 = vst [vmem:[%s428 + $0x68] sm:$0xff] %v3136
      %3169 = vst [vmem:[%s428 + $0x70] sm:$0xff] %v3137
      %3170 = vst [vmem:[%s428 + $0x78] sm:$0xff] %v3138
      %s3171 = smul.u32 16, %s22
      %p3172 = scmp.lt.s32.totalorder %s21, 1
      %s3173 = scalar_select %p3172, %s21, 1
      %p3174 = scmp.lt.s32.totalorder %s3171, 15
      %s3175 = scalar_select %p3174, %s3171, 15
      %s3176 = smul.addr %s3175, 2
      %s3177 = smul.addr %s3173, 32
      %s3178 = sadd.s32 %s3176, %s3177
      %s3179 = smul.addr %s3178, 4
      %s3180 = scalar_lea.vmem %s6, %s3179
      // Predicated region
      $region53: #{audio_enhancement_pallas.5} parent=43 // pred_check
        %p3181 = pneg %p212
      $region54: #{audio_enhancement_pallas.5} parent=43 // pred_check_branch
        %3183 = sbr.rel (%p3181) target = $region56
      $region55: #{audio_enhancement_pallas.5} parent=43 // pred_region
        %s3184 = smul.u32 16, %s22
      $region56: #{audio_enhancement_pallas.5} parent=43 // pred_fallthru
        _
    $region44: #{audio_enhancement_pallas.5} parent=5 // pred_fallthru
      _
    %p3185 = scmp.le.s32.totalorder 2, %s12
    // Predicated region
    $region57: #{audio_enhancement_pallas.5} parent=5 // pred_check
      %p3186 = pneg %p3185
    $region58: #{audio_enhancement_pallas.5} parent=5 // pred_check_branch
      %3188 = sbr.rel (%p3186) target = $region60
    $region59: #{audio_enhancement_pallas.5} parent=5 // pred_region
      %s3189 = ssub.s32 %s12, 2
      // Predicated region
      $region61: #{audio_enhancement_pallas.5} parent=59 // pred_check
        %p3190 = pneg %p218
      $region62: #{audio_enhancement_pallas.5} parent=59 // pred_check_branch
        %3192 = sbr.rel (%p3190) target = $region64
      $region63: #{audio_enhancement_pallas.5} parent=59 // pred_region
        %s3193 = smul.u32 16, %s24
        %p3194 = scmp.lt.s32.totalorder %s23, 1
        %s3195 = scalar_select %p3194, %s23, 1
        %p3196 = scmp.lt.s32.totalorder %s3193, 15
        %s3197 = scalar_select %p3196, %s3193, 15
        %s3198 = smul.addr %s3197, 2
        %s3199 = smul.addr %s3195, 32
        %s3200 = sadd.s32 %s3198, %s3199
        %s3201 = smul.addr %s3200, 4
        %s3202 = scalar_lea.vmem %s6, %s3201
      $region64: #{audio_enhancement_pallas.5} parent=59 // pred_fallthru
        _
    $region60: #{audio_enhancement_pallas.5} parent=5 // pred_fallthru
      _
  $region6: #{audio_enhancement_pallas.5} parent=0 // loop_footer
    %s16 = sadd.s32 1, %s12
  $region7: #{audio_enhancement_pallas.5} parent=0 // loop_footer_branch
    %11 = sbr.rel target = $region3
  $region8: #{audio_enhancement_pallas.5} parent=0 // loop_exit
    _

// kernel: audio_enhancement_pallas.7
$region0: #{audio_enhancement_pallas.7}
  #allocation0 [shape = 'u32[]', space=smem, size = 0x4, offset = 0x4, fixed_abs, tag = 'smem constant byte address 0x4 - core index']
  #allocation1 [shape = 'u32[144,128]{1,0:T(1,128)}', space=vmem, size = 0x12000, scoped, tag = 'internal scratch']
  #allocation2 [shape = 'bf16[288,128]{1,0:T(16,128)(2,1)}', space=vmem, size = 0x12000, scoped, tag = 'scratch operand']
  #allocation3 [shape = 'f32[1,1]{1,0:T(1,128)S(1)}', space=vmem, size = 0x200, scoped, tag = 'scoped memory for audio_enhancement_pallas.7']
  %s0 = inlined_call_operand.vmem [shape: bf16[2,256,128], index: 0, kind: input, shape index: {}, may-alias: {0,1,2}]
  %s1 = inlined_call_operand.vmem [shape: bf16[2,256,128], index: 1, kind: input, shape index: {}, may-alias: {0,1,2}]
  %s2 = inlined_call_operand.vmem [shape: bf16[2,256,128], index: 2, kind: input, shape index: {}, may-alias: {0,1,2}]
  %s3 = inlined_call_operand.vmem [shape: bf16[128,16], index: 3, kind: input, shape index: {}]
  %s4 = inlined_call_operand.<no memory space> [shape: f32[1,1], index: 4, kind: input, shape index: {}]
  %s5 = inlined_call_operand.vmem [shape: f32[2,256,1], index: 5, kind: output, shape index: {}]
  %s6 = sld [smem:[#allocation0]]
  $region61: #{audio_enhancement_pallas.7} parent=0
    _
  %s8 = ssub.s32 1, %s6
  %s9 = scalar_select 0, %s8, %s6
  %v10 = vstv %s4
  %11 = vst [vmem:[#allocation3] sm:$0x1] %v10
  loop: start=0, step=1, limit=4
  $region2: #{audio_enhancement_pallas.7} parent=0 // loop_pre_header
    _
  $region3: #{audio_enhancement_pallas.7} parent=0 // loop_header
    %s13 = sphi 0, %s17
    %p14 = scmp.ge.s32.totalorder %s13, 4
    %s20 = sphi 0, %s32
    %s21 = sphi 0, %s28
    %s22 = sphi 0, %s20
    %s23 = sphi 0, %s21
    %s24 = sphi 0, %s22
    %s25 = sphi 0, %s23
    %s37 = sphi 0, %s39
    %s40 = sphi 0, %s37
    %s41 = sphi 0, %s40
    %s57 = sphi 0, %s41
    %s73 = sphi 0, %s75
    %s76 = sphi 0, %s73
    %s77 = sphi 0, %s76
    %s93 = sphi 0, %s77
    %s109 = sphi 0, %s111
    %s112 = sphi 0, %s109
    %s113 = sphi 0, %s112
    %s129 = sphi 0, %s113
    %s133 = sphi 0, %s133
    %s135 = sphi 0, %s133
    %s136 = sphi 0, %s135
    %s150 = sphi 0, %s136
    %s154 = sphi 0, %s154
    %s156 = sphi 0, %s154
    %s157 = sphi 0, %s156
    %s171 = sphi 0, %s157
    %s179 = sphi 0, %s181
    %s182 = sphi 0, %s179
    %s183 = sphi 0, %s182
    %s199 = sphi 0, %s183
  $region4: #{audio_enhancement_pallas.7} parent=0 // loop_header_branch
    %16 = sbr.rel (%p14) target = $region8
  $region5: #{audio_enhancement_pallas.7} parent=0 // loop_body
    %s18 = ssub.s32 %s13, 1
    %s19 = ssub.s32 %s13, 2
    %s26 = sadd.s32 1, %s21
    %p27 = scmp.ge.s32.totalorder %s26, 1
    %s28 = scalar_select %p27, 0, %s26
    %s29 = sadd.s32 1, %s20
    %s30 = scalar_select %p27, %s29, %s20
    %p31 = scmp.ge.s32.totalorder %s30, 2
    %s32 = scalar_select %p31, 0, %s30
    %s33 = ssub.s32 %s20, %s32
    %s34 = ssub.s32 %s21, %s28
    %s35 = sor.u32 %s33, %s34
    %p36 = scmp.eq.s32.totalorder %s35, 0
    %s38 = sadd.s32 %s37, 1
    %s39 = scalar_select %p36, %s37, %s38
    %p42 = pneg %p36
    %p43 = scmp.eq.s32.totalorder %s13, 1
    %p44 = por %p42, %p43
    %p45 = scmp.ne.s32.totalorder %s37, %s40
    %p46 = scmp.eq.s32.totalorder %s13, 0
    %p47 = por %p45, %p46
    %p48 = scmp.ne.s32.totalorder %s37, %s40
    %p49 = scmp.eq.s32.totalorder %s18, 1
    %p50 = por %p48, %p49
    %p51 = scmp.ne.s32.totalorder %s40, %s41
    %p52 = scmp.eq.s32.totalorder %s18, 0
    %p53 = por %p51, %p52
    %p54 = scmp.ne.s32.totalorder %s40, %s41
    %p55 = scmp.eq.s32.totalorder %s19, 1
    %p56 = por %p54, %p55
    %p58 = scmp.ne.s32.totalorder %s41, %s57
    %p59 = scmp.eq.s32.totalorder %s19, 0
    %p60 = por %p58, %p59
    %s61 = smul.u32 %s21, 16
    %s62 = ssub.s32 %s61, 1
    %p63 = scmp.gt.s32.totalorder %s62, 0
    %s64 = scalar_select %p63, %s62, 0
    %s65 = smul.u32 %s28, 16
    %s66 = ssub.s32 %s65, 1
    %p67 = scmp.gt.s32.totalorder %s66, 0
    %s68 = scalar_select %p67, %s66, 0
    %s69 = ssub.s32 %s20, %s32
    %s70 = ssub.s32 %s64, %s68
    %s71 = sor.u32 %s69, %s70
    %p72 = scmp.eq.s32.totalorder %s71, 0
    %s74 = sadd.s32 %s73, 1
    %s75 = scalar_select %p72, %s73, %s74
    %p78 = pneg %p72
    %p79 = scmp.eq.s32.totalorder %s13, 1
    %p80 = por %p78, %p79
    %p81 = scmp.ne.s32.totalorder %s73, %s76
    %p82 = scmp.eq.s32.totalorder %s13, 0
    %p83 = por %p81, %p82
    %p84 = scmp.ne.s32.totalorder %s73, %s76
    %p85 = scmp.eq.s32.totalorder %s18, 1
    %p86 = por %p84, %p85
    %p87 = scmp.ne.s32.totalorder %s76, %s77
    %p88 = scmp.eq.s32.totalorder %s18, 0
    %p89 = por %p87, %p88
    %p90 = scmp.ne.s32.totalorder %s76, %s77
    %p91 = scmp.eq.s32.totalorder %s19, 1
    %p92 = por %p90, %p91
    %p94 = scmp.ne.s32.totalorder %s77, %s93
    %p95 = scmp.eq.s32.totalorder %s19, 0
    %p96 = por %p94, %p95
    %s97 = sadd.s32 %s21, 1
    %s98 = smul.u32 %s97, 16
    %p99 = scmp.lt.s32.totalorder %s98, 15
    %s100 = scalar_select %p99, %s98, 15
    %s101 = sadd.s32 %s28, 1
    %s102 = smul.u32 %s101, 16
    %p103 = scmp.lt.s32.totalorder %s102, 15
    %s104 = scalar_select %p103, %s102, 15
    %s105 = ssub.s32 %s20, %s32
    %s106 = ssub.s32 %s100, %s104
    %s107 = sor.u32 %s105, %s106
    %p108 = scmp.eq.s32.totalorder %s107, 0
    %s110 = sadd.s32 %s109, 1
    %s111 = scalar_select %p108, %s109, %s110
    %p114 = pneg %p108
    %p115 = scmp.eq.s32.totalorder %s13, 1
    %p116 = por %p114, %p115
    %p117 = scmp.ne.s32.totalorder %s109, %s112
    %p118 = scmp.eq.s32.totalorder %s13, 0
    %p119 = por %p117, %p118
    %p120 = scmp.ne.s32.totalorder %s109, %s112
    %p121 = scmp.eq.s32.totalorder %s18, 1
    %p122 = por %p120, %p121
    %p123 = scmp.ne.s32.totalorder %s112, %s113
    %p124 = scmp.eq.s32.totalorder %s18, 0
    %p125 = por %p123, %p124
    %p126 = scmp.ne.s32.totalorder %s112, %s113
    %p127 = scmp.eq.s32.totalorder %s19, 1
    %p128 = por %p126, %p127
    %p130 = scmp.ne.s32.totalorder %s113, %s129
    %p131 = scmp.eq.s32.totalorder %s19, 0
    %p132 = por %p130, %p131
    %s134 = sadd.s32 %s133, 1
    %p137 = scmp.eq.s32.totalorder %s13, 1
    %p138 = scmp.ne.s32.totalorder %s133, %s135
    %p139 = scmp.eq.s32.totalorder %s13, 0
    %p140 = por %p138, %p139
    %p141 = scmp.ne.s32.totalorder %s133, %s135
    %p142 = scmp.eq.s32.totalorder %s18, 1
    %p143 = por %p141, %p142
    %p144 = scmp.ne.s32.totalorder %s135, %s136
    %p145 = scmp.eq.s32.totalorder %s18, 0
    %p146 = por %p144, %p145
    %p147 = scmp.ne.s32.totalorder %s135, %s136
    %p148 = scmp.eq.s32.totalorder %s19, 1
    %p149 = por %p147, %p148
    %p151 = scmp.ne.s32.totalorder %s136, %s150
    %p152 = scmp.eq.s32.totalorder %s19, 0
    %p153 = por %p151, %p152
    %s155 = sadd.s32 %s154, 1
    %p158 = scmp.eq.s32.totalorder %s13, 1
    %p159 = scmp.ne.s32.totalorder %s154, %s156
    %p160 = scmp.eq.s32.totalorder %s13, 0
    %p161 = por %p159, %p160
    %p162 = scmp.ne.s32.totalorder %s154, %s156
    %p163 = scmp.eq.s32.totalorder %s18, 1
    %p164 = por %p162, %p163
    %p165 = scmp.ne.s32.totalorder %s156, %s157
    %p166 = scmp.eq.s32.totalorder %s18, 0
    %p167 = por %p165, %p166
    %p168 = scmp.ne.s32.totalorder %s156, %s157
    %p169 = scmp.eq.s32.totalorder %s19, 1
    %p170 = por %p168, %p169
    %p172 = scmp.ne.s32.totalorder %s157, %s171
    %p173 = scmp.eq.s32.totalorder %s19, 0
    %p174 = por %p172, %p173
    %s175 = ssub.s32 %s20, %s32
    %s176 = ssub.s32 %s21, %s28
    %s177 = sor.u32 %s175, %s176
    %p178 = scmp.eq.s32.totalorder %s177, 0
    %s180 = sadd.s32 %s179, 1
    %s181 = scalar_select %p178, %s179, %s180
    %p184 = pneg %p178
    %p185 = scmp.eq.s32.totalorder %s13, 1
    %p186 = por %p184, %p185
    %p187 = scmp.ne.s32.totalorder %s179, %s182
    %p188 = scmp.eq.s32.totalorder %s13, 0
    %p189 = por %p187, %p188
    %p190 = scmp.ne.s32.totalorder %s179, %s182
    %p191 = scmp.eq.s32.totalorder %s18, 1
    %p192 = por %p190, %p191
    %p193 = scmp.ne.s32.totalorder %s182, %s183
    %p194 = scmp.eq.s32.totalorder %s18, 0
    %p195 = por %p193, %p194
    %p196 = scmp.ne.s32.totalorder %s182, %s183
    %p197 = scmp.eq.s32.totalorder %s19, 1
    %p198 = por %p196, %p197
    %p200 = scmp.ne.s32.totalorder %s183, %s199
    %p201 = scmp.eq.s32.totalorder %s19, 0
    %p202 = por %p200, %p201
    %p203 = scmp.le.s32.totalorder 1, %s13
    %p204 = scmp.lt.s32.totalorder %s13, 3
    %p205 = pnand %p203, %p204
    %p206 = pneg %p205
    // Predicated region
    $region9: #{audio_enhancement_pallas.7} parent=5 // pred_check
      _
    $region10: #{audio_enhancement_pallas.7} parent=5 // pred_check_branch
      %208 = sbr.rel (%p205) target = $region12
    $region11: #{audio_enhancement_pallas.7} parent=5 // pred_region
      %s209 = ssub.s32 %s13, 1
      // Predicated region
      $region13: #{audio_enhancement_pallas.7} parent=11 // pred_check
        %p210 = pneg %p146
      $region14: #{audio_enhancement_pallas.7} parent=11 // pred_check_branch
        %212 = sbr.rel (%p210) target = $region16
      $region15: #{audio_enhancement_pallas.7} parent=11 // pred_region
        _
      $region16: #{audio_enhancement_pallas.7} parent=11 // pred_fallthru
        _
      // Predicated region
      $region17: #{audio_enhancement_pallas.7} parent=11 // pred_check
        %p213 = pneg %p167
      $region18: #{audio_enhancement_pallas.7} parent=11 // pred_check_branch
        %215 = sbr.rel (%p213) target = $region20
      $region19: #{audio_enhancement_pallas.7} parent=11 // pred_region
        _
      $region20: #{audio_enhancement_pallas.7} parent=11 // pred_fallthru
        _
    $region12: #{audio_enhancement_pallas.7} parent=5 // pred_fallthru
      _
    %p216 = scmp.lt.s32.totalorder %s13, 2
    // Predicated region
    $region21: #{audio_enhancement_pallas.7} parent=5 // pred_check
      %p217 = pneg %p216
    $region22: #{audio_enhancement_pallas.7} parent=5 // pred_check_branch
      %219 = sbr.rel (%p217) target = $region24
    $region23: #{audio_enhancement_pallas.7} parent=5 // pred_region
      // Predicated region
      $region25: #{audio_enhancement_pallas.7} parent=23 // pred_check
        %p220 = pneg %p47
      $region26: #{audio_enhancement_pallas.7} parent=23 // pred_check_branch
        %222 = sbr.rel (%p220) target = $region28
      $region27: #{audio_enhancement_pallas.7} parent=23 // pred_region
        %s223 = smul.u32 32, %s21
        %p224 = scmp.lt.s32.totalorder %s20, 1
        %s225 = scalar_select %p224, %s20, 1
        %p226 = scmp.lt.s32.totalorder %s223, 31
        %s227 = scalar_select %p226, %s223, 31
        %s228 = smul.addr %s225, 32
        %s229 = sadd.s32 %s227, %s228
        %s230 = smul.addr %s229, 4
        %s231 = scalar_lea.vmem %s0, %s230
        %s232 = smul.u32 32, %s21
      $region28: #{audio_enhancement_pallas.7} parent=23 // pred_fallthru
        _
      // Predicated region
      $region29: #{audio_enhancement_pallas.7} parent=23 // pred_check
        %p233 = pneg %p83
      $region30: #{audio_enhancement_pallas.7} parent=23 // pred_check_branch
        %235 = sbr.rel (%p233) target = $region32
      $region31: #{audio_enhancement_pallas.7} parent=23 // pred_region
        %s236 = smul.u32 %s21, 16
        %s237 = ssub.s32 %s236, 1
        %p238 = scmp.gt.s32.totalorder %s237, 0
        %s239 = scalar_select %p238, %s237, 0
        %s240 = smul.u32 2, %s239
        %p241 = scmp.lt.s32.totalorder %s20, 1
        %s242 = scalar_select %p241, %s20, 1
        %p243 = scmp.lt.s32.totalorder %s240, 31
        %s244 = scalar_select %p243, %s240, 31
        %s245 = smul.addr %s242, 32
        %s246 = sadd.s32 %s244, %s245
        %s247 = smul.addr %s246, 4
        %s248 = scalar_lea.vmem %s1, %s247
        %s249 = smul.u32 %s21, 16
        %s250 = ssub.s32 %s249, 1
        %p251 = scmp.gt.s32.totalorder %s250, 0
        %s252 = scalar_select %p251, %s250, 0
        %s253 = smul.u32 2, %s252
      $region32: #{audio_enhancement_pallas.7} parent=23 // pred_fallthru
        _
      // Predicated region
      $region33: #{audio_enhancement_pallas.7} parent=23 // pred_check
        %p254 = pneg %p119
      $region34: #{audio_enhancement_pallas.7} parent=23 // pred_check_branch
        %256 = sbr.rel (%p254) target = $region36
      $region35: #{audio_enhancement_pallas.7} parent=23 // pred_region
        %s257 = sadd.s32 %s21, 1
        %s258 = smul.u32 %s257, 16
        %p259 = scmp.lt.s32.totalorder %s258, 15
        %s260 = scalar_select %p259, %s258, 15
        %s261 = smul.u32 2, %s260
        %p262 = scmp.lt.s32.totalorder %s20, 1
        %s263 = scalar_select %p262, %s20, 1
        %p264 = scmp.lt.s32.totalorder %s261, 31
        %s265 = scalar_select %p264, %s261, 31
        %s266 = smul.addr %s263, 32
        %s267 = sadd.s32 %s265, %s266
        %s268 = smul.addr %s267, 4
        %s269 = scalar_lea.vmem %s2, %s268
        %s270 = sadd.s32 %s21, 1
        %s271 = smul.u32 %s270, 16
        %p272 = scmp.lt.s32.totalorder %s271, 15
        %s273 = scalar_select %p272, %s271, 15
        %s274 = smul.u32 2, %s273
      $region36: #{audio_enhancement_pallas.7} parent=23 // pred_fallthru
        _
    $region24: #{audio_enhancement_pallas.7} parent=5 // pred_fallthru
      _
    %p275 = scmp.le.s32.totalorder 1, %s13
    %p276 = scmp.lt.s32.totalorder %s13, 3
    %p277 = pnand %p275, %p276
    %p278 = pneg %p277
    // Predicated region
    $region37: #{audio_enhancement_pallas.7} parent=5 // pred_check
      _
    $region38: #{audio_enhancement_pallas.7} parent=5 // pred_check_branch
      %280 = sbr.rel (%p277) target = $region40
    $region39: #{audio_enhancement_pallas.7} parent=5 // pred_region
      %s281 = ssub.s32 %s13, 1
      %s282 = smul.u32 32, %s23
      %p283 = scmp.lt.s32.totalorder %s22, 1
      %s284 = scalar_select %p283, %s22, 1
      %p285 = scmp.lt.s32.totalorder %s282, 31
      %s286 = scalar_select %p285, %s282, 31
      %s287 = smul.addr %s284, 32
      %s288 = sadd.s32 %s286, %s287
      %s289 = smul.addr %s288, 4
      %s290 = scalar_lea.vmem %s0, %s289
      %p291 = pneg %p53
      %p292 = pneg %p50
      %s293 = smul.u32 %s23, 16
      %s294 = ssub.s32 %s293, 1
      %p295 = scmp.gt.s32.totalorder %s294, 0
      %s296 = scalar_select %p295, %s294, 0
      %s297 = smul.u32 2, %s296
      %p298 = scmp.lt.s32.totalorder %s22, 1
      %s299 = scalar_select %p298, %s22, 1
      %p300 = scmp.lt.s32.totalorder %s297, 31
      %s301 = scalar_select %p300, %s297, 31
      %s302 = smul.addr %s299, 32
      %s303 = sadd.s32 %s301, %s302
      %s304 = smul.addr %s303, 4
      %s305 = scalar_lea.vmem %s1, %s304
      %p306 = pneg %p89
      %p307 = pneg %p86
      %s308 = sadd.s32 %s23, 1
      %s309 = smul.u32 %s308, 16
      %p310 = scmp.lt.s32.totalorder %s309, 15
      %s311 = scalar_select %p310, %s309, 15
      %s312 = smul.u32 2, %s311
      %p313 = scmp.lt.s32.totalorder %s22, 1
      %s314 = scalar_select %p313, %s22, 1
      %p315 = scmp.lt.s32.totalorder %s312, 31
      %s316 = scalar_select %p315, %s312, 31
      %s317 = smul.addr %s314, 32
      %s318 = sadd.s32 %s316, %s317
      %s319 = smul.addr %s318, 4
      %s320 = scalar_lea.vmem %s2, %s319
      %p321 = pneg %p125
      %p322 = pneg %p122
      %p323 = pneg %p146
      %p324 = pneg %p143
      %p325 = pneg %p167
      %p326 = pneg %p164
      %p327 = pneg %p195
      %p328 = pneg %p192
      %s329 = smul.u32 32, %s23
      %p330 = scmp.lt.s32.totalorder %s22, 1
      %s331 = scalar_select %p330, %s22, 1
      %p332 = scmp.lt.s32.totalorder %s329, 31
      %s333 = scalar_select %p332, %s329, 31
      %s334 = smul.addr %s331, 32
      %s335 = sadd.s32 %s333, %s334
      %s336 = smul.addr %s335, 8
      %s337 = scalar_lea.vmem %s5, %s336
      %s338 = smul.u32 32, %s23
      %p339 = scmp.lt.s32.totalorder %s22, 1
      %s340 = scalar_select %p339, %s22, 1
      %p341 = scmp.lt.s32.totalorder %s338, 31
      %s342 = scalar_select %p341, %s338, 31
      %s343 = smul.addr %s340, 32
      %s344 = sadd.s32 %s342, %s343
      %s345 = smul.addr %s344, 4
      %s346 = scalar_lea.vmem %s0, %s345
      %s347 = smul.u32 32, %s23
      %s348 = smul.u32 %s23, 16
      %s349 = ssub.s32 %s348, 1
      %p350 = scmp.gt.s32.totalorder %s349, 0
      %s351 = scalar_select %p350, %s349, 0
      %s352 = smul.u32 2, %s351
      %p353 = scmp.lt.s32.totalorder %s22, 1
      %s354 = scalar_select %p353, %s22, 1
      %p355 = scmp.lt.s32.totalorder %s352, 31
      %s356 = scalar_select %p355, %s352, 31
      %s357 = smul.addr %s354, 32
      %s358 = sadd.s32 %s356, %s357
      %s359 = smul.addr %s358, 4
      %s360 = scalar_lea.vmem %s1, %s359
      %s361 = smul.u32 %s23, 16
      %s362 = ssub.s32 %s361, 1
      %p363 = scmp.gt.s32.totalorder %s362, 0
      %s364 = scalar_select %p363, %s362, 0
      %s365 = smul.u32 2, %s364
      %s366 = sadd.s32 %s23, 1
      %s367 = smul.u32 %s366, 16
      %p368 = scmp.lt.s32.totalorder %s367, 15
      %s369 = scalar_select %p368, %s367, 15
      %s370 = smul.u32 2, %s369
      %p371 = scmp.lt.s32.totalorder %s22, 1
      %s372 = scalar_select %p371, %s22, 1
      %p373 = scmp.lt.s32.totalorder %s370, 31
      %s374 = scalar_select %p373, %s370, 31
      %s375 = smul.addr %s372, 32
      %s376 = sadd.s32 %s374, %s375
      %s377 = smul.addr %s376, 4
      %s378 = scalar_lea.vmem %s2, %s377
      %s379 = sadd.s32 %s23, 1
      %s380 = smul.u32 %s379, 16
      %p381 = scmp.lt.s32.totalorder %s380, 15
      %s382 = scalar_select %p381, %s380, 15
      %s383 = smul.u32 2, %s382
      %s384 = smul.u32 32, %s23
      %p385 = scmp.lt.s32.totalorder %s22, 1
      %s386 = scalar_select %p385, %s22, 1
      %p387 = scmp.lt.s32.totalorder %s384, 31
      %s388 = scalar_select %p387, %s384, 31
      %s389 = smul.addr %s386, 32
      %s390 = sadd.s32 %s388, %s389
      %s391 = smul.addr %s390, 8
      %s392 = scalar_lea.vmem %s5, %s391
      %s393 = smul.u32 32, %s23
      %v397 = vld [vmem:[%s360] sm:$0xf]
      %v398 = vld [vmem:[%s360 + $0x4] sm:$0xf]
      %v401 = vunpack.c.l.b16 %v397
      %v402 = vunpack.c.l.b16 %v398
      %v403 = vpack.c.b16 %v402, %v401
      %405 = vst [vmem:[#allocation2] sm:$0xff] %v403
      %v406 = vld [vmem:[%s346] sm:$0xf]
      %v407 = vld [vmem:[%s346 + $0x4] sm:$0xf]
      %v408 = vld [vmem:[%s346 + $0x8] sm:$0xf]
      %v409 = vld [vmem:[%s346 + $0xc] sm:$0xf]
      %v410 = vld [vmem:[%s346 + $0x10] sm:$0xf]
      %v411 = vld [vmem:[%s346 + $0x14] sm:$0xf]
      %v412 = vld [vmem:[%s346 + $0x18] sm:$0xf]
      %v413 = vld [vmem:[%s346 + $0x1c] sm:$0xf]
      %v414 = vld [vmem:[%s346 + $0x20] sm:$0xf]
      %v415 = vld [vmem:[%s346 + $0x24] sm:$0xf]
      %v416 = vld [vmem:[%s346 + $0x28] sm:$0xf]
      %v417 = vld [vmem:[%s346 + $0x2c] sm:$0xf]
      %v418 = vld [vmem:[%s346 + $0x30] sm:$0xf]
      %v419 = vld [vmem:[%s346 + $0x34] sm:$0xf]
      %v420 = vld [vmem:[%s346 + $0x38] sm:$0xf]
      %v421 = vld [vmem:[%s346 + $0x3c] sm:$0xf]
      %v422 = vld [vmem:[%s346 + $0x40] sm:$0xf]
      %v423 = vld [vmem:[%s346 + $0x44] sm:$0xf]
      %v424 = vld [vmem:[%s346 + $0x48] sm:$0xf]
      %v425 = vld [vmem:[%s346 + $0x4c] sm:$0xf]
      %v426 = vld [vmem:[%s346 + $0x50] sm:$0xf]
      %v427 = vld [vmem:[%s346 + $0x54] sm:$0xf]
      %v428 = vld [vmem:[%s346 + $0x58] sm:$0xf]
      %v429 = vld [vmem:[%s346 + $0x5c] sm:$0xf]
      %v430 = vld [vmem:[%s346 + $0x60] sm:$0xf]
      %v431 = vld [vmem:[%s346 + $0x64] sm:$0xf]
      %v432 = vld [vmem:[%s346 + $0x68] sm:$0xf]
      %v433 = vld [vmem:[%s346 + $0x6c] sm:$0xf]
      %v434 = vld [vmem:[%s346 + $0x70] sm:$0xf]
      %v435 = vld [vmem:[%s346 + $0x74] sm:$0xf]
      %v436 = vld [vmem:[%s346 + $0x78] sm:$0xf]
      %v437 = vld [vmem:[%s346 + $0x7c] sm:$0xf]
      %v470 = vunpack.c.l.b16 %v406
      %v471 = vunpack.c.l.b16 %v407
      %v472 = vunpack.c.l.b16 %v408
      %v473 = vunpack.c.l.b16 %v409
      %v474 = vunpack.c.l.b16 %v410
      %v475 = vunpack.c.l.b16 %v411
      %v476 = vunpack.c.l.b16 %v412
      %v477 = vunpack.c.l.b16 %v413
      %v478 = vunpack.c.l.b16 %v414
      %v479 = vunpack.c.l.b16 %v415
      %v480 = vunpack.c.l.b16 %v416
      %v481 = vunpack.c.l.b16 %v417
      %v482 = vunpack.c.l.b16 %v418
      %v483 = vunpack.c.l.b16 %v419
      %v484 = vunpack.c.l.b16 %v420
      %v485 = vunpack.c.l.b16 %v421
      %v486 = vunpack.c.l.b16 %v422
      %v487 = vunpack.c.l.b16 %v423
      %v488 = vunpack.c.l.b16 %v424
      %v489 = vunpack.c.l.b16 %v425
      %v490 = vunpack.c.l.b16 %v426
      %v491 = vunpack.c.l.b16 %v427
      %v492 = vunpack.c.l.b16 %v428
      %v493 = vunpack.c.l.b16 %v429
      %v494 = vunpack.c.l.b16 %v430
      %v495 = vunpack.c.l.b16 %v431
      %v496 = vunpack.c.l.b16 %v432
      %v497 = vunpack.c.l.b16 %v433
      %v498 = vunpack.c.l.b16 %v434
      %v499 = vunpack.c.l.b16 %v435
      %v500 = vunpack.c.l.b16 %v436
      %v501 = vunpack.c.l.b16 %v437
      %v502 = vpack.c.b16 %v471, %v470
      %v503 = vpack.c.b16 %v473, %v472
      %v504 = vpack.c.b16 %v475, %v474
      %v505 = vpack.c.b16 %v477, %v476
      %v506 = vpack.c.b16 %v479, %v478
      %v507 = vpack.c.b16 %v481, %v480
      %v508 = vpack.c.b16 %v483, %v482
      %v509 = vpack.c.b16 %v485, %v484
      %v510 = vpack.c.b16 %v487, %v486
      %v511 = vpack.c.b16 %v489, %v488
      %v512 = vpack.c.b16 %v491, %v490
      %v513 = vpack.c.b16 %v493, %v492
      %v514 = vpack.c.b16 %v495, %v494
      %v515 = vpack.c.b16 %v497, %v496
      %v516 = vpack.c.b16 %v499, %v498
      %v517 = vpack.c.b16 %v501, %v500
      %534 = vst [vmem:[#allocation2 + $0x8] sm:$0xff] %v502
      %535 = vst [vmem:[#allocation2 + $0x10] sm:$0xff] %v503
      %536 = vst [vmem:[#allocation2 + $0x18] sm:$0xff] %v504
      %537 = vst [vmem:[#allocation2 + $0x20] sm:$0xff] %v505
      %538 = vst [vmem:[#allocation2 + $0x28] sm:$0xff] %v506
      %539 = vst [vmem:[#allocation2 + $0x30] sm:$0xff] %v507
      %540 = vst [vmem:[#allocation2 + $0x38] sm:$0xff] %v508
      %541 = vst [vmem:[#allocation2 + $0x40] sm:$0xff] %v509
      %542 = vst [vmem:[#allocation2 + $0x48] sm:$0xff] %v510
      %543 = vst [vmem:[#allocation2 + $0x50] sm:$0xff] %v511
      %544 = vst [vmem:[#allocation2 + $0x58] sm:$0xff] %v512
      %545 = vst [vmem:[#allocation2 + $0x60] sm:$0xff] %v513
      %546 = vst [vmem:[#allocation2 + $0x68] sm:$0xff] %v514
      %547 = vst [vmem:[#allocation2 + $0x70] sm:$0xff] %v515
      %548 = vst [vmem:[#allocation2 + $0x78] sm:$0xff] %v516
      %549 = vst [vmem:[#allocation2 + $0x80] sm:$0xff] %v517
      %v550 = vld [vmem:[%s378] sm:$0xf]
      %v551 = vld [vmem:[%s378 + $0x4] sm:$0xf]
      %v554 = vunpack.c.l.b16 %v550
      %v555 = vunpack.c.l.b16 %v551
      %v556 = vpack.c.b16 %v555, %v554
      %558 = vst [vmem:[#allocation2 + $0x88] sm:$0xff] %v556
      %p559 = scmp.eq.s32.totalorder %s23, 0
      // Predicated region
      $region41: #{audio_enhancement_pallas.7} parent=39 // pred_check
        %p560 = pneg %p559
      $region42: #{audio_enhancement_pallas.7} parent=39 // pred_check_branch
        %562 = sbr.rel (%p560) target = $region44
      $region43: #{audio_enhancement_pallas.7} parent=39 // pred_region
        %563 = vst [vmem:[#allocation2] sm:$0xff] 0
      $region44: #{audio_enhancement_pallas.7} parent=39 // pred_fallthru
        _
      %s564 = sadd.s32 %s23, 1
      %s565 = smul.u32 %s564, 256
      %s566 = sadd.s32 %s565, 16
      %p567 = scmp.gt.s32.totalorder %s566, 256
      // Predicated region
      $region45: #{audio_enhancement_pallas.7} parent=39 // pred_check
        %p568 = pneg %p567
      $region46: #{audio_enhancement_pallas.7} parent=39 // pred_check_branch
        %570 = sbr.rel (%p568) target = $region48
      $region47: #{audio_enhancement_pallas.7} parent=39 // pred_region
        %v571 = vlaneseq
        %v572 = vshrl.u32 %v571, 7
        %v573 = vadd.s32 %v572, 8
        %v574 = vadd.s32 %v572, 16
        %v575 = vadd.s32 %v572, 24
        %v576 = vadd.s32 %v572, 32
        %v577 = vadd.s32 %v572, 40
        %v578 = vadd.s32 %v572, 48
        %v579 = vadd.s32 %v572, 56
        %v580 = vadd.s32 %v572, 64
        %v581 = vadd.s32 %v572, 72
        %v582 = vadd.s32 %v572, 80
        %v583 = vadd.s32 %v572, 88
        %v584 = vadd.s32 %v572, 96
        %v585 = vadd.s32 %v572, 104
        %v586 = vadd.s32 %v572, 112
        %v587 = vadd.s32 %v572, 120
        %v588 = vadd.s32 %v572, 128
        %v589 = vadd.s32 %v572, 136
        %v590 = vadd.s32 %v572, 144
        %v591 = vadd.s32 %v572, 152
        %v592 = vadd.s32 %v572, 160
        %v593 = vadd.s32 %v572, 168
        %v594 = vadd.s32 %v572, 176
        %v595 = vadd.s32 %v572, 184
        %v596 = vadd.s32 %v572, 192
        %v597 = vadd.s32 %v572, 200
        %v598 = vadd.s32 %v572, 208
        %v599 = vadd.s32 %v572, 216
        %v600 = vadd.s32 %v572, 224
        %v601 = vadd.s32 %v572, 232
        %v602 = vadd.s32 %v572, 240
        %v603 = vadd.s32 %v572, 248
        %v604 = vadd.s32 %v572, 256
        %v605 = vadd.s32 %v572, 264
        %v606 = vadd.s32 %v572, 272
        %v607 = vadd.s32 %v572, 280
        %s608 = smul.u32 %s23, 256
        %s609 = ssub.s32 %s608, 16
        %v610 = vstv %s609
        %v611 = vadd.s32 %v610, %v572
        %v612 = vadd.s32 %v610, %v573
        %v613 = vadd.s32 %v610, %v574
        %v614 = vadd.s32 %v610, %v575
        %v615 = vadd.s32 %v610, %v576
        %v616 = vadd.s32 %v610, %v577
        %v617 = vadd.s32 %v610, %v578
        %v618 = vadd.s32 %v610, %v579
        %v619 = vadd.s32 %v610, %v580
        %v620 = vadd.s32 %v610, %v581
        %v621 = vadd.s32 %v610, %v582
        %v622 = vadd.s32 %v610, %v583
        %v623 = vadd.s32 %v610, %v584
        %v624 = vadd.s32 %v610, %v585
        %v625 = vadd.s32 %v610, %v586
        %v626 = vadd.s32 %v610, %v587
        %v627 = vadd.s32 %v610, %v588
        %v628 = vadd.s32 %v610, %v589
        %v629 = vadd.s32 %v610, %v590
        %v630 = vadd.s32 %v610, %v591
        %v631 = vadd.s32 %v610, %v592
        %v632 = vadd.s32 %v610, %v593
        %v633 = vadd.s32 %v610, %v594
        %v634 = vadd.s32 %v610, %v595
        %v635 = vadd.s32 %v610, %v596
        %v636 = vadd.s32 %v610, %v597
        %v637 = vadd.s32 %v610, %v598
        %v638 = vadd.s32 %v610, %v599
        %v639 = vadd.s32 %v610, %v600
        %v640 = vadd.s32 %v610, %v601
        %v641 = vadd.s32 %v610, %v602
        %v642 = vadd.s32 %v610, %v603
        %v643 = vadd.s32 %v610, %v604
        %v644 = vadd.s32 %v610, %v605
        %v645 = vadd.s32 %v610, %v606
        %v646 = vadd.s32 %v610, %v607
        %vm647 = vcmp.ge.s32.totalorder %v611, 256
        %vm648 = vcmp.ge.s32.totalorder %v612, 256
        %vm649 = vcmp.ge.s32.totalorder %v613, 256
        %vm650 = vcmp.ge.s32.totalorder %v614, 256
        %vm651 = vcmp.ge.s32.totalorder %v615, 256
        %vm652 = vcmp.ge.s32.totalorder %v616, 256
        %vm653 = vcmp.ge.s32.totalorder %v617, 256
        %vm654 = vcmp.ge.s32.totalorder %v618, 256
        %vm655 = vcmp.ge.s32.totalorder %v619, 256
        %vm656 = vcmp.ge.s32.totalorder %v620, 256
        %vm657 = vcmp.ge.s32.totalorder %v621, 256
        %vm658 = vcmp.ge.s32.totalorder %v622, 256
        %vm659 = vcmp.ge.s32.totalorder %v623, 256
        %vm660 = vcmp.ge.s32.totalorder %v624, 256
        %vm661 = vcmp.ge.s32.totalorder %v625, 256
        %vm662 = vcmp.ge.s32.totalorder %v626, 256
        %vm663 = vcmp.ge.s32.totalorder %v627, 256
        %vm664 = vcmp.ge.s32.totalorder %v628, 256
        %vm665 = vcmp.ge.s32.totalorder %v629, 256
        %vm666 = vcmp.ge.s32.totalorder %v630, 256
        %vm667 = vcmp.ge.s32.totalorder %v631, 256
        %vm668 = vcmp.ge.s32.totalorder %v632, 256
        %vm669 = vcmp.ge.s32.totalorder %v633, 256
        %vm670 = vcmp.ge.s32.totalorder %v634, 256
        %vm671 = vcmp.ge.s32.totalorder %v635, 256
        %vm672 = vcmp.ge.s32.totalorder %v636, 256
        %vm673 = vcmp.ge.s32.totalorder %v637, 256
        %vm674 = vcmp.ge.s32.totalorder %v638, 256
        %vm675 = vcmp.ge.s32.totalorder %v639, 256
        %vm676 = vcmp.ge.s32.totalorder %v640, 256
        %vm677 = vcmp.ge.s32.totalorder %v641, 256
        %vm678 = vcmp.ge.s32.totalorder %v642, 256
        %vm679 = vcmp.ge.s32.totalorder %v643, 256
        %vm680 = vcmp.ge.s32.totalorder %v644, 256
        %vm681 = vcmp.ge.s32.totalorder %v645, 256
        %vm682 = vcmp.ge.s32.totalorder %v646, 256
        %v683 = vld [vmem:[#allocation2] sm:$0xff]
        %v684 = vld [vmem:[#allocation2 + $0x8] sm:$0xff]
        %v685 = vld [vmem:[#allocation2 + $0x10] sm:$0xff]
        %v686 = vld [vmem:[#allocation2 + $0x18] sm:$0xff]
        %v687 = vld [vmem:[#allocation2 + $0x20] sm:$0xff]
        %v688 = vld [vmem:[#allocation2 + $0x28] sm:$0xff]
        %v689 = vld [vmem:[#allocation2 + $0x30] sm:$0xff]
        %v690 = vld [vmem:[#allocation2 + $0x38] sm:$0xff]
        %v691 = vld [vmem:[#allocation2 + $0x40] sm:$0xff]
        %v692 = vld [vmem:[#allocation2 + $0x48] sm:$0xff]
        %v693 = vld [vmem:[#allocation2 + $0x50] sm:$0xff]
        %v694 = vld [vmem:[#allocation2 + $0x58] sm:$0xff]
        %v695 = vld [vmem:[#allocation2 + $0x60] sm:$0xff]
        %v696 = vld [vmem:[#allocation2 + $0x68] sm:$0xff]
        %v697 = vld [vmem:[#allocation2 + $0x70] sm:$0xff]
        %v698 = vld [vmem:[#allocation2 + $0x78] sm:$0xff]
        %v699 = vld [vmem:[#allocation2 + $0x80] sm:$0xff]
        %v700 = vld [vmem:[#allocation2 + $0x88] sm:$0xff]
        %v701 = vsel %vm647, 1, 0
        %v702 = vsel %vm648, 1, 0
        %v703 = vsel %vm649, 1, 0
        %v704 = vsel %vm650, 1, 0
        %v705 = vsel %vm651, 1, 0
        %v706 = vsel %vm652, 1, 0
        %v707 = vsel %vm653, 1, 0
        %v708 = vsel %vm654, 1, 0
        %v709 = vsel %vm655, 1, 0
        %v710 = vsel %vm656, 1, 0
        %v711 = vsel %vm657, 1, 0
        %v712 = vsel %vm658, 1, 0
        %v713 = vsel %vm659, 1, 0
        %v714 = vsel %vm660, 1, 0
        %v715 = vsel %vm661, 1, 0
        %v716 = vsel %vm662, 1, 0
        %v717 = vsel %vm663, 1, 0
        %v718 = vsel %vm664, 1, 0
        %v719 = vsel %vm665, 1, 0
        %v720 = vsel %vm666, 1, 0
        %v721 = vsel %vm667, 1, 0
        %v722 = vsel %vm668, 1, 0
        %v723 = vsel %vm669, 1, 0
        %v724 = vsel %vm670, 1, 0
        %v725 = vsel %vm671, 1, 0
        %v726 = vsel %vm672, 1, 0
        %v727 = vsel %vm673, 1, 0
        %v728 = vsel %vm674, 1, 0
        %v729 = vsel %vm675, 1, 0
        %v730 = vsel %vm676, 1, 0
        %v731 = vsel %vm677, 1, 0
        %v732 = vsel %vm678, 1, 0
        %v733 = vsel %vm679, 1, 0
        %v734 = vsel %vm680, 1, 0
        %v735 = vsel %vm681, 1, 0
        %v736 = vsel %vm682, 1, 0
        %vm737 = vcmp.eq.s32.totalorder %v701, 1
        %vm738 = vcmp.eq.s32.totalorder %v702, 1
        %vm739 = vcmp.eq.s32.totalorder %v703, 1
        %vm740 = vcmp.eq.s32.totalorder %v704, 1
        %vm741 = vcmp.eq.s32.totalorder %v705, 1
        %vm742 = vcmp.eq.s32.totalorder %v706, 1
        %vm743 = vcmp.eq.s32.totalorder %v707, 1
        %vm744 = vcmp.eq.s32.totalorder %v708, 1
        %vm745 = vcmp.eq.s32.totalorder %v709, 1
        %vm746 = vcmp.eq.s32.totalorder %v710, 1
        %vm747 = vcmp.eq.s32.totalorder %v711, 1
        %vm748 = vcmp.eq.s32.totalorder %v712, 1
        %vm749 = vcmp.eq.s32.totalorder %v713, 1
        %vm750 = vcmp.eq.s32.totalorder %v714, 1
        %vm751 = vcmp.eq.s32.totalorder %v715, 1
        %vm752 = vcmp.eq.s32.totalorder %v716, 1
        %vm753 = vcmp.eq.s32.totalorder %v717, 1
        %vm754 = vcmp.eq.s32.totalorder %v718, 1
        %vm755 = vcmp.eq.s32.totalorder %v719, 1
        %vm756 = vcmp.eq.s32.totalorder %v720, 1
        %vm757 = vcmp.eq.s32.totalorder %v721, 1
        %vm758 = vcmp.eq.s32.totalorder %v722, 1
        %vm759 = vcmp.eq.s32.totalorder %v723, 1
        %vm760 = vcmp.eq.s32.totalorder %v724, 1
        %vm761 = vcmp.eq.s32.totalorder %v725, 1
        %vm762 = vcmp.eq.s32.totalorder %v726, 1
        %vm763 = vcmp.eq.s32.totalorder %v727, 1
        %vm764 = vcmp.eq.s32.totalorder %v728, 1
        %vm765 = vcmp.eq.s32.totalorder %v729, 1
        %vm766 = vcmp.eq.s32.totalorder %v730, 1
        %vm767 = vcmp.eq.s32.totalorder %v731, 1
        %vm768 = vcmp.eq.s32.totalorder %v732, 1
        %vm769 = vcmp.eq.s32.totalorder %v733, 1
        %vm770 = vcmp.eq.s32.totalorder %v734, 1
        %vm771 = vcmp.eq.s32.totalorder %v735, 1
        %vm772 = vcmp.eq.s32.totalorder %v736, 1
        %vm773 = vmpackc.low %vm737, %vm737
        %vm774 = vmpackc.low %vm738, %vm738
        %vm775 = vmpackc.low %vm739, %vm739
        %vm776 = vmpackc.low %vm740, %vm740
        %vm777 = vmpackc.low %vm741, %vm741
        %vm778 = vmpackc.low %vm742, %vm742
        %vm779 = vmpackc.low %vm743, %vm743
        %vm780 = vmpackc.low %vm744, %vm744
        %vm781 = vmpackc.low %vm745, %vm745
        %vm782 = vmpackc.low %vm746, %vm746
        %vm783 = vmpackc.low %vm747, %vm747
        %vm784 = vmpackc.low %vm748, %vm748
        %vm785 = vmpackc.low %vm749, %vm749
        %vm786 = vmpackc.low %vm750, %vm750
        %vm787 = vmpackc.low %vm751, %vm751
        %vm788 = vmpackc.low %vm752, %vm752
        %vm789 = vmpackc.low %vm753, %vm753
        %vm790 = vmpackc.low %vm754, %vm754
        %vm791 = vmpackc.low %vm755, %vm755
        %vm792 = vmpackc.low %vm756, %vm756
        %vm793 = vmpackc.low %vm757, %vm757
        %vm794 = vmpackc.low %vm758, %vm758
        %vm795 = vmpackc.low %vm759, %vm759
        %vm796 = vmpackc.low %vm760, %vm760
        %vm797 = vmpackc.low %vm761, %vm761
        %vm798 = vmpackc.low %vm762, %vm762
        %vm799 = vmpackc.low %vm763, %vm763
        %vm800 = vmpackc.low %vm764, %vm764
        %vm801 = vmpackc.low %vm765, %vm765
        %vm802 = vmpackc.low %vm766, %vm766
        %vm803 = vmpackc.low %vm767, %vm767
        %vm804 = vmpackc.low %vm768, %vm768
        %vm805 = vmpackc.low %vm769, %vm769
        %vm806 = vmpackc.low %vm770, %vm770
        %vm807 = vmpackc.low %vm771, %vm771
        %vm808 = vmpackc.low %vm772, %vm772
        %v809 = vsel %vm773, 65537, 0
        %v810 = vsel %vm774, 65537, 0
        %v811 = vsel %vm775, 65537, 0
        %v812 = vsel %vm776, 65537, 0
        %v813 = vsel %vm777, 65537, 0
        %v814 = vsel %vm778, 65537, 0
        %v815 = vsel %vm779, 65537, 0
        %v816 = vsel %vm780, 65537, 0
        %v817 = vsel %vm781, 65537, 0
        %v818 = vsel %vm782, 65537, 0
        %v819 = vsel %vm783, 65537, 0
        %v820 = vsel %vm784, 65537, 0
        %v821 = vsel %vm785, 65537, 0
        %v822 = vsel %vm786, 65537, 0
        %v823 = vsel %vm787, 65537, 0
        %v824 = vsel %vm788, 65537, 0
        %v825 = vsel %vm789, 65537, 0
        %v826 = vsel %vm790, 65537, 0
        %v827 = vsel %vm791, 65537, 0
        %v828 = vsel %vm792, 65537, 0
        %v829 = vsel %vm793, 65537, 0
        %v830 = vsel %vm794, 65537, 0
        %v831 = vsel %vm795, 65537, 0
        %v832 = vsel %vm796, 65537, 0
        %v833 = vsel %vm797, 65537, 0
        %v834 = vsel %vm798, 65537, 0
        %v835 = vsel %vm799, 65537, 0
        %v836 = vsel %vm800, 65537, 0
        %v837 = vsel %vm801, 65537, 0
        %v838 = vsel %vm802, 65537, 0
        %v839 = vsel %vm803, 65537, 0
        %v840 = vsel %vm804, 65537, 0
        %v841 = vsel %vm805, 65537, 0
        %v842 = vsel %vm806, 65537, 0
        %v843 = vsel %vm807, 65537, 0
        %v844 = vsel %vm808, 65537, 0
        %v845 = vunpack.c.l.b16 %v809
        %v846 = vunpack.c.l.b16 %v810
        %v847 = vunpack.c.l.b16 %v811
        %v848 = vunpack.c.l.b16 %v812
        %v849 = vunpack.c.l.b16 %v813
        %v850 = vunpack.c.l.b16 %v814
        %v851 = vunpack.c.l.b16 %v815
        %v852 = vunpack.c.l.b16 %v816
        %v853 = vunpack.c.l.b16 %v817
        %v854 = vunpack.c.l.b16 %v818
        %v855 = vunpack.c.l.b16 %v819
        %v856 = vunpack.c.l.b16 %v820
        %v857 = vunpack.c.l.b16 %v821
        %v858 = vunpack.c.l.b16 %v822
        %v859 = vunpack.c.l.b16 %v823
        %v860 = vunpack.c.l.b16 %v824
        %v861 = vunpack.c.l.b16 %v825
        %v862 = vunpack.c.l.b16 %v826
        %v863 = vunpack.c.l.b16 %v827
        %v864 = vunpack.c.l.b16 %v828
        %v865 = vunpack.c.l.b16 %v829
        %v866 = vunpack.c.l.b16 %v830
        %v867 = vunpack.c.l.b16 %v831
        %v868 = vunpack.c.l.b16 %v832
        %v869 = vunpack.c.l.b16 %v833
        %v870 = vunpack.c.l.b16 %v834
        %v871 = vunpack.c.l.b16 %v835
        %v872 = vunpack.c.l.b16 %v836
        %v873 = vunpack.c.l.b16 %v837
        %v874 = vunpack.c.l.b16 %v838
        %v875 = vunpack.c.l.b16 %v839
        %v876 = vunpack.c.l.b16 %v840
        %v877 = vunpack.c.l.b16 %v841
        %v878 = vunpack.c.l.b16 %v842
        %v879 = vunpack.c.l.b16 %v843
        %v880 = vunpack.c.l.b16 %v844
        %v881 = vpack.c.b16 %v846, %v845
        %v882 = vpack.c.b16 %v848, %v847
        %v883 = vpack.c.b16 %v850, %v849
        %v884 = vpack.c.b16 %v852, %v851
        %v885 = vpack.c.b16 %v854, %v853
        %v886 = vpack.c.b16 %v856, %v855
        %v887 = vpack.c.b16 %v858, %v857
        %v888 = vpack.c.b16 %v860, %v859
        %v889 = vpack.c.b16 %v862, %v861
        %v890 = vpack.c.b16 %v864, %v863
        %v891 = vpack.c.b16 %v866, %v865
        %v892 = vpack.c.b16 %v868, %v867
        %v893 = vpack.c.b16 %v870, %v869
        %v894 = vpack.c.b16 %v872, %v871
        %v895 = vpack.c.b16 %v874, %v873
        %v896 = vpack.c.b16 %v876, %v875
        %v897 = vpack.c.b16 %v878, %v877
        %v898 = vpack.c.b16 %v880, %v879
        %vm899 = vcmp.ne.s16.totalorder %v881, 0
        %vm900 = vcmp.ne.s16.totalorder %v882, 0
        %vm901 = vcmp.ne.s16.totalorder %v883, 0
        %vm902 = vcmp.ne.s16.totalorder %v884, 0
        %vm903 = vcmp.ne.s16.totalorder %v885, 0
        %vm904 = vcmp.ne.s16.totalorder %v886, 0
        %vm905 = vcmp.ne.s16.totalorder %v887, 0
        %vm906 = vcmp.ne.s16.totalorder %v888, 0
        %vm907 = vcmp.ne.s16.totalorder %v889, 0
        %vm908 = vcmp.ne.s16.totalorder %v890, 0
        %vm909 = vcmp.ne.s16.totalorder %v891, 0
        %vm910 = vcmp.ne.s16.totalorder %v892, 0
        %vm911 = vcmp.ne.s16.totalorder %v893, 0
        %vm912 = vcmp.ne.s16.totalorder %v894, 0
        %vm913 = vcmp.ne.s16.totalorder %v895, 0
        %vm914 = vcmp.ne.s16.totalorder %v896, 0
        %vm915 = vcmp.ne.s16.totalorder %v897, 0
        %vm916 = vcmp.ne.s16.totalorder %v898, 0
        %v917 = vsel %vm899, 0, %v683
        %v918 = vsel %vm900, 0, %v684
        %v919 = vsel %vm901, 0, %v685
        %v920 = vsel %vm902, 0, %v686
        %v921 = vsel %vm903, 0, %v687
        %v922 = vsel %vm904, 0, %v688
        %v923 = vsel %vm905, 0, %v689
        %v924 = vsel %vm906, 0, %v690
        %v925 = vsel %vm907, 0, %v691
        %v926 = vsel %vm908, 0, %v692
        %v927 = vsel %vm909, 0, %v693
        %v928 = vsel %vm910, 0, %v694
        %v929 = vsel %vm911, 0, %v695
        %v930 = vsel %vm912, 0, %v696
        %v931 = vsel %vm913, 0, %v697
        %v932 = vsel %vm914, 0, %v698
        %v933 = vsel %vm915, 0, %v699
        %v934 = vsel %vm916, 0, %v700
        %935 = vst [vmem:[#allocation2] sm:$0xff] %v917
        %936 = vst [vmem:[#allocation2 + $0x8] sm:$0xff] %v918
        %937 = vst [vmem:[#allocation2 + $0x10] sm:$0xff] %v919
        %938 = vst [vmem:[#allocation2 + $0x18] sm:$0xff] %v920
        %939 = vst [vmem:[#allocation2 + $0x20] sm:$0xff] %v921
        %940 = vst [vmem:[#allocation2 + $0x28] sm:$0xff] %v922
        %941 = vst [vmem:[#allocation2 + $0x30] sm:$0xff] %v923
        %942 = vst [vmem:[#allocation2 + $0x38] sm:$0xff] %v924
        %943 = vst [vmem:[#allocation2 + $0x40] sm:$0xff] %v925
        %944 = vst [vmem:[#allocation2 + $0x48] sm:$0xff] %v926
        %945 = vst [vmem:[#allocation2 + $0x50] sm:$0xff] %v927
        %946 = vst [vmem:[#allocation2 + $0x58] sm:$0xff] %v928
        %947 = vst [vmem:[#allocation2 + $0x60] sm:$0xff] %v929
        %948 = vst [vmem:[#allocation2 + $0x68] sm:$0xff] %v930
        %949 = vst [vmem:[#allocation2 + $0x70] sm:$0xff] %v931
        %950 = vst [vmem:[#allocation2 + $0x78] sm:$0xff] %v932
        %951 = vst [vmem:[#allocation2 + $0x80] sm:$0xff] %v933
        %952 = vst [vmem:[#allocation2 + $0x88] sm:$0xff] %v934
      $region48: #{audio_enhancement_pallas.7} parent=39 // pred_fallthru
        _
      %v953 = vld [vmem:[#allocation2] sm:$0xff]
      %v954 = vld [vmem:[#allocation2 + $0x8] sm:$0xff]
      %v955 = vld [vmem:[#allocation2 + $0x10] sm:$0xff]
      %v956 = vld [vmem:[#allocation2 + $0x18] sm:$0xff]
      %v957 = vld [vmem:[#allocation2 + $0x20] sm:$0xff]
      %v958 = vld [vmem:[#allocation2 + $0x28] sm:$0xff]
      %v959 = vld [vmem:[#allocation2 + $0x30] sm:$0xff]
      %v960 = vld [vmem:[#allocation2 + $0x38] sm:$0xff]
      %v961 = vld [vmem:[#allocation2 + $0x40] sm:$0xff]
      %v962 = vld [vmem:[#allocation2 + $0x48] sm:$0xff]
      %v963 = vld [vmem:[#allocation2 + $0x50] sm:$0xff]
      %v964 = vld [vmem:[#allocation2 + $0x58] sm:$0xff]
      %v965 = vld [vmem:[#allocation2 + $0x60] sm:$0xff]
      %v966 = vld [vmem:[#allocation2 + $0x68] sm:$0xff]
      %v967 = vld [vmem:[#allocation2 + $0x70] sm:$0xff]
      %v968 = vld [vmem:[#allocation2 + $0x78] sm:$0xff]
      %v969 = vld [vmem:[#allocation2 + $0x80] sm:$0xff]
      %v970 = vld [vmem:[#allocation2 + $0x88] sm:$0xff]
      %v971 = vld [vmem:[%s3] sm:$0xf]
      %v972 = vld [vmem:[%s3 + $0x4] sm:$0xf]
      %v973 = vld [vmem:[%s3 + $0x8] sm:$0xf]
      %v974 = vld [vmem:[%s3 + $0xc] sm:$0xf]
      %v975 = vld [vmem:[%s3 + $0x10] sm:$0xf]
      %v976 = vld [vmem:[%s3 + $0x14] sm:$0xf]
      %v977 = vld [vmem:[%s3 + $0x18] sm:$0xf]
      %v978 = vld [vmem:[%s3 + $0x1c] sm:$0xf]
      %v979 = vld [vmem:[%s3 + $0x20] sm:$0xf]
      %v980 = vld [vmem:[%s3 + $0x24] sm:$0xf]
      %v981 = vld [vmem:[%s3 + $0x28] sm:$0xf]
      %v982 = vld [vmem:[%s3 + $0x2c] sm:$0xf]
      %v983 = vld [vmem:[%s3 + $0x30] sm:$0xf]
      %v984 = vld [vmem:[%s3 + $0x34] sm:$0xf]
      %v985 = vld [vmem:[%s3 + $0x38] sm:$0xf]
      %v986 = vld [vmem:[%s3 + $0x3c] sm:$0xf]
      %v1003 = vunpack.c.l.b16 %v971
      %v1004 = vunpack.c.l.b16 %v972
      %v1005 = vunpack.c.l.b16 %v973
      %v1006 = vunpack.c.l.b16 %v974
      %v1007 = vunpack.c.l.b16 %v975
      %v1008 = vunpack.c.l.b16 %v976
      %v1009 = vunpack.c.l.b16 %v977
      %v1010 = vunpack.c.l.b16 %v978
      %v1011 = vunpack.c.l.b16 %v979
      %v1012 = vunpack.c.l.b16 %v980
      %v1013 = vunpack.c.l.b16 %v981
      %v1014 = vunpack.c.l.b16 %v982
      %v1015 = vunpack.c.l.b16 %v983
      %v1016 = vunpack.c.l.b16 %v984
      %v1017 = vunpack.c.l.b16 %v985
      %v1018 = vunpack.c.l.b16 %v986
      %v1019 = vpack.c.b16 %v1004, %v1003
      %v1020 = vpack.c.b16 %v1006, %v1005
      %v1021 = vpack.c.b16 %v1008, %v1007
      %v1022 = vpack.c.b16 %v1010, %v1009
      %v1023 = vpack.c.b16 %v1012, %v1011
      %v1024 = vpack.c.b16 %v1014, %v1013
      %v1025 = vpack.c.b16 %v1016, %v1015
      %v1026 = vpack.c.b16 %v1018, %v1017
      %1035 = vmatprep.subr.bf16.mxu0 0
      %1036 = vmatpush1.bf16.msra.mxu0 %v1019
      %1037 = vmatprep.subr.bf16.mxu0 0
      %1038 = vmatpush1.bf16.msra.mxu0 %v1020
      %1039 = vmatprep.subr.bf16.mxu0 0
      %1040 = vmatpush1.bf16.msra.mxu0 %v1021
      %1041 = vmatprep.subr.bf16.mxu0 0
      %1042 = vmatpush1.bf16.msra.mxu0 %v1022
      %1043 = vmatprep.subr.bf16.mxu0 0
      %1044 = vmatpush1.bf16.msra.mxu0 %v1023
      %1045 = vmatprep.subr.bf16.mxu0 0
      %1046 = vmatpush1.bf16.msra.mxu0 %v1024
      %1047 = vmatprep.subr.bf16.mxu0 0
      %1048 = vmatpush1.bf16.msra.mxu0 %v1025
      %1049 = vmatprep.subr.bf16.mxu0 0
      %1050 = vmatpush1.bf16.msra.mxu0 %v1026
      %1051 = vmatprep.subr.bf16.mxu0 0
      %1052 = vmatpush1.bf16.msra.mxu0 0
      %1053 = vmatprep.subr.bf16.mxu0 0
      %1054 = vmatpush1.bf16.msra.mxu0 0
      %1055 = vmatprep.subr.bf16.mxu0 0
      %1056 = vmatpush1.bf16.msra.mxu0 0
      %1057 = vmatprep.subr.bf16.mxu0 0
      %1058 = vmatpush1.bf16.msra.mxu0 0
      %1059 = vmatprep.subr.bf16.mxu0 0
      %1060 = vmatpush1.bf16.msra.mxu0 0
      %1061 = vmatprep.subr.bf16.mxu0 0
      %1062 = vmatpush1.bf16.msra.mxu0 0
      %1063 = vmatprep.subr.bf16.mxu0 0
      %1064 = vmatpush1.bf16.msra.mxu0 0
      %1065 = vmatprep.subr.bf16.mxu0 0
      %1066 = vmatpush1.bf16.msra.mxu0 0
      %1067 = vmatprep.mubr.bf16.mxu0 0
      %1068 = vmatmul.mubr.bf16.gmra.mrb[0].mxu0 %v953
      %v1069 = vpop.f32.mrb[0].mxu0
      %v1070 = vpop.f32.mrb[0].mxu0
      %v1071 = vpop.f32.mrb[0].mxu0
      %v1072 = vadd.f32 0.0, %v1071
      %v1073 = vpop.f32.mrb[0].mxu0
      %1074 = vmatprep.mubr.bf16.mxu0 0
      %1075 = vmatmul.mubr.bf16.gmra.mrb[0].mxu0 %v954
      %v1076 = vpop.f32.mrb[0].mxu0
      %v1077 = vadd.f32 0.0, %v1076
      %v1078 = vpop.f32.mrb[0].mxu0
      %v1079 = vpop.f32.mrb[0].mxu0
      %v1080 = vadd.f32 0.0, %v1079
      %v1081 = vpop.f32.mrb[0].mxu0
      %1082 = vmatprep.mubr.bf16.mxu0 0
      %1083 = vmatmul.mubr.bf16.gmra.mrb[0].mxu0 %v955
      %v1084 = vpop.f32.mrb[0].mxu0
      %v1085 = vadd.f32 0.0, %v1084
      %v1086 = vpop.f32.mrb[0].mxu0
      %v1087 = vpop.f32.mrb[0].mxu0
      %v1088 = vadd.f32 0.0, %v1087
      %v1089 = vpop.f32.mrb[0].mxu0
      %1090 = vmatprep.mubr.bf16.mxu0 0
      %1091 = vmatmul.mubr.bf16.gmra.mrb[0].mxu0 %v956
      %v1092 = vpop.f32.mrb[0].mxu0
      %v1093 = vadd.f32 0.0, %v1092
      %v1094 = vpop.f32.mrb[0].mxu0
      %v1095 = vpop.f32.mrb[0].mxu0
      %v1096 = vadd.f32 0.0, %v1095
      %v1097 = vpop.f32.mrb[0].mxu0
      %1098 = vmatprep.mubr.bf16.mxu0 0
      %1099 = vmatmul.mubr.bf16.gmra.mrb[0].mxu0 %v957
      %v1100 = vpop.f32.mrb[0].mxu0
      %v1101 = vadd.f32 0.0, %v1100
      %v1102 = vpop.f32.mrb[0].mxu0
      %v1103 = vpop.f32.mrb[0].mxu0
      %v1104 = vadd.f32 0.0, %v1103
      %v1105 = vpop.f32.mrb[0].mxu0
      %1106 = vmatprep.mubr.bf16.mxu0 0
      %1107 = vmatmul.mubr.bf16.gmra.mrb[0].mxu0 %v958
      %v1108 = vpop.f32.mrb[0].mxu0
      %v1109 = vadd.f32 0.0, %v1108
      %v1110 = vpop.f32.mrb[0].mxu0
      %v1111 = vpop.f32.mrb[0].mxu0
      %v1112 = vadd.f32 0.0, %v1111
      %v1113 = vpop.f32.mrb[0].mxu0
      %1114 = vmatprep.mubr.bf16.mxu0 0
      %1115 = vmatmul.mubr.bf16.gmra.mrb[0].mxu0 %v959
      %v1116 = vpop.f32.mrb[0].mxu0
      %v1117 = vadd.f32 0.0, %v1116
      %v1118 = vpop.f32.mrb[0].mxu0
      %v1119 = vpop.f32.mrb[0].mxu0
      %v1120 = vadd.f32 0.0, %v1119
      %v1121 = vpop.f32.mrb[0].mxu0
      %1122 = vmatprep.mubr.bf16.mxu0 0
      %1123 = vmatmul.mubr.bf16.gmra.mrb[0].mxu0 %v960
      %v1124 = vpop.f32.mrb[0].mxu0
      %v1125 = vadd.f32 0.0, %v1124
      %v1126 = vpop.f32.mrb[0].mxu0
      %v1127 = vpop.f32.mrb[0].mxu0
      %v1128 = vadd.f32 0.0, %v1127
      %v1129 = vpop.f32.mrb[0].mxu0
      %1130 = vmatprep.mubr.bf16.mxu0 0
      %1131 = vmatmul.mubr.bf16.gmra.mrb[0].mxu0 %v961
      %v1132 = vpop.f32.mrb[0].mxu0
      %v1133 = vadd.f32 0.0, %v1132
      %v1134 = vpop.f32.mrb[0].mxu0
      %v1135 = vpop.f32.mrb[0].mxu0
      %v1136 = vadd.f32 0.0, %v1135
      %v1137 = vpop.f32.mrb[0].mxu0
      %1138 = vmatprep.mubr.bf16.mxu0 0
      %1139 = vmatmul.mubr.bf16.gmra.mrb[0].mxu0 %v962
      %v1140 = vpop.f32.mrb[0].mxu0
      %v1141 = vadd.f32 0.0, %v1140
      %v1142 = vpop.f32.mrb[0].mxu0
      %v1143 = vpop.f32.mrb[0].mxu0
      %v1144 = vadd.f32 0.0, %v1143
      %v1145 = vpop.f32.mrb[0].mxu0
      %1146 = vmatprep.mubr.bf16.mxu0 0
      %1147 = vmatmul.mubr.bf16.gmra.mrb[0].mxu0 %v963
      %v1148 = vpop.f32.mrb[0].mxu0
      %v1149 = vadd.f32 0.0, %v1148
      %v1150 = vpop.f32.mrb[0].mxu0
      %v1151 = vpop.f32.mrb[0].mxu0
      %v1152 = vadd.f32 0.0, %v1151
      %v1153 = vpop.f32.mrb[0].mxu0
      %1154 = vmatprep.mubr.bf16.mxu0 0
      %1155 = vmatmul.mubr.bf16.gmra.mrb[0].mxu0 %v964
      %v1156 = vpop.f32.mrb[0].mxu0
      %v1157 = vadd.f32 0.0, %v1156
      %v1158 = vpop.f32.mrb[0].mxu0
      %v1159 = vpop.f32.mrb[0].mxu0
      %v1160 = vadd.f32 0.0, %v1159
      %v1161 = vpop.f32.mrb[0].mxu0
      %1162 = vmatprep.mubr.bf16.mxu0 0
      %1163 = vmatmul.mubr.bf16.gmra.mrb[0].mxu0 %v965
      %v1164 = vpop.f32.mrb[0].mxu0
      %v1165 = vadd.f32 0.0, %v1164
      %v1166 = vpop.f32.mrb[0].mxu0
      %v1167 = vpop.f32.mrb[0].mxu0
      %v1168 = vadd.f32 0.0, %v1167
      %v1169 = vpop.f32.mrb[0].mxu0
      %1170 = vmatprep.mubr.bf16.mxu0 0
      %1171 = vmatmul.mubr.bf16.gmra.mrb[0].mxu0 %v966
      %v1172 = vpop.f32.mrb[0].mxu0
      %v1173 = vadd.f32 0.0, %v1172
      %v1174 = vpop.f32.mrb[0].mxu0
      %v1175 = vpop.f32.mrb[0].mxu0
      %v1176 = vadd.f32 0.0, %v1175
      %v1177 = vpop.f32.mrb[0].mxu0
      %1178 = vmatprep.mubr.bf16.mxu0 0
      %1179 = vmatmul.mubr.bf16.gmra.mrb[0].mxu0 %v967
      %v1180 = vpop.f32.mrb[0].mxu0
      %v1181 = vadd.f32 0.0, %v1180
      %v1182 = vpop.f32.mrb[0].mxu0
      %v1183 = vpop.f32.mrb[0].mxu0
      %v1184 = vadd.f32 0.0, %v1183
      %v1185 = vpop.f32.mrb[0].mxu0
      %1186 = vmatprep.mubr.bf16.mxu0 0
      %1187 = vmatmul.mubr.bf16.gmra.mrb[0].mxu0 %v968
      %v1188 = vpop.f32.mrb[0].mxu0
      %v1189 = vadd.f32 0.0, %v1188
      %v1190 = vpop.f32.mrb[0].mxu0
      %v1191 = vpop.f32.mrb[0].mxu0
      %v1192 = vadd.f32 0.0, %v1191
      %v1193 = vpop.f32.mrb[0].mxu0
      %1194 = vmatprep.mubr.bf16.mxu0 0
      %1195 = vmatmul.mubr.bf16.gmra.mrb[0].mxu0 %v969
      %v1196 = vpop.f32.mrb[0].mxu0
      %v1197 = vadd.f32 0.0, %v1196
      %v1198 = vpop.f32.mrb[0].mxu0
      %v1199 = vpop.f32.mrb[0].mxu0
      %v1200 = vadd.f32 0.0, %v1199
      %v1201 = vpop.f32.mrb[0].mxu0
      %1202 = vmatprep.mubr.bf16.mxu0 0
      %1203 = vmatmul.mubr.bf16.gmra.mrb[0].mxu0 %v970
      %v1204 = vpop.f32.mrb[0].mxu0
      %v1205 = vadd.f32 0.0, %v1204
      %v1206 = vpop.f32.mrb[0].mxu0
      %v1207 = vpop.f32.mrb[0].mxu0
      %v1208 = vpop.f32.mrb[0].mxu0
      %1209 = vdwg.mxu0
      %vm1243 = vcmask 1046528
      %v1244 = vrot.slane %v1072, 1
      %v1245 = vrot.slane %v1077, 1
      %v1246 = vsel %vm1243, %v1244, %v1245
      %v1247 = vrot.slane %v1080, 1
      %v1248 = vsel %vm1243, %v1245, %v1247
      %v1249 = vrot.slane %v1085, 1
      %v1250 = vsel %vm1243, %v1247, %v1249
      %v1251 = vrot.slane %v1088, 1
      %v1252 = vsel %vm1243, %v1249, %v1251
      %v1253 = vrot.slane %v1093, 1
      %v1254 = vsel %vm1243, %v1251, %v1253
      %v1255 = vrot.slane %v1096, 1
      %v1256 = vsel %vm1243, %v1253, %v1255
      %v1257 = vrot.slane %v1101, 1
      %v1258 = vsel %vm1243, %v1255, %v1257
      %v1259 = vrot.slane %v1104, 1
      %v1260 = vsel %vm1243, %v1257, %v1259
      %v1261 = vrot.slane %v1109, 1
      %v1262 = vsel %vm1243, %v1259, %v1261
      %v1263 = vrot.slane %v1112, 1
      %v1264 = vsel %vm1243, %v1261, %v1263
      %v1265 = vrot.slane %v1117, 1
      %v1266 = vsel %vm1243, %v1263, %v1265
      %v1267 = vrot.slane %v1120, 1
      %v1268 = vsel %vm1243, %v1265, %v1267
      %v1269 = vrot.slane %v1125, 1
      %v1270 = vsel %vm1243, %v1267, %v1269
      %v1271 = vrot.slane %v1128, 1
      %v1272 = vsel %vm1243, %v1269, %v1271
      %v1273 = vrot.slane %v1133, 1
      %v1274 = vsel %vm1243, %v1271, %v1273
      %v1275 = vrot.slane %v1136, 1
      %v1276 = vsel %vm1243, %v1273, %v1275
      %v1277 = vrot.slane %v1141, 1
      %v1278 = vsel %vm1243, %v1275, %v1277
      %v1279 = vrot.slane %v1144, 1
      %v1280 = vsel %vm1243, %v1277, %v1279
      %v1281 = vrot.slane %v1149, 1
      %v1282 = vsel %vm1243, %v1279, %v1281
      %v1283 = vrot.slane %v1152, 1
      %v1284 = vsel %vm1243, %v1281, %v1283
      %v1285 = vrot.slane %v1157, 1
      %v1286 = vsel %vm1243, %v1283, %v1285
      %v1287 = vrot.slane %v1160, 1
      %v1288 = vsel %vm1243, %v1285, %v1287
      %v1289 = vrot.slane %v1165, 1
      %v1290 = vsel %vm1243, %v1287, %v1289
      %v1291 = vrot.slane %v1168, 1
      %v1292 = vsel %vm1243, %v1289, %v1291
      %v1293 = vrot.slane %v1173, 1
      %v1294 = vsel %vm1243, %v1291, %v1293
      %v1295 = vrot.slane %v1176, 1
      %v1296 = vsel %vm1243, %v1293, %v1295
      %v1297 = vrot.slane %v1181, 1
      %v1298 = vsel %vm1243, %v1295, %v1297
      %v1299 = vrot.slane %v1184, 1
      %v1300 = vsel %vm1243, %v1297, %v1299
      %v1301 = vrot.slane %v1189, 1
      %v1302 = vsel %vm1243, %v1299, %v1301
      %v1303 = vrot.slane %v1192, 1
      %v1304 = vsel %vm1243, %v1301, %v1303
      %v1305 = vrot.slane %v1197, 1
      %v1306 = vsel %vm1243, %v1303, %v1305
      %v1307 = vrot.slane %v1200, 1
      %v1308 = vsel %vm1243, %v1305, %v1307
      %1309 = vrot.lane.b32.xlu0 %v1246, 127
      %v1310 = vpop.permute.xlu0 %1309
      %1311 = vrot.lane.b32.xlu0 %v1248, 127
      %v1312 = vpop.permute.xlu0 %1311
      %1313 = vrot.lane.b32.xlu0 %v1250, 127
      %v1314 = vpop.permute.xlu0 %1313
      %1315 = vrot.lane.b32.xlu0 %v1252, 127
      %v1316 = vpop.permute.xlu0 %1315
      %1317 = vrot.lane.b32.xlu0 %v1254, 127
      %v1318 = vpop.permute.xlu0 %1317
      %1319 = vrot.lane.b32.xlu0 %v1256, 127
      %v1320 = vpop.permute.xlu0 %1319
      %1321 = vrot.lane.b32.xlu0 %v1258, 127
      %v1322 = vpop.permute.xlu0 %1321
      %1323 = vrot.lane.b32.xlu0 %v1260, 127
      %v1324 = vpop.permute.xlu0 %1323
      %1325 = vrot.lane.b32.xlu0 %v1262, 127
      %v1326 = vpop.permute.xlu0 %1325
      %1327 = vrot.lane.b32.xlu0 %v1264, 127
      %v1328 = vpop.permute.xlu0 %1327
      %1329 = vrot.lane.b32.xlu0 %v1266, 127
      %v1330 = vpop.permute.xlu0 %1329
      %1331 = vrot.lane.b32.xlu0 %v1268, 127
      %v1332 = vpop.permute.xlu0 %1331
      %1333 = vrot.lane.b32.xlu0 %v1270, 127
      %v1334 = vpop.permute.xlu0 %1333
      %1335 = vrot.lane.b32.xlu0 %v1272, 127
      %v1336 = vpop.permute.xlu0 %1335
      %1337 = vrot.lane.b32.xlu0 %v1274, 127
      %v1338 = vpop.permute.xlu0 %1337
      %1339 = vrot.lane.b32.xlu0 %v1276, 127
      %v1340 = vpop.permute.xlu0 %1339
      %1341 = vrot.lane.b32.xlu0 %v1278, 127
      %v1342 = vpop.permute.xlu0 %1341
      %1343 = vrot.lane.b32.xlu0 %v1280, 127
      %v1344 = vpop.permute.xlu0 %1343
      %1345 = vrot.lane.b32.xlu0 %v1282, 127
      %v1346 = vpop.permute.xlu0 %1345
      %1347 = vrot.lane.b32.xlu0 %v1284, 127
      %v1348 = vpop.permute.xlu0 %1347
      %1349 = vrot.lane.b32.xlu0 %v1286, 127
      %v1350 = vpop.permute.xlu0 %1349
      %1351 = vrot.lane.b32.xlu0 %v1288, 127
      %v1352 = vpop.permute.xlu0 %1351
      %1353 = vrot.lane.b32.xlu0 %v1290, 127
      %v1354 = vpop.permute.xlu0 %1353
      %1355 = vrot.lane.b32.xlu0 %v1292, 127
      %v1356 = vpop.permute.xlu0 %1355
      %1357 = vrot.lane.b32.xlu0 %v1294, 127
      %v1358 = vpop.permute.xlu0 %1357
      %1359 = vrot.lane.b32.xlu0 %v1296, 127
      %v1360 = vpop.permute.xlu0 %1359
      %1361 = vrot.lane.b32.xlu0 %v1298, 127
      %v1362 = vpop.permute.xlu0 %1361
      %1363 = vrot.lane.b32.xlu0 %v1300, 127
      %v1364 = vpop.permute.xlu0 %1363
      %1365 = vrot.lane.b32.xlu0 %v1302, 127
      %v1366 = vpop.permute.xlu0 %1365
      %1367 = vrot.lane.b32.xlu0 %v1304, 127
      %v1368 = vpop.permute.xlu0 %1367
      %1369 = vrot.lane.b32.xlu0 %v1306, 127
      %v1370 = vpop.permute.xlu0 %1369
      %1371 = vrot.lane.b32.xlu0 %v1308, 127
      %v1372 = vpop.permute.xlu0 %1371
      %1373 = vrot.lane.b32.xlu0 %v1307, 127
      %v1374 = vpop.permute.xlu0 %1373
      %v1408 = vadd.f32 %v1072, %v1310
      %v1409 = vadd.f32 %v1077, %v1312
      %v1410 = vadd.f32 %v1080, %v1314
      %v1411 = vadd.f32 %v1085, %v1316
      %v1412 = vadd.f32 %v1088, %v1318
      %v1413 = vadd.f32 %v1093, %v1320
      %v1414 = vadd.f32 %v1096, %v1322
      %v1415 = vadd.f32 %v1101, %v1324
      %v1416 = vadd.f32 %v1104, %v1326
      %v1417 = vadd.f32 %v1109, %v1328
      %v1418 = vadd.f32 %v1112, %v1330
      %v1419 = vadd.f32 %v1117, %v1332
      %v1420 = vadd.f32 %v1120, %v1334
      %v1421 = vadd.f32 %v1125, %v1336
      %v1422 = vadd.f32 %v1128, %v1338
      %v1423 = vadd.f32 %v1133, %v1340
      %v1424 = vadd.f32 %v1136, %v1342
      %v1425 = vadd.f32 %v1141, %v1344
      %v1426 = vadd.f32 %v1144, %v1346
      %v1427 = vadd.f32 %v1149, %v1348
      %v1428 = vadd.f32 %v1152, %v1350
      %v1429 = vadd.f32 %v1157, %v1352
      %v1430 = vadd.f32 %v1160, %v1354
      %v1431 = vadd.f32 %v1165, %v1356
      %v1432 = vadd.f32 %v1168, %v1358
      %v1433 = vadd.f32 %v1173, %v1360
      %v1434 = vadd.f32 %v1176, %v1362
      %v1435 = vadd.f32 %v1181, %v1364
      %v1436 = vadd.f32 %v1184, %v1366
      %v1437 = vadd.f32 %v1189, %v1368
      %v1438 = vadd.f32 %v1192, %v1370
      %v1439 = vadd.f32 %v1197, %v1372
      %v1440 = vadd.f32 %v1200, %v1374
      %vm1441 = vcmask 1045504
      %v1442 = vrot.slane %v1072, 2
      %v1443 = vrot.slane %v1077, 2
      %v1444 = vsel %vm1441, %v1442, %v1443
      %v1445 = vrot.slane %v1080, 2
      %v1446 = vsel %vm1441, %v1443, %v1445
      %v1447 = vrot.slane %v1085, 2
      %v1448 = vsel %vm1441, %v1445, %v1447
      %v1449 = vrot.slane %v1088, 2
      %v1450 = vsel %vm1441, %v1447, %v1449
      %v1451 = vrot.slane %v1093, 2
      %v1452 = vsel %vm1441, %v1449, %v1451
      %v1453 = vrot.slane %v1096, 2
      %v1454 = vsel %vm1441, %v1451, %v1453
      %v1455 = vrot.slane %v1101, 2
      %v1456 = vsel %vm1441, %v1453, %v1455
      %v1457 = vrot.slane %v1104, 2
      %v1458 = vsel %vm1441, %v1455, %v1457
      %v1459 = vrot.slane %v1109, 2
      %v1460 = vsel %vm1441, %v1457, %v1459
      %v1461 = vrot.slane %v1112, 2
      %v1462 = vsel %vm1441, %v1459, %v1461
      %v1463 = vrot.slane %v1117, 2
      %v1464 = vsel %vm1441, %v1461, %v1463
      %v1465 = vrot.slane %v1120, 2
      %v1466 = vsel %vm1441, %v1463, %v1465
      %v1467 = vrot.slane %v1125, 2
      %v1468 = vsel %vm1441, %v1465, %v1467
      %v1469 = vrot.slane %v1128, 2
      %v1470 = vsel %vm1441, %v1467, %v1469
      %v1471 = vrot.slane %v1133, 2
      %v1472 = vsel %vm1441, %v1469, %v1471
      %v1473 = vrot.slane %v1136, 2
      %v1474 = vsel %vm1441, %v1471, %v1473
      %v1475 = vrot.slane %v1141, 2
      %v1476 = vsel %vm1441, %v1473, %v1475
      %v1477 = vrot.slane %v1144, 2
      %v1478 = vsel %vm1441, %v1475, %v1477
      %v1479 = vrot.slane %v1149, 2
      %v1480 = vsel %vm1441, %v1477, %v1479
      %v1481 = vrot.slane %v1152, 2
      %v1482 = vsel %vm1441, %v1479, %v1481
      %v1483 = vrot.slane %v1157, 2
      %v1484 = vsel %vm1441, %v1481, %v1483
      %v1485 = vrot.slane %v1160, 2
      %v1486 = vsel %vm1441, %v1483, %v1485
      %v1487 = vrot.slane %v1165, 2
      %v1488 = vsel %vm1441, %v1485, %v1487
      %v1489 = vrot.slane %v1168, 2
      %v1490 = vsel %vm1441, %v1487, %v1489
      %v1491 = vrot.slane %v1173, 2
      %v1492 = vsel %vm1441, %v1489, %v1491
      %v1493 = vrot.slane %v1176, 2
      %v1494 = vsel %vm1441, %v1491, %v1493
      %v1495 = vrot.slane %v1181, 2
      %v1496 = vsel %vm1441, %v1493, %v1495
      %v1497 = vrot.slane %v1184, 2
      %v1498 = vsel %vm1441, %v1495, %v1497
      %v1499 = vrot.slane %v1189, 2
      %v1500 = vsel %vm1441, %v1497, %v1499
      %v1501 = vrot.slane %v1192, 2
      %v1502 = vsel %vm1441, %v1499, %v1501
      %v1503 = vrot.slane %v1197, 2
      %v1504 = vsel %vm1441, %v1501, %v1503
      %v1505 = vrot.slane %v1200, 2
      %v1506 = vsel %vm1441, %v1503, %v1505
      %1507 = vrot.lane.b32.xlu0 %v1444, 126
      %v1508 = vpop.permute.xlu0 %1507
      %1509 = vrot.lane.b32.xlu0 %v1446, 126
      %v1510 = vpop.permute.xlu0 %1509
      %1511 = vrot.lane.b32.xlu0 %v1448, 126
      %v1512 = vpop.permute.xlu0 %1511
      %1513 = vrot.lane.b32.xlu0 %v1450, 126
      %v1514 = vpop.permute.xlu0 %1513
      %1515 = vrot.lane.b32.xlu0 %v1452, 126
      %v1516 = vpop.permute.xlu0 %1515
      %1517 = vrot.lane.b32.xlu0 %v1454, 126
      %v1518 = vpop.permute.xlu0 %1517
      %1519 = vrot.lane.b32.xlu0 %v1456, 126
      %v1520 = vpop.permute.xlu0 %1519
      %1521 = vrot.lane.b32.xlu0 %v1458, 126
      %v1522 = vpop.permute.xlu0 %1521
      %1523 = vrot.lane.b32.xlu0 %v1460, 126
      %v1524 = vpop.permute.xlu0 %1523
      %1525 = vrot.lane.b32.xlu0 %v1462, 126
      %v1526 = vpop.permute.xlu0 %1525
      %1527 = vrot.lane.b32.xlu0 %v1464, 126
      %v1528 = vpop.permute.xlu0 %1527
      %1529 = vrot.lane.b32.xlu0 %v1466, 126
      %v1530 = vpop.permute.xlu0 %1529
      %1531 = vrot.lane.b32.xlu0 %v1468, 126
      %v1532 = vpop.permute.xlu0 %1531
      %1533 = vrot.lane.b32.xlu0 %v1470, 126
      %v1534 = vpop.permute.xlu0 %1533
      %1535 = vrot.lane.b32.xlu0 %v1472, 126
      %v1536 = vpop.permute.xlu0 %1535
      %1537 = vrot.lane.b32.xlu0 %v1474, 126
      %v1538 = vpop.permute.xlu0 %1537
      %1539 = vrot.lane.b32.xlu0 %v1476, 126
      %v1540 = vpop.permute.xlu0 %1539
      %1541 = vrot.lane.b32.xlu0 %v1478, 126
      %v1542 = vpop.permute.xlu0 %1541
      %1543 = vrot.lane.b32.xlu0 %v1480, 126
      %v1544 = vpop.permute.xlu0 %1543
      %1545 = vrot.lane.b32.xlu0 %v1482, 126
      %v1546 = vpop.permute.xlu0 %1545
      %1547 = vrot.lane.b32.xlu0 %v1484, 126
      %v1548 = vpop.permute.xlu0 %1547
      %1549 = vrot.lane.b32.xlu0 %v1486, 126
      %v1550 = vpop.permute.xlu0 %1549
      %1551 = vrot.lane.b32.xlu0 %v1488, 126
      %v1552 = vpop.permute.xlu0 %1551
      %1553 = vrot.lane.b32.xlu0 %v1490, 126
      %v1554 = vpop.permute.xlu0 %1553
      %1555 = vrot.lane.b32.xlu0 %v1492, 126
      %v1556 = vpop.permute.xlu0 %1555
      %1557 = vrot.lane.b32.xlu0 %v1494, 126
      %v1558 = vpop.permute.xlu0 %1557
      %1559 = vrot.lane.b32.xlu0 %v1496, 126
      %v1560 = vpop.permute.xlu0 %1559
      %1561 = vrot.lane.b32.xlu0 %v1498, 126
      %v1562 = vpop.permute.xlu0 %1561
      %1563 = vrot.lane.b32.xlu0 %v1500, 126
      %v1564 = vpop.permute.xlu0 %1563
      %1565 = vrot.lane.b32.xlu0 %v1502, 126
      %v1566 = vpop.permute.xlu0 %1565
      %1567 = vrot.lane.b32.xlu0 %v1504, 126
      %v1568 = vpop.permute.xlu0 %1567
      %1569 = vrot.lane.b32.xlu0 %v1506, 126
      %v1570 = vpop.permute.xlu0 %1569
      %1571 = vrot.lane.b32.xlu0 %v1505, 126
      %v1572 = vpop.permute.xlu0 %1571
      %v1606 = vadd.f32 %v1408, %v1508
      %v1607 = vadd.f32 %v1409, %v1510
      %v1608 = vadd.f32 %v1410, %v1512
      %v1609 = vadd.f32 %v1411, %v1514
      %v1610 = vadd.f32 %v1412, %v1516
      %v1611 = vadd.f32 %v1413, %v1518
      %v1612 = vadd.f32 %v1414, %v1520
      %v1613 = vadd.f32 %v1415, %v1522
      %v1614 = vadd.f32 %v1416, %v1524
      %v1615 = vadd.f32 %v1417, %v1526
      %v1616 = vadd.f32 %v1418, %v1528
      %v1617 = vadd.f32 %v1419, %v1530
      %v1618 = vadd.f32 %v1420, %v1532
      %v1619 = vadd.f32 %v1421, %v1534
      %v1620 = vadd.f32 %v1422, %v1536
      %v1621 = vadd.f32 %v1423, %v1538
      %v1622 = vadd.f32 %v1424, %v1540
      %v1623 = vadd.f32 %v1425, %v1542
      %v1624 = vadd.f32 %v1426, %v1544
      %v1625 = vadd.f32 %v1427, %v1546
      %v1626 = vadd.f32 %v1428, %v1548
      %v1627 = vadd.f32 %v1429, %v1550
      %v1628 = vadd.f32 %v1430, %v1552
      %v1629 = vadd.f32 %v1431, %v1554
      %v1630 = vadd.f32 %v1432, %v1556
      %v1631 = vadd.f32 %v1433, %v1558
      %v1632 = vadd.f32 %v1434, %v1560
      %v1633 = vadd.f32 %v1435, %v1562
      %v1634 = vadd.f32 %v1436, %v1564
      %v1635 = vadd.f32 %v1437, %v1566
      %v1636 = vadd.f32 %v1438, %v1568
      %v1637 = vadd.f32 %v1439, %v1570
      %v1638 = vadd.f32 %v1440, %v1572
      %vm1639 = vcmask 1044480
      %v1640 = vrot.slane %v1072, 3
      %v1641 = vrot.slane %v1077, 3
      %v1642 = vsel %vm1639, %v1640, %v1641
      %v1643 = vrot.slane %v1080, 3
      %v1644 = vsel %vm1639, %v1641, %v1643
      %v1645 = vrot.slane %v1085, 3
      %v1646 = vsel %vm1639, %v1643, %v1645
      %v1647 = vrot.slane %v1088, 3
      %v1648 = vsel %vm1639, %v1645, %v1647
      %v1649 = vrot.slane %v1093, 3
      %v1650 = vsel %vm1639, %v1647, %v1649
      %v1651 = vrot.slane %v1096, 3
      %v1652 = vsel %vm1639, %v1649, %v1651
      %v1653 = vrot.slane %v1101, 3
      %v1654 = vsel %vm1639, %v1651, %v1653
      %v1655 = vrot.slane %v1104, 3
      %v1656 = vsel %vm1639, %v1653, %v1655
      %v1657 = vrot.slane %v1109, 3
      %v1658 = vsel %vm1639, %v1655, %v1657
      %v1659 = vrot.slane %v1112, 3
      %v1660 = vsel %vm1639, %v1657, %v1659
      %v1661 = vrot.slane %v1117, 3
      %v1662 = vsel %vm1639, %v1659, %v1661
      %v1663 = vrot.slane %v1120, 3
      %v1664 = vsel %vm1639, %v1661, %v1663
      %v1665 = vrot.slane %v1125, 3
      %v1666 = vsel %vm1639, %v1663, %v1665
      %v1667 = vrot.slane %v1128, 3
      %v1668 = vsel %vm1639, %v1665, %v1667
      %v1669 = vrot.slane %v1133, 3
      %v1670 = vsel %vm1639, %v1667, %v1669
      %v1671 = vrot.slane %v1136, 3
      %v1672 = vsel %vm1639, %v1669, %v1671
      %v1673 = vrot.slane %v1141, 3
      %v1674 = vsel %vm1639, %v1671, %v1673
      %v1675 = vrot.slane %v1144, 3
      %v1676 = vsel %vm1639, %v1673, %v1675
      %v1677 = vrot.slane %v1149, 3
      %v1678 = vsel %vm1639, %v1675, %v1677
      %v1679 = vrot.slane %v1152, 3
      %v1680 = vsel %vm1639, %v1677, %v1679
      %v1681 = vrot.slane %v1157, 3
      %v1682 = vsel %vm1639, %v1679, %v1681
      %v1683 = vrot.slane %v1160, 3
      %v1684 = vsel %vm1639, %v1681, %v1683
      %v1685 = vrot.slane %v1165, 3
      %v1686 = vsel %vm1639, %v1683, %v1685
      %v1687 = vrot.slane %v1168, 3
      %v1688 = vsel %vm1639, %v1685, %v1687
      %v1689 = vrot.slane %v1173, 3
      %v1690 = vsel %vm1639, %v1687, %v1689
      %v1691 = vrot.slane %v1176, 3
      %v1692 = vsel %vm1639, %v1689, %v1691
      %v1693 = vrot.slane %v1181, 3
      %v1694 = vsel %vm1639, %v1691, %v1693
      %v1695 = vrot.slane %v1184, 3
      %v1696 = vsel %vm1639, %v1693, %v1695
      %v1697 = vrot.slane %v1189, 3
      %v1698 = vsel %vm1639, %v1695, %v1697
      %v1699 = vrot.slane %v1192, 3
      %v1700 = vsel %vm1639, %v1697, %v1699
      %v1701 = vrot.slane %v1197, 3
      %v1702 = vsel %vm1639, %v1699, %v1701
      %v1703 = vrot.slane %v1200, 3
      %v1704 = vsel %vm1639, %v1701, %v1703
      %1705 = vrot.lane.b32.xlu0 %v1642, 125
      %v1706 = vpop.permute.xlu0 %1705
      %1707 = vrot.lane.b32.xlu0 %v1644, 125
      %v1708 = vpop.permute.xlu0 %1707
      %1709 = vrot.lane.b32.xlu0 %v1646, 125
      %v1710 = vpop.permute.xlu0 %1709
      %1711 = vrot.lane.b32.xlu0 %v1648, 125
      %v1712 = vpop.permute.xlu0 %1711
      %1713 = vrot.lane.b32.xlu0 %v1650, 125
      %v1714 = vpop.permute.xlu0 %1713
      %1715 = vrot.lane.b32.xlu0 %v1652, 125
      %v1716 = vpop.permute.xlu0 %1715
      %1717 = vrot.lane.b32.xlu0 %v1654, 125
      %v1718 = vpop.permute.xlu0 %1717
      %1719 = vrot.lane.b32.xlu0 %v1656, 125
      %v1720 = vpop.permute.xlu0 %1719
      %1721 = vrot.lane.b32.xlu0 %v1658, 125
      %v1722 = vpop.permute.xlu0 %1721
      %1723 = vrot.lane.b32.xlu0 %v1660, 125
      %v1724 = vpop.permute.xlu0 %1723
      %1725 = vrot.lane.b32.xlu0 %v1662, 125
      %v1726 = vpop.permute.xlu0 %1725
      %1727 = vrot.lane.b32.xlu0 %v1664, 125
      %v1728 = vpop.permute.xlu0 %1727
      %1729 = vrot.lane.b32.xlu0 %v1666, 125
      %v1730 = vpop.permute.xlu0 %1729
      %1731 = vrot.lane.b32.xlu0 %v1668, 125
      %v1732 = vpop.permute.xlu0 %1731
      %1733 = vrot.lane.b32.xlu0 %v1670, 125
      %v1734 = vpop.permute.xlu0 %1733
      %1735 = vrot.lane.b32.xlu0 %v1672, 125
      %v1736 = vpop.permute.xlu0 %1735
      %1737 = vrot.lane.b32.xlu0 %v1674, 125
      %v1738 = vpop.permute.xlu0 %1737
      %1739 = vrot.lane.b32.xlu0 %v1676, 125
      %v1740 = vpop.permute.xlu0 %1739
      %1741 = vrot.lane.b32.xlu0 %v1678, 125
      %v1742 = vpop.permute.xlu0 %1741
      %1743 = vrot.lane.b32.xlu0 %v1680, 125
      %v1744 = vpop.permute.xlu0 %1743
      %1745 = vrot.lane.b32.xlu0 %v1682, 125
      %v1746 = vpop.permute.xlu0 %1745
      %1747 = vrot.lane.b32.xlu0 %v1684, 125
      %v1748 = vpop.permute.xlu0 %1747
      %1749 = vrot.lane.b32.xlu0 %v1686, 125
      %v1750 = vpop.permute.xlu0 %1749
      %1751 = vrot.lane.b32.xlu0 %v1688, 125
      %v1752 = vpop.permute.xlu0 %1751
      %1753 = vrot.lane.b32.xlu0 %v1690, 125
      %v1754 = vpop.permute.xlu0 %1753
      %1755 = vrot.lane.b32.xlu0 %v1692, 125
      %v1756 = vpop.permute.xlu0 %1755
      %1757 = vrot.lane.b32.xlu0 %v1694, 125
      %v1758 = vpop.permute.xlu0 %1757
      %1759 = vrot.lane.b32.xlu0 %v1696, 125
      %v1760 = vpop.permute.xlu0 %1759
      %1761 = vrot.lane.b32.xlu0 %v1698, 125
      %v1762 = vpop.permute.xlu0 %1761
      %1763 = vrot.lane.b32.xlu0 %v1700, 125
      %v1764 = vpop.permute.xlu0 %1763
      %1765 = vrot.lane.b32.xlu0 %v1702, 125
      %v1766 = vpop.permute.xlu0 %1765
      %1767 = vrot.lane.b32.xlu0 %v1704, 125
      %v1768 = vpop.permute.xlu0 %1767
      %1769 = vrot.lane.b32.xlu0 %v1703, 125
      %v1770 = vpop.permute.xlu0 %1769
      %v1804 = vadd.f32 %v1606, %v1706
      %v1805 = vadd.f32 %v1607, %v1708
      %v1806 = vadd.f32 %v1608, %v1710
      %v1807 = vadd.f32 %v1609, %v1712
      %v1808 = vadd.f32 %v1610, %v1714
      %v1809 = vadd.f32 %v1611, %v1716
      %v1810 = vadd.f32 %v1612, %v1718
      %v1811 = vadd.f32 %v1613, %v1720
      %v1812 = vadd.f32 %v1614, %v1722
      %v1813 = vadd.f32 %v1615, %v1724
      %v1814 = vadd.f32 %v1616, %v1726
      %v1815 = vadd.f32 %v1617, %v1728
      %v1816 = vadd.f32 %v1618, %v1730
      %v1817 = vadd.f32 %v1619, %v1732
      %v1818 = vadd.f32 %v1620, %v1734
      %v1819 = vadd.f32 %v1621, %v1736
      %v1820 = vadd.f32 %v1622, %v1738
      %v1821 = vadd.f32 %v1623, %v1740
      %v1822 = vadd.f32 %v1624, %v1742
      %v1823 = vadd.f32 %v1625, %v1744
      %v1824 = vadd.f32 %v1626, %v1746
      %v1825 = vadd.f32 %v1627, %v1748
      %v1826 = vadd.f32 %v1628, %v1750
      %v1827 = vadd.f32 %v1629, %v1752
      %v1828 = vadd.f32 %v1630, %v1754
      %v1829 = vadd.f32 %v1631, %v1756
      %v1830 = vadd.f32 %v1632, %v1758
      %v1831 = vadd.f32 %v1633, %v1760
      %v1832 = vadd.f32 %v1634, %v1762
      %v1833 = vadd.f32 %v1635, %v1764
      %v1834 = vadd.f32 %v1636, %v1766
      %v1835 = vadd.f32 %v1637, %v1768
      %v1836 = vadd.f32 %v1638, %v1770
      %vm1837 = vcmask 1043456
      %v1838 = vrot.slane %v1077, 4
      %v1839 = vrot.slane %v1080, 4
      %v1840 = vsel %vm1837, %v1838, %v1839
      %v1841 = vrot.slane %v1085, 4
      %v1842 = vsel %vm1837, %v1839, %v1841
      %v1843 = vrot.slane %v1088, 4
      %v1844 = vsel %vm1837, %v1841, %v1843
      %v1845 = vrot.slane %v1093, 4
      %v1846 = vsel %vm1837, %v1843, %v1845
      %v1847 = vrot.slane %v1096, 4
      %v1848 = vsel %vm1837, %v1845, %v1847
      %v1849 = vrot.slane %v1101, 4
      %v1850 = vsel %vm1837, %v1847, %v1849
      %v1851 = vrot.slane %v1104, 4
      %v1852 = vsel %vm1837, %v1849, %v1851
      %v1853 = vrot.slane %v1109, 4
      %v1854 = vsel %vm1837, %v1851, %v1853
      %v1855 = vrot.slane %v1112, 4
      %v1856 = vsel %vm1837, %v1853, %v1855
      %v1857 = vrot.slane %v1117, 4
      %v1858 = vsel %vm1837, %v1855, %v1857
      %v1859 = vrot.slane %v1120, 4
      %v1860 = vsel %vm1837, %v1857, %v1859
      %v1861 = vrot.slane %v1125, 4
      %v1862 = vsel %vm1837, %v1859, %v1861
      %v1863 = vrot.slane %v1128, 4
      %v1864 = vsel %vm1837, %v1861, %v1863
      %v1865 = vrot.slane %v1133, 4
      %v1866 = vsel %vm1837, %v1863, %v1865
      %v1867 = vrot.slane %v1136, 4
      %v1868 = vsel %vm1837, %v1865, %v1867
      %v1869 = vrot.slane %v1141, 4
      %v1870 = vsel %vm1837, %v1867, %v1869
      %v1871 = vrot.slane %v1144, 4
      %v1872 = vsel %vm1837, %v1869, %v1871
      %v1873 = vrot.slane %v1149, 4
      %v1874 = vsel %vm1837, %v1871, %v1873
      %v1875 = vrot.slane %v1152, 4
      %v1876 = vsel %vm1837, %v1873, %v1875
      %v1877 = vrot.slane %v1157, 4
      %v1878 = vsel %vm1837, %v1875, %v1877
      %v1879 = vrot.slane %v1160, 4
      %v1880 = vsel %vm1837, %v1877, %v1879
      %v1881 = vrot.slane %v1165, 4
      %v1882 = vsel %vm1837, %v1879, %v1881
      %v1883 = vrot.slane %v1168, 4
      %v1884 = vsel %vm1837, %v1881, %v1883
      %v1885 = vrot.slane %v1173, 4
      %v1886 = vsel %vm1837, %v1883, %v1885
      %v1887 = vrot.slane %v1176, 4
      %v1888 = vsel %vm1837, %v1885, %v1887
      %v1889 = vrot.slane %v1181, 4
      %v1890 = vsel %vm1837, %v1887, %v1889
      %v1891 = vrot.slane %v1184, 4
      %v1892 = vsel %vm1837, %v1889, %v1891
      %v1893 = vrot.slane %v1189, 4
      %v1894 = vsel %vm1837, %v1891, %v1893
      %v1895 = vrot.slane %v1192, 4
      %v1896 = vsel %vm1837, %v1893, %v1895
      %v1897 = vrot.slane %v1197, 4
      %v1898 = vsel %vm1837, %v1895, %v1897
      %v1899 = vrot.slane %v1200, 4
      %v1900 = vsel %vm1837, %v1897, %v1899
      %1901 = vrot.lane.b32.xlu0 %v1838, 124
      %v1902 = vpop.permute.xlu0 %1901
      %1903 = vrot.lane.b32.xlu0 %v1840, 124
      %v1904 = vpop.permute.xlu0 %1903
      %1905 = vrot.lane.b32.xlu0 %v1842, 124
      %v1906 = vpop.permute.xlu0 %1905
      %1907 = vrot.lane.b32.xlu0 %v1844, 124
      %v1908 = vpop.permute.xlu0 %1907
      %1909 = vrot.lane.b32.xlu0 %v1846, 124
      %v1910 = vpop.permute.xlu0 %1909
      %1911 = vrot.lane.b32.xlu0 %v1848, 124
      %v1912 = vpop.permute.xlu0 %1911
      %1913 = vrot.lane.b32.xlu0 %v1850, 124
      %v1914 = vpop.permute.xlu0 %1913
      %1915 = vrot.lane.b32.xlu0 %v1852, 124
      %v1916 = vpop.permute.xlu0 %1915
      %1917 = vrot.lane.b32.xlu0 %v1854, 124
      %v1918 = vpop.permute.xlu0 %1917
      %1919 = vrot.lane.b32.xlu0 %v1856, 124
      %v1920 = vpop.permute.xlu0 %1919
      %1921 = vrot.lane.b32.xlu0 %v1858, 124
      %v1922 = vpop.permute.xlu0 %1921
      %1923 = vrot.lane.b32.xlu0 %v1860, 124
      %v1924 = vpop.permute.xlu0 %1923
      %1925 = vrot.lane.b32.xlu0 %v1862, 124
      %v1926 = vpop.permute.xlu0 %1925
      %1927 = vrot.lane.b32.xlu0 %v1864, 124
      %v1928 = vpop.permute.xlu0 %1927
      %1929 = vrot.lane.b32.xlu0 %v1866, 124
      %v1930 = vpop.permute.xlu0 %1929
      %1931 = vrot.lane.b32.xlu0 %v1868, 124
      %v1932 = vpop.permute.xlu0 %1931
      %1933 = vrot.lane.b32.xlu0 %v1870, 124
      %v1934 = vpop.permute.xlu0 %1933
      %1935 = vrot.lane.b32.xlu0 %v1872, 124
      %v1936 = vpop.permute.xlu0 %1935
      %1937 = vrot.lane.b32.xlu0 %v1874, 124
      %v1938 = vpop.permute.xlu0 %1937
      %1939 = vrot.lane.b32.xlu0 %v1876, 124
      %v1940 = vpop.permute.xlu0 %1939
      %1941 = vrot.lane.b32.xlu0 %v1878, 124
      %v1942 = vpop.permute.xlu0 %1941
      %1943 = vrot.lane.b32.xlu0 %v1880, 124
      %v1944 = vpop.permute.xlu0 %1943
      %1945 = vrot.lane.b32.xlu0 %v1882, 124
      %v1946 = vpop.permute.xlu0 %1945
      %1947 = vrot.lane.b32.xlu0 %v1884, 124
      %v1948 = vpop.permute.xlu0 %1947
      %1949 = vrot.lane.b32.xlu0 %v1886, 124
      %v1950 = vpop.permute.xlu0 %1949
      %1951 = vrot.lane.b32.xlu0 %v1888, 124
      %v1952 = vpop.permute.xlu0 %1951
      %1953 = vrot.lane.b32.xlu0 %v1890, 124
      %v1954 = vpop.permute.xlu0 %1953
      %1955 = vrot.lane.b32.xlu0 %v1892, 124
      %v1956 = vpop.permute.xlu0 %1955
      %1957 = vrot.lane.b32.xlu0 %v1894, 124
      %v1958 = vpop.permute.xlu0 %1957
      %1959 = vrot.lane.b32.xlu0 %v1896, 124
      %v1960 = vpop.permute.xlu0 %1959
      %1961 = vrot.lane.b32.xlu0 %v1898, 124
      %v1962 = vpop.permute.xlu0 %1961
      %1963 = vrot.lane.b32.xlu0 %v1900, 124
      %v1964 = vpop.permute.xlu0 %1963
      %1965 = vrot.lane.b32.xlu0 %v1899, 124
      %v1966 = vpop.permute.xlu0 %1965
      %v2000 = vadd.f32 %v1804, %v1902
      %v2001 = vadd.f32 %v1805, %v1904
      %v2002 = vadd.f32 %v1806, %v1906
      %v2003 = vadd.f32 %v1807, %v1908
      %v2004 = vadd.f32 %v1808, %v1910
      %v2005 = vadd.f32 %v1809, %v1912
      %v2006 = vadd.f32 %v1810, %v1914
      %v2007 = vadd.f32 %v1811, %v1916
      %v2008 = vadd.f32 %v1812, %v1918
      %v2009 = vadd.f32 %v1813, %v1920
      %v2010 = vadd.f32 %v1814, %v1922
      %v2011 = vadd.f32 %v1815, %v1924
      %v2012 = vadd.f32 %v1816, %v1926
      %v2013 = vadd.f32 %v1817, %v1928
      %v2014 = vadd.f32 %v1818, %v1930
      %v2015 = vadd.f32 %v1819, %v1932
      %v2016 = vadd.f32 %v1820, %v1934
      %v2017 = vadd.f32 %v1821, %v1936
      %v2018 = vadd.f32 %v1822, %v1938
      %v2019 = vadd.f32 %v1823, %v1940
      %v2020 = vadd.f32 %v1824, %v1942
      %v2021 = vadd.f32 %v1825, %v1944
      %v2022 = vadd.f32 %v1826, %v1946
      %v2023 = vadd.f32 %v1827, %v1948
      %v2024 = vadd.f32 %v1828, %v1950
      %v2025 = vadd.f32 %v1829, %v1952
      %v2026 = vadd.f32 %v1830, %v1954
      %v2027 = vadd.f32 %v1831, %v1956
      %v2028 = vadd.f32 %v1832, %v1958
      %v2029 = vadd.f32 %v1833, %v1960
      %v2030 = vadd.f32 %v1834, %v1962
      %v2031 = vadd.f32 %v1835, %v1964
      %v2032 = vadd.f32 %v1836, %v1966
      %vm2034 = vcmask 1042432
      %v2035 = vrot.slane %v1077, 5
      %v2036 = vrot.slane %v1080, 5
      %v2037 = vsel %vm2034, %v2035, %v2036
      %v2038 = vrot.slane %v1085, 5
      %v2039 = vsel %vm2034, %v2036, %v2038
      %v2040 = vrot.slane %v1088, 5
      %v2041 = vsel %vm2034, %v2038, %v2040
      %v2042 = vrot.slane %v1093, 5
      %v2043 = vsel %vm2034, %v2040, %v2042
      %v2044 = vrot.slane %v1096, 5
      %v2045 = vsel %vm2034, %v2042, %v2044
      %v2046 = vrot.slane %v1101, 5
      %v2047 = vsel %vm2034, %v2044, %v2046
      %v2048 = vrot.slane %v1104, 5
      %v2049 = vsel %vm2034, %v2046, %v2048
      %v2050 = vrot.slane %v1109, 5
      %v2051 = vsel %vm2034, %v2048, %v2050
      %v2052 = vrot.slane %v1112, 5
      %v2053 = vsel %vm2034, %v2050, %v2052
      %v2054 = vrot.slane %v1117, 5
      %v2055 = vsel %vm2034, %v2052, %v2054
      %v2056 = vrot.slane %v1120, 5
      %v2057 = vsel %vm2034, %v2054, %v2056
      %v2058 = vrot.slane %v1125, 5
      %v2059 = vsel %vm2034, %v2056, %v2058
      %v2060 = vrot.slane %v1128, 5
      %v2061 = vsel %vm2034, %v2058, %v2060
      %v2062 = vrot.slane %v1133, 5
      %v2063 = vsel %vm2034, %v2060, %v2062
      %v2064 = vrot.slane %v1136, 5
      %v2065 = vsel %vm2034, %v2062, %v2064
      %v2066 = vrot.slane %v1141, 5
      %v2067 = vsel %vm2034, %v2064, %v2066
      %v2068 = vrot.slane %v1144, 5
      %v2069 = vsel %vm2034, %v2066, %v2068
      %v2070 = vrot.slane %v1149, 5
      %v2071 = vsel %vm2034, %v2068, %v2070
      %v2072 = vrot.slane %v1152, 5
      %v2073 = vsel %vm2034, %v2070, %v2072
      %v2074 = vrot.slane %v1157, 5
      %v2075 = vsel %vm2034, %v2072, %v2074
      %v2076 = vrot.slane %v1160, 5
      %v2077 = vsel %vm2034, %v2074, %v2076
      %v2078 = vrot.slane %v1165, 5
      %v2079 = vsel %vm2034, %v2076, %v2078
      %v2080 = vrot.slane %v1168, 5
      %v2081 = vsel %vm2034, %v2078, %v2080
      %v2082 = vrot.slane %v1173, 5
      %v2083 = vsel %vm2034, %v2080, %v2082
      %v2084 = vrot.slane %v1176, 5
      %v2085 = vsel %vm2034, %v2082, %v2084
      %v2086 = vrot.slane %v1181, 5
      %v2087 = vsel %vm2034, %v2084, %v2086
      %v2088 = vrot.slane %v1184, 5
      %v2089 = vsel %vm2034, %v2086, %v2088
      %v2090 = vrot.slane %v1189, 5
      %v2091 = vsel %vm2034, %v2088, %v2090
      %v2092 = vrot.slane %v1192, 5
      %v2093 = vsel %vm2034, %v2090, %v2092
      %v2094 = vrot.slane %v1197, 5
      %v2095 = vsel %vm2034, %v2092, %v2094
      %v2096 = vrot.slane %v1200, 5
      %v2097 = vsel %vm2034, %v2094, %v2096
      %v2098 = vrot.slane %v1205, 5
      %v2099 = vsel %vm2034, %v2096, %v2098
      %2100 = vrot.lane.b32.xlu0 %v2035, 123
      %v2101 = vpop.permute.xlu0 %2100
      %2102 = vrot.lane.b32.xlu0 %v2037, 123
      %v2103 = vpop.permute.xlu0 %2102
      %2104 = vrot.lane.b32.xlu0 %v2039, 123
      %v2105 = vpop.permute.xlu0 %2104
      %2106 = vrot.lane.b32.xlu0 %v2041, 123
      %v2107 = vpop.permute.xlu0 %2106
      %2108 = vrot.lane.b32.xlu0 %v2043, 123
      %v2109 = vpop.permute.xlu0 %2108
      %2110 = vrot.lane.b32.xlu0 %v2045, 123
      %v2111 = vpop.permute.xlu0 %2110
      %2112 = vrot.lane.b32.xlu0 %v2047, 123
      %v2113 = vpop.permute.xlu0 %2112
      %2114 = vrot.lane.b32.xlu0 %v2049, 123
      %v2115 = vpop.permute.xlu0 %2114
      %2116 = vrot.lane.b32.xlu0 %v2051, 123
      %v2117 = vpop.permute.xlu0 %2116
      %2118 = vrot.lane.b32.xlu0 %v2053, 123
      %v2119 = vpop.permute.xlu0 %2118
      %2120 = vrot.lane.b32.xlu0 %v2055, 123
      %v2121 = vpop.permute.xlu0 %2120
      %2122 = vrot.lane.b32.xlu0 %v2057, 123
      %v2123 = vpop.permute.xlu0 %2122
      %2124 = vrot.lane.b32.xlu0 %v2059, 123
      %v2125 = vpop.permute.xlu0 %2124
      %2126 = vrot.lane.b32.xlu0 %v2061, 123
      %v2127 = vpop.permute.xlu0 %2126
      %2128 = vrot.lane.b32.xlu0 %v2063, 123
      %v2129 = vpop.permute.xlu0 %2128
      %2130 = vrot.lane.b32.xlu0 %v2065, 123
      %v2131 = vpop.permute.xlu0 %2130
      %2132 = vrot.lane.b32.xlu0 %v2067, 123
      %v2133 = vpop.permute.xlu0 %2132
      %2134 = vrot.lane.b32.xlu0 %v2069, 123
      %v2135 = vpop.permute.xlu0 %2134
      %2136 = vrot.lane.b32.xlu0 %v2071, 123
      %v2137 = vpop.permute.xlu0 %2136
      %2138 = vrot.lane.b32.xlu0 %v2073, 123
      %v2139 = vpop.permute.xlu0 %2138
      %2140 = vrot.lane.b32.xlu0 %v2075, 123
      %v2141 = vpop.permute.xlu0 %2140
      %2142 = vrot.lane.b32.xlu0 %v2077, 123
      %v2143 = vpop.permute.xlu0 %2142
      %2144 = vrot.lane.b32.xlu0 %v2079, 123
      %v2145 = vpop.permute.xlu0 %2144
      %2146 = vrot.lane.b32.xlu0 %v2081, 123
      %v2147 = vpop.permute.xlu0 %2146
      %2148 = vrot.lane.b32.xlu0 %v2083, 123
      %v2149 = vpop.permute.xlu0 %2148
      %2150 = vrot.lane.b32.xlu0 %v2085, 123
      %v2151 = vpop.permute.xlu0 %2150
      %2152 = vrot.lane.b32.xlu0 %v2087, 123
      %v2153 = vpop.permute.xlu0 %2152
      %2154 = vrot.lane.b32.xlu0 %v2089, 123
      %v2155 = vpop.permute.xlu0 %2154
      %2156 = vrot.lane.b32.xlu0 %v2091, 123
      %v2157 = vpop.permute.xlu0 %2156
      %2158 = vrot.lane.b32.xlu0 %v2093, 123
      %v2159 = vpop.permute.xlu0 %2158
      %2160 = vrot.lane.b32.xlu0 %v2095, 123
      %v2161 = vpop.permute.xlu0 %2160
      %2162 = vrot.lane.b32.xlu0 %v2097, 123
      %v2163 = vpop.permute.xlu0 %2162
      %2164 = vrot.lane.b32.xlu0 %v2099, 123
      %v2165 = vpop.permute.xlu0 %2164
      %v2199 = vadd.f32 %v2000, %v2101
      %v2200 = vadd.f32 %v2001, %v2103
      %v2201 = vadd.f32 %v2002, %v2105
      %v2202 = vadd.f32 %v2003, %v2107
      %v2203 = vadd.f32 %v2004, %v2109
      %v2204 = vadd.f32 %v2005, %v2111
      %v2205 = vadd.f32 %v2006, %v2113
      %v2206 = vadd.f32 %v2007, %v2115
      %v2207 = vadd.f32 %v2008, %v2117
      %v2208 = vadd.f32 %v2009, %v2119
      %v2209 = vadd.f32 %v2010, %v2121
      %v2210 = vadd.f32 %v2011, %v2123
      %v2211 = vadd.f32 %v2012, %v2125
      %v2212 = vadd.f32 %v2013, %v2127
      %v2213 = vadd.f32 %v2014, %v2129
      %v2214 = vadd.f32 %v2015, %v2131
      %v2215 = vadd.f32 %v2016, %v2133
      %v2216 = vadd.f32 %v2017, %v2135
      %v2217 = vadd.f32 %v2018, %v2137
      %v2218 = vadd.f32 %v2019, %v2139
      %v2219 = vadd.f32 %v2020, %v2141
      %v2220 = vadd.f32 %v2021, %v2143
      %v2221 = vadd.f32 %v2022, %v2145
      %v2222 = vadd.f32 %v2023, %v2147
      %v2223 = vadd.f32 %v2024, %v2149
      %v2224 = vadd.f32 %v2025, %v2151
      %v2225 = vadd.f32 %v2026, %v2153
      %v2226 = vadd.f32 %v2027, %v2155
      %v2227 = vadd.f32 %v2028, %v2157
      %v2228 = vadd.f32 %v2029, %v2159
      %v2229 = vadd.f32 %v2030, %v2161
      %v2230 = vadd.f32 %v2031, %v2163
      %v2231 = vadd.f32 %v2032, %v2165
      %vm2232 = vcmask 1041408
      %v2233 = vrot.slane %v1077, 6
      %v2234 = vrot.slane %v1080, 6
      %v2235 = vsel %vm2232, %v2233, %v2234
      %v2236 = vrot.slane %v1085, 6
      %v2237 = vsel %vm2232, %v2234, %v2236
      %v2238 = vrot.slane %v1088, 6
      %v2239 = vsel %vm2232, %v2236, %v2238
      %v2240 = vrot.slane %v1093, 6
      %v2241 = vsel %vm2232, %v2238, %v2240
      %v2242 = vrot.slane %v1096, 6
      %v2243 = vsel %vm2232, %v2240, %v2242
      %v2244 = vrot.slane %v1101, 6
      %v2245 = vsel %vm2232, %v2242, %v2244
      %v2246 = vrot.slane %v1104, 6
      %v2247 = vsel %vm2232, %v2244, %v2246
      %v2248 = vrot.slane %v1109, 6
      %v2249 = vsel %vm2232, %v2246, %v2248
      %v2250 = vrot.slane %v1112, 6
      %v2251 = vsel %vm2232, %v2248, %v2250
      %v2252 = vrot.slane %v1117, 6
      %v2253 = vsel %vm2232, %v2250, %v2252
      %v2254 = vrot.slane %v1120, 6
      %v2255 = vsel %vm2232, %v2252, %v2254
      %v2256 = vrot.slane %v1125, 6
      %v2257 = vsel %vm2232, %v2254, %v2256
      %v2258 = vrot.slane %v1128, 6
      %v2259 = vsel %vm2232, %v2256, %v2258
      %v2260 = vrot.slane %v1133, 6
      %v2261 = vsel %vm2232, %v2258, %v2260
      %v2262 = vrot.slane %v1136, 6
      %v2263 = vsel %vm2232, %v2260, %v2262
      %v2264 = vrot.slane %v1141, 6
      %v2265 = vsel %vm2232, %v2262, %v2264
      %v2266 = vrot.slane %v1144, 6
      %v2267 = vsel %vm2232, %v2264, %v2266
      %v2268 = vrot.slane %v1149, 6
      %v2269 = vsel %vm2232, %v2266, %v2268
      %v2270 = vrot.slane %v1152, 6
      %v2271 = vsel %vm2232, %v2268, %v2270
      %v2272 = vrot.slane %v1157, 6
      %v2273 = vsel %vm2232, %v2270, %v2272
      %v2274 = vrot.slane %v1160, 6
      %v2275 = vsel %vm2232, %v2272, %v2274
      %v2276 = vrot.slane %v1165, 6
      %v2277 = vsel %vm2232, %v2274, %v2276
      %v2278 = vrot.slane %v1168, 6
      %v2279 = vsel %vm2232, %v2276, %v2278
      %v2280 = vrot.slane %v1173, 6
      %v2281 = vsel %vm2232, %v2278, %v2280
      %v2282 = vrot.slane %v1176, 6
      %v2283 = vsel %vm2232, %v2280, %v2282
      %v2284 = vrot.slane %v1181, 6
      %v2285 = vsel %vm2232, %v2282, %v2284
      %v2286 = vrot.slane %v1184, 6
      %v2287 = vsel %vm2232, %v2284, %v2286
      %v2288 = vrot.slane %v1189, 6
      %v2289 = vsel %vm2232, %v2286, %v2288
      %v2290 = vrot.slane %v1192, 6
      %v2291 = vsel %vm2232, %v2288, %v2290
      %v2292 = vrot.slane %v1197, 6
      %v2293 = vsel %vm2232, %v2290, %v2292
      %v2294 = vrot.slane %v1200, 6
      %v2295 = vsel %vm2232, %v2292, %v2294
      %v2296 = vrot.slane %v1205, 6
      %v2297 = vsel %vm2232, %v2294, %v2296
      %2298 = vrot.lane.b32.xlu0 %v2233, 122
      %v2299 = vpop.permute.xlu0 %2298
      %2300 = vrot.lane.b32.xlu0 %v2235, 122
      %v2301 = vpop.permute.xlu0 %2300
      %2302 = vrot.lane.b32.xlu0 %v2237, 122
      %v2303 = vpop.permute.xlu0 %2302
      %2304 = vrot.lane.b32.xlu0 %v2239, 122
      %v2305 = vpop.permute.xlu0 %2304
      %2306 = vrot.lane.b32.xlu0 %v2241, 122
      %v2307 = vpop.permute.xlu0 %2306
      %2308 = vrot.lane.b32.xlu0 %v2243, 122
      %v2309 = vpop.permute.xlu0 %2308
      %2310 = vrot.lane.b32.xlu0 %v2245, 122
      %v2311 = vpop.permute.xlu0 %2310
      %2312 = vrot.lane.b32.xlu0 %v2247, 122
      %v2313 = vpop.permute.xlu0 %2312
      %2314 = vrot.lane.b32.xlu0 %v2249, 122
      %v2315 = vpop.permute.xlu0 %2314
      %2316 = vrot.lane.b32.xlu0 %v2251, 122
      %v2317 = vpop.permute.xlu0 %2316
      %2318 = vrot.lane.b32.xlu0 %v2253, 122
      %v2319 = vpop.permute.xlu0 %2318
      %2320 = vrot.lane.b32.xlu0 %v2255, 122
      %v2321 = vpop.permute.xlu0 %2320
      %2322 = vrot.lane.b32.xlu0 %v2257, 122
      %v2323 = vpop.permute.xlu0 %2322
      %2324 = vrot.lane.b32.xlu0 %v2259, 122
      %v2325 = vpop.permute.xlu0 %2324
      %2326 = vrot.lane.b32.xlu0 %v2261, 122
      %v2327 = vpop.permute.xlu0 %2326
      %2328 = vrot.lane.b32.xlu0 %v2263, 122
      %v2329 = vpop.permute.xlu0 %2328
      %2330 = vrot.lane.b32.xlu0 %v2265, 122
      %v2331 = vpop.permute.xlu0 %2330
      %2332 = vrot.lane.b32.xlu0 %v2267, 122
      %v2333 = vpop.permute.xlu0 %2332
      %2334 = vrot.lane.b32.xlu0 %v2269, 122
      %v2335 = vpop.permute.xlu0 %2334
      %2336 = vrot.lane.b32.xlu0 %v2271, 122
      %v2337 = vpop.permute.xlu0 %2336
      %2338 = vrot.lane.b32.xlu0 %v2273, 122
      %v2339 = vpop.permute.xlu0 %2338
      %2340 = vrot.lane.b32.xlu0 %v2275, 122
      %v2341 = vpop.permute.xlu0 %2340
      %2342 = vrot.lane.b32.xlu0 %v2277, 122
      %v2343 = vpop.permute.xlu0 %2342
      %2344 = vrot.lane.b32.xlu0 %v2279, 122
      %v2345 = vpop.permute.xlu0 %2344
      %2346 = vrot.lane.b32.xlu0 %v2281, 122
      %v2347 = vpop.permute.xlu0 %2346
      %2348 = vrot.lane.b32.xlu0 %v2283, 122
      %v2349 = vpop.permute.xlu0 %2348
      %2350 = vrot.lane.b32.xlu0 %v2285, 122
      %v2351 = vpop.permute.xlu0 %2350
      %2352 = vrot.lane.b32.xlu0 %v2287, 122
      %v2353 = vpop.permute.xlu0 %2352
      %2354 = vrot.lane.b32.xlu0 %v2289, 122
      %v2355 = vpop.permute.xlu0 %2354
      %2356 = vrot.lane.b32.xlu0 %v2291, 122
      %v2357 = vpop.permute.xlu0 %2356
      %2358 = vrot.lane.b32.xlu0 %v2293, 122
      %v2359 = vpop.permute.xlu0 %2358
      %2360 = vrot.lane.b32.xlu0 %v2295, 122
      %v2361 = vpop.permute.xlu0 %2360
      %2362 = vrot.lane.b32.xlu0 %v2297, 122
      %v2363 = vpop.permute.xlu0 %2362
      %v2397 = vadd.f32 %v2199, %v2299
      %v2398 = vadd.f32 %v2200, %v2301
      %v2399 = vadd.f32 %v2201, %v2303
      %v2400 = vadd.f32 %v2202, %v2305
      %v2401 = vadd.f32 %v2203, %v2307
      %v2402 = vadd.f32 %v2204, %v2309
      %v2403 = vadd.f32 %v2205, %v2311
      %v2404 = vadd.f32 %v2206, %v2313
      %v2405 = vadd.f32 %v2207, %v2315
      %v2406 = vadd.f32 %v2208, %v2317
      %v2407 = vadd.f32 %v2209, %v2319
      %v2408 = vadd.f32 %v2210, %v2321
      %v2409 = vadd.f32 %v2211, %v2323
      %v2410 = vadd.f32 %v2212, %v2325
      %v2411 = vadd.f32 %v2213, %v2327
      %v2412 = vadd.f32 %v2214, %v2329
      %v2413 = vadd.f32 %v2215, %v2331
      %v2414 = vadd.f32 %v2216, %v2333
      %v2415 = vadd.f32 %v2217, %v2335
      %v2416 = vadd.f32 %v2218, %v2337
      %v2417 = vadd.f32 %v2219, %v2339
      %v2418 = vadd.f32 %v2220, %v2341
      %v2419 = vadd.f32 %v2221, %v2343
      %v2420 = vadd.f32 %v2222, %v2345
      %v2421 = vadd.f32 %v2223, %v2347
      %v2422 = vadd.f32 %v2224, %v2349
      %v2423 = vadd.f32 %v2225, %v2351
      %v2424 = vadd.f32 %v2226, %v2353
      %v2425 = vadd.f32 %v2227, %v2355
      %v2426 = vadd.f32 %v2228, %v2357
      %v2427 = vadd.f32 %v2229, %v2359
      %v2428 = vadd.f32 %v2230, %v2361
      %v2429 = vadd.f32 %v2231, %v2363
      %vm2430 = vcmask 1040384
      %v2431 = vrot.slane %v1077, 7
      %v2432 = vrot.slane %v1080, 7
      %v2433 = vsel %vm2430, %v2431, %v2432
      %v2434 = vrot.slane %v1085, 7
      %v2435 = vsel %vm2430, %v2432, %v2434
      %v2436 = vrot.slane %v1088, 7
      %v2437 = vsel %vm2430, %v2434, %v2436
      %v2438 = vrot.slane %v1093, 7
      %v2439 = vsel %vm2430, %v2436, %v2438
      %v2440 = vrot.slane %v1096, 7
      %v2441 = vsel %vm2430, %v2438, %v2440
      %v2442 = vrot.slane %v1101, 7
      %v2443 = vsel %vm2430, %v2440, %v2442
      %v2444 = vrot.slane %v1104, 7
      %v2445 = vsel %vm2430, %v2442, %v2444
      %v2446 = vrot.slane %v1109, 7
      %v2447 = vsel %vm2430, %v2444, %v2446
      %v2448 = vrot.slane %v1112, 7
      %v2449 = vsel %vm2430, %v2446, %v2448
      %v2450 = vrot.slane %v1117, 7
      %v2451 = vsel %vm2430, %v2448, %v2450
      %v2452 = vrot.slane %v1120, 7
      %v2453 = vsel %vm2430, %v2450, %v2452
      %v2454 = vrot.slane %v1125, 7
      %v2455 = vsel %vm2430, %v2452, %v2454
      %v2456 = vrot.slane %v1128, 7
      %v2457 = vsel %vm2430, %v2454, %v2456
      %v2458 = vrot.slane %v1133, 7
      %v2459 = vsel %vm2430, %v2456, %v2458
      %v2460 = vrot.slane %v1136, 7
      %v2461 = vsel %vm2430, %v2458, %v2460
      %v2462 = vrot.slane %v1141, 7
      %v2463 = vsel %vm2430, %v2460, %v2462
      %v2464 = vrot.slane %v1144, 7
      %v2465 = vsel %vm2430, %v2462, %v2464
      %v2466 = vrot.slane %v1149, 7
      %v2467 = vsel %vm2430, %v2464, %v2466
      %v2468 = vrot.slane %v1152, 7
      %v2469 = vsel %vm2430, %v2466, %v2468
      %v2470 = vrot.slane %v1157, 7
      %v2471 = vsel %vm2430, %v2468, %v2470
      %v2472 = vrot.slane %v1160, 7
      %v2473 = vsel %vm2430, %v2470, %v2472
      %v2474 = vrot.slane %v1165, 7
      %v2475 = vsel %vm2430, %v2472, %v2474
      %v2476 = vrot.slane %v1168, 7
      %v2477 = vsel %vm2430, %v2474, %v2476
      %v2478 = vrot.slane %v1173, 7
      %v2479 = vsel %vm2430, %v2476, %v2478
      %v2480 = vrot.slane %v1176, 7
      %v2481 = vsel %vm2430, %v2478, %v2480
      %v2482 = vrot.slane %v1181, 7
      %v2483 = vsel %vm2430, %v2480, %v2482
      %v2484 = vrot.slane %v1184, 7
      %v2485 = vsel %vm2430, %v2482, %v2484
      %v2486 = vrot.slane %v1189, 7
      %v2487 = vsel %vm2430, %v2484, %v2486
      %v2488 = vrot.slane %v1192, 7
      %v2489 = vsel %vm2430, %v2486, %v2488
      %v2490 = vrot.slane %v1197, 7
      %v2491 = vsel %vm2430, %v2488, %v2490
      %v2492 = vrot.slane %v1200, 7
      %v2493 = vsel %vm2430, %v2490, %v2492
      %v2494 = vrot.slane %v1205, 7
      %v2495 = vsel %vm2430, %v2492, %v2494
      %2496 = vrot.lane.b32.xlu0 %v2431, 121
      %v2497 = vpop.permute.xlu0 %2496
      %2498 = vrot.lane.b32.xlu0 %v2433, 121
      %v2499 = vpop.permute.xlu0 %2498
      %2500 = vrot.lane.b32.xlu0 %v2435, 121
      %v2501 = vpop.permute.xlu0 %2500
      %2502 = vrot.lane.b32.xlu0 %v2437, 121
      %v2503 = vpop.permute.xlu0 %2502
      %2504 = vrot.lane.b32.xlu0 %v2439, 121
      %v2505 = vpop.permute.xlu0 %2504
      %2506 = vrot.lane.b32.xlu0 %v2441, 121
      %v2507 = vpop.permute.xlu0 %2506
      %2508 = vrot.lane.b32.xlu0 %v2443, 121
      %v2509 = vpop.permute.xlu0 %2508
      %2510 = vrot.lane.b32.xlu0 %v2445, 121
      %v2511 = vpop.permute.xlu0 %2510
      %2512 = vrot.lane.b32.xlu0 %v2447, 121
      %v2513 = vpop.permute.xlu0 %2512
      %2514 = vrot.lane.b32.xlu0 %v2449, 121
      %v2515 = vpop.permute.xlu0 %2514
      %2516 = vrot.lane.b32.xlu0 %v2451, 121
      %v2517 = vpop.permute.xlu0 %2516
      %2518 = vrot.lane.b32.xlu0 %v2453, 121
      %v2519 = vpop.permute.xlu0 %2518
      %2520 = vrot.lane.b32.xlu0 %v2455, 121
      %v2521 = vpop.permute.xlu0 %2520
      %2522 = vrot.lane.b32.xlu0 %v2457, 121
      %v2523 = vpop.permute.xlu0 %2522
      %2524 = vrot.lane.b32.xlu0 %v2459, 121
      %v2525 = vpop.permute.xlu0 %2524
      %2526 = vrot.lane.b32.xlu0 %v2461, 121
      %v2527 = vpop.permute.xlu0 %2526
      %2528 = vrot.lane.b32.xlu0 %v2463, 121
      %v2529 = vpop.permute.xlu0 %2528
      %2530 = vrot.lane.b32.xlu0 %v2465, 121
      %v2531 = vpop.permute.xlu0 %2530
      %2532 = vrot.lane.b32.xlu0 %v2467, 121
      %v2533 = vpop.permute.xlu0 %2532
      %2534 = vrot.lane.b32.xlu0 %v2469, 121
      %v2535 = vpop.permute.xlu0 %2534
      %2536 = vrot.lane.b32.xlu0 %v2471, 121
      %v2537 = vpop.permute.xlu0 %2536
      %2538 = vrot.lane.b32.xlu0 %v2473, 121
      %v2539 = vpop.permute.xlu0 %2538
      %2540 = vrot.lane.b32.xlu0 %v2475, 121
      %v2541 = vpop.permute.xlu0 %2540
      %2542 = vrot.lane.b32.xlu0 %v2477, 121
      %v2543 = vpop.permute.xlu0 %2542
      %2544 = vrot.lane.b32.xlu0 %v2479, 121
      %v2545 = vpop.permute.xlu0 %2544
      %2546 = vrot.lane.b32.xlu0 %v2481, 121
      %v2547 = vpop.permute.xlu0 %2546
      %2548 = vrot.lane.b32.xlu0 %v2483, 121
      %v2549 = vpop.permute.xlu0 %2548
      %2550 = vrot.lane.b32.xlu0 %v2485, 121
      %v2551 = vpop.permute.xlu0 %2550
      %2552 = vrot.lane.b32.xlu0 %v2487, 121
      %v2553 = vpop.permute.xlu0 %2552
      %2554 = vrot.lane.b32.xlu0 %v2489, 121
      %v2555 = vpop.permute.xlu0 %2554
      %2556 = vrot.lane.b32.xlu0 %v2491, 121
      %v2557 = vpop.permute.xlu0 %2556
      %2558 = vrot.lane.b32.xlu0 %v2493, 121
      %v2559 = vpop.permute.xlu0 %2558
      %2560 = vrot.lane.b32.xlu0 %v2495, 121
      %v2561 = vpop.permute.xlu0 %2560
      %v2595 = vadd.f32 %v2397, %v2497
      %v2596 = vadd.f32 %v2398, %v2499
      %v2597 = vadd.f32 %v2399, %v2501
      %v2598 = vadd.f32 %v2400, %v2503
      %v2599 = vadd.f32 %v2401, %v2505
      %v2600 = vadd.f32 %v2402, %v2507
      %v2601 = vadd.f32 %v2403, %v2509
      %v2602 = vadd.f32 %v2404, %v2511
      %v2603 = vadd.f32 %v2405, %v2513
      %v2604 = vadd.f32 %v2406, %v2515
      %v2605 = vadd.f32 %v2407, %v2517
      %v2606 = vadd.f32 %v2408, %v2519
      %v2607 = vadd.f32 %v2409, %v2521
      %v2608 = vadd.f32 %v2410, %v2523
      %v2609 = vadd.f32 %v2411, %v2525
      %v2610 = vadd.f32 %v2412, %v2527
      %v2611 = vadd.f32 %v2413, %v2529
      %v2612 = vadd.f32 %v2414, %v2531
      %v2613 = vadd.f32 %v2415, %v2533
      %v2614 = vadd.f32 %v2416, %v2535
      %v2615 = vadd.f32 %v2417, %v2537
      %v2616 = vadd.f32 %v2418, %v2539
      %v2617 = vadd.f32 %v2419, %v2541
      %v2618 = vadd.f32 %v2420, %v2543
      %v2619 = vadd.f32 %v2421, %v2545
      %v2620 = vadd.f32 %v2422, %v2547
      %v2621 = vadd.f32 %v2423, %v2549
      %v2622 = vadd.f32 %v2424, %v2551
      %v2623 = vadd.f32 %v2425, %v2553
      %v2624 = vadd.f32 %v2426, %v2555
      %v2625 = vadd.f32 %v2427, %v2557
      %v2626 = vadd.f32 %v2428, %v2559
      %v2627 = vadd.f32 %v2429, %v2561
      %2628 = vrot.lane.b32.xlu0 %v1077, 120
      %v2629 = vpop.permute.xlu0 %2628
      %2630 = vrot.lane.b32.xlu0 %v1080, 120
      %v2631 = vpop.permute.xlu0 %2630
      %2632 = vrot.lane.b32.xlu0 %v1085, 120
      %v2633 = vpop.permute.xlu0 %2632
      %2634 = vrot.lane.b32.xlu0 %v1088, 120
      %v2635 = vpop.permute.xlu0 %2634
      %2636 = vrot.lane.b32.xlu0 %v1093, 120
      %v2637 = vpop.permute.xlu0 %2636
      %2638 = vrot.lane.b32.xlu0 %v1096, 120
      %v2639 = vpop.permute.xlu0 %2638
      %2640 = vrot.lane.b32.xlu0 %v1101, 120
      %v2641 = vpop.permute.xlu0 %2640
      %2642 = vrot.lane.b32.xlu0 %v1104, 120
      %v2643 = vpop.permute.xlu0 %2642
      %2644 = vrot.lane.b32.xlu0 %v1109, 120
      %v2645 = vpop.permute.xlu0 %2644
      %2646 = vrot.lane.b32.xlu0 %v1112, 120
      %v2647 = vpop.permute.xlu0 %2646
      %2648 = vrot.lane.b32.xlu0 %v1117, 120
      %v2649 = vpop.permute.xlu0 %2648
      %2650 = vrot.lane.b32.xlu0 %v1120, 120
      %v2651 = vpop.permute.xlu0 %2650
      %2652 = vrot.lane.b32.xlu0 %v1125, 120
      %v2653 = vpop.permute.xlu0 %2652
      %2654 = vrot.lane.b32.xlu0 %v1128, 120
      %v2655 = vpop.permute.xlu0 %2654
      %2656 = vrot.lane.b32.xlu0 %v1133, 120
      %v2657 = vpop.permute.xlu0 %2656
      %2658 = vrot.lane.b32.xlu0 %v1136, 120
      %v2659 = vpop.permute.xlu0 %2658
      %2660 = vrot.lane.b32.xlu0 %v1141, 120
      %v2661 = vpop.permute.xlu0 %2660
      %2662 = vrot.lane.b32.xlu0 %v1144, 120
      %v2663 = vpop.permute.xlu0 %2662
      %2664 = vrot.lane.b32.xlu0 %v1149, 120
      %v2665 = vpop.permute.xlu0 %2664
      %2666 = vrot.lane.b32.xlu0 %v1152, 120
      %v2667 = vpop.permute.xlu0 %2666
      %2668 = vrot.lane.b32.xlu0 %v1157, 120
      %v2669 = vpop.permute.xlu0 %2668
      %2670 = vrot.lane.b32.xlu0 %v1160, 120
      %v2671 = vpop.permute.xlu0 %2670
      %2672 = vrot.lane.b32.xlu0 %v1165, 120
      %v2673 = vpop.permute.xlu0 %2672
      %2674 = vrot.lane.b32.xlu0 %v1168, 120
      %v2675 = vpop.permute.xlu0 %2674
      %2676 = vrot.lane.b32.xlu0 %v1173, 120
      %v2677 = vpop.permute.xlu0 %2676
      %2678 = vrot.lane.b32.xlu0 %v1176, 120
      %v2679 = vpop.permute.xlu0 %2678
      %2680 = vrot.lane.b32.xlu0 %v1181, 120
      %v2681 = vpop.permute.xlu0 %2680
      %2682 = vrot.lane.b32.xlu0 %v1184, 120
      %v2683 = vpop.permute.xlu0 %2682
      %2684 = vrot.lane.b32.xlu0 %v1189, 120
      %v2685 = vpop.permute.xlu0 %2684
      %2686 = vrot.lane.b32.xlu0 %v1192, 120
      %v2687 = vpop.permute.xlu0 %2686
      %2688 = vrot.lane.b32.xlu0 %v1197, 120
      %v2689 = vpop.permute.xlu0 %2688
      %2690 = vrot.lane.b32.xlu0 %v1200, 120
      %v2691 = vpop.permute.xlu0 %2690
      %2692 = vrot.lane.b32.xlu0 %v1205, 120
      %v2693 = vpop.permute.xlu0 %2692
      %v2727 = vadd.f32 %v2595, %v2629
      %v2728 = vadd.f32 %v2596, %v2631
      %v2729 = vadd.f32 %v2597, %v2633
      %v2730 = vadd.f32 %v2598, %v2635
      %v2731 = vadd.f32 %v2599, %v2637
      %v2732 = vadd.f32 %v2600, %v2639
      %v2733 = vadd.f32 %v2601, %v2641
      %v2734 = vadd.f32 %v2602, %v2643
      %v2735 = vadd.f32 %v2603, %v2645
      %v2736 = vadd.f32 %v2604, %v2647
      %v2737 = vadd.f32 %v2605, %v2649
      %v2738 = vadd.f32 %v2606, %v2651
      %v2739 = vadd.f32 %v2607, %v2653
      %v2740 = vadd.f32 %v2608, %v2655
      %v2741 = vadd.f32 %v2609, %v2657
      %v2742 = vadd.f32 %v2610, %v2659
      %v2743 = vadd.f32 %v2611, %v2661
      %v2744 = vadd.f32 %v2612, %v2663
      %v2745 = vadd.f32 %v2613, %v2665
      %v2746 = vadd.f32 %v2614, %v2667
      %v2747 = vadd.f32 %v2615, %v2669
      %v2748 = vadd.f32 %v2616, %v2671
      %v2749 = vadd.f32 %v2617, %v2673
      %v2750 = vadd.f32 %v2618, %v2675
      %v2751 = vadd.f32 %v2619, %v2677
      %v2752 = vadd.f32 %v2620, %v2679
      %v2753 = vadd.f32 %v2621, %v2681
      %v2754 = vadd.f32 %v2622, %v2683
      %v2755 = vadd.f32 %v2623, %v2685
      %v2756 = vadd.f32 %v2624, %v2687
      %v2757 = vadd.f32 %v2625, %v2689
      %v2758 = vadd.f32 %v2626, %v2691
      %v2759 = vadd.f32 %v2627, %v2693
      %v2760 = vld [vmem:[#allocation3] sm:$0x1]
      %v2762 = vlaneseq
      %v2763 = vshrl.u32 %v2762, 7
      %v2764 = vsub.s32 0, %v2763
      %v2765 = vrot.slane %v2760, %v2764
      %v2767 = vadd.f32 %v2727, %v2765
      %v2768 = vadd.f32 %v2728, %v2765
      %v2769 = vadd.f32 %v2729, %v2765
      %v2770 = vadd.f32 %v2730, %v2765
      %v2771 = vadd.f32 %v2731, %v2765
      %v2772 = vadd.f32 %v2732, %v2765
      %v2773 = vadd.f32 %v2733, %v2765
      %v2774 = vadd.f32 %v2734, %v2765
      %v2775 = vadd.f32 %v2735, %v2765
      %v2776 = vadd.f32 %v2736, %v2765
      %v2777 = vadd.f32 %v2737, %v2765
      %v2778 = vadd.f32 %v2738, %v2765
      %v2779 = vadd.f32 %v2739, %v2765
      %v2780 = vadd.f32 %v2740, %v2765
      %v2781 = vadd.f32 %v2741, %v2765
      %v2782 = vadd.f32 %v2742, %v2765
      %v2783 = vadd.f32 %v2743, %v2765
      %v2784 = vadd.f32 %v2744, %v2765
      %v2785 = vadd.f32 %v2745, %v2765
      %v2786 = vadd.f32 %v2746, %v2765
      %v2787 = vadd.f32 %v2747, %v2765
      %v2788 = vadd.f32 %v2748, %v2765
      %v2789 = vadd.f32 %v2749, %v2765
      %v2790 = vadd.f32 %v2750, %v2765
      %v2791 = vadd.f32 %v2751, %v2765
      %v2792 = vadd.f32 %v2752, %v2765
      %v2793 = vadd.f32 %v2753, %v2765
      %v2794 = vadd.f32 %v2754, %v2765
      %v2795 = vadd.f32 %v2755, %v2765
      %v2796 = vadd.f32 %v2756, %v2765
      %v2797 = vadd.f32 %v2757, %v2765
      %v2798 = vadd.f32 %v2758, %v2765
      %v2799 = vadd.f32 %v2759, %v2765
      %vm2800 = vcmask 7172
      %2801 = vst.msk [vmem:[%s392 - $0x4] sm:$0xf0] %vm2800, %v2767
      %vm2802 = vcmask 7168
      %2803 = vst.msk [vmem:[%s392 + $0x4] sm:$0xff] %vm2802, %v2768
      %2804 = vst.msk [vmem:[%s392 + $0xc] sm:$0xff] %vm2802, %v2769
      %2805 = vst.msk [vmem:[%s392 + $0x14] sm:$0xff] %vm2802, %v2770
      %2806 = vst.msk [vmem:[%s392 + $0x1c] sm:$0xff] %vm2802, %v2771
      %2807 = vst.msk [vmem:[%s392 + $0x24] sm:$0xff] %vm2802, %v2772
      %2808 = vst.msk [vmem:[%s392 + $0x2c] sm:$0xff] %vm2802, %v2773
      %2809 = vst.msk [vmem:[%s392 + $0x34] sm:$0xff] %vm2802, %v2774
      %2810 = vst.msk [vmem:[%s392 + $0x3c] sm:$0xff] %vm2802, %v2775
      %2811 = vst.msk [vmem:[%s392 + $0x44] sm:$0xff] %vm2802, %v2776
      %2812 = vst.msk [vmem:[%s392 + $0x4c] sm:$0xff] %vm2802, %v2777
      %2813 = vst.msk [vmem:[%s392 + $0x54] sm:$0xff] %vm2802, %v2778
      %2814 = vst.msk [vmem:[%s392 + $0x5c] sm:$0xff] %vm2802, %v2779
      %2815 = vst.msk [vmem:[%s392 + $0x64] sm:$0xff] %vm2802, %v2780
      %2816 = vst.msk [vmem:[%s392 + $0x6c] sm:$0xff] %vm2802, %v2781
      %2817 = vst.msk [vmem:[%s392 + $0x74] sm:$0xff] %vm2802, %v2782
      %2818 = vst.msk [vmem:[%s392 + $0x7c] sm:$0xff] %vm2802, %v2783
      %2819 = vst.msk [vmem:[%s392 + $0x84] sm:$0xff] %vm2802, %v2784
      %2820 = vst.msk [vmem:[%s392 + $0x8c] sm:$0xff] %vm2802, %v2785
      %2821 = vst.msk [vmem:[%s392 + $0x94] sm:$0xff] %vm2802, %v2786
      %2822 = vst.msk [vmem:[%s392 + $0x9c] sm:$0xff] %vm2802, %v2787
      %2823 = vst.msk [vmem:[%s392 + $0xa4] sm:$0xff] %vm2802, %v2788
      %2824 = vst.msk [vmem:[%s392 + $0xac] sm:$0xff] %vm2802, %v2789
      %2825 = vst.msk [vmem:[%s392 + $0xb4] sm:$0xff] %vm2802, %v2790
      %2826 = vst.msk [vmem:[%s392 + $0xbc] sm:$0xff] %vm2802, %v2791
      %2827 = vst.msk [vmem:[%s392 + $0xc4] sm:$0xff] %vm2802, %v2792
      %2828 = vst.msk [vmem:[%s392 + $0xcc] sm:$0xff] %vm2802, %v2793
      %2829 = vst.msk [vmem:[%s392 + $0xd4] sm:$0xff] %vm2802, %v2794
      %2830 = vst.msk [vmem:[%s392 + $0xdc] sm:$0xff] %vm2802, %v2795
      %2831 = vst.msk [vmem:[%s392 + $0xe4] sm:$0xff] %vm2802, %v2796
      %2832 = vst.msk [vmem:[%s392 + $0xec] sm:$0xff] %vm2802, %v2797
      %2833 = vst.msk [vmem:[%s392 + $0xf4] sm:$0xff] %vm2802, %v2798
      %vm2834 = vcmask 3072
      %2835 = vst.msk [vmem:[%s392 + $0xfc] sm:$0xf] %vm2834, %v2799
      %s2836 = smul.u32 32, %s23
      %p2837 = scmp.lt.s32.totalorder %s22, 1
      %s2838 = scalar_select %p2837, %s22, 1
      %p2839 = scmp.lt.s32.totalorder %s2836, 31
      %s2840 = scalar_select %p2839, %s2836, 31
      %s2841 = smul.addr %s2838, 32
      %s2842 = sadd.s32 %s2840, %s2841
      %s2843 = smul.addr %s2842, 8
      %s2844 = scalar_lea.vmem %s5, %s2843
      // Predicated region
      $region49: #{audio_enhancement_pallas.7} parent=39 // pred_check
        %p2845 = pneg %p192
      $region50: #{audio_enhancement_pallas.7} parent=39 // pred_check_branch
        %2847 = sbr.rel (%p2845) target = $region52
      $region51: #{audio_enhancement_pallas.7} parent=39 // pred_region
        %s2848 = smul.u32 32, %s23
      $region52: #{audio_enhancement_pallas.7} parent=39 // pred_fallthru
        _
    $region40: #{audio_enhancement_pallas.7} parent=5 // pred_fallthru
      _
    %p2849 = scmp.le.s32.totalorder 2, %s13
    // Predicated region
    $region53: #{audio_enhancement_pallas.7} parent=5 // pred_check
      %p2850 = pneg %p2849
    $region54: #{audio_enhancement_pallas.7} parent=5 // pred_check_branch
      %2852 = sbr.rel (%p2850) target = $region56
    $region55: #{audio_enhancement_pallas.7} parent=5 // pred_region
      %s2853 = ssub.s32 %s13, 2
      // Predicated region
      $region57: #{audio_enhancement_pallas.7} parent=55 // pred_check
        %p2854 = pneg %p198
      $region58: #{audio_enhancement_pallas.7} parent=55 // pred_check_branch
        %2856 = sbr.rel (%p2854) target = $region60
      $region59: #{audio_enhancement_pallas.7} parent=55 // pred_region
        %s2857 = smul.u32 32, %s25
        %p2858 = scmp.lt.s32.totalorder %s24, 1
        %s2859 = scalar_select %p2858, %s24, 1
        %p2860 = scmp.lt.s32.totalorder %s2857, 31
        %s2861 = scalar_select %p2860, %s2857, 31
        %s2862 = smul.addr %s2859, 32
        %s2863 = sadd.s32 %s2861, %s2862
        %s2864 = smul.addr %s2863, 8
        %s2865 = scalar_lea.vmem %s5, %s2864
      $region60: #{audio_enhancement_pallas.7} parent=55 // pred_fallthru
        _
    $region56: #{audio_enhancement_pallas.7} parent=5 // pred_fallthru
      _
  $region6: #{audio_enhancement_pallas.7} parent=0 // loop_footer
    %s17 = sadd.s32 1, %s13
  $region7: #{audio_enhancement_pallas.7} parent=0 // loop_footer_branch
    %12 = sbr.rel target = $region3
  $region8: #{audio_enhancement_pallas.7} parent=0 // loop_exit
    _

</llo_original>
